<compile_context>
chip_gen: v6e
topology: v6e:2x2x1
jax: 0.10.0
libtpu: 0.0.40
codegen_flags: <defaults>
</compile_context>

<pallas_src>
import jax
import jax.numpy as jnp
from jax.experimental import pallas as pl
from jax.experimental.pallas import tpu as pltpu


# ---------------------------------------------------------------------------
# Static model geometry (channels-last trunk, 8-row-aligned batch segments)
# ---------------------------------------------------------------------------
SEQ_LEN = 15                       # token positions fed to the inception trunk
VOCAB, VOCAB_PAD = 21, 32          # embedding rows (padded for one-hot matmul)
CIN1, CIN1_PAD = 21, 32            # embedding dim == inception1 input channels
PAD_ID = VOCAB_PAD - 1             # padded rows of the emb table are zero
L1, L2, L3 = 15, 7, 3              # valid sequence length per trunk stage
LP1, LP2, LP3 = 24, 16, 8          # 8-aligned per-sample row stride per stage
                                   # (LP >= L + 2 so the k=5 conv taps stay in
                                   #  the zeroed tail of each segment)


# ---------------------------------------------------------------------------
# Small helpers shared by the kernel and the pure-JAX reference
# ---------------------------------------------------------------------------
def _relu(v):
    return jnp.maximum(v, 0.0)


def _leaky_relu(v):                      # PyTorch LeakyReLU default slope 0.01
    return jnp.where(v > 0, v, 0.01 * v)


def _dot(a, b):
    return jnp.dot(a, b, preferred_element_type=jnp.float32)


# ---------------------------------------------------------------------------
# In-kernel building blocks (whole-block ops, no per-batch loops)
# ---------------------------------------------------------------------------
def _shift_rows(x, d):
    """result[j] = x[j + d], zeros shifted in at the array ends (static |d|<=2)."""
    if d == 0:
        return x
    r, c = x.shape
    z = jnp.zeros((abs(d), c), x.dtype)
    if d > 0:
        return jnp.concatenate([x[d:, :], z], axis=0)
    return jnp.concatenate([z, x[: r + d, :]], axis=0)


def _conv1d_same(pre, w, b, k):
    """'same' Conv1d (stride 1) + ReLU as ONE matmul over an in-VMEM im2col.

    pre: [R, f] activations whose per-segment padding rows are already zero
         (that zeroed tail doubles as the conv boundary padding).
    w:   [k*f, F] tap-major weight;  b: [1, F].
    """
    p = (k - 1) // 2
    taps = [_shift_rows(pre, t - p) for t in range(k)]     # tap t -> pre[l+t-p]
    return _relu(_dot(jnp.concatenate(taps, axis=1), w) + b)


def _inception_block(x, f, seq_len, local, w1x1, b1x1, w3, b3, w5, b5, wp, bp):
    """Inception block on a flat [R, Cin] block (R = batch * Lpad rows).

    local: [R, 1] int32 position of each row inside its Lpad segment.  Rows with
    local >= seq_len are padding; their outputs are garbage and are discarded by
    the following stride-2 pool's selection matmul.  The trailing BatchNorm1d(4f)
    (eval mode) is folded into the per-path weights.
    """
    # Merged 1x1 convs (path1 | 3x3-reduce | 5x5-reduce): one lane-dense matmul.
    pre = _relu(_dot(x, w1x1) + b1x1)
    valid = jnp.where(local < seq_len, 1.0, 0.0).astype(pre.dtype)
    pre = pre * valid                      # zero pad rows -> conv boundary pad
    path1 = pre[:, 0:f]
    path2 = _conv1d_same(pre[:, f:2 * f], w3, b3, k=3)
    path3 = _conv1d_same(pre[:, 2 * f:3 * f], w5, b5, k=5)

    # path4: MaxPool1d(k=3, s=1, p=1) = max of 3 shifted blocks; at segment
    # edges PyTorch's implicit -inf padding never wins, so substitute the row
    # itself there (handles the possibly-negative stage-1 activations).
    first = jnp.where(local == 0, 1.0, 0.0).astype(x.dtype)
    last = jnp.where(local == seq_len - 1, 1.0, 0.0).astype(x.dtype)
    down = _shift_rows(x, -1)                                       # row l-1
    up = _shift_rows(x, 1)                                          # row l+1
    down = first * x + (1.0 - first) * down
    up = last * x + (1.0 - last) * up
    pooled = jnp.maximum(jnp.maximum(x, down), up)
    path4 = _relu(_dot(pooled, wp) + bp)

    return jnp.concatenate([path1, path2, path3, path4], axis=1)    # [R, 4f]


# ---------------------------------------------------------------------------
# The single fused Pallas kernel (everything VMEM-resident, grid-less)
# ---------------------------------------------------------------------------
def _final_model_kernel(*refs):
    (ids_ref, feats_ref, emb_ref,
     l1_ref, l2_ref, l3_ref, s1_ref, s2_ref, s3_ref,
     i1_w1, i1_b1, i1_w3, i1_b3, i1_w5, i1_b5, i1_wp, i1_bp,
     i2_w1, i2_b1, i2_w3, i2_b3, i2_w5, i2_b5, i2_wp, i2_bp,
     i3_w1, i3_b1, i3_w3, i3_b3, i3_w5, i3_b5, i3_wp, i3_bp,
     ifc1_w, ifc1_b, ffc1_w, ffc1_b, ffc2_w, ffc2_b,
     fc1_wa, fc1_wb, fc1_b, fc2_w, fc2_b, fc3_wt, fc3_b,
     out_ref) = refs

    # ---- Embedding lookup folded in as a one-hot MXU matmul -----------------
    ids = ids_ref[...]                                     # [B*LP1, 1] int32
    cols = jax.lax.broadcasted_iota(jnp.int32,
                                    (ids.shape[0], emb_ref.shape[0]), 1)
    onehot = jnp.where(ids == cols, 1.0, 0.0).astype(jnp.float32)
    x = _dot(onehot, emb_ref[...])                         # [B*LP1, 32]

    # ---- Inception trunk -----------------------------------------------------
    stages = (
        (32, L1, l1_ref, s1_ref,
         i1_w1, i1_b1, i1_w3, i1_b3, i1_w5, i1_b5, i1_wp, i1_bp),
        (64, L2, l2_ref, s2_ref,
         i2_w1, i2_b1, i2_w3, i2_b3, i2_w5, i2_b5, i2_wp, i2_bp),
        (128, L3, l3_ref, s3_ref,
         i3_w1, i3_b1, i3_w3, i3_b3, i3_w5, i3_b5, i3_wp, i3_bp),
    )
    for (f, seq_len, l_ref, s_ref, w1, b1, w3, b3, w5, b5, wp, bp) in stages:
        y = _inception_block(x, f, seq_len, l_ref[...],
                             w1[...], b1[...], w3[...], b3[...],
                             w5[...], b5[...], wp[...], bp[...])
        # MaxPool1d(k=3, s=2): max of 3 shifted blocks, then ONE selection
        # matmul that picks every 2nd valid row, drops the garbage padding
        # rows, re-packs into the next 8-aligned layout, and (after the last
        # stage) flattens to [B, 512].
        m = jnp.maximum(jnp.maximum(y, _shift_rows(y, 1)), _shift_rows(y, 2))
        x = _dot(s_ref[...], m)

    # ---- Heads (dropout layers are identity in eval mode) --------------------
    inc = _relu(_dot(x, ifc1_w[...]) + ifc1_b[...])        # [B, 256]
    fx = feats_ref[...]
    fx = _leaky_relu(_dot(fx, ffc1_w[...]) + ffc1_b[...])  # [B, 512] (500 live)
    fx = _leaky_relu(_dot(fx, ffc2_w[...]) + ffc2_b[...])  # [B, 256] (250 live)

    # fc1 on cat([inc, fx], dim=1) done as a split matmul (no concat needed).
    z = _leaky_relu(_dot(inc, fc1_wa[...]) + _dot(fx, fc1_wb[...]) + fc1_b[...])
    z = _leaky_relu(_dot(z, fc2_w[...]) + fc2_b[...])      # [B, 256] (250 live)
    logit = jnp.sum(z * fc3_wt[...], axis=1, keepdims=True) + fc3_b[...]
    out_ref[...] = pl.reciprocal(1.0 + jnp.exp(-logit), approx=True)   # sigmoid


# ---------------------------------------------------------------------------
# Parameter preparation (PyTorch-default init, BN folded, padded & merged)
# ---------------------------------------------------------------------------
def _uinit(key, shape, fan_in):
    bound = 1.0 / (fan_in ** 0.5)
    return jax.random.uniform(key, shape, jnp.float32, -bound, bound)


def _conv_w_to_mat(w):
    """Conv1d weight [Cout, Cin, k] -> tap-major matmul weight [k*Cin, Cout]."""
    cout, cin, k = w.shape
    return jnp.transpose(w, (2, 1, 0)).reshape(k * cin, cout)


def _pad2d(a, rows, cols):
    return jnp.pad(a, ((0, rows - a.shape[0]), (0, cols - a.shape[1])))


def _round_up(n, m):
    return ((n + m - 1) // m) * m


def _default_bn_scale_shift(n, eps=1e-5):
    """Eval-mode BatchNorm1d with default (fresh) running stats / affine params.

    TODO(synk): generalize the fold for trained (non-default) BN statistics.
    """
    gamma = jnp.ones((n,), jnp.float32)
    beta = jnp.zeros((n,), jnp.float32)
    mean = jnp.zeros((n,), jnp.float32)
    var = jnp.ones((n,), jnp.float32)
    s = gamma / jnp.sqrt(var + eps)
    t = beta - mean * s
    return s, t


def _init_linear(key, fin, fout):
    k1, k2 = jax.random.split(key)
    w = _uinit(k1, (fout, fin), fin).T                 # stored as [fin, fout]
    b = _uinit(k2, (1, fout), fin)
    return w, b


def _init_linear_bn(key, fin, fout, fin_pad=None, fout_pad=None, eps=1e-5):
    """Linear + eval-mode BN folded, zero-padded to lane-dense dims."""
    w, b = _init_linear(key, fin, fout)
    s, t = _default_bn_scale_shift(fout, eps)
    w = w * s[None, :]
    b = b * s[None, :] + t[None, :]
    fin_pad = fin if fin_pad is None else fin_pad
    fout_pad = fout if fout_pad is None else fout_pad
    return _pad2d(w, fin_pad, fout_pad), _pad2d(b, 1, fout_pad)


def _init_inception(key, cin, cin_pad, f):
    ks = jax.random.split(key, 12)
    w1 = _conv_w_to_mat(_uinit(ks[0], (f, cin, 1), cin))
    b1 = _uinit(ks[1], (1, f), cin)
    w2a = _conv_w_to_mat(_uinit(ks[2], (f, cin, 1), cin))
    b2a = _uinit(ks[3], (1, f), cin)
    w2b = _conv_w_to_mat(_uinit(ks[4], (f, f, 3), f * 3))
    b2b = _uinit(ks[5], (1, f), f * 3)
    w3a = _conv_w_to_mat(_uinit(ks[6], (f, cin, 1), cin))
    b3a = _uinit(ks[7], (1, f), cin)
    w3b = _conv_w_to_mat(_uinit(ks[8], (f, f, 5), f * 5))
    b3b = _uinit(ks[9], (1, f), f * 5)
    w4 = _conv_w_to_mat(_uinit(ks[10], (f, cin, 1), cin))
    b4 = _uinit(ks[11], (1, f), cin)

    # BatchNorm1d(4f) after the path concat (eval mode, default running stats):
    # y = relu(conv)*s + t with t == 0 and s > 0, so it folds exactly into the
    # final conv of each path (ReLU commutes with a positive per-channel scale).
    s, _t = _default_bn_scale_shift(4 * f)
    s1, s2, s3, s4 = s[0:f], s[f:2 * f], s[2 * f:3 * f], s[3 * f:4 * f]
    w1, b1 = w1 * s1[None, :], b1 * s1[None, :]
    w2b, b2b = w2b * s2[None, :], b2b * s2[None, :]
    w3b, b3b = w3b * s3[None, :], b3b * s3[None, :]
    w4, b4 = w4 * s4[None, :], b4 * s4[None, :]

    # Merge the three 1x1 convs that share the same input into one matmul and
    # zero-pad: Cin -> cin_pad rows, 3f -> multiple-of-128 lanes.
    n3f = _round_up(3 * f, 128)
    w1x1 = _pad2d(jnp.concatenate([w1, w2a, w3a], axis=1), cin_pad, n3f)
    b1x1 = _pad2d(jnp.concatenate([b1, b2a, b3a], axis=1), 1, n3f)
    w4 = _pad2d(w4, cin_pad, f)
    return (w1x1, b1x1, w2b, b2b, w3b, b3b, w4, b4)


def init_params(key, input_size):
    n_feat = input_size - SEQ_LEN
    ks = jax.random.split(key, 10)
    # nn.Embedding default init ~ N(0, 1); padded rows / cols are zero.
    emb = _pad2d(jax.random.normal(ks[0], (VOCAB, VOCAB), jnp.float32),
                 VOCAB_PAD, CIN1_PAD)
    inc1 = _init_inception(ks[1], CIN1, CIN1_PAD, 32)
    inc2 = _init_inception(ks[2], 128, 128, 64)
    inc3 = _init_inception(ks[3], 256, 256, 128)
    ifc1_w, ifc1_b = _init_linear_bn(ks[4], 512, 256)
    ffc1_w, ffc1_b = _init_linear_bn(ks[5], n_feat, 500, fout_pad=512)
    ffc2_w, ffc2_b = _init_linear_bn(ks[6], 500, 250, fin_pad=512, fout_pad=256)
    fc1_w, fc1_b = _init_linear_bn(ks[7], 506, 500, fout_pad=512)
    fc2_w, fc2_b = _init_linear_bn(ks[8], 500, 250, fin_pad=512, fout_pad=256)
    fc3_w, fc3_b = _init_linear(ks[9], 250, 1)
    # fc1 split for the concat-free head: rows 0..255 act on the inception
    # branch, rows 256..505 on the FNN branch (padded to its 256 live lanes).
    fc1_wa = fc1_w[:256, :]
    fc1_wb = _pad2d(fc1_w[256:506, :], 256, 512)
    fc3_wt = _pad2d(fc3_w.T, 1, 256)                   # fc3 as a [1, 256] row
    return (emb, *inc1, *inc2, *inc3,
            ifc1_w, ifc1_b, ffc1_w, ffc1_b, ffc2_w, ffc2_b,
            fc1_wa, fc1_wb, fc1_b, fc2_w, fc2_b, fc3_wt, fc3_b)


# ---------------------------------------------------------------------------
# Wrapper
# ---------------------------------------------------------------------------
def _pool_select_matrix(batch, lp_in, lp_out, l_out):
    """S @ m implements MaxPool1d(k=3, s=2)'s stride-2 row pick + re-packing:
    S[b*lp_out + o, b*lp_in + 2*o] = 1 for o < l_out, else the row is all zero
    (so the next stage's padding rows come out exactly zero)."""
    r = jnp.arange(batch * lp_out)
    src = (r // lp_out) * lp_in + 2 * (r % lp_out)
    valid = (r % lp_out) < l_out
    sel = (jnp.arange(batch * lp_in)[None, :] == src[:, None]) & valid[:, None]
    return sel.astype(jnp.float32)


def _local_rows(batch, lp):
    """int32 [batch*lp, 1] column: each row's position inside its segment."""
    return jnp.tile(jnp.arange(lp, dtype=jnp.int32), batch).reshape(batch * lp, 1)


def _flops_estimate(batch, n_feat):
    per_sample = (
        15 * (21 * 96 + 3 * 32 * 32 + 5 * 32 * 32 + 21 * 32)
        + 7 * (128 * 192 + 3 * 64 * 64 + 5 * 64 * 64 + 128 * 64)
        + 3 * (256 * 384 + 3 * 128 * 128 + 5 * 128 * 128 + 256 * 128)
        + 512 * 256 + n_feat * 500 + 500 * 250 + 506 * 500 + 500 * 250 + 250)
    return 2 * batch * per_sample


def final_model_forward(x, weights):
    """x: [B, input_size]; last 15 columns are token ids, the rest dense feats."""
    batch = x.shape[0]
    ids = x[:, -SEQ_LEN:].astype(jnp.int32)                        # [B, 15]
    ids = jnp.pad(ids, ((0, 0), (0, LP1 - SEQ_LEN)), constant_values=PAD_ID)
    ids_col = ids.reshape(batch * LP1, 1)                          # [B*24, 1]
    feats = x[:, :-SEQ_LEN]

    # Tiny per-batch-size constants: local row indices and pool-selection mats.
    l1 = _local_rows(batch, LP1)
    l2 = _local_rows(batch, LP2)
    l3 = _local_rows(batch, LP3)
    s1 = _pool_select_matrix(batch, LP1, LP2, L2)                  # [B*16, B*24]
    s2 = _pool_select_matrix(batch, LP2, LP3, L3)                  # [B*8,  B*16]
    s3 = _pool_select_matrix(batch, LP3, 1, 1)                     # [B, B*8] (+flatten)

    args = (ids_col, feats, weights[0], l1, l2, l3, s1, s2, s3, *weights[1:])
    vmem = pl.BlockSpec(memory_space=pltpu.MemorySpace.VMEM)
    bytes_accessed = 4 * (sum(int(a.size) for a in args) + batch)
    return pl.pallas_call(
        _final_model_kernel,
        out_shape=jax.ShapeDtypeStruct((batch, 1), jnp.float32),
        in_specs=[vmem] * len(args),
        out_specs=vmem,
        compiler_params=pltpu.CompilerParams(vmem_limit_bytes=32 * 1024 * 1024),
        cost_estimate=pl.CostEstimate(
            flops=_flops_estimate(batch, feats.shape[1]),
            transcendentals=batch,
            bytes_accessed=int(bytes_accessed)),
    )(*args)


# ---------------------------------------------------------------------------
# Pure-JAX reference (same prepared weights) used as a correctness self-check
# ---------------------------------------------------------------------------
def _ref_dot(a, b):
    return jnp.dot(a, b, precision="highest", preferred_element_type=jnp.float32)


def _ref_conv_same(x, w, bias, k):
    B, L, C = x.shape
    p = (k - 1) // 2
    xp = jnp.pad(x, ((0, 0), (p, p), (0, 0)))
    acc = 0.0
    for t in range(k):
        acc = acc + jnp.einsum("blc,cf->blf", xp[:, t:t + L, :],
                               w[t * C:(t + 1) * C, :], precision="highest")
    return _relu(acc + bias)


def _ref_inception(x, f, w1x1, b1x1, w3, b3, w5, b5, wp, bp):
    B, L, _ = x.shape
    pre = _relu(jnp.einsum("blc,cf->blf", x, w1x1, precision="highest") + b1x1)
    p1 = pre[..., 0:f]
    p2 = _ref_conv_same(pre[..., f:2 * f], w3, b3, 3)
    p3 = _ref_conv_same(pre[..., 2 * f:3 * f], w5, b5, 5)
    xp = jnp.pad(x, ((0, 0), (1, 1), (0, 0)), constant_values=-jnp.inf)
    pooled = jnp.maximum(jnp.maximum(xp[:, 0:L], xp[:, 1:L + 1]), xp[:, 2:L + 2])
    p4 = _relu(jnp.einsum("blc,cf->blf", pooled, wp, precision="highest") + bp)
    return jnp.concatenate([p1, p2, p3, p4], axis=-1)


def _ref_pool_s2(x):
    L = x.shape[1]
    lo = (L - 3) // 2 + 1
    return jnp.stack([jnp.max(x[:, 2 * l:2 * l + 3, :], axis=1) for l in range(lo)],
                     axis=1)


def _reference_forward(x, weights):
    B = x.shape[0]
    idx = x[:, -SEQ_LEN:].astype(jnp.int32)
    feats = x[:, :-SEQ_LEN]
    h = jnp.take(weights[0], idx, axis=0)              # [B, 15, 32]
    for f, wb in ((32, weights[1:9]), (64, weights[9:17]), (128, weights[17:25])):
        h = _ref_inception(h, f, *wb)
        h = _ref_pool_s2(h)
    (ifc1_w, ifc1_b, ffc1_w, ffc1_b, ffc2_w, ffc2_b,
     fc1_wa, fc1_wb, fc1_b, fc2_w, fc2_b, fc3_wt, fc3_b) = weights[25:]
    inc = _relu(_ref_dot(h.reshape(B, -1), ifc1_w) + ifc1_b)
    fx = _leaky_relu(_ref_dot(feats, ffc1_w) + ffc1_b)
    fx = _leaky_relu(_ref_dot(fx, ffc2_w) + ffc2_b)
    z = _leaky_relu(_ref_dot(inc, fc1_wa) + _ref_dot(fx, fc1_wb) + fc1_b)
    z = _leaky_relu(_ref_dot(z, fc2_w) + fc2_b)
    logit = jnp.sum(z * fc3_wt, axis=1, keepdims=True) + fc3_b
    return 1.0 / (1.0 + jnp.exp(-logit))


if __name__ == "__main__":
    input_size = 47            # 32 dense features + 15 token-id columns
    batch = 4

    key = jax.random.PRNGKey(0)
    kf, ki, kp = jax.random.split(key, 3)
    feats = jax.random.normal(kf, (batch, input_size - SEQ_LEN), jnp.float32)
    token_ids = jax.random.randint(ki, (batch, SEQ_LEN), 0, VOCAB).astype(jnp.float32)
    x = jnp.concatenate([feats, token_ids], axis=1)    # [B, input_size]

    weights = init_params(kp, input_size)

    fwd = jax.jit(final_model_forward)
    out = jax.block_until_ready(fwd(x, weights))

    assert out.shape == (batch, 1)
    assert bool(jnp.all(jnp.isfinite(out)))
    ref = _reference_forward(x, weights)
    assert bool(jnp.allclose(out, ref, rtol=2e-3, atol=2e-3)), (out, ref)
    print("KERNEL_OK")
</pallas_src>

<mosaic_0001>
module attributes {stable_mosaic.version = 11 : i64} {
  func.func @_final_model_kernel(%arg0: memref<96x1xi32, #tpu.memory_space<vmem>>, %arg1: memref<4x32xf32, #tpu.memory_space<vmem>>, %arg2: memref<32x32xf32, #tpu.memory_space<vmem>>, %arg3: memref<96x1xi32, #tpu.memory_space<vmem>>, %arg4: memref<64x1xi32, #tpu.memory_space<vmem>>, %arg5: memref<32x1xi32, #tpu.memory_space<vmem>>, %arg6: memref<64x96xf32, #tpu.memory_space<vmem>>, %arg7: memref<32x64xf32, #tpu.memory_space<vmem>>, %arg8: memref<4x32xf32, #tpu.memory_space<vmem>>, %arg9: memref<32x128xf32, #tpu.memory_space<vmem>>, %arg10: memref<1x128xf32, #tpu.memory_space<vmem>>, %arg11: memref<96x32xf32, #tpu.memory_space<vmem>>, %arg12: memref<1x32xf32, #tpu.memory_space<vmem>>, %arg13: memref<160x32xf32, #tpu.memory_space<vmem>>, %arg14: memref<1x32xf32, #tpu.memory_space<vmem>>, %arg15: memref<32x32xf32, #tpu.memory_space<vmem>>, %arg16: memref<1x32xf32, #tpu.memory_space<vmem>>, %arg17: memref<128x256xf32, #tpu.memory_space<vmem>>, %arg18: memref<1x256xf32, #tpu.memory_space<vmem>>, %arg19: memref<192x64xf32, #tpu.memory_space<vmem>>, %arg20: memref<1x64xf32, #tpu.memory_space<vmem>>, %arg21: memref<320x64xf32, #tpu.memory_space<vmem>>, %arg22: memref<1x64xf32, #tpu.memory_space<vmem>>, %arg23: memref<128x64xf32, #tpu.memory_space<vmem>>, %arg24: memref<1x64xf32, #tpu.memory_space<vmem>>, %arg25: memref<256x384xf32, #tpu.memory_space<vmem>>, %arg26: memref<1x384xf32, #tpu.memory_space<vmem>>, %arg27: memref<384x128xf32, #tpu.memory_space<vmem>>, %arg28: memref<1x128xf32, #tpu.memory_space<vmem>>, %arg29: memref<640x128xf32, #tpu.memory_space<vmem>>, %arg30: memref<1x128xf32, #tpu.memory_space<vmem>>, %arg31: memref<256x128xf32, #tpu.memory_space<vmem>>, %arg32: memref<1x128xf32, #tpu.memory_space<vmem>>, %arg33: memref<512x256xf32, #tpu.memory_space<vmem>>, %arg34: memref<1x256xf32, #tpu.memory_space<vmem>>, %arg35: memref<32x512xf32, #tpu.memory_space<vmem>>, %arg36: memref<1x512xf32, #tpu.memory_space<vmem>>, %arg37: memref<512x256xf32, #tpu.memory_space<vmem>>, %arg38: memref<1x256xf32, #tpu.memory_space<vmem>>, %arg39: memref<256x512xf32, #tpu.memory_space<vmem>>, %arg40: memref<256x512xf32, #tpu.memory_space<vmem>>, %arg41: memref<1x512xf32, #tpu.memory_space<vmem>>, %arg42: memref<512x256xf32, #tpu.memory_space<vmem>>, %arg43: memref<1x256xf32, #tpu.memory_space<vmem>>, %arg44: memref<1x256xf32, #tpu.memory_space<vmem>>, %arg45: memref<1x1xf32, #tpu.memory_space<vmem>>, %arg46: memref<4x1xf32, #tpu.memory_space<vmem>>) attributes {dimension_semantics = [], scalar_prefetch = 0 : i64, scratch_operands = 0 : i64, tpu.core_type = #tpu.core_type<tc>} {
    %c0 = arith.constant 0 : index
    %c0_0 = arith.constant 0 : index
    %0 = vector.load %arg0[%c0, %c0_0] : memref<96x1xi32, #tpu.memory_space<vmem>>, vector<96x1xi32>
    %1 = tpu.iota {dimensions = array<i32: 1>} : vector<96x32xi32>
    %2 = vector.broadcast %0 : vector<96x1xi32> to vector<96x32xi32>
    %3 = arith.cmpi eq, %2, %1 : vector<96x32xi32>
    %cst = arith.constant 1.000000e+00 : f32
    %cst_1 = arith.constant 0.000000e+00 : f32
    %4 = vector.broadcast %cst : f32 to vector<96x32xf32>
    %5 = vector.broadcast %cst_1 : f32 to vector<96x32xf32>
    %6 = arith.select %3, %4, %5 : vector<96x32xi1>, vector<96x32xf32>
    %c0_2 = arith.constant 0 : index
    %c0_3 = arith.constant 0 : index
    %7 = vector.load %arg2[%c0_2, %c0_3] : memref<32x32xf32, #tpu.memory_space<vmem>>, vector<32x32xf32>
    %cst_4 = arith.constant dense<0.000000e+00> : vector<96x32xf32>
    %8 = tpu.matmul %6, %7, %cst_4 {dimension_numbers = #tpu.dot_dimension_numbers<[1], [0], [0], [1], [0, 0, 1, 1], [], []>} : vector<96x32xf32>, vector<32x32xf32>, vector<96x32xf32> -> vector<96x32xf32>
    %c0_5 = arith.constant 0 : index
    %c0_6 = arith.constant 0 : index
    %9 = vector.load %arg3[%c0_5, %c0_6] : memref<96x1xi32, #tpu.memory_space<vmem>>, vector<96x1xi32>
    %c0_7 = arith.constant 0 : index
    %c0_8 = arith.constant 0 : index
    %10 = vector.load %arg9[%c0_7, %c0_8] : memref<32x128xf32, #tpu.memory_space<vmem>>, vector<32x128xf32>
    %c0_9 = arith.constant 0 : index
    %c0_10 = arith.constant 0 : index
    %11 = vector.load %arg10[%c0_9, %c0_10] : memref<1x128xf32, #tpu.memory_space<vmem>>, vector<1x128xf32>
    %c0_11 = arith.constant 0 : index
    %c0_12 = arith.constant 0 : index
    %12 = vector.load %arg11[%c0_11, %c0_12] : memref<96x32xf32, #tpu.memory_space<vmem>>, vector<96x32xf32>
    %c0_13 = arith.constant 0 : index
    %c0_14 = arith.constant 0 : index
    %13 = vector.load %arg12[%c0_13, %c0_14] : memref<1x32xf32, #tpu.memory_space<vmem>>, vector<1x32xf32>
    %c0_15 = arith.constant 0 : index
    %c0_16 = arith.constant 0 : index
    %14 = vector.load %arg13[%c0_15, %c0_16] : memref<160x32xf32, #tpu.memory_space<vmem>>, vector<160x32xf32>
    %c0_17 = arith.constant 0 : index
    %c0_18 = arith.constant 0 : index
    %15 = vector.load %arg14[%c0_17, %c0_18] : memref<1x32xf32, #tpu.memory_space<vmem>>, vector<1x32xf32>
    %c0_19 = arith.constant 0 : index
    %c0_20 = arith.constant 0 : index
    %16 = vector.load %arg15[%c0_19, %c0_20] : memref<32x32xf32, #tpu.memory_space<vmem>>, vector<32x32xf32>
    %c0_21 = arith.constant 0 : index
    %c0_22 = arith.constant 0 : index
    %17 = vector.load %arg16[%c0_21, %c0_22] : memref<1x32xf32, #tpu.memory_space<vmem>>, vector<1x32xf32>
    %cst_23 = arith.constant dense<0.000000e+00> : vector<96x128xf32>
    %18 = tpu.matmul %8, %10, %cst_23 {dimension_numbers = #tpu.dot_dimension_numbers<[1], [0], [0], [1], [0, 0, 1, 1], [], []>} : vector<96x32xf32>, vector<32x128xf32>, vector<96x128xf32> -> vector<96x128xf32>
    %19 = vector.broadcast %11 : vector<1x128xf32> to vector<96x128xf32>
    %20 = arith.addf %18, %19 : vector<96x128xf32>
    %cst_24 = arith.constant 0.000000e+00 : f32
    %21 = vector.broadcast %cst_24 : f32 to vector<96x128xf32>
    %22 = arith.maximumf %20, %21 : vector<96x128xf32>
    %c15_i32 = arith.constant 15 : i32
    %23 = vector.broadcast %c15_i32 : i32 to vector<96x1xi32>
    %24 = arith.cmpi slt, %9, %23 : vector<96x1xi32>
    %cst_25 = arith.constant 1.000000e+00 : f32
    %cst_26 = arith.constant 0.000000e+00 : f32
    %25 = vector.broadcast %cst_25 : f32 to vector<96x1xf32>
    %26 = vector.broadcast %cst_26 : f32 to vector<96x1xf32>
    %27 = arith.select %24, %25, %26 : vector<96x1xi1>, vector<96x1xf32>
    %28 = vector.broadcast %27 : vector<96x1xf32> to vector<96x128xf32>
    %29 = arith.mulf %22, %28 : vector<96x128xf32>
    %30 = vector.extract_strided_slice %29 {offsets = [0, 0], sizes = [96, 32], strides = [1, 1]} : vector<96x128xf32> to vector<96x32xf32>
    %31 = vector.extract_strided_slice %29 {offsets = [0, 32], sizes = [96, 32], strides = [1, 1]} : vector<96x128xf32> to vector<96x32xf32>
    %cst_27 = arith.constant 0.000000e+00 : f32
    %32 = vector.broadcast %cst_27 : f32 to vector<1x32xf32>
    %33 = vector.extract_strided_slice %31 {offsets = [0, 0], sizes = [95, 32], strides = [1, 1]} : vector<96x32xf32> to vector<95x32xf32>
    %34 = tpu.concatenate %32, %33 in 0 : vector<1x32xf32>, vector<95x32xf32> -> vector<96x32xf32>
    %cst_28 = arith.constant 0.000000e+00 : f32
    %35 = vector.broadcast %cst_28 : f32 to vector<1x32xf32>
    %36 = vector.extract_strided_slice %31 {offsets = [1, 0], sizes = [95, 32], strides = [1, 1]} : vector<96x32xf32> to vector<95x32xf32>
    %37 = tpu.concatenate %36, %35 in 0 : vector<95x32xf32>, vector<1x32xf32> -> vector<96x32xf32>
    %38 = tpu.concatenate %34, %31, %37 in 1 : vector<96x32xf32>, vector<96x32xf32>, vector<96x32xf32> -> vector<96x96xf32>
    %cst_29 = arith.constant dense<0.000000e+00> : vector<96x32xf32>
    %39 = tpu.matmul %38, %12, %cst_29 {dimension_numbers = #tpu.dot_dimension_numbers<[1], [0], [0], [1], [0, 0, 1, 1], [], []>} : vector<96x96xf32>, vector<96x32xf32>, vector<96x32xf32> -> vector<96x32xf32>
    %40 = vector.broadcast %13 : vector<1x32xf32> to vector<96x32xf32>
    %41 = arith.addf %39, %40 : vector<96x32xf32>
    %cst_30 = arith.constant 0.000000e+00 : f32
    %42 = vector.broadcast %cst_30 : f32 to vector<96x32xf32>
    %43 = arith.maximumf %41, %42 : vector<96x32xf32>
    %44 = vector.extract_strided_slice %29 {offsets = [0, 64], sizes = [96, 32], strides = [1, 1]} : vector<96x128xf32> to vector<96x32xf32>
    %cst_31 = arith.constant 0.000000e+00 : f32
    %45 = vector.broadcast %cst_31 : f32 to vector<2x32xf32>
    %46 = vector.extract_strided_slice %44 {offsets = [0, 0], sizes = [94, 32], strides = [1, 1]} : vector<96x32xf32> to vector<94x32xf32>
    %47 = tpu.concatenate %45, %46 in 0 : vector<2x32xf32>, vector<94x32xf32> -> vector<96x32xf32>
    %cst_32 = arith.constant 0.000000e+00 : f32
    %48 = vector.broadcast %cst_32 : f32 to vector<1x32xf32>
    %49 = vector.extract_strided_slice %44 {offsets = [0, 0], sizes = [95, 32], strides = [1, 1]} : vector<96x32xf32> to vector<95x32xf32>
    %50 = tpu.concatenate %48, %49 in 0 : vector<1x32xf32>, vector<95x32xf32> -> vector<96x32xf32>
    %cst_33 = arith.constant 0.000000e+00 : f32
    %51 = vector.broadcast %cst_33 : f32 to vector<1x32xf32>
    %52 = vector.extract_strided_slice %44 {offsets = [1, 0], sizes = [95, 32], strides = [1, 1]} : vector<96x32xf32> to vector<95x32xf32>
    %53 = tpu.concatenate %52, %51 in 0 : vector<95x32xf32>, vector<1x32xf32> -> vector<96x32xf32>
    %cst_34 = arith.constant 0.000000e+00 : f32
    %54 = vector.broadcast %cst_34 : f32 to vector<2x32xf32>
    %55 = vector.extract_strided_slice %44 {offsets = [2, 0], sizes = [94, 32], strides = [1, 1]} : vector<96x32xf32> to vector<94x32xf32>
    %56 = tpu.concatenate %55, %54 in 0 : vector<94x32xf32>, vector<2x32xf32> -> vector<96x32xf32>
    %57 = tpu.concatenate %47, %50, %44, %53, %56 in 1 : vector<96x32xf32>, vector<96x32xf32>, vector<96x32xf32>, vector<96x32xf32>, vector<96x32xf32> -> vector<96x160xf32>
    %cst_35 = arith.constant dense<0.000000e+00> : vector<96x32xf32>
    %58 = tpu.matmul %57, %14, %cst_35 {dimension_numbers = #tpu.dot_dimension_numbers<[1], [0], [0], [1], [0, 0, 1, 1], [], []>} : vector<96x160xf32>, vector<160x32xf32>, vector<96x32xf32> -> vector<96x32xf32>
    %59 = vector.broadcast %15 : vector<1x32xf32> to vector<96x32xf32>
    %60 = arith.addf %58, %59 : vector<96x32xf32>
    %cst_36 = arith.constant 0.000000e+00 : f32
    %61 = vector.broadcast %cst_36 : f32 to vector<96x32xf32>
    %62 = arith.maximumf %60, %61 : vector<96x32xf32>
    %c0_i32 = arith.constant 0 : i32
    %63 = vector.broadcast %c0_i32 : i32 to vector<96x1xi32>
    %64 = arith.cmpi eq, %9, %63 : vector<96x1xi32>
    %cst_37 = arith.constant 1.000000e+00 : f32
    %cst_38 = arith.constant 0.000000e+00 : f32
    %65 = vector.broadcast %cst_37 : f32 to vector<96x1xf32>
    %66 = vector.broadcast %cst_38 : f32 to vector<96x1xf32>
    %67 = arith.select %64, %65, %66 : vector<96x1xi1>, vector<96x1xf32>
    %c14_i32 = arith.constant 14 : i32
    %68 = vector.broadcast %c14_i32 : i32 to vector<96x1xi32>
    %69 = arith.cmpi eq, %9, %68 : vector<96x1xi32>
    %cst_39 = arith.constant 1.000000e+00 : f32
    %cst_40 = arith.constant 0.000000e+00 : f32
    %70 = vector.broadcast %cst_39 : f32 to vector<96x1xf32>
    %71 = vector.broadcast %cst_40 : f32 to vector<96x1xf32>
    %72 = arith.select %69, %70, %71 : vector<96x1xi1>, vector<96x1xf32>
    %cst_41 = arith.constant 0.000000e+00 : f32
    %73 = vector.broadcast %cst_41 : f32 to vector<1x32xf32>
    %74 = vector.extract_strided_slice %8 {offsets = [0, 0], sizes = [95, 32], strides = [1, 1]} : vector<96x32xf32> to vector<95x32xf32>
    %75 = tpu.concatenate %73, %74 in 0 : vector<1x32xf32>, vector<95x32xf32> -> vector<96x32xf32>
    %cst_42 = arith.constant 0.000000e+00 : f32
    %76 = vector.broadcast %cst_42 : f32 to vector<1x32xf32>
    %77 = vector.extract_strided_slice %8 {offsets = [1, 0], sizes = [95, 32], strides = [1, 1]} : vector<96x32xf32> to vector<95x32xf32>
    %78 = tpu.concatenate %77, %76 in 0 : vector<95x32xf32>, vector<1x32xf32> -> vector<96x32xf32>
    %79 = vector.broadcast %67 : vector<96x1xf32> to vector<96x32xf32>
    %80 = arith.mulf %79, %8 : vector<96x32xf32>
    %cst_43 = arith.constant 1.000000e+00 : f32
    %81 = vector.broadcast %cst_43 : f32 to vector<96x1xf32>
    %82 = arith.subf %81, %67 : vector<96x1xf32>
    %83 = vector.broadcast %82 : vector<96x1xf32> to vector<96x32xf32>
    %84 = arith.mulf %83, %75 : vector<96x32xf32>
    %85 = arith.addf %80, %84 : vector<96x32xf32>
    %86 = vector.broadcast %72 : vector<96x1xf32> to vector<96x32xf32>
    %87 = arith.mulf %86, %8 : vector<96x32xf32>
    %cst_44 = arith.constant 1.000000e+00 : f32
    %88 = vector.broadcast %cst_44 : f32 to vector<96x1xf32>
    %89 = arith.subf %88, %72 : vector<96x1xf32>
    %90 = vector.broadcast %89 : vector<96x1xf32> to vector<96x32xf32>
    %91 = arith.mulf %90, %78 : vector<96x32xf32>
    %92 = arith.addf %87, %91 : vector<96x32xf32>
    %93 = arith.maximumf %8, %85 : vector<96x32xf32>
    %94 = arith.maximumf %93, %92 : vector<96x32xf32>
    %cst_45 = arith.constant dense<0.000000e+00> : vector<96x32xf32>
    %95 = tpu.matmul %94, %16, %cst_45 {dimension_numbers = #tpu.dot_dimension_numbers<[1], [0], [0], [1], [0, 0, 1, 1], [], []>} : vector<96x32xf32>, vector<32x32xf32>, vector<96x32xf32> -> vector<96x32xf32>
    %96 = vector.broadcast %17 : vector<1x32xf32> to vector<96x32xf32>
    %97 = arith.addf %95, %96 : vector<96x32xf32>
    %cst_46 = arith.constant 0.000000e+00 : f32
    %98 = vector.broadcast %cst_46 : f32 to vector<96x32xf32>
    %99 = arith.maximumf %97, %98 : vector<96x32xf32>
    %100 = tpu.concatenate %30, %43, %62, %99 in 1 : vector<96x32xf32>, vector<96x32xf32>, vector<96x32xf32>, vector<96x32xf32> -> vector<96x128xf32>
    %cst_47 = arith.constant 0.000000e+00 : f32
    %101 = vector.broadcast %cst_47 : f32 to vector<1x128xf32>
    %102 = vector.extract_strided_slice %100 {offsets = [1, 0], sizes = [95, 128], strides = [1, 1]} : vector<96x128xf32> to vector<95x128xf32>
    %103 = tpu.concatenate %102, %101 in 0 : vector<95x128xf32>, vector<1x128xf32> -> vector<96x128xf32>
    %104 = arith.maximumf %100, %103 : vector<96x128xf32>
    %cst_48 = arith.constant 0.000000e+00 : f32
    %105 = vector.broadcast %cst_48 : f32 to vector<2x128xf32>
    %106 = vector.extract_strided_slice %100 {offsets = [2, 0], sizes = [94, 128], strides = [1, 1]} : vector<96x128xf32> to vector<94x128xf32>
    %107 = tpu.concatenate %106, %105 in 0 : vector<94x128xf32>, vector<2x128xf32> -> vector<96x128xf32>
    %108 = arith.maximumf %104, %107 : vector<96x128xf32>
    %c0_49 = arith.constant 0 : index
    %c0_50 = arith.constant 0 : index
    %109 = vector.load %arg6[%c0_49, %c0_50] : memref<64x96xf32, #tpu.memory_space<vmem>>, vector<64x96xf32>
    %cst_51 = arith.constant dense<0.000000e+00> : vector<64x128xf32>
    %110 = tpu.matmul %109, %108, %cst_51 {dimension_numbers = #tpu.dot_dimension_numbers<[1], [0], [0], [1], [0, 0, 1, 1], [], []>} : vector<64x96xf32>, vector<96x128xf32>, vector<64x128xf32> -> vector<64x128xf32>
    %c0_52 = arith.constant 0 : index
    %c0_53 = arith.constant 0 : index
    %111 = vector.load %arg4[%c0_52, %c0_53] : memref<64x1xi32, #tpu.memory_space<vmem>>, vector<64x1xi32>
    %c0_54 = arith.constant 0 : index
    %c0_55 = arith.constant 0 : index
    %112 = vector.load %arg17[%c0_54, %c0_55] : memref<128x256xf32, #tpu.memory_space<vmem>>, vector<128x256xf32>
    %c0_56 = arith.constant 0 : index
    %c0_57 = arith.constant 0 : index
    %113 = vector.load %arg18[%c0_56, %c0_57] : memref<1x256xf32, #tpu.memory_space<vmem>>, vector<1x256xf32>
    %c0_58 = arith.constant 0 : index
    %c0_59 = arith.constant 0 : index
    %114 = vector.load %arg19[%c0_58, %c0_59] : memref<192x64xf32, #tpu.memory_space<vmem>>, vector<192x64xf32>
    %c0_60 = arith.constant 0 : index
    %c0_61 = arith.constant 0 : index
    %115 = vector.load %arg20[%c0_60, %c0_61] : memref<1x64xf32, #tpu.memory_space<vmem>>, vector<1x64xf32>
    %c0_62 = arith.constant 0 : index
    %c0_63 = arith.constant 0 : index
    %116 = vector.load %arg21[%c0_62, %c0_63] : memref<320x64xf32, #tpu.memory_space<vmem>>, vector<320x64xf32>
    %c0_64 = arith.constant 0 : index
    %c0_65 = arith.constant 0 : index
    %117 = vector.load %arg22[%c0_64, %c0_65] : memref<1x64xf32, #tpu.memory_space<vmem>>, vector<1x64xf32>
    %c0_66 = arith.constant 0 : index
    %c0_67 = arith.constant 0 : index
    %118 = vector.load %arg23[%c0_66, %c0_67] : memref<128x64xf32, #tpu.memory_space<vmem>>, vector<128x64xf32>
    %c0_68 = arith.constant 0 : index
    %c0_69 = arith.constant 0 : index
    %119 = vector.load %arg24[%c0_68, %c0_69] : memref<1x64xf32, #tpu.memory_space<vmem>>, vector<1x64xf32>
    %cst_70 = arith.constant dense<0.000000e+00> : vector<64x256xf32>
    %120 = tpu.matmul %110, %112, %cst_70 {dimension_numbers = #tpu.dot_dimension_numbers<[1], [0], [0], [1], [0, 0, 1, 1], [], []>} : vector<64x128xf32>, vector<128x256xf32>, vector<64x256xf32> -> vector<64x256xf32>
    %121 = vector.broadcast %113 : vector<1x256xf32> to vector<64x256xf32>
    %122 = arith.addf %120, %121 : vector<64x256xf32>
    %cst_71 = arith.constant 0.000000e+00 : f32
    %123 = vector.broadcast %cst_71 : f32 to vector<64x256xf32>
    %124 = arith.maximumf %122, %123 : vector<64x256xf32>
    %c7_i32 = arith.constant 7 : i32
    %125 = vector.broadcast %c7_i32 : i32 to vector<64x1xi32>
    %126 = arith.cmpi slt, %111, %125 : vector<64x1xi32>
    %cst_72 = arith.constant 1.000000e+00 : f32
    %cst_73 = arith.constant 0.000000e+00 : f32
    %127 = vector.broadcast %cst_72 : f32 to vector<64x1xf32>
    %128 = vector.broadcast %cst_73 : f32 to vector<64x1xf32>
    %129 = arith.select %126, %127, %128 : vector<64x1xi1>, vector<64x1xf32>
    %130 = vector.broadcast %129 : vector<64x1xf32> to vector<64x256xf32>
    %131 = arith.mulf %124, %130 : vector<64x256xf32>
    %132 = vector.extract_strided_slice %131 {offsets = [0, 0], sizes = [64, 64], strides = [1, 1]} : vector<64x256xf32> to vector<64x64xf32>
    %133 = vector.extract_strided_slice %131 {offsets = [0, 64], sizes = [64, 64], strides = [1, 1]} : vector<64x256xf32> to vector<64x64xf32>
    %cst_74 = arith.constant 0.000000e+00 : f32
    %134 = vector.broadcast %cst_74 : f32 to vector<1x64xf32>
    %135 = vector.extract_strided_slice %133 {offsets = [0, 0], sizes = [63, 64], strides = [1, 1]} : vector<64x64xf32> to vector<63x64xf32>
    %136 = tpu.concatenate %134, %135 in 0 : vector<1x64xf32>, vector<63x64xf32> -> vector<64x64xf32>
    %cst_75 = arith.constant 0.000000e+00 : f32
    %137 = vector.broadcast %cst_75 : f32 to vector<1x64xf32>
    %138 = vector.extract_strided_slice %133 {offsets = [1, 0], sizes = [63, 64], strides = [1, 1]} : vector<64x64xf32> to vector<63x64xf32>
    %139 = tpu.concatenate %138, %137 in 0 : vector<63x64xf32>, vector<1x64xf32> -> vector<64x64xf32>
    %140 = tpu.concatenate %136, %133, %139 in 1 : vector<64x64xf32>, vector<64x64xf32>, vector<64x64xf32> -> vector<64x192xf32>
    %cst_76 = arith.constant dense<0.000000e+00> : vector<64x64xf32>
    %141 = tpu.matmul %140, %114, %cst_76 {dimension_numbers = #tpu.dot_dimension_numbers<[1], [0], [0], [1], [0, 0, 1, 1], [], []>} : vector<64x192xf32>, vector<192x64xf32>, vector<64x64xf32> -> vector<64x64xf32>
    %142 = vector.broadcast %115 : vector<1x64xf32> to vector<64x64xf32>
    %143 = arith.addf %141, %142 : vector<64x64xf32>
    %cst_77 = arith.constant 0.000000e+00 : f32
    %144 = vector.broadcast %cst_77 : f32 to vector<64x64xf32>
    %145 = arith.maximumf %143, %144 : vector<64x64xf32>
    %146 = vector.extract_strided_slice %131 {offsets = [0, 128], sizes = [64, 64], strides = [1, 1]} : vector<64x256xf32> to vector<64x64xf32>
    %cst_78 = arith.constant 0.000000e+00 : f32
    %147 = vector.broadcast %cst_78 : f32 to vector<2x64xf32>
    %148 = vector.extract_strided_slice %146 {offsets = [0, 0], sizes = [62, 64], strides = [1, 1]} : vector<64x64xf32> to vector<62x64xf32>
    %149 = tpu.concatenate %147, %148 in 0 : vector<2x64xf32>, vector<62x64xf32> -> vector<64x64xf32>
    %cst_79 = arith.constant 0.000000e+00 : f32
    %150 = vector.broadcast %cst_79 : f32 to vector<1x64xf32>
    %151 = vector.extract_strided_slice %146 {offsets = [0, 0], sizes = [63, 64], strides = [1, 1]} : vector<64x64xf32> to vector<63x64xf32>
    %152 = tpu.concatenate %150, %151 in 0 : vector<1x64xf32>, vector<63x64xf32> -> vector<64x64xf32>
    %cst_80 = arith.constant 0.000000e+00 : f32
    %153 = vector.broadcast %cst_80 : f32 to vector<1x64xf32>
    %154 = vector.extract_strided_slice %146 {offsets = [1, 0], sizes = [63, 64], strides = [1, 1]} : vector<64x64xf32> to vector<63x64xf32>
    %155 = tpu.concatenate %154, %153 in 0 : vector<63x64xf32>, vector<1x64xf32> -> vector<64x64xf32>
    %cst_81 = arith.constant 0.000000e+00 : f32
    %156 = vector.broadcast %cst_81 : f32 to vector<2x64xf32>
    %157 = vector.extract_strided_slice %146 {offsets = [2, 0], sizes = [62, 64], strides = [1, 1]} : vector<64x64xf32> to vector<62x64xf32>
    %158 = tpu.concatenate %157, %156 in 0 : vector<62x64xf32>, vector<2x64xf32> -> vector<64x64xf32>
    %159 = tpu.concatenate %149, %152, %146, %155, %158 in 1 : vector<64x64xf32>, vector<64x64xf32>, vector<64x64xf32>, vector<64x64xf32>, vector<64x64xf32> -> vector<64x320xf32>
    %cst_82 = arith.constant dense<0.000000e+00> : vector<64x64xf32>
    %160 = tpu.matmul %159, %116, %cst_82 {dimension_numbers = #tpu.dot_dimension_numbers<[1], [0], [0], [1], [0, 0, 1, 1], [], []>} : vector<64x320xf32>, vector<320x64xf32>, vector<64x64xf32> -> vector<64x64xf32>
    %161 = vector.broadcast %117 : vector<1x64xf32> to vector<64x64xf32>
    %162 = arith.addf %160, %161 : vector<64x64xf32>
    %cst_83 = arith.constant 0.000000e+00 : f32
    %163 = vector.broadcast %cst_83 : f32 to vector<64x64xf32>
    %164 = arith.maximumf %162, %163 : vector<64x64xf32>
    %c0_i32_84 = arith.constant 0 : i32
    %165 = vector.broadcast %c0_i32_84 : i32 to vector<64x1xi32>
    %166 = arith.cmpi eq, %111, %165 : vector<64x1xi32>
    %cst_85 = arith.constant 1.000000e+00 : f32
    %cst_86 = arith.constant 0.000000e+00 : f32
    %167 = vector.broadcast %cst_85 : f32 to vector<64x1xf32>
    %168 = vector.broadcast %cst_86 : f32 to vector<64x1xf32>
    %169 = arith.select %166, %167, %168 : vector<64x1xi1>, vector<64x1xf32>
    %c6_i32 = arith.constant 6 : i32
    %170 = vector.broadcast %c6_i32 : i32 to vector<64x1xi32>
    %171 = arith.cmpi eq, %111, %170 : vector<64x1xi32>
    %cst_87 = arith.constant 1.000000e+00 : f32
    %cst_88 = arith.constant 0.000000e+00 : f32
    %172 = vector.broadcast %cst_87 : f32 to vector<64x1xf32>
    %173 = vector.broadcast %cst_88 : f32 to vector<64x1xf32>
    %174 = arith.select %171, %172, %173 : vector<64x1xi1>, vector<64x1xf32>
    %cst_89 = arith.constant 0.000000e+00 : f32
    %175 = vector.broadcast %cst_89 : f32 to vector<1x128xf32>
    %176 = vector.extract_strided_slice %110 {offsets = [0, 0], sizes = [63, 128], strides = [1, 1]} : vector<64x128xf32> to vector<63x128xf32>
    %177 = tpu.concatenate %175, %176 in 0 : vector<1x128xf32>, vector<63x128xf32> -> vector<64x128xf32>
    %cst_90 = arith.constant 0.000000e+00 : f32
    %178 = vector.broadcast %cst_90 : f32 to vector<1x128xf32>
    %179 = vector.extract_strided_slice %110 {offsets = [1, 0], sizes = [63, 128], strides = [1, 1]} : vector<64x128xf32> to vector<63x128xf32>
    %180 = tpu.concatenate %179, %178 in 0 : vector<63x128xf32>, vector<1x128xf32> -> vector<64x128xf32>
    %181 = vector.broadcast %169 : vector<64x1xf32> to vector<64x128xf32>
    %182 = arith.mulf %181, %110 : vector<64x128xf32>
    %cst_91 = arith.constant 1.000000e+00 : f32
    %183 = vector.broadcast %cst_91 : f32 to vector<64x1xf32>
    %184 = arith.subf %183, %169 : vector<64x1xf32>
    %185 = vector.broadcast %184 : vector<64x1xf32> to vector<64x128xf32>
    %186 = arith.mulf %185, %177 : vector<64x128xf32>
    %187 = arith.addf %182, %186 : vector<64x128xf32>
    %188 = vector.broadcast %174 : vector<64x1xf32> to vector<64x128xf32>
    %189 = arith.mulf %188, %110 : vector<64x128xf32>
    %cst_92 = arith.constant 1.000000e+00 : f32
    %190 = vector.broadcast %cst_92 : f32 to vector<64x1xf32>
    %191 = arith.subf %190, %174 : vector<64x1xf32>
    %192 = vector.broadcast %191 : vector<64x1xf32> to vector<64x128xf32>
    %193 = arith.mulf %192, %180 : vector<64x128xf32>
    %194 = arith.addf %189, %193 : vector<64x128xf32>
    %195 = arith.maximumf %110, %187 : vector<64x128xf32>
    %196 = arith.maximumf %195, %194 : vector<64x128xf32>
    %cst_93 = arith.constant dense<0.000000e+00> : vector<64x64xf32>
    %197 = tpu.matmul %196, %118, %cst_93 {dimension_numbers = #tpu.dot_dimension_numbers<[1], [0], [0], [1], [0, 0, 1, 1], [], []>} : vector<64x128xf32>, vector<128x64xf32>, vector<64x64xf32> -> vector<64x64xf32>
    %198 = vector.broadcast %119 : vector<1x64xf32> to vector<64x64xf32>
    %199 = arith.addf %197, %198 : vector<64x64xf32>
    %cst_94 = arith.constant 0.000000e+00 : f32
    %200 = vector.broadcast %cst_94 : f32 to vector<64x64xf32>
    %201 = arith.maximumf %199, %200 : vector<64x64xf32>
    %202 = tpu.concatenate %132, %145, %164, %201 in 1 : vector<64x64xf32>, vector<64x64xf32>, vector<64x64xf32>, vector<64x64xf32> -> vector<64x256xf32>
    %cst_95 = arith.constant 0.000000e+00 : f32
    %203 = vector.broadcast %cst_95 : f32 to vector<1x256xf32>
    %204 = vector.extract_strided_slice %202 {offsets = [1, 0], sizes = [63, 256], strides = [1, 1]} : vector<64x256xf32> to vector<63x256xf32>
    %205 = tpu.concatenate %204, %203 in 0 : vector<63x256xf32>, vector<1x256xf32> -> vector<64x256xf32>
    %206 = arith.maximumf %202, %205 : vector<64x256xf32>
    %cst_96 = arith.constant 0.000000e+00 : f32
    %207 = vector.broadcast %cst_96 : f32 to vector<2x256xf32>
    %208 = vector.extract_strided_slice %202 {offsets = [2, 0], sizes = [62, 256], strides = [1, 1]} : vector<64x256xf32> to vector<62x256xf32>
    %209 = tpu.concatenate %208, %207 in 0 : vector<62x256xf32>, vector<2x256xf32> -> vector<64x256xf32>
    %210 = arith.maximumf %206, %209 : vector<64x256xf32>
    %c0_97 = arith.constant 0 : index
    %c0_98 = arith.constant 0 : index
    %211 = vector.load %arg7[%c0_97, %c0_98] : memref<32x64xf32, #tpu.memory_space<vmem>>, vector<32x64xf32>
    %cst_99 = arith.constant dense<0.000000e+00> : vector<32x256xf32>
    %212 = tpu.matmul %211, %210, %cst_99 {dimension_numbers = #tpu.dot_dimension_numbers<[1], [0], [0], [1], [0, 0, 1, 1], [], []>} : vector<32x64xf32>, vector<64x256xf32>, vector<32x256xf32> -> vector<32x256xf32>
    %c0_100 = arith.constant 0 : index
    %c0_101 = arith.constant 0 : index
    %213 = vector.load %arg5[%c0_100, %c0_101] : memref<32x1xi32, #tpu.memory_space<vmem>>, vector<32x1xi32>
    %c0_102 = arith.constant 0 : index
    %c0_103 = arith.constant 0 : index
    %214 = vector.load %arg25[%c0_102, %c0_103] : memref<256x384xf32, #tpu.memory_space<vmem>>, vector<256x384xf32>
    %c0_104 = arith.constant 0 : index
    %c0_105 = arith.constant 0 : index
    %215 = vector.load %arg26[%c0_104, %c0_105] : memref<1x384xf32, #tpu.memory_space<vmem>>, vector<1x384xf32>
    %c0_106 = arith.constant 0 : index
    %c0_107 = arith.constant 0 : index
    %216 = vector.load %arg27[%c0_106, %c0_107] : memref<384x128xf32, #tpu.memory_space<vmem>>, vector<384x128xf32>
    %c0_108 = arith.constant 0 : index
    %c0_109 = arith.constant 0 : index
    %217 = vector.load %arg28[%c0_108, %c0_109] : memref<1x128xf32, #tpu.memory_space<vmem>>, vector<1x128xf32>
    %c0_110 = arith.constant 0 : index
    %c0_111 = arith.constant 0 : index
    %218 = vector.load %arg29[%c0_110, %c0_111] : memref<640x128xf32, #tpu.memory_space<vmem>>, vector<640x128xf32>
    %c0_112 = arith.constant 0 : index
    %c0_113 = arith.constant 0 : index
    %219 = vector.load %arg30[%c0_112, %c0_113] : memref<1x128xf32, #tpu.memory_space<vmem>>, vector<1x128xf32>
    %c0_114 = arith.constant 0 : index
    %c0_115 = arith.constant 0 : index
    %220 = vector.load %arg31[%c0_114, %c0_115] : memref<256x128xf32, #tpu.memory_space<vmem>>, vector<256x128xf32>
    %c0_116 = arith.constant 0 : index
    %c0_117 = arith.constant 0 : index
    %221 = vector.load %arg32[%c0_116, %c0_117] : memref<1x128xf32, #tpu.memory_space<vmem>>, vector<1x128xf32>
    %cst_118 = arith.constant dense<0.000000e+00> : vector<32x384xf32>
    %222 = tpu.matmul %212, %214, %cst_118 {dimension_numbers = #tpu.dot_dimension_numbers<[1], [0], [0], [1], [0, 0, 1, 1], [], []>} : vector<32x256xf32>, vector<256x384xf32>, vector<32x384xf32> -> vector<32x384xf32>
    %223 = vector.broadcast %215 : vector<1x384xf32> to vector<32x384xf32>
    %224 = arith.addf %222, %223 : vector<32x384xf32>
    %cst_119 = arith.constant 0.000000e+00 : f32
    %225 = vector.broadcast %cst_119 : f32 to vector<32x384xf32>
    %226 = arith.maximumf %224, %225 : vector<32x384xf32>
    %c3_i32 = arith.constant 3 : i32
    %227 = vector.broadcast %c3_i32 : i32 to vector<32x1xi32>
    %228 = arith.cmpi slt, %213, %227 : vector<32x1xi32>
    %cst_120 = arith.constant 1.000000e+00 : f32
    %cst_121 = arith.constant 0.000000e+00 : f32
    %229 = vector.broadcast %cst_120 : f32 to vector<32x1xf32>
    %230 = vector.broadcast %cst_121 : f32 to vector<32x1xf32>
    %231 = arith.select %228, %229, %230 : vector<32x1xi1>, vector<32x1xf32>
    %232 = vector.broadcast %231 : vector<32x1xf32> to vector<32x384xf32>
    %233 = arith.mulf %226, %232 : vector<32x384xf32>
    %234 = vector.extract_strided_slice %233 {offsets = [0, 0], sizes = [32, 128], strides = [1, 1]} : vector<32x384xf32> to vector<32x128xf32>
    %235 = vector.extract_strided_slice %233 {offsets = [0, 128], sizes = [32, 128], strides = [1, 1]} : vector<32x384xf32> to vector<32x128xf32>
    %cst_122 = arith.constant 0.000000e+00 : f32
    %236 = vector.broadcast %cst_122 : f32 to vector<1x128xf32>
    %237 = vector.extract_strided_slice %235 {offsets = [0, 0], sizes = [31, 128], strides = [1, 1]} : vector<32x128xf32> to vector<31x128xf32>
    %238 = tpu.concatenate %236, %237 in 0 : vector<1x128xf32>, vector<31x128xf32> -> vector<32x128xf32>
    %cst_123 = arith.constant 0.000000e+00 : f32
    %239 = vector.broadcast %cst_123 : f32 to vector<1x128xf32>
    %240 = vector.extract_strided_slice %235 {offsets = [1, 0], sizes = [31, 128], strides = [1, 1]} : vector<32x128xf32> to vector<31x128xf32>
    %241 = tpu.concatenate %240, %239 in 0 : vector<31x128xf32>, vector<1x128xf32> -> vector<32x128xf32>
    %242 = tpu.concatenate %238, %235, %241 in 1 : vector<32x128xf32>, vector<32x128xf32>, vector<32x128xf32> -> vector<32x384xf32>
    %cst_124 = arith.constant dense<0.000000e+00> : vector<32x128xf32>
    %243 = tpu.matmul %242, %216, %cst_124 {dimension_numbers = #tpu.dot_dimension_numbers<[1], [0], [0], [1], [0, 0, 1, 1], [], []>} : vector<32x384xf32>, vector<384x128xf32>, vector<32x128xf32> -> vector<32x128xf32>
    %244 = vector.broadcast %217 : vector<1x128xf32> to vector<32x128xf32>
    %245 = arith.addf %243, %244 : vector<32x128xf32>
    %cst_125 = arith.constant 0.000000e+00 : f32
    %246 = vector.broadcast %cst_125 : f32 to vector<32x128xf32>
    %247 = arith.maximumf %245, %246 : vector<32x128xf32>
    %248 = vector.extract_strided_slice %233 {offsets = [0, 256], sizes = [32, 128], strides = [1, 1]} : vector<32x384xf32> to vector<32x128xf32>
    %cst_126 = arith.constant 0.000000e+00 : f32
    %249 = vector.broadcast %cst_126 : f32 to vector<2x128xf32>
    %250 = vector.extract_strided_slice %248 {offsets = [0, 0], sizes = [30, 128], strides = [1, 1]} : vector<32x128xf32> to vector<30x128xf32>
    %251 = tpu.concatenate %249, %250 in 0 : vector<2x128xf32>, vector<30x128xf32> -> vector<32x128xf32>
    %cst_127 = arith.constant 0.000000e+00 : f32
    %252 = vector.broadcast %cst_127 : f32 to vector<1x128xf32>
    %253 = vector.extract_strided_slice %248 {offsets = [0, 0], sizes = [31, 128], strides = [1, 1]} : vector<32x128xf32> to vector<31x128xf32>
    %254 = tpu.concatenate %252, %253 in 0 : vector<1x128xf32>, vector<31x128xf32> -> vector<32x128xf32>
    %cst_128 = arith.constant 0.000000e+00 : f32
    %255 = vector.broadcast %cst_128 : f32 to vector<1x128xf32>
    %256 = vector.extract_strided_slice %248 {offsets = [1, 0], sizes = [31, 128], strides = [1, 1]} : vector<32x128xf32> to vector<31x128xf32>
    %257 = tpu.concatenate %256, %255 in 0 : vector<31x128xf32>, vector<1x128xf32> -> vector<32x128xf32>
    %cst_129 = arith.constant 0.000000e+00 : f32
    %258 = vector.broadcast %cst_129 : f32 to vector<2x128xf32>
    %259 = vector.extract_strided_slice %248 {offsets = [2, 0], sizes = [30, 128], strides = [1, 1]} : vector<32x128xf32> to vector<30x128xf32>
    %260 = tpu.concatenate %259, %258 in 0 : vector<30x128xf32>, vector<2x128xf32> -> vector<32x128xf32>
    %261 = tpu.concatenate %251, %254, %248, %257, %260 in 1 : vector<32x128xf32>, vector<32x128xf32>, vector<32x128xf32>, vector<32x128xf32>, vector<32x128xf32> -> vector<32x640xf32>
    %cst_130 = arith.constant dense<0.000000e+00> : vector<32x128xf32>
    %262 = tpu.matmul %261, %218, %cst_130 {dimension_numbers = #tpu.dot_dimension_numbers<[1], [0], [0], [1], [0, 0, 1, 1], [], []>} : vector<32x640xf32>, vector<640x128xf32>, vector<32x128xf32> -> vector<32x128xf32>
    %263 = vector.broadcast %219 : vector<1x128xf32> to vector<32x128xf32>
    %264 = arith.addf %262, %263 : vector<32x128xf32>
    %cst_131 = arith.constant 0.000000e+00 : f32
    %265 = vector.broadcast %cst_131 : f32 to vector<32x128xf32>
    %266 = arith.maximumf %264, %265 : vector<32x128xf32>
    %c0_i32_132 = arith.constant 0 : i32
    %267 = vector.broadcast %c0_i32_132 : i32 to vector<32x1xi32>
    %268 = arith.cmpi eq, %213, %267 : vector<32x1xi32>
    %cst_133 = arith.constant 1.000000e+00 : f32
    %cst_134 = arith.constant 0.000000e+00 : f32
    %269 = vector.broadcast %cst_133 : f32 to vector<32x1xf32>
    %270 = vector.broadcast %cst_134 : f32 to vector<32x1xf32>
    %271 = arith.select %268, %269, %270 : vector<32x1xi1>, vector<32x1xf32>
    %c2_i32 = arith.constant 2 : i32
    %272 = vector.broadcast %c2_i32 : i32 to vector<32x1xi32>
    %273 = arith.cmpi eq, %213, %272 : vector<32x1xi32>
    %cst_135 = arith.constant 1.000000e+00 : f32
    %cst_136 = arith.constant 0.000000e+00 : f32
    %274 = vector.broadcast %cst_135 : f32 to vector<32x1xf32>
    %275 = vector.broadcast %cst_136 : f32 to vector<32x1xf32>
    %276 = arith.select %273, %274, %275 : vector<32x1xi1>, vector<32x1xf32>
    %cst_137 = arith.constant 0.000000e+00 : f32
    %277 = vector.broadcast %cst_137 : f32 to vector<1x256xf32>
    %278 = vector.extract_strided_slice %212 {offsets = [0, 0], sizes = [31, 256], strides = [1, 1]} : vector<32x256xf32> to vector<31x256xf32>
    %279 = tpu.concatenate %277, %278 in 0 : vector<1x256xf32>, vector<31x256xf32> -> vector<32x256xf32>
    %cst_138 = arith.constant 0.000000e+00 : f32
    %280 = vector.broadcast %cst_138 : f32 to vector<1x256xf32>
    %281 = vector.extract_strided_slice %212 {offsets = [1, 0], sizes = [31, 256], strides = [1, 1]} : vector<32x256xf32> to vector<31x256xf32>
    %282 = tpu.concatenate %281, %280 in 0 : vector<31x256xf32>, vector<1x256xf32> -> vector<32x256xf32>
    %283 = vector.broadcast %271 : vector<32x1xf32> to vector<32x256xf32>
    %284 = arith.mulf %283, %212 : vector<32x256xf32>
    %cst_139 = arith.constant 1.000000e+00 : f32
    %285 = vector.broadcast %cst_139 : f32 to vector<32x1xf32>
    %286 = arith.subf %285, %271 : vector<32x1xf32>
    %287 = vector.broadcast %286 : vector<32x1xf32> to vector<32x256xf32>
    %288 = arith.mulf %287, %279 : vector<32x256xf32>
    %289 = arith.addf %284, %288 : vector<32x256xf32>
    %290 = vector.broadcast %276 : vector<32x1xf32> to vector<32x256xf32>
    %291 = arith.mulf %290, %212 : vector<32x256xf32>
    %cst_140 = arith.constant 1.000000e+00 : f32
    %292 = vector.broadcast %cst_140 : f32 to vector<32x1xf32>
    %293 = arith.subf %292, %276 : vector<32x1xf32>
    %294 = vector.broadcast %293 : vector<32x1xf32> to vector<32x256xf32>
    %295 = arith.mulf %294, %282 : vector<32x256xf32>
    %296 = arith.addf %291, %295 : vector<32x256xf32>
    %297 = arith.maximumf %212, %289 : vector<32x256xf32>
    %298 = arith.maximumf %297, %296 : vector<32x256xf32>
    %cst_141 = arith.constant dense<0.000000e+00> : vector<32x128xf32>
    %299 = tpu.matmul %298, %220, %cst_141 {dimension_numbers = #tpu.dot_dimension_numbers<[1], [0], [0], [1], [0, 0, 1, 1], [], []>} : vector<32x256xf32>, vector<256x128xf32>, vector<32x128xf32> -> vector<32x128xf32>
    %300 = vector.broadcast %221 : vector<1x128xf32> to vector<32x128xf32>
    %301 = arith.addf %299, %300 : vector<32x128xf32>
    %cst_142 = arith.constant 0.000000e+00 : f32
    %302 = vector.broadcast %cst_142 : f32 to vector<32x128xf32>
    %303 = arith.maximumf %301, %302 : vector<32x128xf32>
    %304 = tpu.concatenate %234, %247, %266, %303 in 1 : vector<32x128xf32>, vector<32x128xf32>, vector<32x128xf32>, vector<32x128xf32> -> vector<32x512xf32>
    %cst_143 = arith.constant 0.000000e+00 : f32
    %305 = vector.broadcast %cst_143 : f32 to vector<1x512xf32>
    %306 = vector.extract_strided_slice %304 {offsets = [1, 0], sizes = [31, 512], strides = [1, 1]} : vector<32x512xf32> to vector<31x512xf32>
    %307 = tpu.concatenate %306, %305 in 0 : vector<31x512xf32>, vector<1x512xf32> -> vector<32x512xf32>
    %308 = arith.maximumf %304, %307 : vector<32x512xf32>
    %cst_144 = arith.constant 0.000000e+00 : f32
    %309 = vector.broadcast %cst_144 : f32 to vector<2x512xf32>
    %310 = vector.extract_strided_slice %304 {offsets = [2, 0], sizes = [30, 512], strides = [1, 1]} : vector<32x512xf32> to vector<30x512xf32>
    %311 = tpu.concatenate %310, %309 in 0 : vector<30x512xf32>, vector<2x512xf32> -> vector<32x512xf32>
    %312 = arith.maximumf %308, %311 : vector<32x512xf32>
    %c0_145 = arith.constant 0 : index
    %c0_146 = arith.constant 0 : index
    %313 = vector.load %arg8[%c0_145, %c0_146] : memref<4x32xf32, #tpu.memory_space<vmem>>, vector<4x32xf32>
    %cst_147 = arith.constant dense<0.000000e+00> : vector<4x512xf32>
    %314 = tpu.matmul %313, %312, %cst_147 {dimension_numbers = #tpu.dot_dimension_numbers<[1], [0], [0], [1], [0, 0, 1, 1], [], []>} : vector<4x32xf32>, vector<32x512xf32>, vector<4x512xf32> -> vector<4x512xf32>
    %c0_148 = arith.constant 0 : index
    %c0_149 = arith.constant 0 : index
    %315 = vector.load %arg33[%c0_148, %c0_149] : memref<512x256xf32, #tpu.memory_space<vmem>>, vector<512x256xf32>
    %cst_150 = arith.constant dense<0.000000e+00> : vector<4x256xf32>
    %316 = tpu.matmul %314, %315, %cst_150 {dimension_numbers = #tpu.dot_dimension_numbers<[1], [0], [0], [1], [0, 0, 1, 1], [], []>} : vector<4x512xf32>, vector<512x256xf32>, vector<4x256xf32> -> vector<4x256xf32>
    %c0_151 = arith.constant 0 : index
    %c0_152 = arith.constant 0 : index
    %317 = vector.load %arg34[%c0_151, %c0_152] : memref<1x256xf32, #tpu.memory_space<vmem>>, vector<1x256xf32>
    %318 = vector.broadcast %317 : vector<1x256xf32> to vector<4x256xf32>
    %319 = arith.addf %316, %318 : vector<4x256xf32>
    %cst_153 = arith.constant 0.000000e+00 : f32
    %320 = vector.broadcast %cst_153 : f32 to vector<4x256xf32>
    %321 = arith.maximumf %319, %320 : vector<4x256xf32>
    %c0_154 = arith.constant 0 : index
    %c0_155 = arith.constant 0 : index
    %322 = vector.load %arg1[%c0_154, %c0_155] : memref<4x32xf32, #tpu.memory_space<vmem>>, vector<4x32xf32>
    %c0_156 = arith.constant 0 : index
    %c0_157 = arith.constant 0 : index
    %323 = vector.load %arg35[%c0_156, %c0_157] : memref<32x512xf32, #tpu.memory_space<vmem>>, vector<32x512xf32>
    %cst_158 = arith.constant dense<0.000000e+00> : vector<4x512xf32>
    %324 = tpu.matmul %322, %323, %cst_158 {dimension_numbers = #tpu.dot_dimension_numbers<[1], [0], [0], [1], [0, 0, 1, 1], [], []>} : vector<4x32xf32>, vector<32x512xf32>, vector<4x512xf32> -> vector<4x512xf32>
    %c0_159 = arith.constant 0 : index
    %c0_160 = arith.constant 0 : index
    %325 = vector.load %arg36[%c0_159, %c0_160] : memref<1x512xf32, #tpu.memory_space<vmem>>, vector<1x512xf32>
    %326 = vector.broadcast %325 : vector<1x512xf32> to vector<4x512xf32>
    %327 = arith.addf %324, %326 : vector<4x512xf32>
    %cst_161 = arith.constant 0.000000e+00 : f32
    %328 = vector.broadcast %cst_161 : f32 to vector<4x512xf32>
    %329 = arith.cmpf ogt, %327, %328 : vector<4x512xf32>
    %cst_162 = arith.constant 0.00999999977 : f32
    %330 = vector.broadcast %cst_162 : f32 to vector<4x512xf32>
    %331 = arith.mulf %330, %327 : vector<4x512xf32>
    %332 = arith.select %329, %327, %331 : vector<4x512xi1>, vector<4x512xf32>
    %c0_163 = arith.constant 0 : index
    %c0_164 = arith.constant 0 : index
    %333 = vector.load %arg37[%c0_163, %c0_164] : memref<512x256xf32, #tpu.memory_space<vmem>>, vector<512x256xf32>
    %cst_165 = arith.constant dense<0.000000e+00> : vector<4x256xf32>
    %334 = tpu.matmul %332, %333, %cst_165 {dimension_numbers = #tpu.dot_dimension_numbers<[1], [0], [0], [1], [0, 0, 1, 1], [], []>} : vector<4x512xf32>, vector<512x256xf32>, vector<4x256xf32> -> vector<4x256xf32>
    %c0_166 = arith.constant 0 : index
    %c0_167 = arith.constant 0 : index
    %335 = vector.load %arg38[%c0_166, %c0_167] : memref<1x256xf32, #tpu.memory_space<vmem>>, vector<1x256xf32>
    %336 = vector.broadcast %335 : vector<1x256xf32> to vector<4x256xf32>
    %337 = arith.addf %334, %336 : vector<4x256xf32>
    %cst_168 = arith.constant 0.000000e+00 : f32
    %338 = vector.broadcast %cst_168 : f32 to vector<4x256xf32>
    %339 = arith.cmpf ogt, %337, %338 : vector<4x256xf32>
    %cst_169 = arith.constant 0.00999999977 : f32
    %340 = vector.broadcast %cst_169 : f32 to vector<4x256xf32>
    %341 = arith.mulf %340, %337 : vector<4x256xf32>
    %342 = arith.select %339, %337, %341 : vector<4x256xi1>, vector<4x256xf32>
    %c0_170 = arith.constant 0 : index
    %c0_171 = arith.constant 0 : index
    %343 = vector.load %arg39[%c0_170, %c0_171] : memref<256x512xf32, #tpu.memory_space<vmem>>, vector<256x512xf32>
    %cst_172 = arith.constant dense<0.000000e+00> : vector<4x512xf32>
    %344 = tpu.matmul %321, %343, %cst_172 {dimension_numbers = #tpu.dot_dimension_numbers<[1], [0], [0], [1], [0, 0, 1, 1], [], []>} : vector<4x256xf32>, vector<256x512xf32>, vector<4x512xf32> -> vector<4x512xf32>
    %c0_173 = arith.constant 0 : index
    %c0_174 = arith.constant 0 : index
    %345 = vector.load %arg40[%c0_173, %c0_174] : memref<256x512xf32, #tpu.memory_space<vmem>>, vector<256x512xf32>
    %cst_175 = arith.constant dense<0.000000e+00> : vector<4x512xf32>
    %346 = tpu.matmul %342, %345, %cst_175 {dimension_numbers = #tpu.dot_dimension_numbers<[1], [0], [0], [1], [0, 0, 1, 1], [], []>} : vector<4x256xf32>, vector<256x512xf32>, vector<4x512xf32> -> vector<4x512xf32>
    %347 = arith.addf %344, %346 : vector<4x512xf32>
    %c0_176 = arith.constant 0 : index
    %c0_177 = arith.constant 0 : index
    %348 = vector.load %arg41[%c0_176, %c0_177] : memref<1x512xf32, #tpu.memory_space<vmem>>, vector<1x512xf32>
    %349 = vector.broadcast %348 : vector<1x512xf32> to vector<4x512xf32>
    %350 = arith.addf %347, %349 : vector<4x512xf32>
    %cst_178 = arith.constant 0.000000e+00 : f32
    %351 = vector.broadcast %cst_178 : f32 to vector<4x512xf32>
    %352 = arith.cmpf ogt, %350, %351 : vector<4x512xf32>
    %cst_179 = arith.constant 0.00999999977 : f32
    %353 = vector.broadcast %cst_179 : f32 to vector<4x512xf32>
    %354 = arith.mulf %353, %350 : vector<4x512xf32>
    %355 = arith.select %352, %350, %354 : vector<4x512xi1>, vector<4x512xf32>
    %c0_180 = arith.constant 0 : index
    %c0_181 = arith.constant 0 : index
    %356 = vector.load %arg42[%c0_180, %c0_181] : memref<512x256xf32, #tpu.memory_space<vmem>>, vector<512x256xf32>
    %cst_182 = arith.constant dense<0.000000e+00> : vector<4x256xf32>
    %357 = tpu.matmul %355, %356, %cst_182 {dimension_numbers = #tpu.dot_dimension_numbers<[1], [0], [0], [1], [0, 0, 1, 1], [], []>} : vector<4x512xf32>, vector<512x256xf32>, vector<4x256xf32> -> vector<4x256xf32>
    %c0_183 = arith.constant 0 : index
    %c0_184 = arith.constant 0 : index
    %358 = vector.load %arg43[%c0_183, %c0_184] : memref<1x256xf32, #tpu.memory_space<vmem>>, vector<1x256xf32>
    %359 = vector.broadcast %358 : vector<1x256xf32> to vector<4x256xf32>
    %360 = arith.addf %357, %359 : vector<4x256xf32>
    %cst_185 = arith.constant 0.000000e+00 : f32
    %361 = vector.broadcast %cst_185 : f32 to vector<4x256xf32>
    %362 = arith.cmpf ogt, %360, %361 : vector<4x256xf32>
    %cst_186 = arith.constant 0.00999999977 : f32
    %363 = vector.broadcast %cst_186 : f32 to vector<4x256xf32>
    %364 = arith.mulf %363, %360 : vector<4x256xf32>
    %365 = arith.select %362, %360, %364 : vector<4x256xi1>, vector<4x256xf32>
    %c0_187 = arith.constant 0 : index
    %c0_188 = arith.constant 0 : index
    %366 = vector.load %arg44[%c0_187, %c0_188] : memref<1x256xf32, #tpu.memory_space<vmem>>, vector<1x256xf32>
    %367 = vector.broadcast %366 : vector<1x256xf32> to vector<4x256xf32>
    %368 = arith.mulf %365, %367 : vector<4x256xf32>
    %cst_189 = arith.constant dense<0.000000e+00> : vector<4xf32>
    %369 = vector.multi_reduction <add>, %368, %cst_189 [1] : vector<4x256xf32> to vector<4xf32>
    %370 = vector.shape_cast %369 : vector<4xf32> to vector<4x1xf32>
    %c0_190 = arith.constant 0 : index
    %c0_191 = arith.constant 0 : index
    %371 = vector.load %arg45[%c0_190, %c0_191] : memref<1x1xf32, #tpu.memory_space<vmem>>, vector<1x1xf32>
    %372 = vector.broadcast %371 : vector<1x1xf32> to vector<4x1xf32>
    %373 = arith.addf %370, %372 : vector<4x1xf32>
    %cst_192 = arith.constant 0.000000e+00 : f32
    %374 = vector.broadcast %cst_192 : f32 to vector<4x1xf32>
    %375 = arith.subf %374, %373 : vector<4x1xf32>
    %376 = math.exp %375 : vector<4x1xf32>
    %cst_193 = arith.constant 1.000000e+00 : f32
    %377 = vector.broadcast %cst_193 : f32 to vector<4x1xf32>
    %378 = arith.addf %377, %376 : vector<4x1xf32>
    %379 = tpu.reciprocal %378 {approx = true} : vector<4x1xf32> -> vector<4x1xf32>
    %c0_194 = arith.constant 0 : index
    %c0_195 = arith.constant 0 : index
    %380 = vector.load %arg46[%c0_194, %c0_195] : memref<4x1xf32, #tpu.memory_space<vmem>>, vector<4x1xf32>
    tpu.vector_store %arg46[%c0_194, %c0_195], %379 {strides = array<i32>} : memref<4x1xf32, #tpu.memory_space<vmem>>, vector<4x1xf32>,
    return
  }
}

</mosaic_0001>

<llo_original>
// kernel: tile.2
$region0: #{tile.2}
  %s0 = inlined_call_operand.vmem [shape: s32[4,8], index: 0, kind: input, shape index: {}]
  %s1 = inlined_call_operand.vmem [shape: s32[32,1], index: 1, kind: output, shape index: {}]
  $region1: #{tile.2} parent=0
    #allocation0 [shape = 'u8[4096]{0}', space=vmem, size = 0x1000, scoped, tag = 'scoped mem for input reshape']
    %s3 = sshll.u32 1, 4
    %s4 = ssub.s32 %s3, 1
    %v5 = vld [vmem:[%s0] sm:%s4]
    %6 = vst [vmem:[#allocation0] sm:%s4] %v5
    %v7 = vld [vmem:[#allocation0] sm:$0xf]
    %vm8 = vcmask 7168
    %9 = vst.msk [vmem:[%s1] ss:$8 sm:$0xf] %vm8, %v7
    %v10 = vld [vmem:[#allocation0] sm:$0xf]
    %11 = vrot.lane.b32.xlu0 %v10, 127
    %v12 = vpop.permute.xlu0 %11
    %vm13 = vcmask 7168
    %s14 = scalar_lea.vmem %s1, 1
    %15 = vst.msk [vmem:[%s14] ss:$8 sm:$0xf] %vm13, %v12
    %v16 = vld [vmem:[#allocation0] sm:$0xf]
    %17 = vrot.lane.b32.xlu0 %v16, 126
    %v18 = vpop.permute.xlu0 %17
    %vm19 = vcmask 7168
    %s20 = scalar_lea.vmem %s1, 2
    %21 = vst.msk [vmem:[%s20] ss:$8 sm:$0xf] %vm19, %v18
    %v22 = vld [vmem:[#allocation0] sm:$0xf]
    %23 = vrot.lane.b32.xlu0 %v22, 125
    %v24 = vpop.permute.xlu0 %23
    %vm25 = vcmask 7168
    %s26 = scalar_lea.vmem %s1, 3
    %27 = vst.msk [vmem:[%s26] ss:$8 sm:$0xf] %vm25, %v24
    %v28 = vld [vmem:[#allocation0] sm:$0xf]
    %29 = vrot.lane.b32.xlu0 %v28, 124
    %v30 = vpop.permute.xlu0 %29
    %vm31 = vcmask 7168
    %s32 = scalar_lea.vmem %s1, 4
    %33 = vst.msk [vmem:[%s32] ss:$8 sm:$0xf] %vm31, %v30
    %v34 = vld [vmem:[#allocation0] sm:$0xf]
    %35 = vrot.lane.b32.xlu0 %v34, 123
    %v36 = vpop.permute.xlu0 %35
    %vm37 = vcmask 7168
    %s38 = scalar_lea.vmem %s1, 5
    %39 = vst.msk [vmem:[%s38] ss:$8 sm:$0xf] %vm37, %v36
    %v40 = vld [vmem:[#allocation0] sm:$0xf]
    %41 = vrot.lane.b32.xlu0 %v40, 122
    %v42 = vpop.permute.xlu0 %41
    %vm43 = vcmask 7168
    %s44 = scalar_lea.vmem %s1, 6
    %45 = vst.msk [vmem:[%s44] ss:$8 sm:$0xf] %vm43, %v42
    %v46 = vld [vmem:[#allocation0] sm:$0xf]
    %47 = vrot.lane.b32.xlu0 %v46, 121
    %v48 = vpop.permute.xlu0 %47
    %vm49 = vcmask 7168
    %s50 = scalar_lea.vmem %s1, 7
    %51 = vst.msk [vmem:[%s50] ss:$8 sm:$0xf] %vm49, %v48

// kernel: tile.1
$region0: #{tile.1}
  %s0 = inlined_call_operand.vmem [shape: s32[4,16], index: 0, kind: input, shape index: {}]
  %s1 = inlined_call_operand.vmem [shape: s32[64,1], index: 1, kind: output, shape index: {}]
  $region1: #{tile.1} parent=0
    #allocation0 [shape = 'u8[4096]{0}', space=vmem, size = 0x1000, scoped, tag = 'scoped mem for input reshape']
    %s3 = sshll.u32 1, 4
    %s4 = ssub.s32 %s3, 1
    %v5 = vld [vmem:[%s0] sm:%s4]
    %6 = vst [vmem:[#allocation0] sm:%s4] %v5
    %v7 = vld [vmem:[#allocation0] sm:$0xf]
    %vm8 = vcmask 7168
    %9 = vst.msk [vmem:[%s1] ss:$16 sm:$0x3] %vm8, %v7
    %10 = vst.msk [vmem:[%s1] ss:$16 sm:$0xc] %vm8, %v7
    %v11 = vld [vmem:[#allocation0] sm:$0xf]
    %12 = vrot.lane.b32.xlu0 %v11, 127
    %v13 = vpop.permute.xlu0 %12
    %vm14 = vcmask 7168
    %s15 = scalar_lea.vmem %s1, 1
    %16 = vst.msk [vmem:[%s15] ss:$16 sm:$0x3] %vm14, %v13
    %s17 = scalar_lea.vmem %s1, 1
    %18 = vst.msk [vmem:[%s17] ss:$16 sm:$0xc] %vm14, %v13
    %v19 = vld [vmem:[#allocation0] sm:$0xf]
    %20 = vrot.lane.b32.xlu0 %v19, 126
    %v21 = vpop.permute.xlu0 %20
    %vm22 = vcmask 7168
    %s23 = scalar_lea.vmem %s1, 2
    %24 = vst.msk [vmem:[%s23] ss:$16 sm:$0x3] %vm22, %v21
    %s25 = scalar_lea.vmem %s1, 2
    %26 = vst.msk [vmem:[%s25] ss:$16 sm:$0xc] %vm22, %v21
    %v27 = vld [vmem:[#allocation0] sm:$0xf]
    %28 = vrot.lane.b32.xlu0 %v27, 125
    %v29 = vpop.permute.xlu0 %28
    %vm30 = vcmask 7168
    %s31 = scalar_lea.vmem %s1, 3
    %32 = vst.msk [vmem:[%s31] ss:$16 sm:$0x3] %vm30, %v29
    %s33 = scalar_lea.vmem %s1, 3
    %34 = vst.msk [vmem:[%s33] ss:$16 sm:$0xc] %vm30, %v29
    %v35 = vld [vmem:[#allocation0] sm:$0xf]
    %36 = vrot.lane.b32.xlu0 %v35, 124
    %v37 = vpop.permute.xlu0 %36
    %vm38 = vcmask 7168
    %s39 = scalar_lea.vmem %s1, 4
    %40 = vst.msk [vmem:[%s39] ss:$16 sm:$0x3] %vm38, %v37
    %s41 = scalar_lea.vmem %s1, 4
    %42 = vst.msk [vmem:[%s41] ss:$16 sm:$0xc] %vm38, %v37
    %v43 = vld [vmem:[#allocation0] sm:$0xf]
    %44 = vrot.lane.b32.xlu0 %v43, 123
    %v45 = vpop.permute.xlu0 %44
    %vm46 = vcmask 7168
    %s47 = scalar_lea.vmem %s1, 5
    %48 = vst.msk [vmem:[%s47] ss:$16 sm:$0x3] %vm46, %v45
    %s49 = scalar_lea.vmem %s1, 5
    %50 = vst.msk [vmem:[%s49] ss:$16 sm:$0xc] %vm46, %v45
    %v51 = vld [vmem:[#allocation0] sm:$0xf]
    %52 = vrot.lane.b32.xlu0 %v51, 122
    %v53 = vpop.permute.xlu0 %52
    %vm54 = vcmask 7168
    %s55 = scalar_lea.vmem %s1, 6
    %56 = vst.msk [vmem:[%s55] ss:$16 sm:$0x3] %vm54, %v53
    %s57 = scalar_lea.vmem %s1, 6
    %58 = vst.msk [vmem:[%s57] ss:$16 sm:$0xc] %vm54, %v53
    %v59 = vld [vmem:[#allocation0] sm:$0xf]
    %60 = vrot.lane.b32.xlu0 %v59, 121
    %v61 = vpop.permute.xlu0 %60
    %vm62 = vcmask 7168
    %s63 = scalar_lea.vmem %s1, 7
    %64 = vst.msk [vmem:[%s63] ss:$16 sm:$0x3] %vm62, %v61
    %s65 = scalar_lea.vmem %s1, 7
    %66 = vst.msk [vmem:[%s65] ss:$16 sm:$0xc] %vm62, %v61
    %v67 = vld [vmem:[#allocation0] sm:$0xf]
    %68 = vrot.lane.b32.xlu0 %v67, 120
    %v69 = vpop.permute.xlu0 %68
    %vm70 = vcmask 7168
    %s71 = scalar_lea.vmem %s1, 8
    %72 = vst.msk [vmem:[%s71] ss:$16 sm:$0x3] %vm70, %v69
    %s73 = scalar_lea.vmem %s1, 8
    %74 = vst.msk [vmem:[%s73] ss:$16 sm:$0xc] %vm70, %v69
    %v75 = vld [vmem:[#allocation0] sm:$0xf]
    %76 = vrot.lane.b32.xlu0 %v75, 119
    %v77 = vpop.permute.xlu0 %76
    %vm78 = vcmask 7168
    %s79 = scalar_lea.vmem %s1, 9
    %80 = vst.msk [vmem:[%s79] ss:$16 sm:$0x3] %vm78, %v77
    %s81 = scalar_lea.vmem %s1, 9
    %82 = vst.msk [vmem:[%s81] ss:$16 sm:$0xc] %vm78, %v77
    %v83 = vld [vmem:[#allocation0] sm:$0xf]
    %84 = vrot.lane.b32.xlu0 %v83, 118
    %v85 = vpop.permute.xlu0 %84
    %vm86 = vcmask 7168
    %s87 = scalar_lea.vmem %s1, 10
    %88 = vst.msk [vmem:[%s87] ss:$16 sm:$0x3] %vm86, %v85
    %s89 = scalar_lea.vmem %s1, 10
    %90 = vst.msk [vmem:[%s89] ss:$16 sm:$0xc] %vm86, %v85
    %v91 = vld [vmem:[#allocation0] sm:$0xf]
    %92 = vrot.lane.b32.xlu0 %v91, 117
    %v93 = vpop.permute.xlu0 %92
    %vm94 = vcmask 7168
    %s95 = scalar_lea.vmem %s1, 11
    %96 = vst.msk [vmem:[%s95] ss:$16 sm:$0x3] %vm94, %v93
    %s97 = scalar_lea.vmem %s1, 11
    %98 = vst.msk [vmem:[%s97] ss:$16 sm:$0xc] %vm94, %v93
    %v99 = vld [vmem:[#allocation0] sm:$0xf]
    %100 = vrot.lane.b32.xlu0 %v99, 116
    %v101 = vpop.permute.xlu0 %100
    %vm102 = vcmask 7168
    %s103 = scalar_lea.vmem %s1, 12
    %104 = vst.msk [vmem:[%s103] ss:$16 sm:$0x3] %vm102, %v101
    %s105 = scalar_lea.vmem %s1, 12
    %106 = vst.msk [vmem:[%s105] ss:$16 sm:$0xc] %vm102, %v101
    %v107 = vld [vmem:[#allocation0] sm:$0xf]
    %108 = vrot.lane.b32.xlu0 %v107, 115
    %v109 = vpop.permute.xlu0 %108
    %vm110 = vcmask 7168
    %s111 = scalar_lea.vmem %s1, 13
    %112 = vst.msk [vmem:[%s111] ss:$16 sm:$0x3] %vm110, %v109
    %s113 = scalar_lea.vmem %s1, 13
    %114 = vst.msk [vmem:[%s113] ss:$16 sm:$0xc] %vm110, %v109
    %v115 = vld [vmem:[#allocation0] sm:$0xf]
    %116 = vrot.lane.b32.xlu0 %v115, 114
    %v117 = vpop.permute.xlu0 %116
    %vm118 = vcmask 7168
    %s119 = scalar_lea.vmem %s1, 14
    %120 = vst.msk [vmem:[%s119] ss:$16 sm:$0x3] %vm118, %v117
    %s121 = scalar_lea.vmem %s1, 14
    %122 = vst.msk [vmem:[%s121] ss:$16 sm:$0xc] %vm118, %v117
    %v123 = vld [vmem:[#allocation0] sm:$0xf]
    %124 = vrot.lane.b32.xlu0 %v123, 113
    %v125 = vpop.permute.xlu0 %124
    %vm126 = vcmask 7168
    %s127 = scalar_lea.vmem %s1, 15
    %128 = vst.msk [vmem:[%s127] ss:$16 sm:$0x3] %vm126, %v125
    %s129 = scalar_lea.vmem %s1, 15
    %130 = vst.msk [vmem:[%s129] ss:$16 sm:$0xc] %vm126, %v125

// kernel: tile.0
$region0: #{tile.0}
  %s0 = inlined_call_operand.vmem [shape: s32[4,24], index: 0, kind: input, shape index: {}]
  %s1 = inlined_call_operand.vmem [shape: s32[96,1], index: 1, kind: output, shape index: {}]
  $region1: #{tile.0} parent=0
    #allocation0 [shape = 'u8[4096]{0}', space=vmem, size = 0x1000, scoped, tag = 'scoped mem for input reshape']
    %s3 = sshll.u32 1, 4
    %s4 = ssub.s32 %s3, 1
    %v5 = vld [vmem:[%s0] sm:%s4]
    %6 = vst [vmem:[#allocation0] sm:%s4] %v5
    %v7 = vld [vmem:[#allocation0] sm:$0xf]
    %vm8 = vcmask 7168
    %9 = vst.msk [vmem:[%s1] ss:$24 sm:$0xf] %vm8, %v7
    %v10 = vld.sshfl [vmem:[#allocation0] sm:$0xff pattern:$0x11111230]
    %11 = vrot.lane.b32.xlu0 %v10, 127
    %v12 = vpop.permute.xlu0 %11
    %vm13 = vcmask 7168
    %s14 = scalar_lea.vmem %s1, 1
    %15 = vst.msk [vmem:[%s14] ss:$72 sm:$0x3] %vm13, %v12
    %s16 = scalar_lea.vmem %s1, 97
    %17 = vst.msk [vmem:[%s16] ss:$-24 sm:$0xc] %vm13, %v12
    %v18 = vld.sshfl [vmem:[#allocation0] sm:$0xff pattern:$0x11111230]
    %19 = vrot.lane.b32.xlu0 %v18, 126
    %v20 = vpop.permute.xlu0 %19
    %vm21 = vcmask 7168
    %s22 = scalar_lea.vmem %s1, 2
    %23 = vst.msk [vmem:[%s22] ss:$72 sm:$0x3] %vm21, %v20
    %s24 = scalar_lea.vmem %s1, 98
    %25 = vst.msk [vmem:[%s24] ss:$-24 sm:$0xc] %vm21, %v20
    %v26 = vld.sshfl [vmem:[#allocation0] sm:$0xff pattern:$0x11111230]
    %27 = vrot.lane.b32.xlu0 %v26, 125
    %v28 = vpop.permute.xlu0 %27
    %vm29 = vcmask 7168
    %s30 = scalar_lea.vmem %s1, 3
    %31 = vst.msk [vmem:[%s30] ss:$72 sm:$0x3] %vm29, %v28
    %s32 = scalar_lea.vmem %s1, 99
    %33 = vst.msk [vmem:[%s32] ss:$-24 sm:$0xc] %vm29, %v28
    %v34 = vld.sshfl [vmem:[#allocation0] sm:$0xff pattern:$0x11111230]
    %35 = vrot.lane.b32.xlu0 %v34, 124
    %v36 = vpop.permute.xlu0 %35
    %vm37 = vcmask 7168
    %s38 = scalar_lea.vmem %s1, 4
    %39 = vst.msk [vmem:[%s38] ss:$72 sm:$0x3] %vm37, %v36
    %s40 = scalar_lea.vmem %s1, 100
    %41 = vst.msk [vmem:[%s40] ss:$-24 sm:$0xc] %vm37, %v36
    %v42 = vld.sshfl [vmem:[#allocation0] sm:$0xff pattern:$0x11111230]
    %43 = vrot.lane.b32.xlu0 %v42, 123
    %v44 = vpop.permute.xlu0 %43
    %vm45 = vcmask 7168
    %s46 = scalar_lea.vmem %s1, 5
    %47 = vst.msk [vmem:[%s46] ss:$72 sm:$0x3] %vm45, %v44
    %s48 = scalar_lea.vmem %s1, 101
    %49 = vst.msk [vmem:[%s48] ss:$-24 sm:$0xc] %vm45, %v44
    %v50 = vld.sshfl [vmem:[#allocation0] sm:$0xff pattern:$0x11111230]
    %51 = vrot.lane.b32.xlu0 %v50, 122
    %v52 = vpop.permute.xlu0 %51
    %vm53 = vcmask 7168
    %s54 = scalar_lea.vmem %s1, 6
    %55 = vst.msk [vmem:[%s54] ss:$72 sm:$0x3] %vm53, %v52
    %s56 = scalar_lea.vmem %s1, 102
    %57 = vst.msk [vmem:[%s56] ss:$-24 sm:$0xc] %vm53, %v52
    %v58 = vld.sshfl [vmem:[#allocation0] sm:$0xff pattern:$0x11111230]
    %59 = vrot.lane.b32.xlu0 %v58, 121
    %v60 = vpop.permute.xlu0 %59
    %vm61 = vcmask 7168
    %s62 = scalar_lea.vmem %s1, 7
    %63 = vst.msk [vmem:[%s62] ss:$72 sm:$0x3] %vm61, %v60
    %s64 = scalar_lea.vmem %s1, 103
    %65 = vst.msk [vmem:[%s64] ss:$-24 sm:$0xc] %vm61, %v60
    %v66 = vld.sshfl [vmem:[#allocation0] sm:$0xff pattern:$0x22222301]
    %67 = vrot.lane.b32.xlu0 %v66, 120
    %v68 = vpop.permute.xlu0 %67
    %vm69 = vcmask 7168
    %s70 = scalar_lea.vmem %s1, 32
    %71 = vst.msk [vmem:[%s70] ss:$-24 sm:$0x3] %vm69, %v68
    %s72 = scalar_lea.vmem %s1, 128
    %73 = vst.msk [vmem:[%s72] ss:$-24 sm:$0xc] %vm69, %v68
    %v74 = vld.sshfl [vmem:[#allocation0] sm:$0xff pattern:$0x22222301]
    %75 = vrot.lane.b32.xlu0 %v74, 119
    %v76 = vpop.permute.xlu0 %75
    %vm77 = vcmask 7168
    %s78 = scalar_lea.vmem %s1, 33
    %79 = vst.msk [vmem:[%s78] ss:$-24 sm:$0x3] %vm77, %v76
    %s80 = scalar_lea.vmem %s1, 129
    %81 = vst.msk [vmem:[%s80] ss:$-24 sm:$0xc] %vm77, %v76
    %v82 = vld.sshfl [vmem:[#allocation0] sm:$0xff pattern:$0x22222301]
    %83 = vrot.lane.b32.xlu0 %v82, 118
    %v84 = vpop.permute.xlu0 %83
    %vm85 = vcmask 7168
    %s86 = scalar_lea.vmem %s1, 34
    %87 = vst.msk [vmem:[%s86] ss:$-24 sm:$0x3] %vm85, %v84
    %s88 = scalar_lea.vmem %s1, 130
    %89 = vst.msk [vmem:[%s88] ss:$-24 sm:$0xc] %vm85, %v84
    %v90 = vld.sshfl [vmem:[#allocation0] sm:$0xff pattern:$0x22222301]
    %91 = vrot.lane.b32.xlu0 %v90, 117
    %v92 = vpop.permute.xlu0 %91
    %vm93 = vcmask 7168
    %s94 = scalar_lea.vmem %s1, 35
    %95 = vst.msk [vmem:[%s94] ss:$-24 sm:$0x3] %vm93, %v92
    %s96 = scalar_lea.vmem %s1, 131
    %97 = vst.msk [vmem:[%s96] ss:$-24 sm:$0xc] %vm93, %v92
    %v98 = vld.sshfl [vmem:[#allocation0] sm:$0xff pattern:$0x22222301]
    %99 = vrot.lane.b32.xlu0 %v98, 116
    %v100 = vpop.permute.xlu0 %99
    %vm101 = vcmask 7168
    %s102 = scalar_lea.vmem %s1, 36
    %103 = vst.msk [vmem:[%s102] ss:$-24 sm:$0x3] %vm101, %v100
    %s104 = scalar_lea.vmem %s1, 132
    %105 = vst.msk [vmem:[%s104] ss:$-24 sm:$0xc] %vm101, %v100
    %v106 = vld.sshfl [vmem:[#allocation0] sm:$0xff pattern:$0x22222301]
    %107 = vrot.lane.b32.xlu0 %v106, 115
    %v108 = vpop.permute.xlu0 %107
    %vm109 = vcmask 7168
    %s110 = scalar_lea.vmem %s1, 37
    %111 = vst.msk [vmem:[%s110] ss:$-24 sm:$0x3] %vm109, %v108
    %s112 = scalar_lea.vmem %s1, 133
    %113 = vst.msk [vmem:[%s112] ss:$-24 sm:$0xc] %vm109, %v108
    %v114 = vld.sshfl [vmem:[#allocation0] sm:$0xff pattern:$0x22222301]
    %115 = vrot.lane.b32.xlu0 %v114, 114
    %v116 = vpop.permute.xlu0 %115
    %vm117 = vcmask 7168
    %s118 = scalar_lea.vmem %s1, 38
    %119 = vst.msk [vmem:[%s118] ss:$-24 sm:$0x3] %vm117, %v116
    %s120 = scalar_lea.vmem %s1, 134
    %121 = vst.msk [vmem:[%s120] ss:$-24 sm:$0xc] %vm117, %v116
    %v122 = vld.sshfl [vmem:[#allocation0] sm:$0xff pattern:$0x22222301]
    %123 = vrot.lane.b32.xlu0 %v122, 113
    %v124 = vpop.permute.xlu0 %123
    %vm125 = vcmask 7168
    %s126 = scalar_lea.vmem %s1, 39
    %127 = vst.msk [vmem:[%s126] ss:$-24 sm:$0x3] %vm125, %v124
    %s128 = scalar_lea.vmem %s1, 135
    %129 = vst.msk [vmem:[%s128] ss:$-24 sm:$0xc] %vm125, %v124
    %v130 = vld.sshfl [vmem:[#allocation0] sm:$0xff pattern:$0x33333012]
    %131 = vrot.lane.b32.xlu0 %v130, 112
    %v132 = vpop.permute.xlu0 %131
    %vm133 = vcmask 7168
    %s134 = scalar_lea.vmem %s1, 64
    %135 = vst.msk [vmem:[%s134] ss:$-24 sm:$0x7] %vm133, %v132
    %s136 = scalar_lea.vmem %s1, 85
    %137 = vst.msk [vmem:[%s136] sm:$0x8] %vm133, %v132
    %v138 = vld.sshfl [vmem:[#allocation0] sm:$0xff pattern:$0x33333012]
    %139 = vrot.lane.b32.xlu0 %v138, 111
    %v140 = vpop.permute.xlu0 %139
    %vm141 = vcmask 7168
    %s142 = scalar_lea.vmem %s1, 65
    %143 = vst.msk [vmem:[%s142] ss:$-24 sm:$0x7] %vm141, %v140
    %s144 = scalar_lea.vmem %s1, 86
    %145 = vst.msk [vmem:[%s144] sm:$0x8] %vm141, %v140
    %v146 = vld.sshfl [vmem:[#allocation0] sm:$0xff pattern:$0x33333012]
    %147 = vrot.lane.b32.xlu0 %v146, 110
    %v148 = vpop.permute.xlu0 %147
    %vm149 = vcmask 7168
    %s150 = scalar_lea.vmem %s1, 66
    %151 = vst.msk [vmem:[%s150] ss:$-24 sm:$0x7] %vm149, %v148
    %s152 = scalar_lea.vmem %s1, 87
    %153 = vst.msk [vmem:[%s152] sm:$0x8] %vm149, %v148
    %v154 = vld.sshfl [vmem:[#allocation0] sm:$0xff pattern:$0x33333012]
    %155 = vrot.lane.b32.xlu0 %v154, 109
    %v156 = vpop.permute.xlu0 %155
    %vm157 = vcmask 7168
    %s158 = scalar_lea.vmem %s1, 67
    %159 = vst.msk [vmem:[%s158] ss:$-24 sm:$0x7] %vm157, %v156
    %s160 = scalar_lea.vmem %s1, 88
    %161 = vst.msk [vmem:[%s160] sm:$0x8] %vm157, %v156
    %v162 = vld.sshfl [vmem:[#allocation0] sm:$0xff pattern:$0x33333012]
    %163 = vrot.lane.b32.xlu0 %v162, 108
    %v164 = vpop.permute.xlu0 %163
    %vm165 = vcmask 7168
    %s166 = scalar_lea.vmem %s1, 68
    %167 = vst.msk [vmem:[%s166] ss:$-24 sm:$0x7] %vm165, %v164
    %s168 = scalar_lea.vmem %s1, 89
    %169 = vst.msk [vmem:[%s168] sm:$0x8] %vm165, %v164
    %v170 = vld.sshfl [vmem:[#allocation0] sm:$0xff pattern:$0x33333012]
    %171 = vrot.lane.b32.xlu0 %v170, 107
    %v172 = vpop.permute.xlu0 %171
    %vm173 = vcmask 7168
    %s174 = scalar_lea.vmem %s1, 69
    %175 = vst.msk [vmem:[%s174] ss:$-24 sm:$0x7] %vm173, %v172
    %s176 = scalar_lea.vmem %s1, 90
    %177 = vst.msk [vmem:[%s176] sm:$0x8] %vm173, %v172
    %v178 = vld.sshfl [vmem:[#allocation0] sm:$0xff pattern:$0x33333012]
    %179 = vrot.lane.b32.xlu0 %v178, 106
    %v180 = vpop.permute.xlu0 %179
    %vm181 = vcmask 7168
    %s182 = scalar_lea.vmem %s1, 70
    %183 = vst.msk [vmem:[%s182] ss:$-24 sm:$0x7] %vm181, %v180
    %s184 = scalar_lea.vmem %s1, 91
    %185 = vst.msk [vmem:[%s184] sm:$0x8] %vm181, %v180
    %v186 = vld.sshfl [vmem:[#allocation0] sm:$0xff pattern:$0x33333012]
    %187 = vrot.lane.b32.xlu0 %v186, 105
    %v188 = vpop.permute.xlu0 %187
    %vm189 = vcmask 7168
    %s190 = scalar_lea.vmem %s1, 71
    %191 = vst.msk [vmem:[%s190] ss:$-24 sm:$0x7] %vm189, %v188
    %s192 = scalar_lea.vmem %s1, 92
    %193 = vst.msk [vmem:[%s192] sm:$0x8] %vm189, %v188

// kernel: final_model_forward.1
$region0: #{final_model_forward.1}
  #allocation0 [shape = 'u32[]', space=smem, size = 0x4, offset = 0x4, fixed_abs, tag = 'smem constant byte address 0x4 - core index']
  #allocation1 [shape = 'u32[144,128]{1,0:T(1,128)}', space=vmem, size = 0x12000, scoped, tag = 'internal scratch']
  #allocation2 [shape = 'f32[1,1]{1,0:T(1,128)S(1)}', space=vmem, size = 0x200, scoped, tag = 'scoped memory for final_model_forward.1']
  %s0 = inlined_call_operand.smem [shape: u32[47], index: -1, kind: input, shape index: {}]
  %s1 = sld [smem:[%s0]]
  %s2 = scalar_lea.smem %s0, 1
  %s3 = sld [smem:[%s2]]
  %s4 = scalar_lea.smem %s0, 2
  %s5 = sld [smem:[%s4]]
  %s6 = scalar_lea.smem %s0, 3
  %s7 = sld [smem:[%s6]]
  %s8 = scalar_lea.smem %s0, 4
  %s9 = sld [smem:[%s8]]
  %s10 = scalar_lea.smem %s0, 5
  %s11 = sld [smem:[%s10]]
  %s12 = scalar_lea.smem %s0, 6
  %s13 = sld [smem:[%s12]]
  %s14 = scalar_lea.smem %s0, 7
  %s15 = sld [smem:[%s14]]
  %s16 = scalar_lea.smem %s0, 8
  %s17 = sld [smem:[%s16]]
  %s18 = scalar_lea.smem %s0, 9
  %s19 = sld [smem:[%s18]]
  %s20 = scalar_lea.smem %s0, 10
  %s21 = sld [smem:[%s20]]
  %s22 = scalar_lea.smem %s0, 11
  %s23 = sld [smem:[%s22]]
  %s24 = scalar_lea.smem %s0, 12
  %s25 = sld [smem:[%s24]]
  %s26 = scalar_lea.smem %s0, 13
  %s27 = sld [smem:[%s26]]
  %s28 = scalar_lea.smem %s0, 14
  %s29 = sld [smem:[%s28]]
  %s30 = scalar_lea.smem %s0, 15
  %s31 = sld [smem:[%s30]]
  %s32 = scalar_lea.smem %s0, 16
  %s33 = sld [smem:[%s32]]
  %s34 = scalar_lea.smem %s0, 17
  %s35 = sld [smem:[%s34]]
  %s36 = scalar_lea.smem %s0, 18
  %s37 = sld [smem:[%s36]]
  %s38 = scalar_lea.smem %s0, 19
  %s39 = sld [smem:[%s38]]
  %s40 = scalar_lea.smem %s0, 20
  %s41 = sld [smem:[%s40]]
  %s42 = scalar_lea.smem %s0, 21
  %s43 = sld [smem:[%s42]]
  %s44 = scalar_lea.smem %s0, 22
  %s45 = sld [smem:[%s44]]
  %s46 = scalar_lea.smem %s0, 23
  %s47 = sld [smem:[%s46]]
  %s48 = scalar_lea.smem %s0, 24
  %s49 = sld [smem:[%s48]]
  %s50 = scalar_lea.smem %s0, 25
  %s51 = sld [smem:[%s50]]
  %s52 = scalar_lea.smem %s0, 26
  %s53 = sld [smem:[%s52]]
  %s54 = scalar_lea.smem %s0, 27
  %s55 = sld [smem:[%s54]]
  %s56 = scalar_lea.smem %s0, 28
  %s57 = sld [smem:[%s56]]
  %s58 = scalar_lea.smem %s0, 29
  %s59 = sld [smem:[%s58]]
  %s60 = scalar_lea.smem %s0, 30
  %s61 = sld [smem:[%s60]]
  %s62 = scalar_lea.smem %s0, 31
  %s63 = sld [smem:[%s62]]
  %s64 = scalar_lea.smem %s0, 32
  %s65 = sld [smem:[%s64]]
  %s66 = scalar_lea.smem %s0, 33
  %s67 = sld [smem:[%s66]]
  %s68 = scalar_lea.smem %s0, 34
  %s69 = sld [smem:[%s68]]
  %s70 = scalar_lea.smem %s0, 35
  %s71 = sld [smem:[%s70]]
  %s72 = scalar_lea.smem %s0, 36
  %s73 = sld [smem:[%s72]]
  %s74 = scalar_lea.smem %s0, 37
  %s75 = sld [smem:[%s74]]
  %s76 = scalar_lea.smem %s0, 38
  %s77 = sld [smem:[%s76]]
  %s78 = scalar_lea.smem %s0, 39
  %s79 = sld [smem:[%s78]]
  %s80 = scalar_lea.smem %s0, 40
  %s81 = sld [smem:[%s80]]
  %s82 = scalar_lea.smem %s0, 41
  %s83 = sld [smem:[%s82]]
  %s84 = scalar_lea.smem %s0, 42
  %s85 = sld [smem:[%s84]]
  %s86 = scalar_lea.smem %s0, 43
  %s87 = sld [smem:[%s86]]
  %s88 = scalar_lea.smem %s0, 44
  %s89 = sld [smem:[%s88]]
  %s90 = scalar_lea.smem %s0, 45
  %s91 = sld [smem:[%s90]]
  %s92 = scalar_lea.smem %s0, 46
  %s93 = sld [smem:[%s92]]
  %s94 = sld [smem:[#allocation0]]
  $region274: #{final_model_forward.1} parent=0
    _
  %s96 = ssub.s32 1, %s94
  %s97 = scalar_select 0, %s96, %s94
  %v98 = vstv %s91
  %99 = vst [vmem:[#allocation2] sm:$0x1] %v98
  $region1: #{final_model_forward.1} parent=0
    #allocation3 [shape = 'u8[512]{0}', space=vmem, size = 0x400, scoped, tag = 'input window, operand 12, single buffered']
    #allocation4 [shape = 's32[1]{0}', space=sflag, size = 0x4, scoped, tag = 'scoped memory for final_model_forward.1']
    #allocation5 [shape = 'u8[512]{0}', space=vmem, size = 0x400, scoped, tag = 'input window, operand 14, single buffered']
    #allocation6 [shape = 's32[1]{0}', space=sflag, size = 0x4, scoped, tag = 'scoped memory for final_model_forward.1']
    #allocation7 [shape = 'u8[16384]{0}', space=vmem, size = 0x4000, scoped, tag = 'input window, operand 15, single buffered']
    #allocation8 [shape = 'u8[512]{0}', space=vmem, size = 0x400, scoped, tag = 'input window, operand 16, single buffered']
    #allocation9 [shape = 's32[1]{0}', space=sflag, size = 0x4, scoped, tag = 'scoped memory for final_model_forward.1']
    #allocation10 [shape = 'u8[131072]{0}', space=vmem, size = 0x20000, scoped, tag = 'input window, operand 17, single buffered']
    #allocation11 [shape = 'u8[512]{0}', space=vmem, size = 0x400, scoped, tag = 'input window, operand 20, single buffered']
    #allocation12 [shape = 's32[1]{0}', space=sflag, size = 0x4, scoped, tag = 'scoped memory for final_model_forward.1']
    #allocation13 [shape = 'u8[512]{0}', space=vmem, size = 0x400, scoped, tag = 'input window, operand 22, single buffered']
    #allocation14 [shape = 'u8[512]{0}', space=vmem, size = 0x400, scoped, tag = 'input window, operand 24, single buffered']
    #allocation15 [shape = 's32[1]{0}', space=sflag, size = 0x4, scoped, tag = 'scoped memory for final_model_forward.1']
    #allocation16 [shape = 'u8[196608]{0}', space=vmem, size = 0x30000, scoped, tag = 'input window, operand 27, single buffered']
    #allocation17 [shape = 'u8[512]{0}', space=vmem, size = 0x400, scoped, tag = 'input window, operand 28, single buffered']
    #allocation18 [shape = 's32[1]{0}', space=sflag, size = 0x4, scoped, tag = 'scoped memory for final_model_forward.1']
    #allocation19 [shape = 'u8[327680]{0}', space=vmem, size = 0x50000, scoped, tag = 'input window, operand 29, single buffered']
    #allocation20 [shape = 'u8[512]{0}', space=vmem, size = 0x400, scoped, tag = 'input window, operand 30, single buffered']
    #allocation21 [shape = 's32[1]{0}', space=sflag, size = 0x4, scoped, tag = 'scoped memory for final_model_forward.1']
    #allocation22 [shape = 'u8[131072]{0}', space=vmem, size = 0x20000, scoped, tag = 'input window, operand 31, single buffered']
    #allocation23 [shape = 'u8[512]{0}', space=vmem, size = 0x400, scoped, tag = 'input window, operand 32, single buffered']
    #allocation24 [shape = 's32[1]{0}', space=sflag, size = 0x4, scoped, tag = 'scoped memory for final_model_forward.1']
    #allocation25 [shape = 'u8[1024]{0}', space=vmem, size = 0x400, scoped, tag = 'input window, operand 34, single buffered']
    #allocation26 [shape = 'u8[65536]{0}', space=vmem, size = 0x10000, scoped, tag = 'input window, operand 35, single buffered']
    #allocation27 [shape = 's32[1]{0}', space=sflag, size = 0x4, scoped, tag = 'scoped memory for final_model_forward.1']
    #allocation28 [shape = 'u8[524288]{0}', space=vmem, size = 0x80000, scoped, tag = 'input window, operand 37, single buffered']
    #allocation29 [shape = 'u8[524288]{0}', space=vmem, size = 0x80000, scoped, tag = 'input window, operand 39, single buffered']
    #allocation30 [shape = 's32[1]{0}', space=sflag, size = 0x4, scoped, tag = 'scoped memory for final_model_forward.1']
    #allocation31 [shape = 'u8[524288]{0}', space=vmem, size = 0x80000, scoped, tag = 'input window, operand 40, single buffered']
    #allocation32 [shape = 'u8[524288]{0}', space=vmem, size = 0x80000, scoped, tag = 'input window, operand 42, single buffered']
    #allocation33 [shape = 's32[1]{0}', space=sflag, size = 0x4, scoped, tag = 'scoped memory for final_model_forward.1']
    %100 = vsyncpa [#allocation4], 0
    %101 = vsyncpa [#allocation6], 0
    %102 = vsyncpa [#allocation9], 0
    %103 = vsyncpa [#allocation12], 0
    %104 = vsyncpa [#allocation15], 0
    %105 = vsyncpa [#allocation18], 0
    %106 = vsyncpa [#allocation21], 0
    %107 = vsyncpa [#allocation24], 0
    %108 = vsyncpa [#allocation27], 0
    %109 = vsyncpa [#allocation30], 0
    %110 = vsyncpa [#allocation33], 0
    // Predicated region
    $region2: #{final_model_forward.1} parent=1 // pred_check
      _
    $region3: #{final_model_forward.1} parent=1 // pred_check_branch
      %112 = sbr.rel (0) target = $region5
    $region4: #{final_model_forward.1} parent=1 // pred_region
      _
    $region5: #{final_model_forward.1} parent=1 // pred_fallthru
      _
    // Predicated region
    $region6: #{final_model_forward.1} parent=1 // pred_check
      _
    $region7: #{final_model_forward.1} parent=1 // pred_check_branch
      %114 = sbr.rel (0) target = $region9
    $region8: #{final_model_forward.1} parent=1 // pred_region
      _
    $region9: #{final_model_forward.1} parent=1 // pred_fallthru
      _
    // Predicated region
    $region10: #{final_model_forward.1} parent=1 // pred_check
      _
    $region11: #{final_model_forward.1} parent=1 // pred_check_branch
      %116 = sbr.rel (0) target = $region13
    $region12: #{final_model_forward.1} parent=1 // pred_region
      _
    $region13: #{final_model_forward.1} parent=1 // pred_fallthru
      _
    // Predicated region
    $region14: #{final_model_forward.1} parent=1 // pred_check
      _
    $region15: #{final_model_forward.1} parent=1 // pred_check_branch
      %118 = sbr.rel (0) target = $region17
    $region16: #{final_model_forward.1} parent=1 // pred_region
      _
    $region17: #{final_model_forward.1} parent=1 // pred_fallthru
      _
    // Predicated region
    $region18: #{final_model_forward.1} parent=1 // pred_check
      _
    $region19: #{final_model_forward.1} parent=1 // pred_check_branch
      %120 = sbr.rel (0) target = $region21
    $region20: #{final_model_forward.1} parent=1 // pred_region
      _
    $region21: #{final_model_forward.1} parent=1 // pred_fallthru
      _
    // Predicated region
    $region22: #{final_model_forward.1} parent=1 // pred_check
      _
    $region23: #{final_model_forward.1} parent=1 // pred_check_branch
      %122 = sbr.rel (0) target = $region25
    $region24: #{final_model_forward.1} parent=1 // pred_region
      _
    $region25: #{final_model_forward.1} parent=1 // pred_fallthru
      _
    // Predicated region
    $region26: #{final_model_forward.1} parent=1 // pred_check
      _
    $region27: #{final_model_forward.1} parent=1 // pred_check_branch
      %124 = sbr.rel (0) target = $region29
    $region28: #{final_model_forward.1} parent=1 // pred_region
      _
    $region29: #{final_model_forward.1} parent=1 // pred_fallthru
      _
    // Predicated region
    $region30: #{final_model_forward.1} parent=1 // pred_check
      _
    $region31: #{final_model_forward.1} parent=1 // pred_check_branch
      %126 = sbr.rel (0) target = $region33
    $region32: #{final_model_forward.1} parent=1 // pred_region
      _
    $region33: #{final_model_forward.1} parent=1 // pred_fallthru
      _
    // Predicated region
    $region34: #{final_model_forward.1} parent=1 // pred_check
      _
    $region35: #{final_model_forward.1} parent=1 // pred_check_branch
      %128 = sbr.rel (0) target = $region37
    $region36: #{final_model_forward.1} parent=1 // pred_region
      _
    $region37: #{final_model_forward.1} parent=1 // pred_fallthru
      _
    // Predicated region
    $region38: #{final_model_forward.1} parent=1 // pred_check
      _
    $region39: #{final_model_forward.1} parent=1 // pred_check_branch
      %130 = sbr.rel (0) target = $region41
    $region40: #{final_model_forward.1} parent=1 // pred_region
      _
    $region41: #{final_model_forward.1} parent=1 // pred_fallthru
      _
    // Predicated region
    $region42: #{final_model_forward.1} parent=1 // pred_check
      _
    $region43: #{final_model_forward.1} parent=1 // pred_check_branch
      %132 = sbr.rel (0) target = $region45
    $region44: #{final_model_forward.1} parent=1 // pred_region
      _
    $region45: #{final_model_forward.1} parent=1 // pred_fallthru
      _
    // Predicated region
    $region46: #{final_model_forward.1} parent=1 // pred_check
      _
    $region47: #{final_model_forward.1} parent=1 // pred_check_branch
      %134 = sbr.rel (0) target = $region49
    $region48: #{final_model_forward.1} parent=1 // pred_region
      _
    $region49: #{final_model_forward.1} parent=1 // pred_fallthru
      _
    // Predicated region
    $region50: #{final_model_forward.1} parent=1 // pred_check
      _
    $region51: #{final_model_forward.1} parent=1 // pred_check_branch
      %136 = sbr.rel (0) target = $region53
    $region52: #{final_model_forward.1} parent=1 // pred_region
      %s138 = ssub.s32 16, 16
      %139 = vsyncadd [#allocation4], %s138
      %s141 = sshll.u32 [#allocation3], 4
      %s142 = int_to_ptr.vmem [resolvable:$true] %s141
      %144 = dma.hbm_to_vmem [thread:$0]  %s25, 16, %s142, [#allocation4]
    $region53: #{final_model_forward.1} parent=1 // pred_fallthru
      _
    // Predicated region
    $region54: #{final_model_forward.1} parent=1 // pred_check
      _
    $region55: #{final_model_forward.1} parent=1 // pred_check_branch
      %146 = sbr.rel (0) target = $region57
    $region56: #{final_model_forward.1} parent=1 // pred_region
      _
    $region57: #{final_model_forward.1} parent=1 // pred_fallthru
      _
    // Predicated region
    $region58: #{final_model_forward.1} parent=1 // pred_check
      _
    $region59: #{final_model_forward.1} parent=1 // pred_check_branch
      %148 = sbr.rel (0) target = $region61
    $region60: #{final_model_forward.1} parent=1 // pred_region
      %s150 = ssub.s32 16, 16
      %151 = vsyncadd [#allocation6], %s150
      %s153 = sshll.u32 [#allocation5], 4
      %s154 = int_to_ptr.vmem [resolvable:$true] %s153
      %156 = dma.hbm_to_vmem [thread:$0]  %s29, 16, %s154, [#allocation6]
    $region61: #{final_model_forward.1} parent=1 // pred_fallthru
      _
    // Predicated region
    $region62: #{final_model_forward.1} parent=1 // pred_check
      _
    $region63: #{final_model_forward.1} parent=1 // pred_check_branch
      %158 = sbr.rel (0) target = $region65
    $region64: #{final_model_forward.1} parent=1 // pred_region
      %s160 = ssub.s32 512, 512
      %161 = vsyncadd [#allocation6], %s160
      %s162 = sshll.u32 [#allocation7], 4
      %s163 = int_to_ptr.vmem [resolvable:$true] %s162
      %168 = dma.hbm_to_vmem [thread:$0]  %s31, 512, %s163, [#allocation6], 128, 128, 8
    $region65: #{final_model_forward.1} parent=1 // pred_fallthru
      _
    // Predicated region
    $region66: #{final_model_forward.1} parent=1 // pred_check
      _
    $region67: #{final_model_forward.1} parent=1 // pred_check_branch
      %170 = sbr.rel (0) target = $region69
    $region68: #{final_model_forward.1} parent=1 // pred_region
      %s172 = ssub.s32 16, 16
      %173 = vsyncadd [#allocation9], %s172
      %s175 = sshll.u32 [#allocation8], 4
      %s176 = int_to_ptr.vmem [resolvable:$true] %s175
      %178 = dma.hbm_to_vmem [thread:$0]  %s33, 16, %s176, [#allocation9]
    $region69: #{final_model_forward.1} parent=1 // pred_fallthru
      _
    // Predicated region
    $region70: #{final_model_forward.1} parent=1 // pred_check
      _
    $region71: #{final_model_forward.1} parent=1 // pred_check_branch
      %180 = sbr.rel (0) target = $region73
    $region72: #{final_model_forward.1} parent=1 // pred_region
      %s182 = ssub.s32 4096, 4096
      %183 = vsyncadd [#allocation9], %s182
      %s184 = sshll.u32 [#allocation10], 4
      %s185 = int_to_ptr.vmem [resolvable:$true] %s184
      %190 = dma.hbm_to_vmem [thread:$0]  %s35, 4096, %s185, [#allocation9], 256, 256, 16
    $region73: #{final_model_forward.1} parent=1 // pred_fallthru
      _
    // Predicated region
    $region74: #{final_model_forward.1} parent=1 // pred_check
      _
    $region75: #{final_model_forward.1} parent=1 // pred_check_branch
      %192 = sbr.rel (0) target = $region77
    $region76: #{final_model_forward.1} parent=1 // pred_region
      _
    $region77: #{final_model_forward.1} parent=1 // pred_fallthru
      _
    // Predicated region
    $region78: #{final_model_forward.1} parent=1 // pred_check
      _
    $region79: #{final_model_forward.1} parent=1 // pred_check_branch
      %194 = sbr.rel (0) target = $region81
    $region80: #{final_model_forward.1} parent=1 // pred_region
      _
    $region81: #{final_model_forward.1} parent=1 // pred_fallthru
      _
    // Predicated region
    $region82: #{final_model_forward.1} parent=1 // pred_check
      _
    $region83: #{final_model_forward.1} parent=1 // pred_check_branch
      %196 = sbr.rel (0) target = $region85
    $region84: #{final_model_forward.1} parent=1 // pred_region
      %s198 = ssub.s32 16, 16
      %199 = vsyncadd [#allocation12], %s198
      %s201 = sshll.u32 [#allocation11], 4
      %s202 = int_to_ptr.vmem [resolvable:$true] %s201
      %204 = dma.hbm_to_vmem [thread:$0]  %s41, 16, %s202, [#allocation12]
    $region85: #{final_model_forward.1} parent=1 // pred_fallthru
      _
    // Predicated region
    $region86: #{final_model_forward.1} parent=1 // pred_check
      _
    $region87: #{final_model_forward.1} parent=1 // pred_check_branch
      %206 = sbr.rel (0) target = $region89
    $region88: #{final_model_forward.1} parent=1 // pred_region
      _
    $region89: #{final_model_forward.1} parent=1 // pred_fallthru
      _
    // Predicated region
    $region90: #{final_model_forward.1} parent=1 // pred_check
      _
    $region91: #{final_model_forward.1} parent=1 // pred_check_branch
      %208 = sbr.rel (0) target = $region93
    $region92: #{final_model_forward.1} parent=1 // pred_region
      %s210 = ssub.s32 16, 16
      %211 = vsyncadd [#allocation12], %s210
      %s213 = sshll.u32 [#allocation13], 4
      %s214 = int_to_ptr.vmem [resolvable:$true] %s213
      %216 = dma.hbm_to_vmem [thread:$0]  %s45, 16, %s214, [#allocation12]
    $region93: #{final_model_forward.1} parent=1 // pred_fallthru
      _
    // Predicated region
    $region94: #{final_model_forward.1} parent=1 // pred_check
      _
    $region95: #{final_model_forward.1} parent=1 // pred_check_branch
      %218 = sbr.rel (0) target = $region97
    $region96: #{final_model_forward.1} parent=1 // pred_region
      _
    $region97: #{final_model_forward.1} parent=1 // pred_fallthru
      _
    // Predicated region
    $region98: #{final_model_forward.1} parent=1 // pred_check
      _
    $region99: #{final_model_forward.1} parent=1 // pred_check_branch
      %220 = sbr.rel (0) target = $region101
    $region100: #{final_model_forward.1} parent=1 // pred_region
      %s222 = ssub.s32 16, 16
      %223 = vsyncadd [#allocation15], %s222
      %s225 = sshll.u32 [#allocation14], 4
      %s226 = int_to_ptr.vmem [resolvable:$true] %s225
      %228 = dma.hbm_to_vmem [thread:$0]  %s49, 16, %s226, [#allocation15]
    $region101: #{final_model_forward.1} parent=1 // pred_fallthru
      _
    // Predicated region
    $region102: #{final_model_forward.1} parent=1 // pred_check
      _
    $region103: #{final_model_forward.1} parent=1 // pred_check_branch
      %230 = sbr.rel (0) target = $region105
    $region104: #{final_model_forward.1} parent=1 // pred_region
      _
    $region105: #{final_model_forward.1} parent=1 // pred_fallthru
      _
    // Predicated region
    $region106: #{final_model_forward.1} parent=1 // pred_check
      _
    $region107: #{final_model_forward.1} parent=1 // pred_check_branch
      %232 = sbr.rel (0) target = $region109
    $region108: #{final_model_forward.1} parent=1 // pred_region
      _
    $region109: #{final_model_forward.1} parent=1 // pred_fallthru
      _
    // Predicated region
    $region110: #{final_model_forward.1} parent=1 // pred_check
      _
    $region111: #{final_model_forward.1} parent=1 // pred_check_branch
      %234 = sbr.rel (0) target = $region113
    $region112: #{final_model_forward.1} parent=1 // pred_region
      %s236 = ssub.s32 6144, 6144
      %237 = vsyncadd [#allocation15], %s236
      %s238 = sshll.u32 [#allocation16], 4
      %s239 = int_to_ptr.vmem [resolvable:$true] %s238
      %244 = dma.hbm_to_vmem [thread:$0]  %s55, 6144, %s239, [#allocation15], 128, 128, 8
    $region113: #{final_model_forward.1} parent=1 // pred_fallthru
      _
    // Predicated region
    $region114: #{final_model_forward.1} parent=1 // pred_check
      _
    $region115: #{final_model_forward.1} parent=1 // pred_check_branch
      %246 = sbr.rel (0) target = $region117
    $region116: #{final_model_forward.1} parent=1 // pred_region
      %s248 = ssub.s32 16, 16
      %249 = vsyncadd [#allocation18], %s248
      %s251 = sshll.u32 [#allocation17], 4
      %s252 = int_to_ptr.vmem [resolvable:$true] %s251
      %254 = dma.hbm_to_vmem [thread:$0]  %s57, 16, %s252, [#allocation18]
    $region117: #{final_model_forward.1} parent=1 // pred_fallthru
      _
    // Predicated region
    $region118: #{final_model_forward.1} parent=1 // pred_check
      _
    $region119: #{final_model_forward.1} parent=1 // pred_check_branch
      %256 = sbr.rel (0) target = $region121
    $region120: #{final_model_forward.1} parent=1 // pred_region
      %s258 = ssub.s32 10240, 10240
      %259 = vsyncadd [#allocation18], %s258
      %s260 = sshll.u32 [#allocation19], 4
      %s261 = int_to_ptr.vmem [resolvable:$true] %s260
      %266 = dma.hbm_to_vmem [thread:$0]  %s59, 10240, %s261, [#allocation18], 128, 128, 8
    $region121: #{final_model_forward.1} parent=1 // pred_fallthru
      _
    // Predicated region
    $region122: #{final_model_forward.1} parent=1 // pred_check
      _
    $region123: #{final_model_forward.1} parent=1 // pred_check_branch
      %268 = sbr.rel (0) target = $region125
    $region124: #{final_model_forward.1} parent=1 // pred_region
      %s270 = ssub.s32 16, 16
      %271 = vsyncadd [#allocation21], %s270
      %s273 = sshll.u32 [#allocation20], 4
      %s274 = int_to_ptr.vmem [resolvable:$true] %s273
      %276 = dma.hbm_to_vmem [thread:$0]  %s61, 16, %s274, [#allocation21]
    $region125: #{final_model_forward.1} parent=1 // pred_fallthru
      _
    // Predicated region
    $region126: #{final_model_forward.1} parent=1 // pred_check
      _
    $region127: #{final_model_forward.1} parent=1 // pred_check_branch
      %278 = sbr.rel (0) target = $region129
    $region128: #{final_model_forward.1} parent=1 // pred_region
      %s280 = ssub.s32 4096, 4096
      %281 = vsyncadd [#allocation21], %s280
      %s282 = sshll.u32 [#allocation22], 4
      %s283 = int_to_ptr.vmem [resolvable:$true] %s282
      %288 = dma.hbm_to_vmem [thread:$0]  %s63, 4096, %s283, [#allocation21], 128, 128, 8
    $region129: #{final_model_forward.1} parent=1 // pred_fallthru
      _
    // Predicated region
    $region130: #{final_model_forward.1} parent=1 // pred_check
      _
    $region131: #{final_model_forward.1} parent=1 // pred_check_branch
      %290 = sbr.rel (0) target = $region133
    $region132: #{final_model_forward.1} parent=1 // pred_region
      %s292 = ssub.s32 16, 16
      %293 = vsyncadd [#allocation24], %s292
      %s295 = sshll.u32 [#allocation23], 4
      %s296 = int_to_ptr.vmem [resolvable:$true] %s295
      %298 = dma.hbm_to_vmem [thread:$0]  %s65, 16, %s296, [#allocation24]
    $region133: #{final_model_forward.1} parent=1 // pred_fallthru
      _
    // Predicated region
    $region134: #{final_model_forward.1} parent=1 // pred_check
      _
    $region135: #{final_model_forward.1} parent=1 // pred_check_branch
      %300 = sbr.rel (0) target = $region137
    $region136: #{final_model_forward.1} parent=1 // pred_region
      _
    $region137: #{final_model_forward.1} parent=1 // pred_fallthru
      _
    // Predicated region
    $region138: #{final_model_forward.1} parent=1 // pred_check
      _
    $region139: #{final_model_forward.1} parent=1 // pred_check_branch
      %302 = sbr.rel (0) target = $region141
    $region140: #{final_model_forward.1} parent=1 // pred_region
      %s304 = ssub.s32 32, 32
      %305 = vsyncadd [#allocation24], %s304
      %s307 = sshll.u32 [#allocation25], 4
      %s308 = int_to_ptr.vmem [resolvable:$true] %s307
      %310 = dma.hbm_to_vmem [thread:$0]  %s69, 32, %s308, [#allocation24]
    $region141: #{final_model_forward.1} parent=1 // pred_fallthru
      _
    // Predicated region
    $region142: #{final_model_forward.1} parent=1 // pred_check
      _
    $region143: #{final_model_forward.1} parent=1 // pred_check_branch
      %312 = sbr.rel (0) target = $region145
    $region144: #{final_model_forward.1} parent=1 // pred_region
      %s314 = ssub.s32 2048, 2048
      %315 = vsyncadd [#allocation27], %s314
      %s316 = sshll.u32 [#allocation26], 4
      %s317 = int_to_ptr.vmem [resolvable:$true] %s316
      %322 = dma.hbm_to_vmem [thread:$0]  %s71, 2048, %s317, [#allocation27], 512, 512, 32
    $region145: #{final_model_forward.1} parent=1 // pred_fallthru
      _
    // Predicated region
    $region146: #{final_model_forward.1} parent=1 // pred_check
      _
    $region147: #{final_model_forward.1} parent=1 // pred_check_branch
      %324 = sbr.rel (0) target = $region149
    $region148: #{final_model_forward.1} parent=1 // pred_region
      _
    $region149: #{final_model_forward.1} parent=1 // pred_fallthru
      _
    // Predicated region
    $region150: #{final_model_forward.1} parent=1 // pred_check
      _
    $region151: #{final_model_forward.1} parent=1 // pred_check_branch
      %326 = sbr.rel (0) target = $region153
    $region152: #{final_model_forward.1} parent=1 // pred_region
      %s328 = ssub.s32 16384, 16384
      %329 = vsyncadd [#allocation27], %s328
      %s330 = sshll.u32 [#allocation28], 4
      %s331 = int_to_ptr.vmem [resolvable:$true] %s330
      %336 = dma.hbm_to_vmem [thread:$0]  %s75, 16384, %s331, [#allocation27], 256, 256, 16
    $region153: #{final_model_forward.1} parent=1 // pred_fallthru
      _
    // Predicated region
    $region154: #{final_model_forward.1} parent=1 // pred_check
      _
    $region155: #{final_model_forward.1} parent=1 // pred_check_branch
      %338 = sbr.rel (0) target = $region157
    $region156: #{final_model_forward.1} parent=1 // pred_region
      _
    $region157: #{final_model_forward.1} parent=1 // pred_fallthru
      _
    // Predicated region
    $region158: #{final_model_forward.1} parent=1 // pred_check
      _
    $region159: #{final_model_forward.1} parent=1 // pred_check_branch
      %340 = sbr.rel (0) target = $region161
    $region160: #{final_model_forward.1} parent=1 // pred_region
      %s342 = ssub.s32 16384, 16384
      %343 = vsyncadd [#allocation30], %s342
      %s344 = sshll.u32 [#allocation29], 4
      %s345 = int_to_ptr.vmem [resolvable:$true] %s344
      %350 = dma.hbm_to_vmem [thread:$0]  %s79, 16384, %s345, [#allocation30], 512, 512, 32
    $region161: #{final_model_forward.1} parent=1 // pred_fallthru
      _
    // Predicated region
    $region162: #{final_model_forward.1} parent=1 // pred_check
      _
    $region163: #{final_model_forward.1} parent=1 // pred_check_branch
      %352 = sbr.rel (0) target = $region165
    $region164: #{final_model_forward.1} parent=1 // pred_region
      %s354 = ssub.s32 16384, 16384
      %355 = vsyncadd [#allocation30], %s354
      %s356 = sshll.u32 [#allocation31], 4
      %s357 = int_to_ptr.vmem [resolvable:$true] %s356
      %362 = dma.hbm_to_vmem [thread:$0]  %s81, 16384, %s357, [#allocation30], 512, 512, 32
    $region165: #{final_model_forward.1} parent=1 // pred_fallthru
      _
    // Predicated region
    $region166: #{final_model_forward.1} parent=1 // pred_check
      _
    $region167: #{final_model_forward.1} parent=1 // pred_check_branch
      %364 = sbr.rel (0) target = $region169
    $region168: #{final_model_forward.1} parent=1 // pred_region
      _
    $region169: #{final_model_forward.1} parent=1 // pred_fallthru
      _
    // Predicated region
    $region170: #{final_model_forward.1} parent=1 // pred_check
      _
    $region171: #{final_model_forward.1} parent=1 // pred_check_branch
      %366 = sbr.rel (0) target = $region173
    $region172: #{final_model_forward.1} parent=1 // pred_region
      %s368 = ssub.s32 16384, 16384
      %369 = vsyncadd [#allocation33], %s368
      %s370 = sshll.u32 [#allocation32], 4
      %s371 = int_to_ptr.vmem [resolvable:$true] %s370
      %376 = dma.hbm_to_vmem [thread:$0]  %s85, 16384, %s371, [#allocation33], 256, 256, 16
    $region173: #{final_model_forward.1} parent=1 // pred_fallthru
      _
    // Predicated region
    $region174: #{final_model_forward.1} parent=1 // pred_check
      _
    $region175: #{final_model_forward.1} parent=1 // pred_check_branch
      %378 = sbr.rel (0) target = $region177
    $region176: #{final_model_forward.1} parent=1 // pred_region
      _
    $region177: #{final_model_forward.1} parent=1 // pred_fallthru
      _
    // Predicated region
    $region178: #{final_model_forward.1} parent=1 // pred_check
      _
    $region179: #{final_model_forward.1} parent=1 // pred_check_branch
      %380 = sbr.rel (0) target = $region181
    $region180: #{final_model_forward.1} parent=1 // pred_region
      _
    $region181: #{final_model_forward.1} parent=1 // pred_fallthru
      _
    // Predicated region
    $region182: #{final_model_forward.1} parent=1 // pred_check
      _
    $region183: #{final_model_forward.1} parent=1 // pred_check_branch
      %382 = sbr.rel (0) target = $region185
    $region184: #{final_model_forward.1} parent=1 // pred_region
      _
    $region185: #{final_model_forward.1} parent=1 // pred_fallthru
      _
    // Predicated region
    $region186: #{final_model_forward.1} parent=1 // pred_check
      _
    $region187: #{final_model_forward.1} parent=1 // pred_check_branch
      %384 = sbr.rel (0) target = $region189
    $region188: #{final_model_forward.1} parent=1 // pred_region
      %385 = dma.done [#allocation4], 16
    $region189: #{final_model_forward.1} parent=1 // pred_fallthru
      _
    // Predicated region
    $region190: #{final_model_forward.1} parent=1 // pred_check
      _
    $region191: #{final_model_forward.1} parent=1 // pred_check_branch
      %387 = sbr.rel (0) target = $region193
    $region192: #{final_model_forward.1} parent=1 // pred_region
      %388 = dma.done [#allocation6], 16
    $region193: #{final_model_forward.1} parent=1 // pred_fallthru
      _
    // Predicated region
    $region194: #{final_model_forward.1} parent=1 // pred_check
      _
    $region195: #{final_model_forward.1} parent=1 // pred_check_branch
      %390 = sbr.rel (0) target = $region197
    $region196: #{final_model_forward.1} parent=1 // pred_region
      %391 = dma.done [#allocation6], 512
    $region197: #{final_model_forward.1} parent=1 // pred_fallthru
      _
    // Predicated region
    $region198: #{final_model_forward.1} parent=1 // pred_check
      _
    $region199: #{final_model_forward.1} parent=1 // pred_check_branch
      %393 = sbr.rel (0) target = $region201
    $region200: #{final_model_forward.1} parent=1 // pred_region
      %394 = dma.done [#allocation9], 16
    $region201: #{final_model_forward.1} parent=1 // pred_fallthru
      _
    // Predicated region
    $region202: #{final_model_forward.1} parent=1 // pred_check
      _
    $region203: #{final_model_forward.1} parent=1 // pred_check_branch
      %396 = sbr.rel (0) target = $region205
    $region204: #{final_model_forward.1} parent=1 // pred_region
      %397 = dma.done [#allocation9], 4096
    $region205: #{final_model_forward.1} parent=1 // pred_fallthru
      _
    // Predicated region
    $region206: #{final_model_forward.1} parent=1 // pred_check
      _
    $region207: #{final_model_forward.1} parent=1 // pred_check_branch
      %399 = sbr.rel (0) target = $region209
    $region208: #{final_model_forward.1} parent=1 // pred_region
      %400 = dma.done [#allocation12], 16
    $region209: #{final_model_forward.1} parent=1 // pred_fallthru
      _
    // Predicated region
    $region210: #{final_model_forward.1} parent=1 // pred_check
      _
    $region211: #{final_model_forward.1} parent=1 // pred_check_branch
      %402 = sbr.rel (0) target = $region213
    $region212: #{final_model_forward.1} parent=1 // pred_region
      %403 = dma.done [#allocation12], 16
    $region213: #{final_model_forward.1} parent=1 // pred_fallthru
      _
    // Predicated region
    $region214: #{final_model_forward.1} parent=1 // pred_check
      _
    $region215: #{final_model_forward.1} parent=1 // pred_check_branch
      %405 = sbr.rel (0) target = $region217
    $region216: #{final_model_forward.1} parent=1 // pred_region
      %406 = dma.done [#allocation15], 16
    $region217: #{final_model_forward.1} parent=1 // pred_fallthru
      _
    // Predicated region
    $region218: #{final_model_forward.1} parent=1 // pred_check
      _
    $region219: #{final_model_forward.1} parent=1 // pred_check_branch
      %408 = sbr.rel (0) target = $region221
    $region220: #{final_model_forward.1} parent=1 // pred_region
      %409 = dma.done [#allocation15], 6144
    $region221: #{final_model_forward.1} parent=1 // pred_fallthru
      _
    // Predicated region
    $region222: #{final_model_forward.1} parent=1 // pred_check
      _
    $region223: #{final_model_forward.1} parent=1 // pred_check_branch
      %411 = sbr.rel (0) target = $region225
    $region224: #{final_model_forward.1} parent=1 // pred_region
      %412 = dma.done [#allocation18], 16
    $region225: #{final_model_forward.1} parent=1 // pred_fallthru
      _
    // Predicated region
    $region226: #{final_model_forward.1} parent=1 // pred_check
      _
    $region227: #{final_model_forward.1} parent=1 // pred_check_branch
      %414 = sbr.rel (0) target = $region229
    $region228: #{final_model_forward.1} parent=1 // pred_region
      %415 = dma.done [#allocation18], 10240
    $region229: #{final_model_forward.1} parent=1 // pred_fallthru
      _
    // Predicated region
    $region230: #{final_model_forward.1} parent=1 // pred_check
      _
    $region231: #{final_model_forward.1} parent=1 // pred_check_branch
      %417 = sbr.rel (0) target = $region233
    $region232: #{final_model_forward.1} parent=1 // pred_region
      %418 = dma.done [#allocation21], 16
    $region233: #{final_model_forward.1} parent=1 // pred_fallthru
      _
    // Predicated region
    $region234: #{final_model_forward.1} parent=1 // pred_check
      _
    $region235: #{final_model_forward.1} parent=1 // pred_check_branch
      %420 = sbr.rel (0) target = $region237
    $region236: #{final_model_forward.1} parent=1 // pred_region
      %421 = dma.done [#allocation21], 4096
    $region237: #{final_model_forward.1} parent=1 // pred_fallthru
      _
    // Predicated region
    $region238: #{final_model_forward.1} parent=1 // pred_check
      _
    $region239: #{final_model_forward.1} parent=1 // pred_check_branch
      %423 = sbr.rel (0) target = $region241
    $region240: #{final_model_forward.1} parent=1 // pred_region
      %424 = dma.done [#allocation24], 16
    $region241: #{final_model_forward.1} parent=1 // pred_fallthru
      _
    // Predicated region
    $region242: #{final_model_forward.1} parent=1 // pred_check
      _
    $region243: #{final_model_forward.1} parent=1 // pred_check_branch
      %426 = sbr.rel (0) target = $region245
    $region244: #{final_model_forward.1} parent=1 // pred_region
      %427 = dma.done [#allocation24], 32
    $region245: #{final_model_forward.1} parent=1 // pred_fallthru
      _
    // Predicated region
    $region246: #{final_model_forward.1} parent=1 // pred_check
      _
    $region247: #{final_model_forward.1} parent=1 // pred_check_branch
      %429 = sbr.rel (0) target = $region249
    $region248: #{final_model_forward.1} parent=1 // pred_region
      %430 = dma.done [#allocation27], 2048
    $region249: #{final_model_forward.1} parent=1 // pred_fallthru
      _
    // Predicated region
    $region250: #{final_model_forward.1} parent=1 // pred_check
      _
    $region251: #{final_model_forward.1} parent=1 // pred_check_branch
      %432 = sbr.rel (0) target = $region253
    $region252: #{final_model_forward.1} parent=1 // pred_region
      %433 = dma.done [#allocation27], 16384
    $region253: #{final_model_forward.1} parent=1 // pred_fallthru
      _
    // Predicated region
    $region254: #{final_model_forward.1} parent=1 // pred_check
      _
    $region255: #{final_model_forward.1} parent=1 // pred_check_branch
      %435 = sbr.rel (0) target = $region257
    $region256: #{final_model_forward.1} parent=1 // pred_region
      %436 = dma.done [#allocation30], 16384
    $region257: #{final_model_forward.1} parent=1 // pred_fallthru
      _
    // Predicated region
    $region258: #{final_model_forward.1} parent=1 // pred_check
      _
    $region259: #{final_model_forward.1} parent=1 // pred_check_branch
      %438 = sbr.rel (0) target = $region261
    $region260: #{final_model_forward.1} parent=1 // pred_region
      %439 = dma.done [#allocation30], 16384
    $region261: #{final_model_forward.1} parent=1 // pred_fallthru
      _
    // Predicated region
    $region262: #{final_model_forward.1} parent=1 // pred_check
      _
    $region263: #{final_model_forward.1} parent=1 // pred_check_branch
      %441 = sbr.rel (0) target = $region265
    $region264: #{final_model_forward.1} parent=1 // pred_region
      %442 = dma.done [#allocation33], 16384
    $region265: #{final_model_forward.1} parent=1 // pred_fallthru
      _
    %v443 = vld [vmem:[%s1] sm:$0xff]
    %v444 = vld [vmem:[%s1 + $0x8] sm:$0xff]
    %v445 = vld [vmem:[%s1 + $0x10] sm:$0xff]
    %v446 = vld [vmem:[%s1 + $0x18] sm:$0xff]
    %v447 = vld [vmem:[%s1 + $0x20] sm:$0xff]
    %v448 = vld [vmem:[%s1 + $0x28] sm:$0xff]
    %v449 = vld [vmem:[%s1 + $0x30] sm:$0xff]
    %v450 = vld [vmem:[%s1 + $0x38] sm:$0xff]
    %v451 = vld [vmem:[%s1 + $0x40] sm:$0xff]
    %v452 = vld [vmem:[%s1 + $0x48] sm:$0xff]
    %v453 = vld [vmem:[%s1 + $0x50] sm:$0xff]
    %v454 = vld [vmem:[%s1 + $0x58] sm:$0xff]
    %v455 = vlaneseq
    %v456 = vand.u32 %v455, 127
    %457 = vset.pattern.permute.xlu0 0
    %458 = vperm.xlu0 %457, %v443
    %v459 = vpop.permute.xlu0 %458
    %460 = vset.pattern.permute.xlu0 0
    %461 = vperm.xlu0 %460, %v444
    %v462 = vpop.permute.xlu0 %461
    %463 = vset.pattern.permute.xlu0 0
    %464 = vperm.xlu0 %463, %v445
    %v465 = vpop.permute.xlu0 %464
    %466 = vset.pattern.permute.xlu0 0
    %467 = vperm.xlu0 %466, %v446
    %v468 = vpop.permute.xlu0 %467
    %469 = vset.pattern.permute.xlu0 0
    %470 = vperm.xlu0 %469, %v447
    %v471 = vpop.permute.xlu0 %470
    %472 = vset.pattern.permute.xlu0 0
    %473 = vperm.xlu0 %472, %v448
    %v474 = vpop.permute.xlu0 %473
    %475 = vset.pattern.permute.xlu0 0
    %476 = vperm.xlu0 %475, %v449
    %v477 = vpop.permute.xlu0 %476
    %478 = vset.pattern.permute.xlu0 0
    %479 = vperm.xlu0 %478, %v450
    %v480 = vpop.permute.xlu0 %479
    %481 = vset.pattern.permute.xlu0 0
    %482 = vperm.xlu0 %481, %v451
    %v483 = vpop.permute.xlu0 %482
    %484 = vset.pattern.permute.xlu0 0
    %485 = vperm.xlu0 %484, %v452
    %v486 = vpop.permute.xlu0 %485
    %487 = vset.pattern.permute.xlu0 0
    %488 = vperm.xlu0 %487, %v453
    %v489 = vpop.permute.xlu0 %488
    %490 = vset.pattern.permute.xlu0 0
    %491 = vperm.xlu0 %490, %v454
    %v492 = vpop.permute.xlu0 %491
    %vm493 = vcmp.eq.s32.totalorder %v459, %v456
    %vm494 = vcmp.eq.s32.totalorder %v462, %v456
    %vm495 = vcmp.eq.s32.totalorder %v465, %v456
    %vm496 = vcmp.eq.s32.totalorder %v468, %v456
    %vm497 = vcmp.eq.s32.totalorder %v471, %v456
    %vm498 = vcmp.eq.s32.totalorder %v474, %v456
    %vm499 = vcmp.eq.s32.totalorder %v477, %v456
    %vm500 = vcmp.eq.s32.totalorder %v480, %v456
    %vm501 = vcmp.eq.s32.totalorder %v483, %v456
    %vm502 = vcmp.eq.s32.totalorder %v486, %v456
    %vm503 = vcmp.eq.s32.totalorder %v489, %v456
    %vm504 = vcmp.eq.s32.totalorder %v492, %v456
    %v505 = vsel %vm493, 1.0, 0.0
    %v506 = vsel %vm494, 1.0, 0.0
    %v507 = vsel %vm495, 1.0, 0.0
    %v508 = vsel %vm496, 1.0, 0.0
    %v509 = vsel %vm497, 1.0, 0.0
    %v510 = vsel %vm498, 1.0, 0.0
    %v511 = vsel %vm499, 1.0, 0.0
    %v512 = vsel %vm500, 1.0, 0.0
    %v513 = vsel %vm501, 1.0, 0.0
    %v514 = vsel %vm502, 1.0, 0.0
    %v515 = vsel %vm503, 1.0, 0.0
    %v516 = vsel %vm504, 1.0, 0.0
    %v517 = vld [vmem:[%s5] sm:$0xff]
    %v518 = vld [vmem:[%s5 + $0x8] sm:$0xff]
    %v519 = vld [vmem:[%s5 + $0x10] sm:$0xff]
    %v520 = vld [vmem:[%s5 + $0x18] sm:$0xff]
    %vm521 = vcmask 261120
    %v523 = vsel %vm521, %v505, 0
    %v526 = vsel %vm521, %v506, 0
    %v529 = vsel %vm521, %v507, 0
    %v532 = vsel %vm521, %v508, 0
    %v535 = vsel %vm521, %v509, 0
    %v538 = vsel %vm521, %v510, 0
    %v541 = vsel %vm521, %v511, 0
    %v544 = vsel %vm521, %v512, 0
    %v547 = vsel %vm521, %v513, 0
    %v550 = vsel %vm521, %v514, 0
    %v553 = vsel %vm521, %v515, 0
    %v556 = vsel %vm521, %v516, 0
    %558 = vmatprep.subr.mxu0 0.0
    %559 = vmatpush1.msra.mxu0 0.0
    %560 = vmatprep.subr.mxu0 0.0
    %561 = vmatpush1.msra.mxu0 0.0
    %562 = vmatprep.subr.mxu0 0.0
    %563 = vmatpush1.msra.mxu0 0.0
    %564 = vmatprep.subr.mxu0 0.0
    %565 = vmatpush1.msra.mxu0 0.0
    %566 = vmatprep.subr.mxu0 0.0
    %567 = vmatpush1.msra.mxu0 0.0
    %568 = vmatprep.subr.mxu0 0.0
    %569 = vmatpush1.msra.mxu0 0.0
    %570 = vmatprep.subr.mxu0 0.0
    %571 = vmatpush1.msra.mxu0 0.0
    %572 = vmatprep.subr.mxu0 0.0
    %573 = vmatpush1.msra.mxu0 0.0
    %574 = vmatprep.subr.mxu0 0.0
    %575 = vmatpush1.msra.mxu0 0.0
    %576 = vmatprep.subr.mxu0 0.0
    %577 = vmatpush1.msra.mxu0 0.0
    %578 = vmatprep.subr.mxu0 0.0
    %579 = vmatpush1.msra.mxu0 0.0
    %580 = vmatprep.subr.mxu0 0.0
    %581 = vmatpush1.msra.mxu0 0.0
    %582 = vmatprep.subr.mxu0 0.0
    %583 = vmatpush1.msra.mxu0 %v520
    %584 = vmatprep.subr.mxu0 0.0
    %585 = vmatpush1.msra.mxu0 %v519
    %586 = vmatprep.subr.mxu0 0.0
    %587 = vmatpush1.msra.mxu0 %v518
    %588 = vmatprep.subr.mxu0 0.0
    %589 = vmatpush1.msra.mxu0 %v517
    %590 = vmatprep.subr.mxu0 0.0
    %591 = vmatpush2.msra.mxu0 0.0
    %592 = vmatprep.subr.mxu0 0.0
    %593 = vmatpush2.msra.mxu0 0.0
    %594 = vmatprep.subr.mxu0 0.0
    %595 = vmatpush2.msra.mxu0 0.0
    %596 = vmatprep.subr.mxu0 0.0
    %597 = vmatpush2.msra.mxu0 0.0
    %598 = vmatprep.subr.mxu0 0.0
    %599 = vmatpush2.msra.mxu0 0.0
    %600 = vmatprep.subr.mxu0 0.0
    %601 = vmatpush2.msra.mxu0 0.0
    %602 = vmatprep.subr.mxu0 0.0
    %603 = vmatpush2.msra.mxu0 0.0
    %604 = vmatprep.subr.mxu0 0.0
    %605 = vmatpush2.msra.mxu0 0.0
    %606 = vmatprep.subr.mxu0 0.0
    %607 = vmatpush2.msra.mxu0 0.0
    %608 = vmatprep.subr.mxu0 0.0
    %609 = vmatpush2.msra.mxu0 0.0
    %610 = vmatprep.subr.mxu0 0.0
    %611 = vmatpush2.msra.mxu0 0.0
    %612 = vmatprep.subr.mxu0 0.0
    %613 = vmatpush2.msra.mxu0 0.0
    %614 = vmatprep.subr.mxu0 0.0
    %615 = vmatpush2.msra.mxu0 0.0
    %616 = vmatprep.subr.mxu0 0.0
    %617 = vmatpush2.msra.mxu0 0.0
    %618 = vmatprep.subr.mxu0 0.0
    %619 = vmatpush2.msra.mxu0 0.0
    %620 = vmatprep.subr.mxu0 0.0
    %621 = vmatpush2.msra.mxu0 0.0
    %622 = vmatprep.mubr.f32.mxu0 0.0
    %623 = vmatmul.mubr.f32.gmra.mxu0 %v523
    %v624 = vpop.f32.mrf.mxu0
    %v625 = vadd.f32 0.0, %v624
    %v626 = vpop.f32.mrf.mxu0
    %627 = vmatprep.mubr.f32.mxu0 0.0
    %628 = vmatmul.mubr.f32.gmra.mxu0 %v526
    %v629 = vpop.f32.mrf.mxu0
    %v630 = vadd.f32 0.0, %v629
    %v631 = vpop.f32.mrf.mxu0
    %632 = vmatprep.mubr.f32.mxu0 0.0
    %633 = vmatmul.mubr.f32.gmra.mxu0 %v529
    %v634 = vpop.f32.mrf.mxu0
    %v635 = vadd.f32 0.0, %v634
    %v636 = vpop.f32.mrf.mxu0
    %637 = vmatprep.mubr.f32.mxu0 0.0
    %638 = vmatmul.mubr.f32.gmra.mxu0 %v532
    %v639 = vpop.f32.mrf.mxu0
    %v640 = vadd.f32 0.0, %v639
    %v641 = vpop.f32.mrf.mxu0
    %642 = vmatprep.mubr.f32.mxu0 0.0
    %643 = vmatmul.mubr.f32.gmra.mxu0 %v535
    %v644 = vpop.f32.mrf.mxu0
    %v645 = vadd.f32 0.0, %v644
    %v646 = vpop.f32.mrf.mxu0
    %647 = vmatprep.mubr.f32.mxu0 0.0
    %648 = vmatmul.mubr.f32.gmra.mxu0 %v538
    %v649 = vpop.f32.mrf.mxu0
    %v650 = vadd.f32 0.0, %v649
    %v651 = vpop.f32.mrf.mxu0
    %652 = vmatprep.mubr.f32.mxu0 0.0
    %653 = vmatmul.mubr.f32.gmra.mxu0 %v541
    %v654 = vpop.f32.mrf.mxu0
    %v655 = vadd.f32 0.0, %v654
    %v656 = vpop.f32.mrf.mxu0
    %657 = vmatprep.mubr.f32.mxu0 0.0
    %658 = vmatmul.mubr.f32.gmra.mxu0 %v544
    %v659 = vpop.f32.mrf.mxu0
    %v660 = vadd.f32 0.0, %v659
    %v661 = vpop.f32.mrf.mxu0
    %662 = vmatprep.mubr.f32.mxu0 0.0
    %663 = vmatmul.mubr.f32.gmra.mxu0 %v547
    %v664 = vpop.f32.mrf.mxu0
    %v665 = vadd.f32 0.0, %v664
    %v666 = vpop.f32.mrf.mxu0
    %667 = vmatprep.mubr.f32.mxu0 0.0
    %668 = vmatmul.mubr.f32.gmra.mxu0 %v550
    %v669 = vpop.f32.mrf.mxu0
    %v670 = vadd.f32 0.0, %v669
    %v671 = vpop.f32.mrf.mxu0
    %672 = vmatprep.mubr.f32.mxu0 0.0
    %673 = vmatmul.mubr.f32.gmra.mxu0 %v553
    %v674 = vpop.f32.mrf.mxu0
    %v675 = vadd.f32 0.0, %v674
    %v676 = vpop.f32.mrf.mxu0
    %677 = vmatprep.mubr.f32.mxu0 0.0
    %678 = vmatmul.mubr.f32.gmra.mxu0 %v556
    %v679 = vpop.f32.mrf.mxu0
    %v680 = vadd.f32 0.0, %v679
    %v681 = vpop.f32.mrf.mxu0
    %682 = vdwg.mxu0
    %v683 = vld [vmem:[%s7] sm:$0xff]
    %v684 = vld [vmem:[%s7 + $0x8] sm:$0xff]
    %v685 = vld [vmem:[%s7 + $0x10] sm:$0xff]
    %v686 = vld [vmem:[%s7 + $0x18] sm:$0xff]
    %v687 = vld [vmem:[%s7 + $0x20] sm:$0xff]
    %v688 = vld [vmem:[%s7 + $0x28] sm:$0xff]
    %v689 = vld [vmem:[%s7 + $0x30] sm:$0xff]
    %v690 = vld [vmem:[%s7 + $0x38] sm:$0xff]
    %v691 = vld [vmem:[%s7 + $0x40] sm:$0xff]
    %v692 = vld [vmem:[%s7 + $0x48] sm:$0xff]
    %v693 = vld [vmem:[%s7 + $0x50] sm:$0xff]
    %v694 = vld [vmem:[%s7 + $0x58] sm:$0xff]
    %v695 = vld [vmem:[%s19] sm:$0xff]
    %v696 = vld [vmem:[%s19 + $0x8] sm:$0xff]
    %v697 = vld [vmem:[%s19 + $0x10] sm:$0xff]
    %v698 = vld [vmem:[%s19 + $0x18] sm:$0xff]
    %v699 = vld [vmem:[%s21] sm:$0x1]
    %v700 = vld [vmem:[%s23] sm:$0xff]
    %v701 = vld [vmem:[%s23 + $0x8] sm:$0xff]
    %v702 = vld [vmem:[%s23 + $0x10] sm:$0xff]
    %v703 = vld [vmem:[%s23 + $0x18] sm:$0xff]
    %v704 = vld [vmem:[%s23 + $0x20] sm:$0xff]
    %v705 = vld [vmem:[%s23 + $0x28] sm:$0xff]
    %v706 = vld [vmem:[%s23 + $0x30] sm:$0xff]
    %v707 = vld [vmem:[%s23 + $0x38] sm:$0xff]
    %v708 = vld [vmem:[%s23 + $0x40] sm:$0xff]
    %v709 = vld [vmem:[%s23 + $0x48] sm:$0xff]
    %v710 = vld [vmem:[%s23 + $0x50] sm:$0xff]
    %v711 = vld [vmem:[%s23 + $0x58] sm:$0xff]
    %v712 = vld [vmem:[#allocation3] sm:$0x1]
    %v713 = vld [vmem:[%s27] sm:$0xff]
    %v714 = vld [vmem:[%s27 + $0x8] sm:$0xff]
    %v715 = vld [vmem:[%s27 + $0x10] sm:$0xff]
    %v716 = vld [vmem:[%s27 + $0x18] sm:$0xff]
    %v717 = vld [vmem:[%s27 + $0x20] sm:$0xff]
    %v718 = vld [vmem:[%s27 + $0x28] sm:$0xff]
    %v719 = vld [vmem:[%s27 + $0x30] sm:$0xff]
    %v720 = vld [vmem:[%s27 + $0x38] sm:$0xff]
    %v721 = vld [vmem:[%s27 + $0x40] sm:$0xff]
    %v722 = vld [vmem:[%s27 + $0x48] sm:$0xff]
    %v723 = vld [vmem:[%s27 + $0x50] sm:$0xff]
    %v724 = vld [vmem:[%s27 + $0x58] sm:$0xff]
    %v725 = vld [vmem:[%s27 + $0x60] sm:$0xff]
    %v726 = vld [vmem:[%s27 + $0x68] sm:$0xff]
    %v727 = vld [vmem:[%s27 + $0x70] sm:$0xff]
    %v728 = vld [vmem:[%s27 + $0x78] sm:$0xff]
    %v729 = vld [vmem:[%s27 + $0x80] sm:$0xff]
    %v730 = vld [vmem:[%s27 + $0x88] sm:$0xff]
    %v731 = vld [vmem:[%s27 + $0x90] sm:$0xff]
    %v732 = vld [vmem:[%s27 + $0x98] sm:$0xff]
    %v733 = vld [vmem:[#allocation5] sm:$0x1]
    %v734 = vld [vmem:[#allocation7] sm:$0xff]
    %v735 = vld [vmem:[#allocation7 + $0x8] sm:$0xff]
    %v736 = vld [vmem:[#allocation7 + $0x10] sm:$0xff]
    %v737 = vld [vmem:[#allocation7 + $0x18] sm:$0xff]
    %v738 = vld [vmem:[#allocation8] sm:$0x1]
    %v740 = vlaneseq
    %v741 = vshrl.u32 %v740, 7
    %v742 = vsub.s32 0, %v741
    %v743 = vrot.slane %v699, %v742
    %v746 = vsel %vm521, %v625, 0
    %v749 = vsel %vm521, %v630, 0
    %v752 = vsel %vm521, %v635, 0
    %v755 = vsel %vm521, %v640, 0
    %v758 = vsel %vm521, %v645, 0
    %v761 = vsel %vm521, %v650, 0
    %v764 = vsel %vm521, %v655, 0
    %v767 = vsel %vm521, %v660, 0
    %v770 = vsel %vm521, %v665, 0
    %v773 = vsel %vm521, %v670, 0
    %v776 = vsel %vm521, %v675, 0
    %v779 = vsel %vm521, %v680, 0
    %781 = vmatprep.subr.mxu0 0.0
    %782 = vmatpush1.msra.mxu0 0.0
    %783 = vmatprep.subr.mxu0 0.0
    %784 = vmatpush1.msra.mxu0 0.0
    %785 = vmatprep.subr.mxu0 0.0
    %786 = vmatpush1.msra.mxu0 0.0
    %787 = vmatprep.subr.mxu0 0.0
    %788 = vmatpush1.msra.mxu0 0.0
    %789 = vmatprep.subr.mxu0 0.0
    %790 = vmatpush1.msra.mxu0 0.0
    %791 = vmatprep.subr.mxu0 0.0
    %792 = vmatpush1.msra.mxu0 0.0
    %793 = vmatprep.subr.mxu0 0.0
    %794 = vmatpush1.msra.mxu0 0.0
    %795 = vmatprep.subr.mxu0 0.0
    %796 = vmatpush1.msra.mxu0 0.0
    %797 = vmatprep.subr.mxu0 0.0
    %798 = vmatpush1.msra.mxu0 0.0
    %799 = vmatprep.subr.mxu0 0.0
    %800 = vmatpush1.msra.mxu0 0.0
    %801 = vmatprep.subr.mxu0 0.0
    %802 = vmatpush1.msra.mxu0 0.0
    %803 = vmatprep.subr.mxu0 0.0
    %804 = vmatpush1.msra.mxu0 0.0
    %805 = vmatprep.subr.mxu0 0.0
    %806 = vmatpush1.msra.mxu0 %v698
    %807 = vmatprep.subr.mxu0 0.0
    %808 = vmatpush1.msra.mxu0 %v697
    %809 = vmatprep.subr.mxu0 0.0
    %810 = vmatpush1.msra.mxu0 %v696
    %811 = vmatprep.subr.mxu0 0.0
    %812 = vmatpush1.msra.mxu0 %v695
    %813 = vmatprep.subr.mxu0 0.0
    %814 = vmatpush2.msra.mxu0 0.0
    %815 = vmatprep.subr.mxu0 0.0
    %816 = vmatpush2.msra.mxu0 0.0
    %817 = vmatprep.subr.mxu0 0.0
    %818 = vmatpush2.msra.mxu0 0.0
    %819 = vmatprep.subr.mxu0 0.0
    %820 = vmatpush2.msra.mxu0 0.0
    %821 = vmatprep.subr.mxu0 0.0
    %822 = vmatpush2.msra.mxu0 0.0
    %823 = vmatprep.subr.mxu0 0.0
    %824 = vmatpush2.msra.mxu0 0.0
    %825 = vmatprep.subr.mxu0 0.0
    %826 = vmatpush2.msra.mxu0 0.0
    %827 = vmatprep.subr.mxu0 0.0
    %828 = vmatpush2.msra.mxu0 0.0
    %829 = vmatprep.subr.mxu0 0.0
    %830 = vmatpush2.msra.mxu0 0.0
    %831 = vmatprep.subr.mxu0 0.0
    %832 = vmatpush2.msra.mxu0 0.0
    %833 = vmatprep.subr.mxu0 0.0
    %834 = vmatpush2.msra.mxu0 0.0
    %835 = vmatprep.subr.mxu0 0.0
    %836 = vmatpush2.msra.mxu0 0.0
    %837 = vmatprep.subr.mxu0 0.0
    %838 = vmatpush2.msra.mxu0 0.0
    %839 = vmatprep.subr.mxu0 0.0
    %840 = vmatpush2.msra.mxu0 0.0
    %841 = vmatprep.subr.mxu0 0.0
    %842 = vmatpush2.msra.mxu0 0.0
    %843 = vmatprep.subr.mxu0 0.0
    %844 = vmatpush2.msra.mxu0 0.0
    %845 = vmatprep.mubr.f32.mxu0 0.0
    %846 = vmatmul.mubr.f32.gmra.mxu0 %v746
    %v847 = vpop.f32.mrf.mxu0
    %v848 = vadd.f32 %v743, %v847
    %v849 = vpop.f32.mrf.mxu0
    %850 = vmatprep.mubr.f32.mxu0 0.0
    %851 = vmatmul.mubr.f32.gmra.mxu0 %v749
    %v852 = vpop.f32.mrf.mxu0
    %v853 = vadd.f32 %v743, %v852
    %v854 = vpop.f32.mrf.mxu0
    %855 = vmatprep.mubr.f32.mxu0 0.0
    %856 = vmatmul.mubr.f32.gmra.mxu0 %v752
    %v857 = vpop.f32.mrf.mxu0
    %v858 = vadd.f32 %v743, %v857
    %v859 = vpop.f32.mrf.mxu0
    %860 = vmatprep.mubr.f32.mxu0 0.0
    %861 = vmatmul.mubr.f32.gmra.mxu0 %v755
    %v862 = vpop.f32.mrf.mxu0
    %v863 = vadd.f32 %v743, %v862
    %v864 = vpop.f32.mrf.mxu0
    %865 = vmatprep.mubr.f32.mxu0 0.0
    %866 = vmatmul.mubr.f32.gmra.mxu0 %v758
    %v867 = vpop.f32.mrf.mxu0
    %v868 = vadd.f32 %v743, %v867
    %v869 = vpop.f32.mrf.mxu0
    %870 = vmatprep.mubr.f32.mxu0 0.0
    %871 = vmatmul.mubr.f32.gmra.mxu0 %v761
    %v872 = vpop.f32.mrf.mxu0
    %v873 = vadd.f32 %v743, %v872
    %v874 = vpop.f32.mrf.mxu0
    %875 = vmatprep.mubr.f32.mxu0 0.0
    %876 = vmatmul.mubr.f32.gmra.mxu0 %v764
    %v877 = vpop.f32.mrf.mxu0
    %v878 = vadd.f32 %v743, %v877
    %v879 = vpop.f32.mrf.mxu0
    %880 = vmatprep.mubr.f32.mxu0 0.0
    %881 = vmatmul.mubr.f32.gmra.mxu0 %v767
    %v882 = vpop.f32.mrf.mxu0
    %v883 = vadd.f32 %v743, %v882
    %v884 = vpop.f32.mrf.mxu0
    %885 = vmatprep.mubr.f32.mxu0 0.0
    %886 = vmatmul.mubr.f32.gmra.mxu0 %v770
    %v887 = vpop.f32.mrf.mxu0
    %v888 = vadd.f32 %v743, %v887
    %v889 = vpop.f32.mrf.mxu0
    %890 = vmatprep.mubr.f32.mxu0 0.0
    %891 = vmatmul.mubr.f32.gmra.mxu0 %v773
    %v892 = vpop.f32.mrf.mxu0
    %v893 = vadd.f32 %v743, %v892
    %v894 = vpop.f32.mrf.mxu0
    %895 = vmatprep.mubr.f32.mxu0 0.0
    %896 = vmatmul.mubr.f32.gmra.mxu0 %v776
    %v897 = vpop.f32.mrf.mxu0
    %v898 = vadd.f32 %v743, %v897
    %v899 = vpop.f32.mrf.mxu0
    %900 = vmatprep.mubr.f32.mxu0 0.0
    %901 = vmatmul.mubr.f32.gmra.mxu0 %v779
    %v902 = vpop.f32.mrf.mxu0
    %v903 = vadd.f32 %v743, %v902
    %v904 = vpop.f32.mrf.mxu0
    %905 = vdwg.mxu0
    %v906 = vmax.f32 %v848, 0.0
    %v907 = vmax.f32 %v853, 0.0
    %v908 = vmax.f32 %v858, 0.0
    %v909 = vmax.f32 %v863, 0.0
    %v910 = vmax.f32 %v868, 0.0
    %v911 = vmax.f32 %v873, 0.0
    %v912 = vmax.f32 %v878, 0.0
    %v913 = vmax.f32 %v883, 0.0
    %v914 = vmax.f32 %v888, 0.0
    %v915 = vmax.f32 %v893, 0.0
    %v916 = vmax.f32 %v898, 0.0
    %v917 = vmax.f32 %v903, 0.0
    %vm918 = vcmp.lt.s32.totalorder %v683, 15
    %vm919 = vcmp.lt.s32.totalorder %v684, 15
    %vm920 = vcmp.lt.s32.totalorder %v685, 15
    %vm921 = vcmp.lt.s32.totalorder %v686, 15
    %vm922 = vcmp.lt.s32.totalorder %v687, 15
    %vm923 = vcmp.lt.s32.totalorder %v688, 15
    %vm924 = vcmp.lt.s32.totalorder %v689, 15
    %vm925 = vcmp.lt.s32.totalorder %v690, 15
    %vm926 = vcmp.lt.s32.totalorder %v691, 15
    %vm927 = vcmp.lt.s32.totalorder %v692, 15
    %vm928 = vcmp.lt.s32.totalorder %v693, 15
    %vm929 = vcmp.lt.s32.totalorder %v694, 15
    %v930 = vsel %vm918, 1.0, 0.0
    %v931 = vsel %vm919, 1.0, 0.0
    %v932 = vsel %vm920, 1.0, 0.0
    %v933 = vsel %vm921, 1.0, 0.0
    %v934 = vsel %vm922, 1.0, 0.0
    %v935 = vsel %vm923, 1.0, 0.0
    %v936 = vsel %vm924, 1.0, 0.0
    %v937 = vsel %vm925, 1.0, 0.0
    %v938 = vsel %vm926, 1.0, 0.0
    %v939 = vsel %vm927, 1.0, 0.0
    %v940 = vsel %vm928, 1.0, 0.0
    %v941 = vsel %vm929, 1.0, 0.0
    %943 = vset.pattern.permute.xlu0 0
    %944 = vperm.xlu0 %943, %v930
    %v945 = vpop.permute.xlu0 %944
    %948 = vset.pattern.permute.xlu0 0
    %949 = vperm.xlu0 %948, %v931
    %v950 = vpop.permute.xlu0 %949
    %953 = vset.pattern.permute.xlu0 0
    %954 = vperm.xlu0 %953, %v932
    %v955 = vpop.permute.xlu0 %954
    %958 = vset.pattern.permute.xlu0 0
    %959 = vperm.xlu0 %958, %v933
    %v960 = vpop.permute.xlu0 %959
    %963 = vset.pattern.permute.xlu0 0
    %964 = vperm.xlu0 %963, %v934
    %v965 = vpop.permute.xlu0 %964
    %968 = vset.pattern.permute.xlu0 0
    %969 = vperm.xlu0 %968, %v935
    %v970 = vpop.permute.xlu0 %969
    %973 = vset.pattern.permute.xlu0 0
    %974 = vperm.xlu0 %973, %v936
    %v975 = vpop.permute.xlu0 %974
    %978 = vset.pattern.permute.xlu0 0
    %979 = vperm.xlu0 %978, %v937
    %v980 = vpop.permute.xlu0 %979
    %983 = vset.pattern.permute.xlu0 0
    %984 = vperm.xlu0 %983, %v938
    %v985 = vpop.permute.xlu0 %984
    %988 = vset.pattern.permute.xlu0 0
    %989 = vperm.xlu0 %988, %v939
    %v990 = vpop.permute.xlu0 %989
    %993 = vset.pattern.permute.xlu0 0
    %994 = vperm.xlu0 %993, %v940
    %v995 = vpop.permute.xlu0 %994
    %998 = vset.pattern.permute.xlu0 0
    %999 = vperm.xlu0 %998, %v941
    %v1000 = vpop.permute.xlu0 %999
    %v1002 = vmul.f32 %v906, %v945
    %v1003 = vmul.f32 %v907, %v950
    %v1004 = vmul.f32 %v908, %v955
    %v1005 = vmul.f32 %v909, %v960
    %v1006 = vmul.f32 %v910, %v965
    %v1007 = vmul.f32 %v911, %v970
    %v1008 = vmul.f32 %v912, %v975
    %v1009 = vmul.f32 %v913, %v980
    %v1010 = vmul.f32 %v914, %v985
    %v1011 = vmul.f32 %v915, %v990
    %v1012 = vmul.f32 %v916, %v995
    %v1013 = vmul.f32 %v917, %v1000
    %vm1026 = vcmask 1040384
    %v1027 = vrot.slane %v1002, 7
    %v1028 = vrot.slane %v1003, 7
    %v1029 = vsel %vm1026, %v1027, %v1028
    %v1030 = vrot.slane %v1004, 7
    %v1031 = vsel %vm1026, %v1028, %v1030
    %v1032 = vrot.slane %v1005, 7
    %v1033 = vsel %vm1026, %v1030, %v1032
    %v1034 = vrot.slane %v1006, 7
    %v1035 = vsel %vm1026, %v1032, %v1034
    %v1036 = vrot.slane %v1007, 7
    %v1037 = vsel %vm1026, %v1034, %v1036
    %v1038 = vrot.slane %v1008, 7
    %v1039 = vsel %vm1026, %v1036, %v1038
    %v1040 = vrot.slane %v1009, 7
    %v1041 = vsel %vm1026, %v1038, %v1040
    %v1042 = vrot.slane %v1010, 7
    %v1043 = vsel %vm1026, %v1040, %v1042
    %v1044 = vrot.slane %v1011, 7
    %v1045 = vsel %vm1026, %v1042, %v1044
    %v1046 = vrot.slane %v1012, 7
    %v1047 = vsel %vm1026, %v1044, %v1046
    %v1048 = vrot.slane %v1013, 7
    %v1049 = vsel %vm1026, %v1046, %v1048
    %1050 = vrot.lane.b32.xlu0 %v1027, 96
    %v1051 = vpop.permute.xlu0 %1050
    %1052 = vrot.lane.b32.xlu0 %v1029, 96
    %v1053 = vpop.permute.xlu0 %1052
    %1054 = vrot.lane.b32.xlu0 %v1031, 96
    %v1055 = vpop.permute.xlu0 %1054
    %1056 = vrot.lane.b32.xlu0 %v1033, 96
    %v1057 = vpop.permute.xlu0 %1056
    %1058 = vrot.lane.b32.xlu0 %v1035, 96
    %v1059 = vpop.permute.xlu0 %1058
    %1060 = vrot.lane.b32.xlu0 %v1037, 96
    %v1061 = vpop.permute.xlu0 %1060
    %1062 = vrot.lane.b32.xlu0 %v1039, 96
    %v1063 = vpop.permute.xlu0 %1062
    %1064 = vrot.lane.b32.xlu0 %v1041, 96
    %v1065 = vpop.permute.xlu0 %1064
    %1066 = vrot.lane.b32.xlu0 %v1043, 96
    %v1067 = vpop.permute.xlu0 %1066
    %1068 = vrot.lane.b32.xlu0 %v1045, 96
    %v1069 = vpop.permute.xlu0 %1068
    %1070 = vrot.lane.b32.xlu0 %v1047, 96
    %v1071 = vpop.permute.xlu0 %1070
    %1072 = vrot.lane.b32.xlu0 %v1049, 96
    %v1073 = vpop.permute.xlu0 %1072
    %v1086 = vsel %vm1026, 0.0, %v1051
    %vm1087 = vcmask 1046528
    %v1088 = vrot.slane %v1002, 1
    %v1089 = vrot.slane %v1003, 1
    %v1090 = vsel %vm1087, %v1088, %v1089
    %v1091 = vrot.slane %v1004, 1
    %v1092 = vsel %vm1087, %v1089, %v1091
    %v1093 = vrot.slane %v1005, 1
    %v1094 = vsel %vm1087, %v1091, %v1093
    %v1095 = vrot.slane %v1006, 1
    %v1096 = vsel %vm1087, %v1093, %v1095
    %v1097 = vrot.slane %v1007, 1
    %v1098 = vsel %vm1087, %v1095, %v1097
    %v1099 = vrot.slane %v1008, 1
    %v1100 = vsel %vm1087, %v1097, %v1099
    %v1101 = vrot.slane %v1009, 1
    %v1102 = vsel %vm1087, %v1099, %v1101
    %v1103 = vrot.slane %v1010, 1
    %v1104 = vsel %vm1087, %v1101, %v1103
    %v1105 = vrot.slane %v1011, 1
    %v1106 = vsel %vm1087, %v1103, %v1105
    %v1107 = vrot.slane %v1012, 1
    %v1108 = vsel %vm1087, %v1105, %v1107
    %v1109 = vrot.slane %v1013, 1
    %v1110 = vsel %vm1087, %v1107, %v1109
    %v1112 = vsel %vm1087, %v1109, 0.0
    %1114 = vrot.lane.b32.xlu0 %v1090, 32
    %v1115 = vpop.permute.xlu0 %1114
    %1116 = vrot.lane.b32.xlu0 %v1092, 32
    %v1117 = vpop.permute.xlu0 %1116
    %1118 = vrot.lane.b32.xlu0 %v1094, 32
    %v1119 = vpop.permute.xlu0 %1118
    %1120 = vrot.lane.b32.xlu0 %v1096, 32
    %v1121 = vpop.permute.xlu0 %1120
    %1122 = vrot.lane.b32.xlu0 %v1098, 32
    %v1123 = vpop.permute.xlu0 %1122
    %1124 = vrot.lane.b32.xlu0 %v1100, 32
    %v1125 = vpop.permute.xlu0 %1124
    %1126 = vrot.lane.b32.xlu0 %v1102, 32
    %v1127 = vpop.permute.xlu0 %1126
    %1128 = vrot.lane.b32.xlu0 %v1104, 32
    %v1129 = vpop.permute.xlu0 %1128
    %1130 = vrot.lane.b32.xlu0 %v1106, 32
    %v1131 = vpop.permute.xlu0 %1130
    %1132 = vrot.lane.b32.xlu0 %v1108, 32
    %v1133 = vpop.permute.xlu0 %1132
    %1134 = vrot.lane.b32.xlu0 %v1110, 32
    %v1135 = vpop.permute.xlu0 %1134
    %1136 = vrot.lane.b32.xlu0 %v1112, 32
    %v1137 = vpop.permute.xlu0 %1136
    %v1150 = vsel %vm521, %v1086, %v1002
    %v1151 = vsel %vm521, %v1053, %v1003
    %v1152 = vsel %vm521, %v1055, %v1004
    %v1153 = vsel %vm521, %v1057, %v1005
    %v1154 = vsel %vm521, %v1059, %v1006
    %v1155 = vsel %vm521, %v1061, %v1007
    %v1156 = vsel %vm521, %v1063, %v1008
    %v1157 = vsel %vm521, %v1065, %v1009
    %v1158 = vsel %vm521, %v1067, %v1010
    %v1159 = vsel %vm521, %v1069, %v1011
    %v1160 = vsel %vm521, %v1071, %v1012
    %v1161 = vsel %vm521, %v1073, %v1013
    %vm1162 = vcmask 523264
    %v1163 = vsel %vm1162, %v1150, %v1115
    %v1164 = vsel %vm1162, %v1151, %v1117
    %v1165 = vsel %vm1162, %v1152, %v1119
    %v1166 = vsel %vm1162, %v1153, %v1121
    %v1167 = vsel %vm1162, %v1154, %v1123
    %v1168 = vsel %vm1162, %v1155, %v1125
    %v1169 = vsel %vm1162, %v1156, %v1127
    %v1170 = vsel %vm1162, %v1157, %v1129
    %v1171 = vsel %vm1162, %v1158, %v1131
    %v1172 = vsel %vm1162, %v1159, %v1133
    %v1173 = vsel %vm1162, %v1160, %v1135
    %v1174 = vsel %vm1162, %v1161, %v1137
    %v1176 = vlaneseq
    %v1177 = vshrl.u32 %v1176, 7
    %v1178 = vsub.s32 0, %v1177
    %v1179 = vrot.slane %v712, %v1178
    %vm1181 = vcmask 785408
    %v1183 = vsel %vm1181, %v1163, 0
    %v1186 = vsel %vm1181, %v1164, 0
    %v1189 = vsel %vm1181, %v1165, 0
    %v1192 = vsel %vm1181, %v1166, 0
    %v1195 = vsel %vm1181, %v1167, 0
    %v1198 = vsel %vm1181, %v1168, 0
    %v1201 = vsel %vm1181, %v1169, 0
    %v1204 = vsel %vm1181, %v1170, 0
    %v1207 = vsel %vm1181, %v1171, 0
    %v1210 = vsel %vm1181, %v1172, 0
    %v1213 = vsel %vm1181, %v1173, 0
    %v1216 = vsel %vm1181, %v1174, 0
    %1218 = vmatprep.subr.mxu0 0.0
    %1219 = vmatpush1.msra.mxu0 0.0
    %1220 = vmatprep.subr.mxu0 0.0
    %1221 = vmatpush1.msra.mxu0 0.0
    %1222 = vmatprep.subr.mxu0 0.0
    %1223 = vmatpush1.msra.mxu0 0.0
    %1224 = vmatprep.subr.mxu0 0.0
    %1225 = vmatpush1.msra.mxu0 0.0
    %1226 = vmatprep.subr.mxu0 0.0
    %1227 = vmatpush1.msra.mxu0 %v711
    %1228 = vmatprep.subr.mxu0 0.0
    %1229 = vmatpush1.msra.mxu0 %v710
    %1230 = vmatprep.subr.mxu0 0.0
    %1231 = vmatpush1.msra.mxu0 %v709
    %1232 = vmatprep.subr.mxu0 0.0
    %1233 = vmatpush1.msra.mxu0 %v708
    %1234 = vmatprep.subr.mxu0 0.0
    %1235 = vmatpush1.msra.mxu0 %v707
    %1236 = vmatprep.subr.mxu0 0.0
    %1237 = vmatpush1.msra.mxu0 %v706
    %1238 = vmatprep.subr.mxu0 0.0
    %1239 = vmatpush1.msra.mxu0 %v705
    %1240 = vmatprep.subr.mxu0 0.0
    %1241 = vmatpush1.msra.mxu0 %v704
    %1242 = vmatprep.subr.mxu0 0.0
    %1243 = vmatpush1.msra.mxu0 %v703
    %1244 = vmatprep.subr.mxu0 0.0
    %1245 = vmatpush1.msra.mxu0 %v702
    %1246 = vmatprep.subr.mxu0 0.0
    %1247 = vmatpush1.msra.mxu0 %v701
    %1248 = vmatprep.subr.mxu0 0.0
    %1249 = vmatpush1.msra.mxu0 %v700
    %1250 = vmatprep.subr.mxu0 0.0
    %1251 = vmatpush2.msra.mxu0 0.0
    %1252 = vmatprep.subr.mxu0 0.0
    %1253 = vmatpush2.msra.mxu0 0.0
    %1254 = vmatprep.subr.mxu0 0.0
    %1255 = vmatpush2.msra.mxu0 0.0
    %1256 = vmatprep.subr.mxu0 0.0
    %1257 = vmatpush2.msra.mxu0 0.0
    %1258 = vmatprep.subr.mxu0 0.0
    %1259 = vmatpush2.msra.mxu0 0.0
    %1260 = vmatprep.subr.mxu0 0.0
    %1261 = vmatpush2.msra.mxu0 0.0
    %1262 = vmatprep.subr.mxu0 0.0
    %1263 = vmatpush2.msra.mxu0 0.0
    %1264 = vmatprep.subr.mxu0 0.0
    %1265 = vmatpush2.msra.mxu0 0.0
    %1266 = vmatprep.subr.mxu0 0.0
    %1267 = vmatpush2.msra.mxu0 0.0
    %1268 = vmatprep.subr.mxu0 0.0
    %1269 = vmatpush2.msra.mxu0 0.0
    %1270 = vmatprep.subr.mxu0 0.0
    %1271 = vmatpush2.msra.mxu0 0.0
    %1272 = vmatprep.subr.mxu0 0.0
    %1273 = vmatpush2.msra.mxu0 0.0
    %1274 = vmatprep.subr.mxu0 0.0
    %1275 = vmatpush2.msra.mxu0 0.0
    %1276 = vmatprep.subr.mxu0 0.0
    %1277 = vmatpush2.msra.mxu0 0.0
    %1278 = vmatprep.subr.mxu0 0.0
    %1279 = vmatpush2.msra.mxu0 0.0
    %1280 = vmatprep.subr.mxu0 0.0
    %1281 = vmatpush2.msra.mxu0 0.0
    %1282 = vmatprep.mubr.f32.mxu0 0.0
    %1283 = vmatmul.mubr.f32.gmra.mxu0 %v1183
    %v1284 = vpop.f32.mrf.mxu0
    %v1285 = vadd.f32 %v1179, %v1284
    %v1286 = vpop.f32.mrf.mxu0
    %1287 = vmatprep.mubr.f32.mxu0 0.0
    %1288 = vmatmul.mubr.f32.gmra.mxu0 %v1186
    %v1289 = vpop.f32.mrf.mxu0
    %v1290 = vadd.f32 %v1179, %v1289
    %v1291 = vpop.f32.mrf.mxu0
    %1292 = vmatprep.mubr.f32.mxu0 0.0
    %1293 = vmatmul.mubr.f32.gmra.mxu0 %v1189
    %v1294 = vpop.f32.mrf.mxu0
    %v1295 = vadd.f32 %v1179, %v1294
    %v1296 = vpop.f32.mrf.mxu0
    %1297 = vmatprep.mubr.f32.mxu0 0.0
    %1298 = vmatmul.mubr.f32.gmra.mxu0 %v1192
    %v1299 = vpop.f32.mrf.mxu0
    %v1300 = vadd.f32 %v1179, %v1299
    %v1301 = vpop.f32.mrf.mxu0
    %1302 = vmatprep.mubr.f32.mxu0 0.0
    %1303 = vmatmul.mubr.f32.gmra.mxu0 %v1195
    %v1304 = vpop.f32.mrf.mxu0
    %v1305 = vadd.f32 %v1179, %v1304
    %v1306 = vpop.f32.mrf.mxu0
    %1307 = vmatprep.mubr.f32.mxu0 0.0
    %1308 = vmatmul.mubr.f32.gmra.mxu0 %v1198
    %v1309 = vpop.f32.mrf.mxu0
    %v1310 = vadd.f32 %v1179, %v1309
    %v1311 = vpop.f32.mrf.mxu0
    %1312 = vmatprep.mubr.f32.mxu0 0.0
    %1313 = vmatmul.mubr.f32.gmra.mxu0 %v1201
    %v1314 = vpop.f32.mrf.mxu0
    %v1315 = vadd.f32 %v1179, %v1314
    %v1316 = vpop.f32.mrf.mxu0
    %1317 = vmatprep.mubr.f32.mxu0 0.0
    %1318 = vmatmul.mubr.f32.gmra.mxu0 %v1204
    %v1319 = vpop.f32.mrf.mxu0
    %v1320 = vadd.f32 %v1179, %v1319
    %v1321 = vpop.f32.mrf.mxu0
    %1322 = vmatprep.mubr.f32.mxu0 0.0
    %1323 = vmatmul.mubr.f32.gmra.mxu0 %v1207
    %v1324 = vpop.f32.mrf.mxu0
    %v1325 = vadd.f32 %v1179, %v1324
    %v1326 = vpop.f32.mrf.mxu0
    %1327 = vmatprep.mubr.f32.mxu0 0.0
    %1328 = vmatmul.mubr.f32.gmra.mxu0 %v1210
    %v1329 = vpop.f32.mrf.mxu0
    %v1330 = vadd.f32 %v1179, %v1329
    %v1331 = vpop.f32.mrf.mxu0
    %1332 = vmatprep.mubr.f32.mxu0 0.0
    %1333 = vmatmul.mubr.f32.gmra.mxu0 %v1213
    %v1334 = vpop.f32.mrf.mxu0
    %v1335 = vadd.f32 %v1179, %v1334
    %v1336 = vpop.f32.mrf.mxu0
    %1337 = vmatprep.mubr.f32.mxu0 0.0
    %1338 = vmatmul.mubr.f32.gmra.mxu0 %v1216
    %v1339 = vpop.f32.mrf.mxu0
    %v1340 = vadd.f32 %v1179, %v1339
    %v1341 = vpop.f32.mrf.mxu0
    %1342 = vdwg.mxu0
    %v1343 = vmax.f32 %v1285, 0.0
    %v1344 = vmax.f32 %v1290, 0.0
    %v1345 = vmax.f32 %v1295, 0.0
    %v1346 = vmax.f32 %v1300, 0.0
    %v1347 = vmax.f32 %v1305, 0.0
    %v1348 = vmax.f32 %v1310, 0.0
    %v1349 = vmax.f32 %v1315, 0.0
    %v1350 = vmax.f32 %v1320, 0.0
    %v1351 = vmax.f32 %v1325, 0.0
    %v1352 = vmax.f32 %v1330, 0.0
    %v1353 = vmax.f32 %v1335, 0.0
    %v1354 = vmax.f32 %v1340, 0.0
    %vm1355 = vcmask 1041408
    %v1356 = vrot.slane %v1002, 6
    %v1357 = vrot.slane %v1003, 6
    %v1358 = vsel %vm1355, %v1356, %v1357
    %v1359 = vrot.slane %v1004, 6
    %v1360 = vsel %vm1355, %v1357, %v1359
    %v1361 = vrot.slane %v1005, 6
    %v1362 = vsel %vm1355, %v1359, %v1361
    %v1363 = vrot.slane %v1006, 6
    %v1364 = vsel %vm1355, %v1361, %v1363
    %v1365 = vrot.slane %v1007, 6
    %v1366 = vsel %vm1355, %v1363, %v1365
    %v1367 = vrot.slane %v1008, 6
    %v1368 = vsel %vm1355, %v1365, %v1367
    %v1369 = vrot.slane %v1009, 6
    %v1370 = vsel %vm1355, %v1367, %v1369
    %v1371 = vrot.slane %v1010, 6
    %v1372 = vsel %vm1355, %v1369, %v1371
    %v1373 = vrot.slane %v1011, 6
    %v1374 = vsel %vm1355, %v1371, %v1373
    %v1375 = vrot.slane %v1012, 6
    %v1376 = vsel %vm1355, %v1373, %v1375
    %v1377 = vrot.slane %v1013, 6
    %v1378 = vsel %vm1355, %v1375, %v1377
    %1379 = vrot.lane.b32.xlu0 %v1356, 64
    %v1380 = vpop.permute.xlu0 %1379
    %1381 = vrot.lane.b32.xlu0 %v1358, 64
    %v1382 = vpop.permute.xlu0 %1381
    %1383 = vrot.lane.b32.xlu0 %v1360, 64
    %v1384 = vpop.permute.xlu0 %1383
    %1385 = vrot.lane.b32.xlu0 %v1362, 64
    %v1386 = vpop.permute.xlu0 %1385
    %1387 = vrot.lane.b32.xlu0 %v1364, 64
    %v1388 = vpop.permute.xlu0 %1387
    %1389 = vrot.lane.b32.xlu0 %v1366, 64
    %v1390 = vpop.permute.xlu0 %1389
    %1391 = vrot.lane.b32.xlu0 %v1368, 64
    %v1392 = vpop.permute.xlu0 %1391
    %1393 = vrot.lane.b32.xlu0 %v1370, 64
    %v1394 = vpop.permute.xlu0 %1393
    %1395 = vrot.lane.b32.xlu0 %v1372, 64
    %v1396 = vpop.permute.xlu0 %1395
    %1397 = vrot.lane.b32.xlu0 %v1374, 64
    %v1398 = vpop.permute.xlu0 %1397
    %1399 = vrot.lane.b32.xlu0 %v1376, 64
    %v1400 = vpop.permute.xlu0 %1399
    %1401 = vrot.lane.b32.xlu0 %v1378, 64
    %v1402 = vpop.permute.xlu0 %1401
    %v1415 = vsel %vm1355, 0.0, %v1380
    %1416 = vrot.lane.b32.xlu0 %v1027, 64
    %v1417 = vpop.permute.xlu0 %1416
    %1418 = vrot.lane.b32.xlu0 %v1029, 64
    %v1419 = vpop.permute.xlu0 %1418
    %1420 = vrot.lane.b32.xlu0 %v1031, 64
    %v1421 = vpop.permute.xlu0 %1420
    %1422 = vrot.lane.b32.xlu0 %v1033, 64
    %v1423 = vpop.permute.xlu0 %1422
    %1424 = vrot.lane.b32.xlu0 %v1035, 64
    %v1425 = vpop.permute.xlu0 %1424
    %1426 = vrot.lane.b32.xlu0 %v1037, 64
    %v1427 = vpop.permute.xlu0 %1426
    %1428 = vrot.lane.b32.xlu0 %v1039, 64
    %v1429 = vpop.permute.xlu0 %1428
    %1430 = vrot.lane.b32.xlu0 %v1041, 64
    %v1431 = vpop.permute.xlu0 %1430
    %1432 = vrot.lane.b32.xlu0 %v1043, 64
    %v1433 = vpop.permute.xlu0 %1432
    %1434 = vrot.lane.b32.xlu0 %v1045, 64
    %v1435 = vpop.permute.xlu0 %1434
    %1436 = vrot.lane.b32.xlu0 %v1047, 64
    %v1437 = vpop.permute.xlu0 %1436
    %1438 = vrot.lane.b32.xlu0 %v1049, 64
    %v1439 = vpop.permute.xlu0 %1438
    %v1441 = vsel %vm1026, 0.0, %v1417
    %vm1442 = vcmask 1045504
    %v1443 = vrot.slane %v1002, 2
    %v1444 = vrot.slane %v1003, 2
    %v1445 = vsel %vm1442, %v1443, %v1444
    %v1446 = vrot.slane %v1004, 2
    %v1447 = vsel %vm1442, %v1444, %v1446
    %v1448 = vrot.slane %v1005, 2
    %v1449 = vsel %vm1442, %v1446, %v1448
    %v1450 = vrot.slane %v1006, 2
    %v1451 = vsel %vm1442, %v1448, %v1450
    %v1452 = vrot.slane %v1007, 2
    %v1453 = vsel %vm1442, %v1450, %v1452
    %v1454 = vrot.slane %v1008, 2
    %v1455 = vsel %vm1442, %v1452, %v1454
    %v1456 = vrot.slane %v1009, 2
    %v1457 = vsel %vm1442, %v1454, %v1456
    %v1458 = vrot.slane %v1010, 2
    %v1459 = vsel %vm1442, %v1456, %v1458
    %v1460 = vrot.slane %v1011, 2
    %v1461 = vsel %vm1442, %v1458, %v1460
    %v1462 = vrot.slane %v1012, 2
    %v1463 = vsel %vm1442, %v1460, %v1462
    %v1464 = vrot.slane %v1013, 2
    %v1465 = vsel %vm1442, %v1462, %v1464
    %v1467 = vsel %vm1442, %v1464, 0.0
    %1469 = vrot.lane.b32.xlu0 %v1441, 32
    %v1470 = vpop.permute.xlu0 %1469
    %1471 = vrot.lane.b32.xlu0 %v1419, 32
    %v1472 = vpop.permute.xlu0 %1471
    %1473 = vrot.lane.b32.xlu0 %v1421, 32
    %v1474 = vpop.permute.xlu0 %1473
    %1475 = vrot.lane.b32.xlu0 %v1423, 32
    %v1476 = vpop.permute.xlu0 %1475
    %1477 = vrot.lane.b32.xlu0 %v1425, 32
    %v1478 = vpop.permute.xlu0 %1477
    %1479 = vrot.lane.b32.xlu0 %v1427, 32
    %v1480 = vpop.permute.xlu0 %1479
    %1481 = vrot.lane.b32.xlu0 %v1429, 32
    %v1482 = vpop.permute.xlu0 %1481
    %1483 = vrot.lane.b32.xlu0 %v1431, 32
    %v1484 = vpop.permute.xlu0 %1483
    %1485 = vrot.lane.b32.xlu0 %v1433, 32
    %v1486 = vpop.permute.xlu0 %1485
    %1487 = vrot.lane.b32.xlu0 %v1435, 32
    %v1488 = vpop.permute.xlu0 %1487
    %1489 = vrot.lane.b32.xlu0 %v1437, 32
    %v1490 = vpop.permute.xlu0 %1489
    %1491 = vrot.lane.b32.xlu0 %v1439, 32
    %v1492 = vpop.permute.xlu0 %1491
    %1506 = vrot.lane.b32.xlu0 %v1445, 64
    %v1507 = vpop.permute.xlu0 %1506
    %1508 = vrot.lane.b32.xlu0 %v1447, 64
    %v1509 = vpop.permute.xlu0 %1508
    %1510 = vrot.lane.b32.xlu0 %v1449, 64
    %v1511 = vpop.permute.xlu0 %1510
    %1512 = vrot.lane.b32.xlu0 %v1451, 64
    %v1513 = vpop.permute.xlu0 %1512
    %1514 = vrot.lane.b32.xlu0 %v1453, 64
    %v1515 = vpop.permute.xlu0 %1514
    %1516 = vrot.lane.b32.xlu0 %v1455, 64
    %v1517 = vpop.permute.xlu0 %1516
    %1518 = vrot.lane.b32.xlu0 %v1457, 64
    %v1519 = vpop.permute.xlu0 %1518
    %1520 = vrot.lane.b32.xlu0 %v1459, 64
    %v1521 = vpop.permute.xlu0 %1520
    %1522 = vrot.lane.b32.xlu0 %v1461, 64
    %v1523 = vpop.permute.xlu0 %1522
    %1524 = vrot.lane.b32.xlu0 %v1463, 64
    %v1525 = vpop.permute.xlu0 %1524
    %1526 = vrot.lane.b32.xlu0 %v1465, 64
    %v1527 = vpop.permute.xlu0 %1526
    %1528 = vrot.lane.b32.xlu0 %v1467, 64
    %v1529 = vpop.permute.xlu0 %1528
    %v1530 = vsel %vm521, %v1415, %v1470
    %v1531 = vsel %vm521, %v1382, %v1472
    %v1532 = vsel %vm521, %v1384, %v1474
    %v1533 = vsel %vm521, %v1386, %v1476
    %v1534 = vsel %vm521, %v1388, %v1478
    %v1535 = vsel %vm521, %v1390, %v1480
    %v1536 = vsel %vm521, %v1392, %v1482
    %v1537 = vsel %vm521, %v1394, %v1484
    %v1538 = vsel %vm521, %v1396, %v1486
    %v1539 = vsel %vm521, %v1398, %v1488
    %v1540 = vsel %vm521, %v1400, %v1490
    %v1541 = vsel %vm521, %v1402, %v1492
    %v1542 = vsel %vm1162, %v1530, %v1002
    %v1543 = vsel %vm1162, %v1531, %v1003
    %v1544 = vsel %vm1162, %v1532, %v1004
    %v1545 = vsel %vm1162, %v1533, %v1005
    %v1546 = vsel %vm1162, %v1534, %v1006
    %v1547 = vsel %vm1162, %v1535, %v1007
    %v1548 = vsel %vm1162, %v1536, %v1008
    %v1549 = vsel %vm1162, %v1537, %v1009
    %v1550 = vsel %vm1162, %v1538, %v1010
    %v1551 = vsel %vm1162, %v1539, %v1011
    %v1552 = vsel %vm1162, %v1540, %v1012
    %v1553 = vsel %vm1162, %v1541, %v1013
    %v1554 = vsel %vm1181, %v1542, %v1115
    %v1555 = vsel %vm1181, %v1543, %v1117
    %v1556 = vsel %vm1181, %v1544, %v1119
    %v1557 = vsel %vm1181, %v1545, %v1121
    %v1558 = vsel %vm1181, %v1546, %v1123
    %v1559 = vsel %vm1181, %v1547, %v1125
    %v1560 = vsel %vm1181, %v1548, %v1127
    %v1561 = vsel %vm1181, %v1549, %v1129
    %v1562 = vsel %vm1181, %v1550, %v1131
    %v1563 = vsel %vm1181, %v1551, %v1133
    %v1564 = vsel %vm1181, %v1552, %v1135
    %v1565 = vsel %vm1181, %v1553, %v1137
    %v1567 = vlaneseq
    %v1568 = vshrl.u32 %v1567, 7
    %v1569 = vsub.s32 0, %v1568
    %v1570 = vrot.slane %v733, %v1569
    %v1572 = vsel %vm521, %v1507, 0
    %v1574 = vsel %vm521, %v1509, 0
    %v1576 = vsel %vm521, %v1511, 0
    %v1578 = vsel %vm521, %v1513, 0
    %v1580 = vsel %vm521, %v1515, 0
    %v1582 = vsel %vm521, %v1517, 0
    %v1584 = vsel %vm521, %v1519, 0
    %v1586 = vsel %vm521, %v1521, 0
    %v1588 = vsel %vm521, %v1523, 0
    %v1590 = vsel %vm521, %v1525, 0
    %v1592 = vsel %vm521, %v1527, 0
    %v1594 = vsel %vm521, %v1529, 0
    %1596 = vmatprep.subr.mxu0 0.0
    %1597 = vmatpush1.msra.mxu0 %v728
    %1598 = vmatprep.subr.mxu0 0.0
    %1599 = vmatpush1.msra.mxu0 %v727
    %1600 = vmatprep.subr.mxu0 0.0
    %1601 = vmatpush1.msra.mxu0 %v726
    %1602 = vmatprep.subr.mxu0 0.0
    %1603 = vmatpush1.msra.mxu0 %v725
    %1604 = vmatprep.subr.mxu0 0.0
    %1605 = vmatpush1.msra.mxu0 %v724
    %1606 = vmatprep.subr.mxu0 0.0
    %1607 = vmatpush1.msra.mxu0 %v723
    %1608 = vmatprep.subr.mxu0 0.0
    %1609 = vmatpush1.msra.mxu0 %v722
    %1610 = vmatprep.subr.mxu0 0.0
    %1611 = vmatpush1.msra.mxu0 %v721
    %1612 = vmatprep.subr.mxu0 0.0
    %1613 = vmatpush1.msra.mxu0 %v720
    %1614 = vmatprep.subr.mxu0 0.0
    %1615 = vmatpush1.msra.mxu0 %v719
    %1616 = vmatprep.subr.mxu0 0.0
    %1617 = vmatpush1.msra.mxu0 %v718
    %1618 = vmatprep.subr.mxu0 0.0
    %1619 = vmatpush1.msra.mxu0 %v717
    %1620 = vmatprep.subr.mxu0 0.0
    %1621 = vmatpush1.msra.mxu0 %v716
    %1622 = vmatprep.subr.mxu0 0.0
    %1623 = vmatpush1.msra.mxu0 %v715
    %1624 = vmatprep.subr.mxu0 0.0
    %1625 = vmatpush1.msra.mxu0 %v714
    %1626 = vmatprep.subr.mxu0 0.0
    %1627 = vmatpush1.msra.mxu0 %v713
    %1628 = vmatprep.subr.mxu0 0.0
    %1629 = vmatpush2.msra.mxu0 0.0
    %1630 = vmatprep.subr.mxu0 0.0
    %1631 = vmatpush2.msra.mxu0 0.0
    %1632 = vmatprep.subr.mxu0 0.0
    %1633 = vmatpush2.msra.mxu0 0.0
    %1634 = vmatprep.subr.mxu0 0.0
    %1635 = vmatpush2.msra.mxu0 0.0
    %1636 = vmatprep.subr.mxu0 0.0
    %1637 = vmatpush2.msra.mxu0 0.0
    %1638 = vmatprep.subr.mxu0 0.0
    %1639 = vmatpush2.msra.mxu0 0.0
    %1640 = vmatprep.subr.mxu0 0.0
    %1641 = vmatpush2.msra.mxu0 0.0
    %1642 = vmatprep.subr.mxu0 0.0
    %1643 = vmatpush2.msra.mxu0 0.0
    %1644 = vmatprep.subr.mxu0 0.0
    %1645 = vmatpush2.msra.mxu0 0.0
    %1646 = vmatprep.subr.mxu0 0.0
    %1647 = vmatpush2.msra.mxu0 0.0
    %1648 = vmatprep.subr.mxu0 0.0
    %1649 = vmatpush2.msra.mxu0 0.0
    %1650 = vmatprep.subr.mxu0 0.0
    %1651 = vmatpush2.msra.mxu0 0.0
    %1652 = vmatprep.subr.mxu0 0.0
    %1653 = vmatpush2.msra.mxu0 %v732
    %1654 = vmatprep.subr.mxu0 0.0
    %1655 = vmatpush2.msra.mxu0 %v731
    %1656 = vmatprep.subr.mxu0 0.0
    %1657 = vmatpush2.msra.mxu0 %v730
    %1658 = vmatprep.subr.mxu0 0.0
    %1659 = vmatpush2.msra.mxu0 %v729
    %1660 = vmatprep.mubr.f32.mxu0 %v1572
    %1661 = vmatmul.mubr.f32.gmra.mxu0 %v1554
    %v1662 = vpop.f32.mrf.mxu0
    %v1663 = vadd.f32 %v1570, %v1662
    %v1664 = vpop.f32.mrf.mxu0
    %1665 = vmatprep.mubr.f32.mxu0 %v1574
    %1666 = vmatmul.mubr.f32.gmra.mxu0 %v1555
    %v1667 = vpop.f32.mrf.mxu0
    %v1668 = vadd.f32 %v1570, %v1667
    %v1669 = vpop.f32.mrf.mxu0
    %1670 = vmatprep.mubr.f32.mxu0 %v1576
    %1671 = vmatmul.mubr.f32.gmra.mxu0 %v1556
    %v1672 = vpop.f32.mrf.mxu0
    %v1673 = vadd.f32 %v1570, %v1672
    %v1674 = vpop.f32.mrf.mxu0
    %1675 = vmatprep.mubr.f32.mxu0 %v1578
    %1676 = vmatmul.mubr.f32.gmra.mxu0 %v1557
    %v1677 = vpop.f32.mrf.mxu0
    %v1678 = vadd.f32 %v1570, %v1677
    %v1679 = vpop.f32.mrf.mxu0
    %1680 = vmatprep.mubr.f32.mxu0 %v1580
    %1681 = vmatmul.mubr.f32.gmra.mxu0 %v1558
    %v1682 = vpop.f32.mrf.mxu0
    %v1683 = vadd.f32 %v1570, %v1682
    %v1684 = vpop.f32.mrf.mxu0
    %1685 = vmatprep.mubr.f32.mxu0 %v1582
    %1686 = vmatmul.mubr.f32.gmra.mxu0 %v1559
    %v1687 = vpop.f32.mrf.mxu0
    %v1688 = vadd.f32 %v1570, %v1687
    %v1689 = vpop.f32.mrf.mxu0
    %1690 = vmatprep.mubr.f32.mxu0 %v1584
    %1691 = vmatmul.mubr.f32.gmra.mxu0 %v1560
    %v1692 = vpop.f32.mrf.mxu0
    %v1693 = vadd.f32 %v1570, %v1692
    %v1694 = vpop.f32.mrf.mxu0
    %1695 = vmatprep.mubr.f32.mxu0 %v1586
    %1696 = vmatmul.mubr.f32.gmra.mxu0 %v1561
    %v1697 = vpop.f32.mrf.mxu0
    %v1698 = vadd.f32 %v1570, %v1697
    %v1699 = vpop.f32.mrf.mxu0
    %1700 = vmatprep.mubr.f32.mxu0 %v1588
    %1701 = vmatmul.mubr.f32.gmra.mxu0 %v1562
    %v1702 = vpop.f32.mrf.mxu0
    %v1703 = vadd.f32 %v1570, %v1702
    %v1704 = vpop.f32.mrf.mxu0
    %1705 = vmatprep.mubr.f32.mxu0 %v1590
    %1706 = vmatmul.mubr.f32.gmra.mxu0 %v1563
    %v1707 = vpop.f32.mrf.mxu0
    %v1708 = vadd.f32 %v1570, %v1707
    %v1709 = vpop.f32.mrf.mxu0
    %1710 = vmatprep.mubr.f32.mxu0 %v1592
    %1711 = vmatmul.mubr.f32.gmra.mxu0 %v1564
    %v1712 = vpop.f32.mrf.mxu0
    %v1713 = vadd.f32 %v1570, %v1712
    %v1714 = vpop.f32.mrf.mxu0
    %1715 = vmatprep.mubr.f32.mxu0 %v1594
    %1716 = vmatmul.mubr.f32.gmra.mxu0 %v1565
    %v1717 = vpop.f32.mrf.mxu0
    %v1718 = vadd.f32 %v1570, %v1717
    %v1719 = vpop.f32.mrf.mxu0
    %1720 = vdwg.mxu0
    %v1721 = vmax.f32 %v1663, 0.0
    %v1722 = vmax.f32 %v1668, 0.0
    %v1723 = vmax.f32 %v1673, 0.0
    %v1724 = vmax.f32 %v1678, 0.0
    %v1725 = vmax.f32 %v1683, 0.0
    %v1726 = vmax.f32 %v1688, 0.0
    %v1727 = vmax.f32 %v1693, 0.0
    %v1728 = vmax.f32 %v1698, 0.0
    %v1729 = vmax.f32 %v1703, 0.0
    %v1730 = vmax.f32 %v1708, 0.0
    %v1731 = vmax.f32 %v1713, 0.0
    %v1732 = vmax.f32 %v1718, 0.0
    %vm1733 = vcmp.eq.s32.totalorder %v683, 0
    %vm1734 = vcmp.eq.s32.totalorder %v684, 0
    %vm1735 = vcmp.eq.s32.totalorder %v685, 0
    %vm1736 = vcmp.eq.s32.totalorder %v686, 0
    %vm1737 = vcmp.eq.s32.totalorder %v687, 0
    %vm1738 = vcmp.eq.s32.totalorder %v688, 0
    %vm1739 = vcmp.eq.s32.totalorder %v689, 0
    %vm1740 = vcmp.eq.s32.totalorder %v690, 0
    %vm1741 = vcmp.eq.s32.totalorder %v691, 0
    %vm1742 = vcmp.eq.s32.totalorder %v692, 0
    %vm1743 = vcmp.eq.s32.totalorder %v693, 0
    %vm1744 = vcmp.eq.s32.totalorder %v694, 0
    %v1745 = vsel %vm1733, 1.0, 0.0
    %v1746 = vsel %vm1734, 1.0, 0.0
    %v1747 = vsel %vm1735, 1.0, 0.0
    %v1748 = vsel %vm1736, 1.0, 0.0
    %v1749 = vsel %vm1737, 1.0, 0.0
    %v1750 = vsel %vm1738, 1.0, 0.0
    %v1751 = vsel %vm1739, 1.0, 0.0
    %v1752 = vsel %vm1740, 1.0, 0.0
    %v1753 = vsel %vm1741, 1.0, 0.0
    %v1754 = vsel %vm1742, 1.0, 0.0
    %v1755 = vsel %vm1743, 1.0, 0.0
    %v1756 = vsel %vm1744, 1.0, 0.0
    %vm1757 = vcmp.eq.s32.totalorder %v683, 14
    %vm1758 = vcmp.eq.s32.totalorder %v684, 14
    %vm1759 = vcmp.eq.s32.totalorder %v685, 14
    %vm1760 = vcmp.eq.s32.totalorder %v686, 14
    %vm1761 = vcmp.eq.s32.totalorder %v687, 14
    %vm1762 = vcmp.eq.s32.totalorder %v688, 14
    %vm1763 = vcmp.eq.s32.totalorder %v689, 14
    %vm1764 = vcmp.eq.s32.totalorder %v690, 14
    %vm1765 = vcmp.eq.s32.totalorder %v691, 14
    %vm1766 = vcmp.eq.s32.totalorder %v692, 14
    %vm1767 = vcmp.eq.s32.totalorder %v693, 14
    %vm1768 = vcmp.eq.s32.totalorder %v694, 14
    %v1769 = vsel %vm1757, 1.0, 0.0
    %v1770 = vsel %vm1758, 1.0, 0.0
    %v1771 = vsel %vm1759, 1.0, 0.0
    %v1772 = vsel %vm1760, 1.0, 0.0
    %v1773 = vsel %vm1761, 1.0, 0.0
    %v1774 = vsel %vm1762, 1.0, 0.0
    %v1775 = vsel %vm1763, 1.0, 0.0
    %v1776 = vsel %vm1764, 1.0, 0.0
    %v1777 = vsel %vm1765, 1.0, 0.0
    %v1778 = vsel %vm1766, 1.0, 0.0
    %v1779 = vsel %vm1767, 1.0, 0.0
    %v1780 = vsel %vm1768, 1.0, 0.0
    %v1781 = vrot.slane %v625, 7
    %v1782 = vrot.slane %v630, 7
    %v1783 = vsel %vm1026, %v1781, %v1782
    %v1784 = vrot.slane %v635, 7
    %v1785 = vsel %vm1026, %v1782, %v1784
    %v1786 = vrot.slane %v640, 7
    %v1787 = vsel %vm1026, %v1784, %v1786
    %v1788 = vrot.slane %v645, 7
    %v1789 = vsel %vm1026, %v1786, %v1788
    %v1790 = vrot.slane %v650, 7
    %v1791 = vsel %vm1026, %v1788, %v1790
    %v1792 = vrot.slane %v655, 7
    %v1793 = vsel %vm1026, %v1790, %v1792
    %v1794 = vrot.slane %v660, 7
    %v1795 = vsel %vm1026, %v1792, %v1794
    %v1796 = vrot.slane %v665, 7
    %v1797 = vsel %vm1026, %v1794, %v1796
    %v1798 = vrot.slane %v670, 7
    %v1799 = vsel %vm1026, %v1796, %v1798
    %v1800 = vrot.slane %v675, 7
    %v1801 = vsel %vm1026, %v1798, %v1800
    %v1802 = vrot.slane %v680, 7
    %v1803 = vsel %vm1026, %v1800, %v1802
    %v1816 = vsel %vm1026, 0.0, %v1781
    %v1817 = vrot.slane %v625, 1
    %v1818 = vrot.slane %v630, 1
    %v1819 = vsel %vm1087, %v1817, %v1818
    %v1820 = vrot.slane %v635, 1
    %v1821 = vsel %vm1087, %v1818, %v1820
    %v1822 = vrot.slane %v640, 1
    %v1823 = vsel %vm1087, %v1820, %v1822
    %v1824 = vrot.slane %v645, 1
    %v1825 = vsel %vm1087, %v1822, %v1824
    %v1826 = vrot.slane %v650, 1
    %v1827 = vsel %vm1087, %v1824, %v1826
    %v1828 = vrot.slane %v655, 1
    %v1829 = vsel %vm1087, %v1826, %v1828
    %v1830 = vrot.slane %v660, 1
    %v1831 = vsel %vm1087, %v1828, %v1830
    %v1832 = vrot.slane %v665, 1
    %v1833 = vsel %vm1087, %v1830, %v1832
    %v1834 = vrot.slane %v670, 1
    %v1835 = vsel %vm1087, %v1832, %v1834
    %v1836 = vrot.slane %v675, 1
    %v1837 = vsel %vm1087, %v1834, %v1836
    %v1838 = vrot.slane %v680, 1
    %v1839 = vsel %vm1087, %v1836, %v1838
    %v1852 = vsel %vm1087, %v1838, 0.0
    %1854 = vset.pattern.permute.xlu0 0
    %1855 = vperm.xlu0 %1854, %v1745
    %v1856 = vpop.permute.xlu0 %1855
    %1859 = vset.pattern.permute.xlu0 0
    %1860 = vperm.xlu0 %1859, %v1746
    %v1861 = vpop.permute.xlu0 %1860
    %1864 = vset.pattern.permute.xlu0 0
    %1865 = vperm.xlu0 %1864, %v1747
    %v1866 = vpop.permute.xlu0 %1865
    %1869 = vset.pattern.permute.xlu0 0
    %1870 = vperm.xlu0 %1869, %v1748
    %v1871 = vpop.permute.xlu0 %1870
    %1874 = vset.pattern.permute.xlu0 0
    %1875 = vperm.xlu0 %1874, %v1749
    %v1876 = vpop.permute.xlu0 %1875
    %1879 = vset.pattern.permute.xlu0 0
    %1880 = vperm.xlu0 %1879, %v1750
    %v1881 = vpop.permute.xlu0 %1880
    %1884 = vset.pattern.permute.xlu0 0
    %1885 = vperm.xlu0 %1884, %v1751
    %v1886 = vpop.permute.xlu0 %1885
    %1889 = vset.pattern.permute.xlu0 0
    %1890 = vperm.xlu0 %1889, %v1752
    %v1891 = vpop.permute.xlu0 %1890
    %1894 = vset.pattern.permute.xlu0 0
    %1895 = vperm.xlu0 %1894, %v1753
    %v1896 = vpop.permute.xlu0 %1895
    %1899 = vset.pattern.permute.xlu0 0
    %1900 = vperm.xlu0 %1899, %v1754
    %v1901 = vpop.permute.xlu0 %1900
    %1904 = vset.pattern.permute.xlu0 0
    %1905 = vperm.xlu0 %1904, %v1755
    %v1906 = vpop.permute.xlu0 %1905
    %1909 = vset.pattern.permute.xlu0 0
    %1910 = vperm.xlu0 %1909, %v1756
    %v1911 = vpop.permute.xlu0 %1910
    %v1913 = vmul.f32 %v1856, %v625
    %v1914 = vmul.f32 %v1861, %v630
    %v1915 = vmul.f32 %v1866, %v635
    %v1916 = vmul.f32 %v1871, %v640
    %v1917 = vmul.f32 %v1876, %v645
    %v1918 = vmul.f32 %v1881, %v650
    %v1919 = vmul.f32 %v1886, %v655
    %v1920 = vmul.f32 %v1891, %v660
    %v1921 = vmul.f32 %v1896, %v665
    %v1922 = vmul.f32 %v1901, %v670
    %v1923 = vmul.f32 %v1906, %v675
    %v1924 = vmul.f32 %v1911, %v680
    %v1925 = vsub.f32 1.0, %v1745
    %v1926 = vsub.f32 1.0, %v1746
    %v1927 = vsub.f32 1.0, %v1747
    %v1928 = vsub.f32 1.0, %v1748
    %v1929 = vsub.f32 1.0, %v1749
    %v1930 = vsub.f32 1.0, %v1750
    %v1931 = vsub.f32 1.0, %v1751
    %v1932 = vsub.f32 1.0, %v1752
    %v1933 = vsub.f32 1.0, %v1753
    %v1934 = vsub.f32 1.0, %v1754
    %v1935 = vsub.f32 1.0, %v1755
    %v1936 = vsub.f32 1.0, %v1756
    %1938 = vset.pattern.permute.xlu0 0
    %1939 = vperm.xlu0 %1938, %v1925
    %v1940 = vpop.permute.xlu0 %1939
    %1943 = vset.pattern.permute.xlu0 0
    %1944 = vperm.xlu0 %1943, %v1926
    %v1945 = vpop.permute.xlu0 %1944
    %1948 = vset.pattern.permute.xlu0 0
    %1949 = vperm.xlu0 %1948, %v1927
    %v1950 = vpop.permute.xlu0 %1949
    %1953 = vset.pattern.permute.xlu0 0
    %1954 = vperm.xlu0 %1953, %v1928
    %v1955 = vpop.permute.xlu0 %1954
    %1958 = vset.pattern.permute.xlu0 0
    %1959 = vperm.xlu0 %1958, %v1929
    %v1960 = vpop.permute.xlu0 %1959
    %1963 = vset.pattern.permute.xlu0 0
    %1964 = vperm.xlu0 %1963, %v1930
    %v1965 = vpop.permute.xlu0 %1964
    %1968 = vset.pattern.permute.xlu0 0
    %1969 = vperm.xlu0 %1968, %v1931
    %v1970 = vpop.permute.xlu0 %1969
    %1973 = vset.pattern.permute.xlu0 0
    %1974 = vperm.xlu0 %1973, %v1932
    %v1975 = vpop.permute.xlu0 %1974
    %1978 = vset.pattern.permute.xlu0 0
    %1979 = vperm.xlu0 %1978, %v1933
    %v1980 = vpop.permute.xlu0 %1979
    %1983 = vset.pattern.permute.xlu0 0
    %1984 = vperm.xlu0 %1983, %v1934
    %v1985 = vpop.permute.xlu0 %1984
    %1988 = vset.pattern.permute.xlu0 0
    %1989 = vperm.xlu0 %1988, %v1935
    %v1990 = vpop.permute.xlu0 %1989
    %1993 = vset.pattern.permute.xlu0 0
    %1994 = vperm.xlu0 %1993, %v1936
    %v1995 = vpop.permute.xlu0 %1994
    %v1997 = vmul.f32 %v1940, %v1816
    %v1998 = vmul.f32 %v1945, %v1783
    %v1999 = vmul.f32 %v1950, %v1785
    %v2000 = vmul.f32 %v1955, %v1787
    %v2001 = vmul.f32 %v1960, %v1789
    %v2002 = vmul.f32 %v1965, %v1791
    %v2003 = vmul.f32 %v1970, %v1793
    %v2004 = vmul.f32 %v1975, %v1795
    %v2005 = vmul.f32 %v1980, %v1797
    %v2006 = vmul.f32 %v1985, %v1799
    %v2007 = vmul.f32 %v1990, %v1801
    %v2008 = vmul.f32 %v1995, %v1803
    %v2009 = vadd.f32 %v1913, %v1997
    %v2010 = vadd.f32 %v1914, %v1998
    %v2011 = vadd.f32 %v1915, %v1999
    %v2012 = vadd.f32 %v1916, %v2000
    %v2013 = vadd.f32 %v1917, %v2001
    %v2014 = vadd.f32 %v1918, %v2002
    %v2015 = vadd.f32 %v1919, %v2003
    %v2016 = vadd.f32 %v1920, %v2004
    %v2017 = vadd.f32 %v1921, %v2005
    %v2018 = vadd.f32 %v1922, %v2006
    %v2019 = vadd.f32 %v1923, %v2007
    %v2020 = vadd.f32 %v1924, %v2008
    %2022 = vset.pattern.permute.xlu0 0
    %2023 = vperm.xlu0 %2022, %v1769
    %v2024 = vpop.permute.xlu0 %2023
    %2027 = vset.pattern.permute.xlu0 0
    %2028 = vperm.xlu0 %2027, %v1770
    %v2029 = vpop.permute.xlu0 %2028
    %2032 = vset.pattern.permute.xlu0 0
    %2033 = vperm.xlu0 %2032, %v1771
    %v2034 = vpop.permute.xlu0 %2033
    %2037 = vset.pattern.permute.xlu0 0
    %2038 = vperm.xlu0 %2037, %v1772
    %v2039 = vpop.permute.xlu0 %2038
    %2042 = vset.pattern.permute.xlu0 0
    %2043 = vperm.xlu0 %2042, %v1773
    %v2044 = vpop.permute.xlu0 %2043
    %2047 = vset.pattern.permute.xlu0 0
    %2048 = vperm.xlu0 %2047, %v1774
    %v2049 = vpop.permute.xlu0 %2048
    %2052 = vset.pattern.permute.xlu0 0
    %2053 = vperm.xlu0 %2052, %v1775
    %v2054 = vpop.permute.xlu0 %2053
    %2057 = vset.pattern.permute.xlu0 0
    %2058 = vperm.xlu0 %2057, %v1776
    %v2059 = vpop.permute.xlu0 %2058
    %2062 = vset.pattern.permute.xlu0 0
    %2063 = vperm.xlu0 %2062, %v1777
    %v2064 = vpop.permute.xlu0 %2063
    %2067 = vset.pattern.permute.xlu0 0
    %2068 = vperm.xlu0 %2067, %v1778
    %v2069 = vpop.permute.xlu0 %2068
    %2072 = vset.pattern.permute.xlu0 0
    %2073 = vperm.xlu0 %2072, %v1779
    %v2074 = vpop.permute.xlu0 %2073
    %2077 = vset.pattern.permute.xlu0 0
    %2078 = vperm.xlu0 %2077, %v1780
    %v2079 = vpop.permute.xlu0 %2078
    %v2081 = vmul.f32 %v2024, %v625
    %v2082 = vmul.f32 %v2029, %v630
    %v2083 = vmul.f32 %v2034, %v635
    %v2084 = vmul.f32 %v2039, %v640
    %v2085 = vmul.f32 %v2044, %v645
    %v2086 = vmul.f32 %v2049, %v650
    %v2087 = vmul.f32 %v2054, %v655
    %v2088 = vmul.f32 %v2059, %v660
    %v2089 = vmul.f32 %v2064, %v665
    %v2090 = vmul.f32 %v2069, %v670
    %v2091 = vmul.f32 %v2074, %v675
    %v2092 = vmul.f32 %v2079, %v680
    %v2093 = vsub.f32 1.0, %v1769
    %v2094 = vsub.f32 1.0, %v1770
    %v2095 = vsub.f32 1.0, %v1771
    %v2096 = vsub.f32 1.0, %v1772
    %v2097 = vsub.f32 1.0, %v1773
    %v2098 = vsub.f32 1.0, %v1774
    %v2099 = vsub.f32 1.0, %v1775
    %v2100 = vsub.f32 1.0, %v1776
    %v2101 = vsub.f32 1.0, %v1777
    %v2102 = vsub.f32 1.0, %v1778
    %v2103 = vsub.f32 1.0, %v1779
    %v2104 = vsub.f32 1.0, %v1780
    %2106 = vset.pattern.permute.xlu0 0
    %2107 = vperm.xlu0 %2106, %v2093
    %v2108 = vpop.permute.xlu0 %2107
    %2111 = vset.pattern.permute.xlu0 0
    %2112 = vperm.xlu0 %2111, %v2094
    %v2113 = vpop.permute.xlu0 %2112
    %2116 = vset.pattern.permute.xlu0 0
    %2117 = vperm.xlu0 %2116, %v2095
    %v2118 = vpop.permute.xlu0 %2117
    %2121 = vset.pattern.permute.xlu0 0
    %2122 = vperm.xlu0 %2121, %v2096
    %v2123 = vpop.permute.xlu0 %2122
    %2126 = vset.pattern.permute.xlu0 0
    %2127 = vperm.xlu0 %2126, %v2097
    %v2128 = vpop.permute.xlu0 %2127
    %2131 = vset.pattern.permute.xlu0 0
    %2132 = vperm.xlu0 %2131, %v2098
    %v2133 = vpop.permute.xlu0 %2132
    %2136 = vset.pattern.permute.xlu0 0
    %2137 = vperm.xlu0 %2136, %v2099
    %v2138 = vpop.permute.xlu0 %2137
    %2141 = vset.pattern.permute.xlu0 0
    %2142 = vperm.xlu0 %2141, %v2100
    %v2143 = vpop.permute.xlu0 %2142
    %2146 = vset.pattern.permute.xlu0 0
    %2147 = vperm.xlu0 %2146, %v2101
    %v2148 = vpop.permute.xlu0 %2147
    %2151 = vset.pattern.permute.xlu0 0
    %2152 = vperm.xlu0 %2151, %v2102
    %v2153 = vpop.permute.xlu0 %2152
    %2156 = vset.pattern.permute.xlu0 0
    %2157 = vperm.xlu0 %2156, %v2103
    %v2158 = vpop.permute.xlu0 %2157
    %2161 = vset.pattern.permute.xlu0 0
    %2162 = vperm.xlu0 %2161, %v2104
    %v2163 = vpop.permute.xlu0 %2162
    %v2165 = vmul.f32 %v2108, %v1819
    %v2166 = vmul.f32 %v2113, %v1821
    %v2167 = vmul.f32 %v2118, %v1823
    %v2168 = vmul.f32 %v2123, %v1825
    %v2169 = vmul.f32 %v2128, %v1827
    %v2170 = vmul.f32 %v2133, %v1829
    %v2171 = vmul.f32 %v2138, %v1831
    %v2172 = vmul.f32 %v2143, %v1833
    %v2173 = vmul.f32 %v2148, %v1835
    %v2174 = vmul.f32 %v2153, %v1837
    %v2175 = vmul.f32 %v2158, %v1839
    %v2176 = vmul.f32 %v2163, %v1852
    %v2177 = vadd.f32 %v2081, %v2165
    %v2178 = vadd.f32 %v2082, %v2166
    %v2179 = vadd.f32 %v2083, %v2167
    %v2180 = vadd.f32 %v2084, %v2168
    %v2181 = vadd.f32 %v2085, %v2169
    %v2182 = vadd.f32 %v2086, %v2170
    %v2183 = vadd.f32 %v2087, %v2171
    %v2184 = vadd.f32 %v2088, %v2172
    %v2185 = vadd.f32 %v2089, %v2173
    %v2186 = vadd.f32 %v2090, %v2174
    %v2187 = vadd.f32 %v2091, %v2175
    %v2188 = vadd.f32 %v2092, %v2176
    %v2189 = vmax.f32 %v625, %v2009
    %v2190 = vmax.f32 %v630, %v2010
    %v2191 = vmax.f32 %v635, %v2011
    %v2192 = vmax.f32 %v640, %v2012
    %v2193 = vmax.f32 %v645, %v2013
    %v2194 = vmax.f32 %v650, %v2014
    %v2195 = vmax.f32 %v655, %v2015
    %v2196 = vmax.f32 %v660, %v2016
    %v2197 = vmax.f32 %v665, %v2017
    %v2198 = vmax.f32 %v670, %v2018
    %v2199 = vmax.f32 %v675, %v2019
    %v2200 = vmax.f32 %v680, %v2020
    %v2201 = vmax.f32 %v2189, %v2177
    %v2202 = vmax.f32 %v2190, %v2178
    %v2203 = vmax.f32 %v2191, %v2179
    %v2204 = vmax.f32 %v2192, %v2180
    %v2205 = vmax.f32 %v2193, %v2181
    %v2206 = vmax.f32 %v2194, %v2182
    %v2207 = vmax.f32 %v2195, %v2183
    %v2208 = vmax.f32 %v2196, %v2184
    %v2209 = vmax.f32 %v2197, %v2185
    %v2210 = vmax.f32 %v2198, %v2186
    %v2211 = vmax.f32 %v2199, %v2187
    %v2212 = vmax.f32 %v2200, %v2188
    %v2214 = vlaneseq
    %v2215 = vshrl.u32 %v2214, 7
    %v2216 = vsub.s32 0, %v2215
    %v2217 = vrot.slane %v738, %v2216
    %v2220 = vsel %vm521, %v2201, 0
    %v2223 = vsel %vm521, %v2202, 0
    %v2226 = vsel %vm521, %v2203, 0
    %v2229 = vsel %vm521, %v2204, 0
    %v2232 = vsel %vm521, %v2205, 0
    %v2235 = vsel %vm521, %v2206, 0
    %v2238 = vsel %vm521, %v2207, 0
    %v2241 = vsel %vm521, %v2208, 0
    %v2244 = vsel %vm521, %v2209, 0
    %v2247 = vsel %vm521, %v2210, 0
    %v2250 = vsel %vm521, %v2211, 0
    %v2253 = vsel %vm521, %v2212, 0
    %2255 = vmatprep.subr.mxu0 0.0
    %2256 = vmatpush1.msra.mxu0 0.0
    %2257 = vmatprep.subr.mxu0 0.0
    %2258 = vmatpush1.msra.mxu0 0.0
    %2259 = vmatprep.subr.mxu0 0.0
    %2260 = vmatpush1.msra.mxu0 0.0
    %2261 = vmatprep.subr.mxu0 0.0
    %2262 = vmatpush1.msra.mxu0 0.0
    %2263 = vmatprep.subr.mxu0 0.0
    %2264 = vmatpush1.msra.mxu0 0.0
    %2265 = vmatprep.subr.mxu0 0.0
    %2266 = vmatpush1.msra.mxu0 0.0
    %2267 = vmatprep.subr.mxu0 0.0
    %2268 = vmatpush1.msra.mxu0 0.0
    %2269 = vmatprep.subr.mxu0 0.0
    %2270 = vmatpush1.msra.mxu0 0.0
    %2271 = vmatprep.subr.mxu0 0.0
    %2272 = vmatpush1.msra.mxu0 0.0
    %2273 = vmatprep.subr.mxu0 0.0
    %2274 = vmatpush1.msra.mxu0 0.0
    %2275 = vmatprep.subr.mxu0 0.0
    %2276 = vmatpush1.msra.mxu0 0.0
    %2277 = vmatprep.subr.mxu0 0.0
    %2278 = vmatpush1.msra.mxu0 0.0
    %2279 = vmatprep.subr.mxu0 0.0
    %2280 = vmatpush1.msra.mxu0 %v737
    %2281 = vmatprep.subr.mxu0 0.0
    %2282 = vmatpush1.msra.mxu0 %v736
    %2283 = vmatprep.subr.mxu0 0.0
    %2284 = vmatpush1.msra.mxu0 %v735
    %2285 = vmatprep.subr.mxu0 0.0
    %2286 = vmatpush1.msra.mxu0 %v734
    %2287 = vmatprep.subr.mxu0 0.0
    %2288 = vmatpush2.msra.mxu0 0.0
    %2289 = vmatprep.subr.mxu0 0.0
    %2290 = vmatpush2.msra.mxu0 0.0
    %2291 = vmatprep.subr.mxu0 0.0
    %2292 = vmatpush2.msra.mxu0 0.0
    %2293 = vmatprep.subr.mxu0 0.0
    %2294 = vmatpush2.msra.mxu0 0.0
    %2295 = vmatprep.subr.mxu0 0.0
    %2296 = vmatpush2.msra.mxu0 0.0
    %2297 = vmatprep.subr.mxu0 0.0
    %2298 = vmatpush2.msra.mxu0 0.0
    %2299 = vmatprep.subr.mxu0 0.0
    %2300 = vmatpush2.msra.mxu0 0.0
    %2301 = vmatprep.subr.mxu0 0.0
    %2302 = vmatpush2.msra.mxu0 0.0
    %2303 = vmatprep.subr.mxu0 0.0
    %2304 = vmatpush2.msra.mxu0 0.0
    %2305 = vmatprep.subr.mxu0 0.0
    %2306 = vmatpush2.msra.mxu0 0.0
    %2307 = vmatprep.subr.mxu0 0.0
    %2308 = vmatpush2.msra.mxu0 0.0
    %2309 = vmatprep.subr.mxu0 0.0
    %2310 = vmatpush2.msra.mxu0 0.0
    %2311 = vmatprep.subr.mxu0 0.0
    %2312 = vmatpush2.msra.mxu0 0.0
    %2313 = vmatprep.subr.mxu0 0.0
    %2314 = vmatpush2.msra.mxu0 0.0
    %2315 = vmatprep.subr.mxu0 0.0
    %2316 = vmatpush2.msra.mxu0 0.0
    %2317 = vmatprep.subr.mxu0 0.0
    %2318 = vmatpush2.msra.mxu0 0.0
    %2319 = vmatprep.mubr.f32.mxu0 0.0
    %2320 = vmatmul.mubr.f32.gmra.mxu0 %v2220
    %v2321 = vpop.f32.mrf.mxu0
    %v2322 = vadd.f32 %v2217, %v2321
    %v2323 = vpop.f32.mrf.mxu0
    %2324 = vmatprep.mubr.f32.mxu0 0.0
    %2325 = vmatmul.mubr.f32.gmra.mxu0 %v2223
    %v2326 = vpop.f32.mrf.mxu0
    %v2327 = vadd.f32 %v2217, %v2326
    %v2328 = vpop.f32.mrf.mxu0
    %2329 = vmatprep.mubr.f32.mxu0 0.0
    %2330 = vmatmul.mubr.f32.gmra.mxu0 %v2226
    %v2331 = vpop.f32.mrf.mxu0
    %v2332 = vadd.f32 %v2217, %v2331
    %v2333 = vpop.f32.mrf.mxu0
    %2334 = vmatprep.mubr.f32.mxu0 0.0
    %2335 = vmatmul.mubr.f32.gmra.mxu0 %v2229
    %v2336 = vpop.f32.mrf.mxu0
    %v2337 = vadd.f32 %v2217, %v2336
    %v2338 = vpop.f32.mrf.mxu0
    %2339 = vmatprep.mubr.f32.mxu0 0.0
    %2340 = vmatmul.mubr.f32.gmra.mxu0 %v2232
    %v2341 = vpop.f32.mrf.mxu0
    %v2342 = vadd.f32 %v2217, %v2341
    %v2343 = vpop.f32.mrf.mxu0
    %2344 = vmatprep.mubr.f32.mxu0 0.0
    %2345 = vmatmul.mubr.f32.gmra.mxu0 %v2235
    %v2346 = vpop.f32.mrf.mxu0
    %v2347 = vadd.f32 %v2217, %v2346
    %v2348 = vpop.f32.mrf.mxu0
    %2349 = vmatprep.mubr.f32.mxu0 0.0
    %2350 = vmatmul.mubr.f32.gmra.mxu0 %v2238
    %v2351 = vpop.f32.mrf.mxu0
    %v2352 = vadd.f32 %v2217, %v2351
    %v2353 = vpop.f32.mrf.mxu0
    %2354 = vmatprep.mubr.f32.mxu0 0.0
    %2355 = vmatmul.mubr.f32.gmra.mxu0 %v2241
    %v2356 = vpop.f32.mrf.mxu0
    %v2357 = vadd.f32 %v2217, %v2356
    %v2358 = vpop.f32.mrf.mxu0
    %2359 = vmatprep.mubr.f32.mxu0 0.0
    %2360 = vmatmul.mubr.f32.gmra.mxu0 %v2244
    %v2361 = vpop.f32.mrf.mxu0
    %v2362 = vadd.f32 %v2217, %v2361
    %v2363 = vpop.f32.mrf.mxu0
    %2364 = vmatprep.mubr.f32.mxu0 0.0
    %2365 = vmatmul.mubr.f32.gmra.mxu0 %v2247
    %v2366 = vpop.f32.mrf.mxu0
    %v2367 = vadd.f32 %v2217, %v2366
    %v2368 = vpop.f32.mrf.mxu0
    %2369 = vmatprep.mubr.f32.mxu0 0.0
    %2370 = vmatmul.mubr.f32.gmra.mxu0 %v2250
    %v2371 = vpop.f32.mrf.mxu0
    %v2372 = vadd.f32 %v2217, %v2371
    %v2373 = vpop.f32.mrf.mxu0
    %2374 = vmatprep.mubr.f32.mxu0 0.0
    %2375 = vmatmul.mubr.f32.gmra.mxu0 %v2253
    %v2376 = vpop.f32.mrf.mxu0
    %v2377 = vadd.f32 %v2217, %v2376
    %v2378 = vpop.f32.mrf.mxu0
    %2379 = vdwg.mxu0
    %v2380 = vmax.f32 %v2322, 0.0
    %v2381 = vmax.f32 %v2327, 0.0
    %v2382 = vmax.f32 %v2332, 0.0
    %v2383 = vmax.f32 %v2337, 0.0
    %v2384 = vmax.f32 %v2342, 0.0
    %v2385 = vmax.f32 %v2347, 0.0
    %v2386 = vmax.f32 %v2352, 0.0
    %v2387 = vmax.f32 %v2357, 0.0
    %v2388 = vmax.f32 %v2362, 0.0
    %v2389 = vmax.f32 %v2367, 0.0
    %v2390 = vmax.f32 %v2372, 0.0
    %v2391 = vmax.f32 %v2377, 0.0
    %2404 = vrot.lane.b32.xlu0 %v1343, 32
    %v2405 = vpop.permute.xlu0 %2404
    %2406 = vrot.lane.b32.xlu0 %v1344, 32
    %v2407 = vpop.permute.xlu0 %2406
    %2408 = vrot.lane.b32.xlu0 %v1345, 32
    %v2409 = vpop.permute.xlu0 %2408
    %2410 = vrot.lane.b32.xlu0 %v1346, 32
    %v2411 = vpop.permute.xlu0 %2410
    %2412 = vrot.lane.b32.xlu0 %v1347, 32
    %v2413 = vpop.permute.xlu0 %2412
    %2414 = vrot.lane.b32.xlu0 %v1348, 32
    %v2415 = vpop.permute.xlu0 %2414
    %2416 = vrot.lane.b32.xlu0 %v1349, 32
    %v2417 = vpop.permute.xlu0 %2416
    %2418 = vrot.lane.b32.xlu0 %v1350, 32
    %v2419 = vpop.permute.xlu0 %2418
    %2420 = vrot.lane.b32.xlu0 %v1351, 32
    %v2421 = vpop.permute.xlu0 %2420
    %2422 = vrot.lane.b32.xlu0 %v1352, 32
    %v2423 = vpop.permute.xlu0 %2422
    %2424 = vrot.lane.b32.xlu0 %v1353, 32
    %v2425 = vpop.permute.xlu0 %2424
    %2426 = vrot.lane.b32.xlu0 %v1354, 32
    %v2427 = vpop.permute.xlu0 %2426
    %2452 = vrot.lane.b32.xlu0 %v1721, 64
    %v2453 = vpop.permute.xlu0 %2452
    %2454 = vrot.lane.b32.xlu0 %v1722, 64
    %v2455 = vpop.permute.xlu0 %2454
    %2456 = vrot.lane.b32.xlu0 %v1723, 64
    %v2457 = vpop.permute.xlu0 %2456
    %2458 = vrot.lane.b32.xlu0 %v1724, 64
    %v2459 = vpop.permute.xlu0 %2458
    %2460 = vrot.lane.b32.xlu0 %v1725, 64
    %v2461 = vpop.permute.xlu0 %2460
    %2462 = vrot.lane.b32.xlu0 %v1726, 64
    %v2463 = vpop.permute.xlu0 %2462
    %2464 = vrot.lane.b32.xlu0 %v1727, 64
    %v2465 = vpop.permute.xlu0 %2464
    %2466 = vrot.lane.b32.xlu0 %v1728, 64
    %v2467 = vpop.permute.xlu0 %2466
    %2468 = vrot.lane.b32.xlu0 %v1729, 64
    %v2469 = vpop.permute.xlu0 %2468
    %2470 = vrot.lane.b32.xlu0 %v1730, 64
    %v2471 = vpop.permute.xlu0 %2470
    %2472 = vrot.lane.b32.xlu0 %v1731, 64
    %v2473 = vpop.permute.xlu0 %2472
    %2474 = vrot.lane.b32.xlu0 %v1732, 64
    %v2475 = vpop.permute.xlu0 %2474
    %2500 = vrot.lane.b32.xlu0 %v2380, 96
    %v2501 = vpop.permute.xlu0 %2500
    %2502 = vrot.lane.b32.xlu0 %v2381, 96
    %v2503 = vpop.permute.xlu0 %2502
    %2504 = vrot.lane.b32.xlu0 %v2382, 96
    %v2505 = vpop.permute.xlu0 %2504
    %2506 = vrot.lane.b32.xlu0 %v2383, 96
    %v2507 = vpop.permute.xlu0 %2506
    %2508 = vrot.lane.b32.xlu0 %v2384, 96
    %v2509 = vpop.permute.xlu0 %2508
    %2510 = vrot.lane.b32.xlu0 %v2385, 96
    %v2511 = vpop.permute.xlu0 %2510
    %2512 = vrot.lane.b32.xlu0 %v2386, 96
    %v2513 = vpop.permute.xlu0 %2512
    %2514 = vrot.lane.b32.xlu0 %v2387, 96
    %v2515 = vpop.permute.xlu0 %2514
    %2516 = vrot.lane.b32.xlu0 %v2388, 96
    %v2517 = vpop.permute.xlu0 %2516
    %2518 = vrot.lane.b32.xlu0 %v2389, 96
    %v2519 = vpop.permute.xlu0 %2518
    %2520 = vrot.lane.b32.xlu0 %v2390, 96
    %v2521 = vpop.permute.xlu0 %2520
    %2522 = vrot.lane.b32.xlu0 %v2391, 96
    %v2523 = vpop.permute.xlu0 %2522
    %v2536 = vsel %vm521, %v1002, %v2405
    %v2537 = vsel %vm521, %v1003, %v2407
    %v2538 = vsel %vm521, %v1004, %v2409
    %v2539 = vsel %vm521, %v1005, %v2411
    %v2540 = vsel %vm521, %v1006, %v2413
    %v2541 = vsel %vm521, %v1007, %v2415
    %v2542 = vsel %vm521, %v1008, %v2417
    %v2543 = vsel %vm521, %v1009, %v2419
    %v2544 = vsel %vm521, %v1010, %v2421
    %v2545 = vsel %vm521, %v1011, %v2423
    %v2546 = vsel %vm521, %v1012, %v2425
    %v2547 = vsel %vm521, %v1013, %v2427
    %v2548 = vsel %vm1162, %v2536, %v2453
    %v2549 = vsel %vm1162, %v2537, %v2455
    %v2550 = vsel %vm1162, %v2538, %v2457
    %v2551 = vsel %vm1162, %v2539, %v2459
    %v2552 = vsel %vm1162, %v2540, %v2461
    %v2553 = vsel %vm1162, %v2541, %v2463
    %v2554 = vsel %vm1162, %v2542, %v2465
    %v2555 = vsel %vm1162, %v2543, %v2467
    %v2556 = vsel %vm1162, %v2544, %v2469
    %v2557 = vsel %vm1162, %v2545, %v2471
    %v2558 = vsel %vm1162, %v2546, %v2473
    %v2559 = vsel %vm1162, %v2547, %v2475
    %v2560 = vsel %vm1181, %v2548, %v2501
    %v2561 = vsel %vm1181, %v2549, %v2503
    %v2562 = vsel %vm1181, %v2550, %v2505
    %v2563 = vsel %vm1181, %v2551, %v2507
    %v2564 = vsel %vm1181, %v2552, %v2509
    %v2565 = vsel %vm1181, %v2553, %v2511
    %v2566 = vsel %vm1181, %v2554, %v2513
    %v2567 = vsel %vm1181, %v2555, %v2515
    %v2568 = vsel %vm1181, %v2556, %v2517
    %v2569 = vsel %vm1181, %v2557, %v2519
    %v2570 = vsel %vm1181, %v2558, %v2521
    %v2571 = vsel %vm1181, %v2559, %v2523
    %v2584 = vrot.slane %v2560, 1
    %v2585 = vrot.slane %v2561, 1
    %v2586 = vsel %vm1087, %v2584, %v2585
    %v2587 = vrot.slane %v2562, 1
    %v2588 = vsel %vm1087, %v2585, %v2587
    %v2589 = vrot.slane %v2563, 1
    %v2590 = vsel %vm1087, %v2587, %v2589
    %v2591 = vrot.slane %v2564, 1
    %v2592 = vsel %vm1087, %v2589, %v2591
    %v2593 = vrot.slane %v2565, 1
    %v2594 = vsel %vm1087, %v2591, %v2593
    %v2595 = vrot.slane %v2566, 1
    %v2596 = vsel %vm1087, %v2593, %v2595
    %v2597 = vrot.slane %v2567, 1
    %v2598 = vsel %vm1087, %v2595, %v2597
    %v2599 = vrot.slane %v2568, 1
    %v2600 = vsel %vm1087, %v2597, %v2599
    %v2601 = vrot.slane %v2569, 1
    %v2602 = vsel %vm1087, %v2599, %v2601
    %v2603 = vrot.slane %v2570, 1
    %v2604 = vsel %vm1087, %v2601, %v2603
    %v2605 = vrot.slane %v2571, 1
    %v2606 = vsel %vm1087, %v2603, %v2605
    %v2619 = vsel %vm1087, %v2605, 0.0
    %v2620 = vmax.f32 %v2560, %v2586
    %v2621 = vmax.f32 %v2561, %v2588
    %v2622 = vmax.f32 %v2562, %v2590
    %v2623 = vmax.f32 %v2563, %v2592
    %v2624 = vmax.f32 %v2564, %v2594
    %v2625 = vmax.f32 %v2565, %v2596
    %v2626 = vmax.f32 %v2566, %v2598
    %v2627 = vmax.f32 %v2567, %v2600
    %v2628 = vmax.f32 %v2568, %v2602
    %v2629 = vmax.f32 %v2569, %v2604
    %v2630 = vmax.f32 %v2570, %v2606
    %v2631 = vmax.f32 %v2571, %v2619
    %v2632 = vrot.slane %v2560, 2
    %v2633 = vrot.slane %v2561, 2
    %v2634 = vsel %vm1442, %v2632, %v2633
    %v2635 = vrot.slane %v2562, 2
    %v2636 = vsel %vm1442, %v2633, %v2635
    %v2637 = vrot.slane %v2563, 2
    %v2638 = vsel %vm1442, %v2635, %v2637
    %v2639 = vrot.slane %v2564, 2
    %v2640 = vsel %vm1442, %v2637, %v2639
    %v2641 = vrot.slane %v2565, 2
    %v2642 = vsel %vm1442, %v2639, %v2641
    %v2643 = vrot.slane %v2566, 2
    %v2644 = vsel %vm1442, %v2641, %v2643
    %v2645 = vrot.slane %v2567, 2
    %v2646 = vsel %vm1442, %v2643, %v2645
    %v2647 = vrot.slane %v2568, 2
    %v2648 = vsel %vm1442, %v2645, %v2647
    %v2649 = vrot.slane %v2569, 2
    %v2650 = vsel %vm1442, %v2647, %v2649
    %v2651 = vrot.slane %v2570, 2
    %v2652 = vsel %vm1442, %v2649, %v2651
    %v2653 = vrot.slane %v2571, 2
    %v2654 = vsel %vm1442, %v2651, %v2653
    %v2667 = vsel %vm1442, %v2653, 0.0
    %v2668 = vmax.f32 %v2620, %v2634
    %v2669 = vmax.f32 %v2621, %v2636
    %v2670 = vmax.f32 %v2622, %v2638
    %v2671 = vmax.f32 %v2623, %v2640
    %v2672 = vmax.f32 %v2624, %v2642
    %v2673 = vmax.f32 %v2625, %v2644
    %v2674 = vmax.f32 %v2626, %v2646
    %v2675 = vmax.f32 %v2627, %v2648
    %v2676 = vmax.f32 %v2628, %v2650
    %v2677 = vmax.f32 %v2629, %v2652
    %v2678 = vmax.f32 %v2630, %v2654
    %v2679 = vmax.f32 %v2631, %v2667
    %v2680 = vld [vmem:[%s13] sm:$0xff]
    %v2681 = vld [vmem:[%s13 + $0x8] sm:$0xff]
    %v2682 = vld [vmem:[%s13 + $0x10] sm:$0xff]
    %v2683 = vld [vmem:[%s13 + $0x18] sm:$0xff]
    %v2684 = vld [vmem:[%s13 + $0x20] sm:$0xff]
    %v2685 = vld [vmem:[%s13 + $0x28] sm:$0xff]
    %v2686 = vld [vmem:[%s13 + $0x30] sm:$0xff]
    %v2687 = vld [vmem:[%s13 + $0x38] sm:$0xff]
    %v2689 = vsel %vm1181, %v2680, 0
    %v2692 = vsel %vm1181, %v2681, 0
    %v2695 = vsel %vm1181, %v2682, 0
    %v2698 = vsel %vm1181, %v2683, 0
    %v2701 = vsel %vm1181, %v2684, 0
    %v2704 = vsel %vm1181, %v2685, 0
    %v2707 = vsel %vm1181, %v2686, 0
    %v2710 = vsel %vm1181, %v2687, 0
    %2712 = vmatprep.subr.mxu0 0.0
    %2713 = vmatpush1.msra.mxu0 0.0
    %2714 = vmatprep.subr.mxu0 0.0
    %2715 = vmatpush1.msra.mxu0 0.0
    %2716 = vmatprep.subr.mxu0 0.0
    %2717 = vmatpush1.msra.mxu0 0.0
    %2718 = vmatprep.subr.mxu0 0.0
    %2719 = vmatpush1.msra.mxu0 0.0
    %2720 = vmatprep.subr.mxu0 0.0
    %2721 = vmatpush1.msra.mxu0 %v2679
    %2722 = vmatprep.subr.mxu0 0.0
    %2723 = vmatpush1.msra.mxu0 %v2678
    %2724 = vmatprep.subr.mxu0 0.0
    %2725 = vmatpush1.msra.mxu0 %v2677
    %2726 = vmatprep.subr.mxu0 0.0
    %2727 = vmatpush1.msra.mxu0 %v2676
    %2728 = vmatprep.subr.mxu0 0.0
    %2729 = vmatpush1.msra.mxu0 %v2675
    %2730 = vmatprep.subr.mxu0 0.0
    %2731 = vmatpush1.msra.mxu0 %v2674
    %2732 = vmatprep.subr.mxu0 0.0
    %2733 = vmatpush1.msra.mxu0 %v2673
    %2734 = vmatprep.subr.mxu0 0.0
    %2735 = vmatpush1.msra.mxu0 %v2672
    %2736 = vmatprep.subr.mxu0 0.0
    %2737 = vmatpush1.msra.mxu0 %v2671
    %2738 = vmatprep.subr.mxu0 0.0
    %2739 = vmatpush1.msra.mxu0 %v2670
    %2740 = vmatprep.subr.mxu0 0.0
    %2741 = vmatpush1.msra.mxu0 %v2669
    %2742 = vmatprep.subr.mxu0 0.0
    %2743 = vmatpush1.msra.mxu0 %v2668
    %2744 = vmatprep.subr.mxu0 0.0
    %2745 = vmatpush2.msra.mxu0 0.0
    %2746 = vmatprep.subr.mxu0 0.0
    %2747 = vmatpush2.msra.mxu0 0.0
    %2748 = vmatprep.subr.mxu0 0.0
    %2749 = vmatpush2.msra.mxu0 0.0
    %2750 = vmatprep.subr.mxu0 0.0
    %2751 = vmatpush2.msra.mxu0 0.0
    %2752 = vmatprep.subr.mxu0 0.0
    %2753 = vmatpush2.msra.mxu0 0.0
    %2754 = vmatprep.subr.mxu0 0.0
    %2755 = vmatpush2.msra.mxu0 0.0
    %2756 = vmatprep.subr.mxu0 0.0
    %2757 = vmatpush2.msra.mxu0 0.0
    %2758 = vmatprep.subr.mxu0 0.0
    %2759 = vmatpush2.msra.mxu0 0.0
    %2760 = vmatprep.subr.mxu0 0.0
    %2761 = vmatpush2.msra.mxu0 0.0
    %2762 = vmatprep.subr.mxu0 0.0
    %2763 = vmatpush2.msra.mxu0 0.0
    %2764 = vmatprep.subr.mxu0 0.0
    %2765 = vmatpush2.msra.mxu0 0.0
    %2766 = vmatprep.subr.mxu0 0.0
    %2767 = vmatpush2.msra.mxu0 0.0
    %2768 = vmatprep.subr.mxu0 0.0
    %2769 = vmatpush2.msra.mxu0 0.0
    %2770 = vmatprep.subr.mxu0 0.0
    %2771 = vmatpush2.msra.mxu0 0.0
    %2772 = vmatprep.subr.mxu0 0.0
    %2773 = vmatpush2.msra.mxu0 0.0
    %2774 = vmatprep.subr.mxu0 0.0
    %2775 = vmatpush2.msra.mxu0 0.0
    %2776 = vmatprep.mubr.f32.mxu0 0.0
    %2777 = vmatmul.mubr.f32.gmra.mxu0 %v2689
    %v2778 = vpop.f32.mrf.mxu0
    %v2779 = vadd.f32 0.0, %v2778
    %v2780 = vpop.f32.mrf.mxu0
    %2781 = vmatprep.mubr.f32.mxu0 0.0
    %2782 = vmatmul.mubr.f32.gmra.mxu0 %v2692
    %v2783 = vpop.f32.mrf.mxu0
    %v2784 = vadd.f32 0.0, %v2783
    %v2785 = vpop.f32.mrf.mxu0
    %2786 = vmatprep.mubr.f32.mxu0 0.0
    %2787 = vmatmul.mubr.f32.gmra.mxu0 %v2695
    %v2788 = vpop.f32.mrf.mxu0
    %v2789 = vadd.f32 0.0, %v2788
    %v2790 = vpop.f32.mrf.mxu0
    %2791 = vmatprep.mubr.f32.mxu0 0.0
    %2792 = vmatmul.mubr.f32.gmra.mxu0 %v2698
    %v2793 = vpop.f32.mrf.mxu0
    %v2794 = vadd.f32 0.0, %v2793
    %v2795 = vpop.f32.mrf.mxu0
    %2796 = vmatprep.mubr.f32.mxu0 0.0
    %2797 = vmatmul.mubr.f32.gmra.mxu0 %v2701
    %v2798 = vpop.f32.mrf.mxu0
    %v2799 = vadd.f32 0.0, %v2798
    %v2800 = vpop.f32.mrf.mxu0
    %2801 = vmatprep.mubr.f32.mxu0 0.0
    %2802 = vmatmul.mubr.f32.gmra.mxu0 %v2704
    %v2803 = vpop.f32.mrf.mxu0
    %v2804 = vadd.f32 0.0, %v2803
    %v2805 = vpop.f32.mrf.mxu0
    %2806 = vmatprep.mubr.f32.mxu0 0.0
    %2807 = vmatmul.mubr.f32.gmra.mxu0 %v2707
    %v2808 = vpop.f32.mrf.mxu0
    %v2809 = vadd.f32 0.0, %v2808
    %v2810 = vpop.f32.mrf.mxu0
    %2811 = vmatprep.mubr.f32.mxu0 0.0
    %2812 = vmatmul.mubr.f32.gmra.mxu0 %v2710
    %v2813 = vpop.f32.mrf.mxu0
    %v2814 = vadd.f32 0.0, %v2813
    %v2815 = vpop.f32.mrf.mxu0
    %2816 = vdwg.mxu0
    %v2817 = vld [vmem:[%s9] sm:$0xff]
    %v2818 = vld [vmem:[%s9 + $0x8] sm:$0xff]
    %v2819 = vld [vmem:[%s9 + $0x10] sm:$0xff]
    %v2820 = vld [vmem:[%s9 + $0x18] sm:$0xff]
    %v2821 = vld [vmem:[%s9 + $0x20] sm:$0xff]
    %v2822 = vld [vmem:[%s9 + $0x28] sm:$0xff]
    %v2823 = vld [vmem:[%s9 + $0x30] sm:$0xff]
    %v2824 = vld [vmem:[%s9 + $0x38] sm:$0xff]
    %v2825 = vld [vmem:[#allocation10] sm:$0xff]
    %v2826 = vld [vmem:[#allocation10 + $0x8] sm:$0xff]
    %v2827 = vld [vmem:[#allocation10 + $0x10] sm:$0xff]
    %v2828 = vld [vmem:[#allocation10 + $0x18] sm:$0xff]
    %v2829 = vld [vmem:[#allocation10 + $0x20] sm:$0xff]
    %v2830 = vld [vmem:[#allocation10 + $0x28] sm:$0xff]
    %v2831 = vld [vmem:[#allocation10 + $0x30] sm:$0xff]
    %v2832 = vld [vmem:[#allocation10 + $0x38] sm:$0xff]
    %v2833 = vld [vmem:[#allocation10 + $0x40] sm:$0xff]
    %v2834 = vld [vmem:[#allocation10 + $0x48] sm:$0xff]
    %v2835 = vld [vmem:[#allocation10 + $0x50] sm:$0xff]
    %v2836 = vld [vmem:[#allocation10 + $0x58] sm:$0xff]
    %v2837 = vld [vmem:[#allocation10 + $0x60] sm:$0xff]
    %v2838 = vld [vmem:[#allocation10 + $0x68] sm:$0xff]
    %v2839 = vld [vmem:[#allocation10 + $0x70] sm:$0xff]
    %v2840 = vld [vmem:[#allocation10 + $0x78] sm:$0xff]
    %v2841 = vld [vmem:[#allocation10 + $0x80] sm:$0xff]
    %v2842 = vld [vmem:[#allocation10 + $0x88] sm:$0xff]
    %v2843 = vld [vmem:[#allocation10 + $0x90] sm:$0xff]
    %v2844 = vld [vmem:[#allocation10 + $0x98] sm:$0xff]
    %v2845 = vld [vmem:[#allocation10 + $0xa0] sm:$0xff]
    %v2846 = vld [vmem:[#allocation10 + $0xa8] sm:$0xff]
    %v2847 = vld [vmem:[#allocation10 + $0xb0] sm:$0xff]
    %v2848 = vld [vmem:[#allocation10 + $0xb8] sm:$0xff]
    %v2849 = vld [vmem:[#allocation10 + $0xc0] sm:$0xff]
    %v2850 = vld [vmem:[#allocation10 + $0xc8] sm:$0xff]
    %v2851 = vld [vmem:[#allocation10 + $0xd0] sm:$0xff]
    %v2852 = vld [vmem:[#allocation10 + $0xd8] sm:$0xff]
    %v2853 = vld [vmem:[#allocation10 + $0xe0] sm:$0xff]
    %v2854 = vld [vmem:[#allocation10 + $0xe8] sm:$0xff]
    %v2855 = vld [vmem:[#allocation10 + $0xf0] sm:$0xff]
    %v2856 = vld [vmem:[#allocation10 + $0xf8] sm:$0xff]
    %v2857 = vld [vmem:[%s37] sm:$0x3]
    %v2858 = vld [vmem:[%s39] sm:$0xff]
    %v2859 = vld [vmem:[%s39 + $0x8] sm:$0xff]
    %v2860 = vld [vmem:[%s39 + $0x10] sm:$0xff]
    %v2861 = vld [vmem:[%s39 + $0x18] sm:$0xff]
    %v2862 = vld [vmem:[%s39 + $0x20] sm:$0xff]
    %v2863 = vld [vmem:[%s39 + $0x28] sm:$0xff]
    %v2864 = vld [vmem:[%s39 + $0x30] sm:$0xff]
    %v2865 = vld [vmem:[%s39 + $0x38] sm:$0xff]
    %v2866 = vld [vmem:[%s39 + $0x40] sm:$0xff]
    %v2867 = vld [vmem:[%s39 + $0x48] sm:$0xff]
    %v2868 = vld [vmem:[%s39 + $0x50] sm:$0xff]
    %v2869 = vld [vmem:[%s39 + $0x58] sm:$0xff]
    %v2870 = vld [vmem:[%s39 + $0x60] sm:$0xff]
    %v2871 = vld [vmem:[%s39 + $0x68] sm:$0xff]
    %v2872 = vld [vmem:[%s39 + $0x70] sm:$0xff]
    %v2873 = vld [vmem:[%s39 + $0x78] sm:$0xff]
    %v2874 = vld [vmem:[%s39 + $0x80] sm:$0xff]
    %v2875 = vld [vmem:[%s39 + $0x88] sm:$0xff]
    %v2876 = vld [vmem:[%s39 + $0x90] sm:$0xff]
    %v2877 = vld [vmem:[%s39 + $0x98] sm:$0xff]
    %v2878 = vld [vmem:[%s39 + $0xa0] sm:$0xff]
    %v2879 = vld [vmem:[%s39 + $0xa8] sm:$0xff]
    %v2880 = vld [vmem:[%s39 + $0xb0] sm:$0xff]
    %v2881 = vld [vmem:[%s39 + $0xb8] sm:$0xff]
    %v2882 = vld [vmem:[#allocation11] sm:$0x1]
    %v2883 = vld [vmem:[%s43] sm:$0xff]
    %v2884 = vld [vmem:[%s43 + $0x8] sm:$0xff]
    %v2885 = vld [vmem:[%s43 + $0x10] sm:$0xff]
    %v2886 = vld [vmem:[%s43 + $0x18] sm:$0xff]
    %v2887 = vld [vmem:[%s43 + $0x20] sm:$0xff]
    %v2888 = vld [vmem:[%s43 + $0x28] sm:$0xff]
    %v2889 = vld [vmem:[%s43 + $0x30] sm:$0xff]
    %v2890 = vld [vmem:[%s43 + $0x38] sm:$0xff]
    %v2891 = vld [vmem:[%s43 + $0x40] sm:$0xff]
    %v2892 = vld [vmem:[%s43 + $0x48] sm:$0xff]
    %v2893 = vld [vmem:[%s43 + $0x50] sm:$0xff]
    %v2894 = vld [vmem:[%s43 + $0x58] sm:$0xff]
    %v2895 = vld [vmem:[%s43 + $0x60] sm:$0xff]
    %v2896 = vld [vmem:[%s43 + $0x68] sm:$0xff]
    %v2897 = vld [vmem:[%s43 + $0x70] sm:$0xff]
    %v2898 = vld [vmem:[%s43 + $0x78] sm:$0xff]
    %v2899 = vld [vmem:[%s43 + $0x80] sm:$0xff]
    %v2900 = vld [vmem:[%s43 + $0x88] sm:$0xff]
    %v2901 = vld [vmem:[%s43 + $0x90] sm:$0xff]
    %v2902 = vld [vmem:[%s43 + $0x98] sm:$0xff]
    %v2903 = vld [vmem:[%s43 + $0xa0] sm:$0xff]
    %v2904 = vld [vmem:[%s43 + $0xa8] sm:$0xff]
    %v2905 = vld [vmem:[%s43 + $0xb0] sm:$0xff]
    %v2906 = vld [vmem:[%s43 + $0xb8] sm:$0xff]
    %v2907 = vld [vmem:[%s43 + $0xc0] sm:$0xff]
    %v2908 = vld [vmem:[%s43 + $0xc8] sm:$0xff]
    %v2909 = vld [vmem:[%s43 + $0xd0] sm:$0xff]
    %v2910 = vld [vmem:[%s43 + $0xd8] sm:$0xff]
    %v2911 = vld [vmem:[%s43 + $0xe0] sm:$0xff]
    %v2912 = vld [vmem:[%s43 + $0xe8] sm:$0xff]
    %v2913 = vld [vmem:[%s43 + $0xf0] sm:$0xff]
    %v2914 = vld [vmem:[%s43 + $0xf8] sm:$0xff]
    %v2915 = vld [vmem:[%s43 + $0x100] sm:$0xff]
    %v2916 = vld [vmem:[%s43 + $0x108] sm:$0xff]
    %v2917 = vld [vmem:[%s43 + $0x110] sm:$0xff]
    %v2918 = vld [vmem:[%s43 + $0x118] sm:$0xff]
    %v2919 = vld [vmem:[%s43 + $0x120] sm:$0xff]
    %v2920 = vld [vmem:[%s43 + $0x128] sm:$0xff]
    %v2921 = vld [vmem:[%s43 + $0x130] sm:$0xff]
    %v2922 = vld [vmem:[%s43 + $0x138] sm:$0xff]
    %v2923 = vld [vmem:[#allocation13] sm:$0x1]
    %v2924 = vld [vmem:[%s47] sm:$0xff]
    %v2925 = vld [vmem:[%s47 + $0x8] sm:$0xff]
    %v2926 = vld [vmem:[%s47 + $0x10] sm:$0xff]
    %v2927 = vld [vmem:[%s47 + $0x18] sm:$0xff]
    %v2928 = vld [vmem:[%s47 + $0x20] sm:$0xff]
    %v2929 = vld [vmem:[%s47 + $0x28] sm:$0xff]
    %v2930 = vld [vmem:[%s47 + $0x30] sm:$0xff]
    %v2931 = vld [vmem:[%s47 + $0x38] sm:$0xff]
    %v2932 = vld [vmem:[%s47 + $0x40] sm:$0xff]
    %v2933 = vld [vmem:[%s47 + $0x48] sm:$0xff]
    %v2934 = vld [vmem:[%s47 + $0x50] sm:$0xff]
    %v2935 = vld [vmem:[%s47 + $0x58] sm:$0xff]
    %v2936 = vld [vmem:[%s47 + $0x60] sm:$0xff]
    %v2937 = vld [vmem:[%s47 + $0x68] sm:$0xff]
    %v2938 = vld [vmem:[%s47 + $0x70] sm:$0xff]
    %v2939 = vld [vmem:[%s47 + $0x78] sm:$0xff]
    %v2940 = vld [vmem:[#allocation14] sm:$0x1]
    %v2942 = vlaneseq
    %v2943 = vshrl.u32 %v2942, 7
    %v2944 = vsub.s32 0, %v2943
    %v2945 = vrot.slane %v2857, %v2944
    %v2946 = vlaneseq
    %v2947 = vshrl.u32 %v2946, 7
    %v2948 = vsub.s32 1, %v2947
    %v2949 = vrot.slane %v2857, %v2948
    %2952 = vmatprep.subr.mxu0 %v2856
    %2953 = vmatpush1.msra.mxu0 %v2855
    %2954 = vmatprep.subr.mxu0 %v2854
    %2955 = vmatpush1.msra.mxu0 %v2853
    %2956 = vmatprep.subr.mxu0 %v2852
    %2957 = vmatpush1.msra.mxu0 %v2851
    %2958 = vmatprep.subr.mxu0 %v2850
    %2959 = vmatpush1.msra.mxu0 %v2849
    %2960 = vmatprep.subr.mxu0 %v2848
    %2961 = vmatpush1.msra.mxu0 %v2847
    %2962 = vmatprep.subr.mxu0 %v2846
    %2963 = vmatpush1.msra.mxu0 %v2845
    %2964 = vmatprep.subr.mxu0 %v2844
    %2965 = vmatpush1.msra.mxu0 %v2843
    %2966 = vmatprep.subr.mxu0 %v2842
    %2967 = vmatpush1.msra.mxu0 %v2841
    %2968 = vmatprep.subr.mxu0 %v2840
    %2969 = vmatpush1.msra.mxu0 %v2839
    %2970 = vmatprep.subr.mxu0 %v2838
    %2971 = vmatpush1.msra.mxu0 %v2837
    %2972 = vmatprep.subr.mxu0 %v2836
    %2973 = vmatpush1.msra.mxu0 %v2835
    %2974 = vmatprep.subr.mxu0 %v2834
    %2975 = vmatpush1.msra.mxu0 %v2833
    %2976 = vmatprep.subr.mxu0 %v2832
    %2977 = vmatpush1.msra.mxu0 %v2831
    %2978 = vmatprep.subr.mxu0 %v2830
    %2979 = vmatpush1.msra.mxu0 %v2829
    %2980 = vmatprep.subr.mxu0 %v2828
    %2981 = vmatpush1.msra.mxu0 %v2827
    %2982 = vmatprep.subr.mxu0 %v2826
    %2983 = vmatpush1.msra.mxu0 %v2825
    %2984 = vmatprep.subr.mxu0 0.0
    %2985 = vmatpush2.msra.mxu0 0.0
    %2986 = vmatprep.subr.mxu0 0.0
    %2987 = vmatpush2.msra.mxu0 0.0
    %2988 = vmatprep.subr.mxu0 0.0
    %2989 = vmatpush2.msra.mxu0 0.0
    %2990 = vmatprep.subr.mxu0 0.0
    %2991 = vmatpush2.msra.mxu0 0.0
    %2992 = vmatprep.subr.mxu0 0.0
    %2993 = vmatpush2.msra.mxu0 0.0
    %2994 = vmatprep.subr.mxu0 0.0
    %2995 = vmatpush2.msra.mxu0 0.0
    %2996 = vmatprep.subr.mxu0 0.0
    %2997 = vmatpush2.msra.mxu0 0.0
    %2998 = vmatprep.subr.mxu0 0.0
    %2999 = vmatpush2.msra.mxu0 0.0
    %3000 = vmatprep.subr.mxu0 0.0
    %3001 = vmatpush2.msra.mxu0 0.0
    %3002 = vmatprep.subr.mxu0 0.0
    %3003 = vmatpush2.msra.mxu0 0.0
    %3004 = vmatprep.subr.mxu0 0.0
    %3005 = vmatpush2.msra.mxu0 0.0
    %3006 = vmatprep.subr.mxu0 0.0
    %3007 = vmatpush2.msra.mxu0 0.0
    %3008 = vmatprep.subr.mxu0 0.0
    %3009 = vmatpush2.msra.mxu0 0.0
    %3010 = vmatprep.subr.mxu0 0.0
    %3011 = vmatpush2.msra.mxu0 0.0
    %3012 = vmatprep.subr.mxu0 0.0
    %3013 = vmatpush2.msra.mxu0 0.0
    %3014 = vmatprep.subr.mxu0 0.0
    %3015 = vmatpush2.msra.mxu0 0.0
    %3016 = vmatprep.mubr.f32.mxu0 0.0
    %3017 = vmatmul.mubr.f32.gmra.mxu0 %v2779
    %v3018 = vpop.f32.mrf.mxu0
    %v3019 = vadd.f32 %v2945, %v3018
    %v3020 = vpop.f32.mrf.mxu0
    %v3021 = vadd.f32 %v2949, %v3020
    %3022 = vmatprep.mubr.f32.mxu0 0.0
    %3023 = vmatmul.mubr.f32.gmra.mxu0 %v2784
    %v3024 = vpop.f32.mrf.mxu0
    %v3025 = vadd.f32 %v2945, %v3024
    %v3026 = vpop.f32.mrf.mxu0
    %v3027 = vadd.f32 %v2949, %v3026
    %3028 = vmatprep.mubr.f32.mxu0 0.0
    %3029 = vmatmul.mubr.f32.gmra.mxu0 %v2789
    %v3030 = vpop.f32.mrf.mxu0
    %v3031 = vadd.f32 %v2945, %v3030
    %v3032 = vpop.f32.mrf.mxu0
    %v3033 = vadd.f32 %v2949, %v3032
    %3034 = vmatprep.mubr.f32.mxu0 0.0
    %3035 = vmatmul.mubr.f32.gmra.mxu0 %v2794
    %v3036 = vpop.f32.mrf.mxu0
    %v3037 = vadd.f32 %v2945, %v3036
    %v3038 = vpop.f32.mrf.mxu0
    %v3039 = vadd.f32 %v2949, %v3038
    %3040 = vmatprep.mubr.f32.mxu0 0.0
    %3041 = vmatmul.mubr.f32.gmra.mxu0 %v2799
    %v3042 = vpop.f32.mrf.mxu0
    %v3043 = vadd.f32 %v2945, %v3042
    %v3044 = vpop.f32.mrf.mxu0
    %v3045 = vadd.f32 %v2949, %v3044
    %3046 = vmatprep.mubr.f32.mxu0 0.0
    %3047 = vmatmul.mubr.f32.gmra.mxu0 %v2804
    %v3048 = vpop.f32.mrf.mxu0
    %v3049 = vadd.f32 %v2945, %v3048
    %v3050 = vpop.f32.mrf.mxu0
    %v3051 = vadd.f32 %v2949, %v3050
    %3052 = vmatprep.mubr.f32.mxu0 0.0
    %3053 = vmatmul.mubr.f32.gmra.mxu0 %v2809
    %v3054 = vpop.f32.mrf.mxu0
    %v3055 = vadd.f32 %v2945, %v3054
    %v3056 = vpop.f32.mrf.mxu0
    %v3057 = vadd.f32 %v2949, %v3056
    %3058 = vmatprep.mubr.f32.mxu0 0.0
    %3059 = vmatmul.mubr.f32.gmra.mxu0 %v2814
    %v3060 = vpop.f32.mrf.mxu0
    %v3061 = vadd.f32 %v2945, %v3060
    %v3062 = vpop.f32.mrf.mxu0
    %v3063 = vadd.f32 %v2949, %v3062
    %3064 = vdwg.mxu0
    %v3065 = vmax.f32 %v3019, 0.0
    %v3066 = vmax.f32 %v3021, 0.0
    %v3067 = vmax.f32 %v3025, 0.0
    %v3068 = vmax.f32 %v3027, 0.0
    %v3069 = vmax.f32 %v3031, 0.0
    %v3070 = vmax.f32 %v3033, 0.0
    %v3071 = vmax.f32 %v3037, 0.0
    %v3072 = vmax.f32 %v3039, 0.0
    %v3073 = vmax.f32 %v3043, 0.0
    %v3074 = vmax.f32 %v3045, 0.0
    %v3075 = vmax.f32 %v3049, 0.0
    %v3076 = vmax.f32 %v3051, 0.0
    %v3077 = vmax.f32 %v3055, 0.0
    %v3078 = vmax.f32 %v3057, 0.0
    %v3079 = vmax.f32 %v3061, 0.0
    %v3080 = vmax.f32 %v3063, 0.0
    %vm3081 = vcmp.lt.s32.totalorder %v2817, 7
    %vm3082 = vcmp.lt.s32.totalorder %v2818, 7
    %vm3083 = vcmp.lt.s32.totalorder %v2819, 7
    %vm3084 = vcmp.lt.s32.totalorder %v2820, 7
    %vm3085 = vcmp.lt.s32.totalorder %v2821, 7
    %vm3086 = vcmp.lt.s32.totalorder %v2822, 7
    %vm3087 = vcmp.lt.s32.totalorder %v2823, 7
    %vm3088 = vcmp.lt.s32.totalorder %v2824, 7
    %v3089 = vsel %vm3081, 1.0, 0.0
    %v3090 = vsel %vm3082, 1.0, 0.0
    %v3091 = vsel %vm3083, 1.0, 0.0
    %v3092 = vsel %vm3084, 1.0, 0.0
    %v3093 = vsel %vm3085, 1.0, 0.0
    %v3094 = vsel %vm3086, 1.0, 0.0
    %v3095 = vsel %vm3087, 1.0, 0.0
    %v3096 = vsel %vm3088, 1.0, 0.0
    %3098 = vset.pattern.permute.xlu0 0
    %3099 = vperm.xlu0 %3098, %v3089
    %v3100 = vpop.permute.xlu0 %3099
    %3103 = vset.pattern.permute.xlu0 0
    %3104 = vperm.xlu0 %3103, %v3090
    %v3105 = vpop.permute.xlu0 %3104
    %3108 = vset.pattern.permute.xlu0 0
    %3109 = vperm.xlu0 %3108, %v3091
    %v3110 = vpop.permute.xlu0 %3109
    %3113 = vset.pattern.permute.xlu0 0
    %3114 = vperm.xlu0 %3113, %v3092
    %v3115 = vpop.permute.xlu0 %3114
    %3118 = vset.pattern.permute.xlu0 0
    %3119 = vperm.xlu0 %3118, %v3093
    %v3120 = vpop.permute.xlu0 %3119
    %3123 = vset.pattern.permute.xlu0 0
    %3124 = vperm.xlu0 %3123, %v3094
    %v3125 = vpop.permute.xlu0 %3124
    %3128 = vset.pattern.permute.xlu0 0
    %3129 = vperm.xlu0 %3128, %v3095
    %v3130 = vpop.permute.xlu0 %3129
    %3133 = vset.pattern.permute.xlu0 0
    %3134 = vperm.xlu0 %3133, %v3096
    %v3135 = vpop.permute.xlu0 %3134
    %v3137 = vmul.f32 %v3065, %v3100
    %v3138 = vmul.f32 %v3066, %v3100
    %v3139 = vmul.f32 %v3067, %v3105
    %v3140 = vmul.f32 %v3068, %v3105
    %v3141 = vmul.f32 %v3069, %v3110
    %v3142 = vmul.f32 %v3070, %v3110
    %v3143 = vmul.f32 %v3071, %v3115
    %v3144 = vmul.f32 %v3072, %v3115
    %v3145 = vmul.f32 %v3073, %v3120
    %v3146 = vmul.f32 %v3074, %v3120
    %v3147 = vmul.f32 %v3075, %v3125
    %v3148 = vmul.f32 %v3076, %v3125
    %v3149 = vmul.f32 %v3077, %v3130
    %v3150 = vmul.f32 %v3078, %v3130
    %v3151 = vmul.f32 %v3079, %v3135
    %v3152 = vmul.f32 %v3080, %v3135
    %v3161 = vrot.slane %v3137, 7
    %v3162 = vrot.slane %v3139, 7
    %v3163 = vsel %vm1026, %v3161, %v3162
    %v3164 = vrot.slane %v3141, 7
    %v3165 = vsel %vm1026, %v3162, %v3164
    %v3166 = vrot.slane %v3143, 7
    %v3167 = vsel %vm1026, %v3164, %v3166
    %v3168 = vrot.slane %v3145, 7
    %v3169 = vsel %vm1026, %v3166, %v3168
    %v3170 = vrot.slane %v3147, 7
    %v3171 = vsel %vm1026, %v3168, %v3170
    %v3172 = vrot.slane %v3149, 7
    %v3173 = vsel %vm1026, %v3170, %v3172
    %v3174 = vrot.slane %v3151, 7
    %v3175 = vsel %vm1026, %v3172, %v3174
    %3176 = vrot.lane.b32.xlu0 %v3161, 64
    %v3177 = vpop.permute.xlu0 %3176
    %3178 = vrot.lane.b32.xlu0 %v3163, 64
    %v3179 = vpop.permute.xlu0 %3178
    %3180 = vrot.lane.b32.xlu0 %v3165, 64
    %v3181 = vpop.permute.xlu0 %3180
    %3182 = vrot.lane.b32.xlu0 %v3167, 64
    %v3183 = vpop.permute.xlu0 %3182
    %3184 = vrot.lane.b32.xlu0 %v3169, 64
    %v3185 = vpop.permute.xlu0 %3184
    %3186 = vrot.lane.b32.xlu0 %v3171, 64
    %v3187 = vpop.permute.xlu0 %3186
    %3188 = vrot.lane.b32.xlu0 %v3173, 64
    %v3189 = vpop.permute.xlu0 %3188
    %3190 = vrot.lane.b32.xlu0 %v3175, 64
    %v3191 = vpop.permute.xlu0 %3190
    %v3200 = vsel %vm1026, 0.0, %v3177
    %v3201 = vrot.slane %v3137, 1
    %v3202 = vrot.slane %v3139, 1
    %v3203 = vsel %vm1087, %v3201, %v3202
    %v3204 = vrot.slane %v3141, 1
    %v3205 = vsel %vm1087, %v3202, %v3204
    %v3206 = vrot.slane %v3143, 1
    %v3207 = vsel %vm1087, %v3204, %v3206
    %v3208 = vrot.slane %v3145, 1
    %v3209 = vsel %vm1087, %v3206, %v3208
    %v3210 = vrot.slane %v3147, 1
    %v3211 = vsel %vm1087, %v3208, %v3210
    %v3212 = vrot.slane %v3149, 1
    %v3213 = vsel %vm1087, %v3210, %v3212
    %v3214 = vrot.slane %v3151, 1
    %v3215 = vsel %vm1087, %v3212, %v3214
    %v3217 = vsel %vm1087, %v3214, 0.0
    %3219 = vrot.lane.b32.xlu0 %v3203, 64
    %v3220 = vpop.permute.xlu0 %3219
    %3221 = vrot.lane.b32.xlu0 %v3205, 64
    %v3222 = vpop.permute.xlu0 %3221
    %3223 = vrot.lane.b32.xlu0 %v3207, 64
    %v3224 = vpop.permute.xlu0 %3223
    %3225 = vrot.lane.b32.xlu0 %v3209, 64
    %v3226 = vpop.permute.xlu0 %3225
    %3227 = vrot.lane.b32.xlu0 %v3211, 64
    %v3228 = vpop.permute.xlu0 %3227
    %3229 = vrot.lane.b32.xlu0 %v3213, 64
    %v3230 = vpop.permute.xlu0 %3229
    %3231 = vrot.lane.b32.xlu0 %v3215, 64
    %v3232 = vpop.permute.xlu0 %3231
    %3233 = vrot.lane.b32.xlu0 %v3217, 64
    %v3234 = vpop.permute.xlu0 %3233
    %v3235 = vsel %vm1162, %v3200, %v3137
    %v3236 = vsel %vm1162, %v3179, %v3139
    %v3237 = vsel %vm1162, %v3181, %v3141
    %v3238 = vsel %vm1162, %v3183, %v3143
    %v3239 = vsel %vm1162, %v3185, %v3145
    %v3240 = vsel %vm1162, %v3187, %v3147
    %v3241 = vsel %vm1162, %v3189, %v3149
    %v3242 = vsel %vm1162, %v3191, %v3151
    %v3244 = vlaneseq
    %v3245 = vshrl.u32 %v3244, 7
    %v3246 = vsub.s32 0, %v3245
    %v3247 = vrot.slane %v2882, %v3246
    %v3249 = vsel %vm1162, %v3220, 0
    %v3251 = vsel %vm1162, %v3222, 0
    %v3253 = vsel %vm1162, %v3224, 0
    %v3255 = vsel %vm1162, %v3226, 0
    %v3257 = vsel %vm1162, %v3228, 0
    %v3259 = vsel %vm1162, %v3230, 0
    %v3261 = vsel %vm1162, %v3232, 0
    %v3263 = vsel %vm1162, %v3234, 0
    %3265 = vmatprep.subr.mxu0 0.0
    %3266 = vmatpush1.msra.mxu0 %v2873
    %3267 = vmatprep.subr.mxu0 0.0
    %3268 = vmatpush1.msra.mxu0 %v2872
    %3269 = vmatprep.subr.mxu0 0.0
    %3270 = vmatpush1.msra.mxu0 %v2871
    %3271 = vmatprep.subr.mxu0 0.0
    %3272 = vmatpush1.msra.mxu0 %v2870
    %3273 = vmatprep.subr.mxu0 0.0
    %3274 = vmatpush1.msra.mxu0 %v2869
    %3275 = vmatprep.subr.mxu0 0.0
    %3276 = vmatpush1.msra.mxu0 %v2868
    %3277 = vmatprep.subr.mxu0 0.0
    %3278 = vmatpush1.msra.mxu0 %v2867
    %3279 = vmatprep.subr.mxu0 0.0
    %3280 = vmatpush1.msra.mxu0 %v2866
    %3281 = vmatprep.subr.mxu0 0.0
    %3282 = vmatpush1.msra.mxu0 %v2865
    %3283 = vmatprep.subr.mxu0 0.0
    %3284 = vmatpush1.msra.mxu0 %v2864
    %3285 = vmatprep.subr.mxu0 0.0
    %3286 = vmatpush1.msra.mxu0 %v2863
    %3287 = vmatprep.subr.mxu0 0.0
    %3288 = vmatpush1.msra.mxu0 %v2862
    %3289 = vmatprep.subr.mxu0 0.0
    %3290 = vmatpush1.msra.mxu0 %v2861
    %3291 = vmatprep.subr.mxu0 0.0
    %3292 = vmatpush1.msra.mxu0 %v2860
    %3293 = vmatprep.subr.mxu0 0.0
    %3294 = vmatpush1.msra.mxu0 %v2859
    %3295 = vmatprep.subr.mxu0 0.0
    %3296 = vmatpush1.msra.mxu0 %v2858
    %3297 = vmatprep.subr.mxu0 0.0
    %3298 = vmatpush2.msra.mxu0 0.0
    %3299 = vmatprep.subr.mxu0 0.0
    %3300 = vmatpush2.msra.mxu0 0.0
    %3301 = vmatprep.subr.mxu0 0.0
    %3302 = vmatpush2.msra.mxu0 0.0
    %3303 = vmatprep.subr.mxu0 0.0
    %3304 = vmatpush2.msra.mxu0 0.0
    %3305 = vmatprep.subr.mxu0 0.0
    %3306 = vmatpush2.msra.mxu0 0.0
    %3307 = vmatprep.subr.mxu0 0.0
    %3308 = vmatpush2.msra.mxu0 0.0
    %3309 = vmatprep.subr.mxu0 0.0
    %3310 = vmatpush2.msra.mxu0 0.0
    %3311 = vmatprep.subr.mxu0 0.0
    %3312 = vmatpush2.msra.mxu0 0.0
    %3313 = vmatprep.subr.mxu0 0.0
    %3314 = vmatpush2.msra.mxu0 %v2881
    %3315 = vmatprep.subr.mxu0 0.0
    %3316 = vmatpush2.msra.mxu0 %v2880
    %3317 = vmatprep.subr.mxu0 0.0
    %3318 = vmatpush2.msra.mxu0 %v2879
    %3319 = vmatprep.subr.mxu0 0.0
    %3320 = vmatpush2.msra.mxu0 %v2878
    %3321 = vmatprep.subr.mxu0 0.0
    %3322 = vmatpush2.msra.mxu0 %v2877
    %3323 = vmatprep.subr.mxu0 0.0
    %3324 = vmatpush2.msra.mxu0 %v2876
    %3325 = vmatprep.subr.mxu0 0.0
    %3326 = vmatpush2.msra.mxu0 %v2875
    %3327 = vmatprep.subr.mxu0 0.0
    %3328 = vmatpush2.msra.mxu0 %v2874
    %3329 = vmatprep.mubr.f32.mxu0 %v3249
    %3330 = vmatmul.mubr.f32.gmra.mxu0 %v3235
    %v3331 = vpop.f32.mrf.mxu0
    %v3332 = vadd.f32 %v3247, %v3331
    %v3333 = vpop.f32.mrf.mxu0
    %3334 = vmatprep.mubr.f32.mxu0 %v3251
    %3335 = vmatmul.mubr.f32.gmra.mxu0 %v3236
    %v3336 = vpop.f32.mrf.mxu0
    %v3337 = vadd.f32 %v3247, %v3336
    %v3338 = vpop.f32.mrf.mxu0
    %3339 = vmatprep.mubr.f32.mxu0 %v3253
    %3340 = vmatmul.mubr.f32.gmra.mxu0 %v3237
    %v3341 = vpop.f32.mrf.mxu0
    %v3342 = vadd.f32 %v3247, %v3341
    %v3343 = vpop.f32.mrf.mxu0
    %3344 = vmatprep.mubr.f32.mxu0 %v3255
    %3345 = vmatmul.mubr.f32.gmra.mxu0 %v3238
    %v3346 = vpop.f32.mrf.mxu0
    %v3347 = vadd.f32 %v3247, %v3346
    %v3348 = vpop.f32.mrf.mxu0
    %3349 = vmatprep.mubr.f32.mxu0 %v3257
    %3350 = vmatmul.mubr.f32.gmra.mxu0 %v3239
    %v3351 = vpop.f32.mrf.mxu0
    %v3352 = vadd.f32 %v3247, %v3351
    %v3353 = vpop.f32.mrf.mxu0
    %3354 = vmatprep.mubr.f32.mxu0 %v3259
    %3355 = vmatmul.mubr.f32.gmra.mxu0 %v3240
    %v3356 = vpop.f32.mrf.mxu0
    %v3357 = vadd.f32 %v3247, %v3356
    %v3358 = vpop.f32.mrf.mxu0
    %3359 = vmatprep.mubr.f32.mxu0 %v3261
    %3360 = vmatmul.mubr.f32.gmra.mxu0 %v3241
    %v3361 = vpop.f32.mrf.mxu0
    %v3362 = vadd.f32 %v3247, %v3361
    %v3363 = vpop.f32.mrf.mxu0
    %3364 = vmatprep.mubr.f32.mxu0 %v3263
    %3365 = vmatmul.mubr.f32.gmra.mxu0 %v3242
    %v3366 = vpop.f32.mrf.mxu0
    %v3367 = vadd.f32 %v3247, %v3366
    %v3368 = vpop.f32.mrf.mxu0
    %3369 = vdwg.mxu0
    %v3370 = vmax.f32 %v3332, 0.0
    %v3371 = vmax.f32 %v3337, 0.0
    %v3372 = vmax.f32 %v3342, 0.0
    %v3373 = vmax.f32 %v3347, 0.0
    %v3374 = vmax.f32 %v3352, 0.0
    %v3375 = vmax.f32 %v3357, 0.0
    %v3376 = vmax.f32 %v3362, 0.0
    %v3377 = vmax.f32 %v3367, 0.0
    %v3386 = vrot.slane %v3138, 6
    %v3387 = vrot.slane %v3140, 6
    %v3388 = vsel %vm1355, %v3386, %v3387
    %v3389 = vrot.slane %v3142, 6
    %v3390 = vsel %vm1355, %v3387, %v3389
    %v3391 = vrot.slane %v3144, 6
    %v3392 = vsel %vm1355, %v3389, %v3391
    %v3393 = vrot.slane %v3146, 6
    %v3394 = vsel %vm1355, %v3391, %v3393
    %v3395 = vrot.slane %v3148, 6
    %v3396 = vsel %vm1355, %v3393, %v3395
    %v3397 = vrot.slane %v3150, 6
    %v3398 = vsel %vm1355, %v3395, %v3397
    %v3399 = vrot.slane %v3152, 6
    %v3400 = vsel %vm1355, %v3397, %v3399
    %v3409 = vsel %vm1355, 0.0, %v3386
    %v3410 = vrot.slane %v3138, 7
    %v3411 = vrot.slane %v3140, 7
    %v3412 = vsel %vm1026, %v3410, %v3411
    %v3413 = vrot.slane %v3142, 7
    %v3414 = vsel %vm1026, %v3411, %v3413
    %v3415 = vrot.slane %v3144, 7
    %v3416 = vsel %vm1026, %v3413, %v3415
    %v3417 = vrot.slane %v3146, 7
    %v3418 = vsel %vm1026, %v3415, %v3417
    %v3419 = vrot.slane %v3148, 7
    %v3420 = vsel %vm1026, %v3417, %v3419
    %v3421 = vrot.slane %v3150, 7
    %v3422 = vsel %vm1026, %v3419, %v3421
    %v3423 = vrot.slane %v3152, 7
    %v3424 = vsel %vm1026, %v3421, %v3423
    %v3426 = vsel %vm1026, 0.0, %v3410
    %v3427 = vrot.slane %v3138, 1
    %v3428 = vrot.slane %v3140, 1
    %v3429 = vsel %vm1087, %v3427, %v3428
    %v3430 = vrot.slane %v3142, 1
    %v3431 = vsel %vm1087, %v3428, %v3430
    %v3432 = vrot.slane %v3144, 1
    %v3433 = vsel %vm1087, %v3430, %v3432
    %v3434 = vrot.slane %v3146, 1
    %v3435 = vsel %vm1087, %v3432, %v3434
    %v3436 = vrot.slane %v3148, 1
    %v3437 = vsel %vm1087, %v3434, %v3436
    %v3438 = vrot.slane %v3150, 1
    %v3439 = vsel %vm1087, %v3436, %v3438
    %v3440 = vrot.slane %v3152, 1
    %v3441 = vsel %vm1087, %v3438, %v3440
    %v3443 = vsel %vm1087, %v3440, 0.0
    %v3444 = vrot.slane %v3138, 2
    %v3445 = vrot.slane %v3140, 2
    %v3446 = vsel %vm1442, %v3444, %v3445
    %v3447 = vrot.slane %v3142, 2
    %v3448 = vsel %vm1442, %v3445, %v3447
    %v3449 = vrot.slane %v3144, 2
    %v3450 = vsel %vm1442, %v3447, %v3449
    %v3451 = vrot.slane %v3146, 2
    %v3452 = vsel %vm1442, %v3449, %v3451
    %v3453 = vrot.slane %v3148, 2
    %v3454 = vsel %vm1442, %v3451, %v3453
    %v3455 = vrot.slane %v3150, 2
    %v3456 = vsel %vm1442, %v3453, %v3455
    %v3457 = vrot.slane %v3152, 2
    %v3458 = vsel %vm1442, %v3455, %v3457
    %v3460 = vsel %vm1442, %v3457, 0.0
    %3462 = vrot.lane.b32.xlu0 %v3426, 64
    %v3463 = vpop.permute.xlu0 %3462
    %3464 = vrot.lane.b32.xlu0 %v3412, 64
    %v3465 = vpop.permute.xlu0 %3464
    %3466 = vrot.lane.b32.xlu0 %v3414, 64
    %v3467 = vpop.permute.xlu0 %3466
    %3468 = vrot.lane.b32.xlu0 %v3416, 64
    %v3469 = vpop.permute.xlu0 %3468
    %3470 = vrot.lane.b32.xlu0 %v3418, 64
    %v3471 = vpop.permute.xlu0 %3470
    %3472 = vrot.lane.b32.xlu0 %v3420, 64
    %v3473 = vpop.permute.xlu0 %3472
    %3474 = vrot.lane.b32.xlu0 %v3422, 64
    %v3475 = vpop.permute.xlu0 %3474
    %3476 = vrot.lane.b32.xlu0 %v3424, 64
    %v3477 = vpop.permute.xlu0 %3476
    %3487 = vrot.lane.b32.xlu0 %v3429, 64
    %v3488 = vpop.permute.xlu0 %3487
    %3489 = vrot.lane.b32.xlu0 %v3431, 64
    %v3490 = vpop.permute.xlu0 %3489
    %3491 = vrot.lane.b32.xlu0 %v3433, 64
    %v3492 = vpop.permute.xlu0 %3491
    %3493 = vrot.lane.b32.xlu0 %v3435, 64
    %v3494 = vpop.permute.xlu0 %3493
    %3495 = vrot.lane.b32.xlu0 %v3437, 64
    %v3496 = vpop.permute.xlu0 %3495
    %3497 = vrot.lane.b32.xlu0 %v3439, 64
    %v3498 = vpop.permute.xlu0 %3497
    %3499 = vrot.lane.b32.xlu0 %v3441, 64
    %v3500 = vpop.permute.xlu0 %3499
    %3501 = vrot.lane.b32.xlu0 %v3443, 64
    %v3502 = vpop.permute.xlu0 %3501
    %v3511 = vsel %vm1162, %v3409, %v3463
    %v3512 = vsel %vm1162, %v3388, %v3465
    %v3513 = vsel %vm1162, %v3390, %v3467
    %v3514 = vsel %vm1162, %v3392, %v3469
    %v3515 = vsel %vm1162, %v3394, %v3471
    %v3516 = vsel %vm1162, %v3396, %v3473
    %v3517 = vsel %vm1162, %v3398, %v3475
    %v3518 = vsel %vm1162, %v3400, %v3477
    %v3519 = vsel %vm1162, %v3138, %v3488
    %v3520 = vsel %vm1162, %v3140, %v3490
    %v3521 = vsel %vm1162, %v3142, %v3492
    %v3522 = vsel %vm1162, %v3144, %v3494
    %v3523 = vsel %vm1162, %v3146, %v3496
    %v3524 = vsel %vm1162, %v3148, %v3498
    %v3525 = vsel %vm1162, %v3150, %v3500
    %v3526 = vsel %vm1162, %v3152, %v3502
    %v3528 = vlaneseq
    %v3529 = vshrl.u32 %v3528, 7
    %v3530 = vsub.s32 0, %v3529
    %v3531 = vrot.slane %v2923, %v3530
    %v3533 = vsel %vm1162, %v3446, 0
    %v3535 = vsel %vm1162, %v3448, 0
    %v3537 = vsel %vm1162, %v3450, 0
    %v3539 = vsel %vm1162, %v3452, 0
    %v3541 = vsel %vm1162, %v3454, 0
    %v3543 = vsel %vm1162, %v3456, 0
    %v3545 = vsel %vm1162, %v3458, 0
    %v3548 = vsel %vm1162, %v3460, 0
    %3550 = vmatprep.subr.mxu0 0.0
    %3551 = vmatpush1.msra.mxu0 %v2898
    %3552 = vmatprep.subr.mxu0 0.0
    %3553 = vmatpush1.msra.mxu0 %v2897
    %3554 = vmatprep.subr.mxu0 0.0
    %3555 = vmatpush1.msra.mxu0 %v2896
    %3556 = vmatprep.subr.mxu0 0.0
    %3557 = vmatpush1.msra.mxu0 %v2895
    %3558 = vmatprep.subr.mxu0 0.0
    %3559 = vmatpush1.msra.mxu0 %v2894
    %3560 = vmatprep.subr.mxu0 0.0
    %3561 = vmatpush1.msra.mxu0 %v2893
    %3562 = vmatprep.subr.mxu0 0.0
    %3563 = vmatpush1.msra.mxu0 %v2892
    %3564 = vmatprep.subr.mxu0 0.0
    %3565 = vmatpush1.msra.mxu0 %v2891
    %3566 = vmatprep.subr.mxu0 0.0
    %3567 = vmatpush1.msra.mxu0 %v2890
    %3568 = vmatprep.subr.mxu0 0.0
    %3569 = vmatpush1.msra.mxu0 %v2889
    %3570 = vmatprep.subr.mxu0 0.0
    %3571 = vmatpush1.msra.mxu0 %v2888
    %3572 = vmatprep.subr.mxu0 0.0
    %3573 = vmatpush1.msra.mxu0 %v2887
    %3574 = vmatprep.subr.mxu0 0.0
    %3575 = vmatpush1.msra.mxu0 %v2886
    %3576 = vmatprep.subr.mxu0 0.0
    %3577 = vmatpush1.msra.mxu0 %v2885
    %3578 = vmatprep.subr.mxu0 0.0
    %3579 = vmatpush1.msra.mxu0 %v2884
    %3580 = vmatprep.subr.mxu0 0.0
    %3581 = vmatpush1.msra.mxu0 %v2883
    %3582 = vmatprep.subr.mxu0 0.0
    %3583 = vmatpush2.msra.mxu0 %v2914
    %3584 = vmatprep.subr.mxu0 0.0
    %3585 = vmatpush2.msra.mxu0 %v2913
    %3586 = vmatprep.subr.mxu0 0.0
    %3587 = vmatpush2.msra.mxu0 %v2912
    %3588 = vmatprep.subr.mxu0 0.0
    %3589 = vmatpush2.msra.mxu0 %v2911
    %3590 = vmatprep.subr.mxu0 0.0
    %3591 = vmatpush2.msra.mxu0 %v2910
    %3592 = vmatprep.subr.mxu0 0.0
    %3593 = vmatpush2.msra.mxu0 %v2909
    %3594 = vmatprep.subr.mxu0 0.0
    %3595 = vmatpush2.msra.mxu0 %v2908
    %3596 = vmatprep.subr.mxu0 0.0
    %3597 = vmatpush2.msra.mxu0 %v2907
    %3598 = vmatprep.subr.mxu0 0.0
    %3599 = vmatpush2.msra.mxu0 %v2906
    %3600 = vmatprep.subr.mxu0 0.0
    %3601 = vmatpush2.msra.mxu0 %v2905
    %3602 = vmatprep.subr.mxu0 0.0
    %3603 = vmatpush2.msra.mxu0 %v2904
    %3604 = vmatprep.subr.mxu0 0.0
    %3605 = vmatpush2.msra.mxu0 %v2903
    %3606 = vmatprep.subr.mxu0 0.0
    %3607 = vmatpush2.msra.mxu0 %v2902
    %3608 = vmatprep.subr.mxu0 0.0
    %3609 = vmatpush2.msra.mxu0 %v2901
    %3610 = vmatprep.subr.mxu0 0.0
    %3611 = vmatpush2.msra.mxu0 %v2900
    %3612 = vmatprep.subr.mxu0 0.0
    %3613 = vmatpush2.msra.mxu0 %v2899
    %3614 = vmatprep.mubr.f32.mxu0 %v3519
    %3615 = vmatmul.mubr.f32.gmra.mxu0 %v3511
    %v3616 = vpop.f32.mrf.mxu0
    %v3617 = vadd.f32 %v3531, %v3616
    %v3618 = vpop.f32.mrf.mxu0
    %3619 = vmatprep.mubr.f32.mxu0 %v3520
    %3620 = vmatmul.mubr.f32.gmra.mxu0 %v3512
    %v3621 = vpop.f32.mrf.mxu0
    %v3622 = vadd.f32 %v3531, %v3621
    %v3623 = vpop.f32.mrf.mxu0
    %3624 = vmatprep.mubr.f32.mxu0 %v3521
    %3625 = vmatmul.mubr.f32.gmra.mxu0 %v3513
    %v3626 = vpop.f32.mrf.mxu0
    %v3627 = vadd.f32 %v3531, %v3626
    %v3628 = vpop.f32.mrf.mxu0
    %3629 = vmatprep.mubr.f32.mxu0 %v3522
    %3630 = vmatmul.mubr.f32.gmra.mxu0 %v3514
    %v3631 = vpop.f32.mrf.mxu0
    %v3632 = vadd.f32 %v3531, %v3631
    %v3633 = vpop.f32.mrf.mxu0
    %3634 = vmatprep.mubr.f32.mxu0 %v3523
    %3635 = vmatmul.mubr.f32.gmra.mxu0 %v3515
    %v3636 = vpop.f32.mrf.mxu0
    %v3637 = vadd.f32 %v3531, %v3636
    %v3638 = vpop.f32.mrf.mxu0
    %3639 = vmatprep.mubr.f32.mxu0 %v3524
    %3640 = vmatmul.mubr.f32.gmra.mxu0 %v3516
    %v3641 = vpop.f32.mrf.mxu0
    %v3642 = vadd.f32 %v3531, %v3641
    %v3643 = vpop.f32.mrf.mxu0
    %3644 = vmatprep.mubr.f32.mxu0 %v3525
    %3645 = vmatmul.mubr.f32.gmra.mxu0 %v3517
    %v3646 = vpop.f32.mrf.mxu0
    %v3647 = vadd.f32 %v3531, %v3646
    %v3648 = vpop.f32.mrf.mxu0
    %3649 = vmatprep.mubr.f32.mxu0 %v3526
    %3650 = vmatmul.mubr.f32.gmra.mxu0 %v3518
    %v3651 = vpop.f32.mrf.mxu0
    %v3652 = vadd.f32 %v3531, %v3651
    %v3653 = vpop.f32.mrf.mxu0
    %3654 = vdwg.mxu0
    %3655 = vmatprep.subr.mxu0 0.0
    %3656 = vmatpush1.msra.mxu0 0.0
    %3657 = vmatprep.subr.mxu0 0.0
    %3658 = vmatpush1.msra.mxu0 0.0
    %3659 = vmatprep.subr.mxu0 0.0
    %3660 = vmatpush1.msra.mxu0 0.0
    %3661 = vmatprep.subr.mxu0 0.0
    %3662 = vmatpush1.msra.mxu0 0.0
    %3663 = vmatprep.subr.mxu0 0.0
    %3664 = vmatpush1.msra.mxu0 0.0
    %3665 = vmatprep.subr.mxu0 0.0
    %3666 = vmatpush1.msra.mxu0 0.0
    %3667 = vmatprep.subr.mxu0 0.0
    %3668 = vmatpush1.msra.mxu0 0.0
    %3669 = vmatprep.subr.mxu0 0.0
    %3670 = vmatpush1.msra.mxu0 0.0
    %3671 = vmatprep.subr.mxu0 0.0
    %3672 = vmatpush1.msra.mxu0 %v2922
    %3673 = vmatprep.subr.mxu0 0.0
    %3674 = vmatpush1.msra.mxu0 %v2921
    %3675 = vmatprep.subr.mxu0 0.0
    %3676 = vmatpush1.msra.mxu0 %v2920
    %3677 = vmatprep.subr.mxu0 0.0
    %3678 = vmatpush1.msra.mxu0 %v2919
    %3679 = vmatprep.subr.mxu0 0.0
    %3680 = vmatpush1.msra.mxu0 %v2918
    %3681 = vmatprep.subr.mxu0 0.0
    %3682 = vmatpush1.msra.mxu0 %v2917
    %3683 = vmatprep.subr.mxu0 0.0
    %3684 = vmatpush1.msra.mxu0 %v2916
    %3685 = vmatprep.subr.mxu0 0.0
    %3686 = vmatpush1.msra.mxu0 %v2915
    %3687 = vmatprep.subr.mxu0 0.0
    %3688 = vmatpush2.msra.mxu0 0.0
    %3689 = vmatprep.subr.mxu0 0.0
    %3690 = vmatpush2.msra.mxu0 0.0
    %3691 = vmatprep.subr.mxu0 0.0
    %3692 = vmatpush2.msra.mxu0 0.0
    %3693 = vmatprep.subr.mxu0 0.0
    %3694 = vmatpush2.msra.mxu0 0.0
    %3695 = vmatprep.subr.mxu0 0.0
    %3696 = vmatpush2.msra.mxu0 0.0
    %3697 = vmatprep.subr.mxu0 0.0
    %3698 = vmatpush2.msra.mxu0 0.0
    %3699 = vmatprep.subr.mxu0 0.0
    %3700 = vmatpush2.msra.mxu0 0.0
    %3701 = vmatprep.subr.mxu0 0.0
    %3702 = vmatpush2.msra.mxu0 0.0
    %3703 = vmatprep.subr.mxu0 0.0
    %3704 = vmatpush2.msra.mxu0 0.0
    %3705 = vmatprep.subr.mxu0 0.0
    %3706 = vmatpush2.msra.mxu0 0.0
    %3707 = vmatprep.subr.mxu0 0.0
    %3708 = vmatpush2.msra.mxu0 0.0
    %3709 = vmatprep.subr.mxu0 0.0
    %3710 = vmatpush2.msra.mxu0 0.0
    %3711 = vmatprep.subr.mxu0 0.0
    %3712 = vmatpush2.msra.mxu0 0.0
    %3713 = vmatprep.subr.mxu0 0.0
    %3714 = vmatpush2.msra.mxu0 0.0
    %3715 = vmatprep.subr.mxu0 0.0
    %3716 = vmatpush2.msra.mxu0 0.0
    %3717 = vmatprep.subr.mxu0 0.0
    %3718 = vmatpush2.msra.mxu0 0.0
    %3719 = vmatprep.mubr.f32.mxu0 0.0
    %3720 = vmatmul.mubr.f32.gmra.mxu0 %v3533
    %v3721 = vpop.f32.mrf.mxu0
    %v3722 = vadd.f32 %v3617, %v3721
    %v3723 = vpop.f32.mrf.mxu0
    %3724 = vmatprep.mubr.f32.mxu0 0.0
    %3725 = vmatmul.mubr.f32.gmra.mxu0 %v3535
    %v3726 = vpop.f32.mrf.mxu0
    %v3727 = vadd.f32 %v3622, %v3726
    %v3728 = vpop.f32.mrf.mxu0
    %3729 = vmatprep.mubr.f32.mxu0 0.0
    %3730 = vmatmul.mubr.f32.gmra.mxu0 %v3537
    %v3731 = vpop.f32.mrf.mxu0
    %v3732 = vadd.f32 %v3627, %v3731
    %v3733 = vpop.f32.mrf.mxu0
    %3734 = vmatprep.mubr.f32.mxu0 0.0
    %3735 = vmatmul.mubr.f32.gmra.mxu0 %v3539
    %v3736 = vpop.f32.mrf.mxu0
    %v3737 = vadd.f32 %v3632, %v3736
    %v3738 = vpop.f32.mrf.mxu0
    %3739 = vmatprep.mubr.f32.mxu0 0.0
    %3740 = vmatmul.mubr.f32.gmra.mxu0 %v3541
    %v3741 = vpop.f32.mrf.mxu0
    %v3742 = vadd.f32 %v3637, %v3741
    %v3743 = vpop.f32.mrf.mxu0
    %3744 = vmatprep.mubr.f32.mxu0 0.0
    %3745 = vmatmul.mubr.f32.gmra.mxu0 %v3543
    %v3746 = vpop.f32.mrf.mxu0
    %v3747 = vadd.f32 %v3642, %v3746
    %v3748 = vpop.f32.mrf.mxu0
    %3749 = vmatprep.mubr.f32.mxu0 0.0
    %3750 = vmatmul.mubr.f32.gmra.mxu0 %v3545
    %v3751 = vpop.f32.mrf.mxu0
    %v3752 = vadd.f32 %v3647, %v3751
    %v3753 = vpop.f32.mrf.mxu0
    %3754 = vmatprep.mubr.f32.mxu0 0.0
    %3755 = vmatmul.mubr.f32.gmra.mxu0 %v3548
    %v3756 = vpop.f32.mrf.mxu0
    %v3757 = vadd.f32 %v3652, %v3756
    %v3758 = vpop.f32.mrf.mxu0
    %3759 = vdwg.mxu0
    %v3760 = vmax.f32 %v3722, 0.0
    %v3761 = vmax.f32 %v3727, 0.0
    %v3762 = vmax.f32 %v3732, 0.0
    %v3763 = vmax.f32 %v3737, 0.0
    %v3764 = vmax.f32 %v3742, 0.0
    %v3765 = vmax.f32 %v3747, 0.0
    %v3766 = vmax.f32 %v3752, 0.0
    %v3767 = vmax.f32 %v3757, 0.0
    %vm3768 = vcmp.eq.s32.totalorder %v2817, 0
    %vm3769 = vcmp.eq.s32.totalorder %v2818, 0
    %vm3770 = vcmp.eq.s32.totalorder %v2819, 0
    %vm3771 = vcmp.eq.s32.totalorder %v2820, 0
    %vm3772 = vcmp.eq.s32.totalorder %v2821, 0
    %vm3773 = vcmp.eq.s32.totalorder %v2822, 0
    %vm3774 = vcmp.eq.s32.totalorder %v2823, 0
    %vm3775 = vcmp.eq.s32.totalorder %v2824, 0
    %v3776 = vsel %vm3768, 1.0, 0.0
    %v3777 = vsel %vm3769, 1.0, 0.0
    %v3778 = vsel %vm3770, 1.0, 0.0
    %v3779 = vsel %vm3771, 1.0, 0.0
    %v3780 = vsel %vm3772, 1.0, 0.0
    %v3781 = vsel %vm3773, 1.0, 0.0
    %v3782 = vsel %vm3774, 1.0, 0.0
    %v3783 = vsel %vm3775, 1.0, 0.0
    %vm3784 = vcmp.eq.s32.totalorder %v2817, 6
    %vm3785 = vcmp.eq.s32.totalorder %v2818, 6
    %vm3786 = vcmp.eq.s32.totalorder %v2819, 6
    %vm3787 = vcmp.eq.s32.totalorder %v2820, 6
    %vm3788 = vcmp.eq.s32.totalorder %v2821, 6
    %vm3789 = vcmp.eq.s32.totalorder %v2822, 6
    %vm3790 = vcmp.eq.s32.totalorder %v2823, 6
    %vm3791 = vcmp.eq.s32.totalorder %v2824, 6
    %v3792 = vsel %vm3784, 1.0, 0.0
    %v3793 = vsel %vm3785, 1.0, 0.0
    %v3794 = vsel %vm3786, 1.0, 0.0
    %v3795 = vsel %vm3787, 1.0, 0.0
    %v3796 = vsel %vm3788, 1.0, 0.0
    %v3797 = vsel %vm3789, 1.0, 0.0
    %v3798 = vsel %vm3790, 1.0, 0.0
    %v3799 = vsel %vm3791, 1.0, 0.0
    %v3808 = vrot.slane %v2779, 7
    %v3809 = vrot.slane %v2784, 7
    %v3810 = vsel %vm1026, %v3808, %v3809
    %v3811 = vrot.slane %v2789, 7
    %v3812 = vsel %vm1026, %v3809, %v3811
    %v3813 = vrot.slane %v2794, 7
    %v3814 = vsel %vm1026, %v3811, %v3813
    %v3815 = vrot.slane %v2799, 7
    %v3816 = vsel %vm1026, %v3813, %v3815
    %v3817 = vrot.slane %v2804, 7
    %v3818 = vsel %vm1026, %v3815, %v3817
    %v3819 = vrot.slane %v2809, 7
    %v3820 = vsel %vm1026, %v3817, %v3819
    %v3821 = vrot.slane %v2814, 7
    %v3822 = vsel %vm1026, %v3819, %v3821
    %v3831 = vsel %vm1026, 0.0, %v3808
    %v3832 = vrot.slane %v2779, 1
    %v3833 = vrot.slane %v2784, 1
    %v3834 = vsel %vm1087, %v3832, %v3833
    %v3835 = vrot.slane %v2789, 1
    %v3836 = vsel %vm1087, %v3833, %v3835
    %v3837 = vrot.slane %v2794, 1
    %v3838 = vsel %vm1087, %v3835, %v3837
    %v3839 = vrot.slane %v2799, 1
    %v3840 = vsel %vm1087, %v3837, %v3839
    %v3841 = vrot.slane %v2804, 1
    %v3842 = vsel %vm1087, %v3839, %v3841
    %v3843 = vrot.slane %v2809, 1
    %v3844 = vsel %vm1087, %v3841, %v3843
    %v3845 = vrot.slane %v2814, 1
    %v3846 = vsel %vm1087, %v3843, %v3845
    %v3855 = vsel %vm1087, %v3845, 0.0
    %3857 = vset.pattern.permute.xlu0 0
    %3858 = vperm.xlu0 %3857, %v3776
    %v3859 = vpop.permute.xlu0 %3858
    %3862 = vset.pattern.permute.xlu0 0
    %3863 = vperm.xlu0 %3862, %v3777
    %v3864 = vpop.permute.xlu0 %3863
    %3867 = vset.pattern.permute.xlu0 0
    %3868 = vperm.xlu0 %3867, %v3778
    %v3869 = vpop.permute.xlu0 %3868
    %3872 = vset.pattern.permute.xlu0 0
    %3873 = vperm.xlu0 %3872, %v3779
    %v3874 = vpop.permute.xlu0 %3873
    %3877 = vset.pattern.permute.xlu0 0
    %3878 = vperm.xlu0 %3877, %v3780
    %v3879 = vpop.permute.xlu0 %3878
    %3882 = vset.pattern.permute.xlu0 0
    %3883 = vperm.xlu0 %3882, %v3781
    %v3884 = vpop.permute.xlu0 %3883
    %3887 = vset.pattern.permute.xlu0 0
    %3888 = vperm.xlu0 %3887, %v3782
    %v3889 = vpop.permute.xlu0 %3888
    %3892 = vset.pattern.permute.xlu0 0
    %3893 = vperm.xlu0 %3892, %v3783
    %v3894 = vpop.permute.xlu0 %3893
    %v3896 = vmul.f32 %v3859, %v2779
    %v3897 = vmul.f32 %v3864, %v2784
    %v3898 = vmul.f32 %v3869, %v2789
    %v3899 = vmul.f32 %v3874, %v2794
    %v3900 = vmul.f32 %v3879, %v2799
    %v3901 = vmul.f32 %v3884, %v2804
    %v3902 = vmul.f32 %v3889, %v2809
    %v3903 = vmul.f32 %v3894, %v2814
    %v3904 = vsub.f32 1.0, %v3776
    %v3905 = vsub.f32 1.0, %v3777
    %v3906 = vsub.f32 1.0, %v3778
    %v3907 = vsub.f32 1.0, %v3779
    %v3908 = vsub.f32 1.0, %v3780
    %v3909 = vsub.f32 1.0, %v3781
    %v3910 = vsub.f32 1.0, %v3782
    %v3911 = vsub.f32 1.0, %v3783
    %3913 = vset.pattern.permute.xlu0 0
    %3914 = vperm.xlu0 %3913, %v3904
    %v3915 = vpop.permute.xlu0 %3914
    %3918 = vset.pattern.permute.xlu0 0
    %3919 = vperm.xlu0 %3918, %v3905
    %v3920 = vpop.permute.xlu0 %3919
    %3923 = vset.pattern.permute.xlu0 0
    %3924 = vperm.xlu0 %3923, %v3906
    %v3925 = vpop.permute.xlu0 %3924
    %3928 = vset.pattern.permute.xlu0 0
    %3929 = vperm.xlu0 %3928, %v3907
    %v3930 = vpop.permute.xlu0 %3929
    %3933 = vset.pattern.permute.xlu0 0
    %3934 = vperm.xlu0 %3933, %v3908
    %v3935 = vpop.permute.xlu0 %3934
    %3938 = vset.pattern.permute.xlu0 0
    %3939 = vperm.xlu0 %3938, %v3909
    %v3940 = vpop.permute.xlu0 %3939
    %3943 = vset.pattern.permute.xlu0 0
    %3944 = vperm.xlu0 %3943, %v3910
    %v3945 = vpop.permute.xlu0 %3944
    %3948 = vset.pattern.permute.xlu0 0
    %3949 = vperm.xlu0 %3948, %v3911
    %v3950 = vpop.permute.xlu0 %3949
    %v3952 = vmul.f32 %v3915, %v3831
    %v3953 = vmul.f32 %v3920, %v3810
    %v3954 = vmul.f32 %v3925, %v3812
    %v3955 = vmul.f32 %v3930, %v3814
    %v3956 = vmul.f32 %v3935, %v3816
    %v3957 = vmul.f32 %v3940, %v3818
    %v3958 = vmul.f32 %v3945, %v3820
    %v3959 = vmul.f32 %v3950, %v3822
    %v3960 = vadd.f32 %v3896, %v3952
    %v3961 = vadd.f32 %v3897, %v3953
    %v3962 = vadd.f32 %v3898, %v3954
    %v3963 = vadd.f32 %v3899, %v3955
    %v3964 = vadd.f32 %v3900, %v3956
    %v3965 = vadd.f32 %v3901, %v3957
    %v3966 = vadd.f32 %v3902, %v3958
    %v3967 = vadd.f32 %v3903, %v3959
    %3969 = vset.pattern.permute.xlu0 0
    %3970 = vperm.xlu0 %3969, %v3792
    %v3971 = vpop.permute.xlu0 %3970
    %3974 = vset.pattern.permute.xlu0 0
    %3975 = vperm.xlu0 %3974, %v3793
    %v3976 = vpop.permute.xlu0 %3975
    %3979 = vset.pattern.permute.xlu0 0
    %3980 = vperm.xlu0 %3979, %v3794
    %v3981 = vpop.permute.xlu0 %3980
    %3984 = vset.pattern.permute.xlu0 0
    %3985 = vperm.xlu0 %3984, %v3795
    %v3986 = vpop.permute.xlu0 %3985
    %3989 = vset.pattern.permute.xlu0 0
    %3990 = vperm.xlu0 %3989, %v3796
    %v3991 = vpop.permute.xlu0 %3990
    %3994 = vset.pattern.permute.xlu0 0
    %3995 = vperm.xlu0 %3994, %v3797
    %v3996 = vpop.permute.xlu0 %3995
    %3999 = vset.pattern.permute.xlu0 0
    %4000 = vperm.xlu0 %3999, %v3798
    %v4001 = vpop.permute.xlu0 %4000
    %4004 = vset.pattern.permute.xlu0 0
    %4005 = vperm.xlu0 %4004, %v3799
    %v4006 = vpop.permute.xlu0 %4005
    %v4008 = vmul.f32 %v3971, %v2779
    %v4009 = vmul.f32 %v3976, %v2784
    %v4010 = vmul.f32 %v3981, %v2789
    %v4011 = vmul.f32 %v3986, %v2794
    %v4012 = vmul.f32 %v3991, %v2799
    %v4013 = vmul.f32 %v3996, %v2804
    %v4014 = vmul.f32 %v4001, %v2809
    %v4015 = vmul.f32 %v4006, %v2814
    %v4016 = vsub.f32 1.0, %v3792
    %v4017 = vsub.f32 1.0, %v3793
    %v4018 = vsub.f32 1.0, %v3794
    %v4019 = vsub.f32 1.0, %v3795
    %v4020 = vsub.f32 1.0, %v3796
    %v4021 = vsub.f32 1.0, %v3797
    %v4022 = vsub.f32 1.0, %v3798
    %v4023 = vsub.f32 1.0, %v3799
    %4025 = vset.pattern.permute.xlu0 0
    %4026 = vperm.xlu0 %4025, %v4016
    %v4027 = vpop.permute.xlu0 %4026
    %4030 = vset.pattern.permute.xlu0 0
    %4031 = vperm.xlu0 %4030, %v4017
    %v4032 = vpop.permute.xlu0 %4031
    %4035 = vset.pattern.permute.xlu0 0
    %4036 = vperm.xlu0 %4035, %v4018
    %v4037 = vpop.permute.xlu0 %4036
    %4040 = vset.pattern.permute.xlu0 0
    %4041 = vperm.xlu0 %4040, %v4019
    %v4042 = vpop.permute.xlu0 %4041
    %4045 = vset.pattern.permute.xlu0 0
    %4046 = vperm.xlu0 %4045, %v4020
    %v4047 = vpop.permute.xlu0 %4046
    %4050 = vset.pattern.permute.xlu0 0
    %4051 = vperm.xlu0 %4050, %v4021
    %v4052 = vpop.permute.xlu0 %4051
    %4055 = vset.pattern.permute.xlu0 0
    %4056 = vperm.xlu0 %4055, %v4022
    %v4057 = vpop.permute.xlu0 %4056
    %4060 = vset.pattern.permute.xlu0 0
    %4061 = vperm.xlu0 %4060, %v4023
    %v4062 = vpop.permute.xlu0 %4061
    %v4064 = vmul.f32 %v4027, %v3834
    %v4065 = vmul.f32 %v4032, %v3836
    %v4066 = vmul.f32 %v4037, %v3838
    %v4067 = vmul.f32 %v4042, %v3840
    %v4068 = vmul.f32 %v4047, %v3842
    %v4069 = vmul.f32 %v4052, %v3844
    %v4070 = vmul.f32 %v4057, %v3846
    %v4071 = vmul.f32 %v4062, %v3855
    %v4072 = vadd.f32 %v4008, %v4064
    %v4073 = vadd.f32 %v4009, %v4065
    %v4074 = vadd.f32 %v4010, %v4066
    %v4075 = vadd.f32 %v4011, %v4067
    %v4076 = vadd.f32 %v4012, %v4068
    %v4077 = vadd.f32 %v4013, %v4069
    %v4078 = vadd.f32 %v4014, %v4070
    %v4079 = vadd.f32 %v4015, %v4071
    %v4080 = vmax.f32 %v2779, %v3960
    %v4081 = vmax.f32 %v2784, %v3961
    %v4082 = vmax.f32 %v2789, %v3962
    %v4083 = vmax.f32 %v2794, %v3963
    %v4084 = vmax.f32 %v2799, %v3964
    %v4085 = vmax.f32 %v2804, %v3965
    %v4086 = vmax.f32 %v2809, %v3966
    %v4087 = vmax.f32 %v2814, %v3967
    %v4088 = vmax.f32 %v4080, %v4072
    %v4089 = vmax.f32 %v4081, %v4073
    %v4090 = vmax.f32 %v4082, %v4074
    %v4091 = vmax.f32 %v4083, %v4075
    %v4092 = vmax.f32 %v4084, %v4076
    %v4093 = vmax.f32 %v4085, %v4077
    %v4094 = vmax.f32 %v4086, %v4078
    %v4095 = vmax.f32 %v4087, %v4079
    %v4097 = vlaneseq
    %v4098 = vshrl.u32 %v4097, 7
    %v4099 = vsub.s32 0, %v4098
    %v4100 = vrot.slane %v2940, %v4099
    %4102 = vmatprep.subr.mxu0 0.0
    %4103 = vmatpush1.msra.mxu0 %v2939
    %4104 = vmatprep.subr.mxu0 0.0
    %4105 = vmatpush1.msra.mxu0 %v2938
    %4106 = vmatprep.subr.mxu0 0.0
    %4107 = vmatpush1.msra.mxu0 %v2937
    %4108 = vmatprep.subr.mxu0 0.0
    %4109 = vmatpush1.msra.mxu0 %v2936
    %4110 = vmatprep.subr.mxu0 0.0
    %4111 = vmatpush1.msra.mxu0 %v2935
    %4112 = vmatprep.subr.mxu0 0.0
    %4113 = vmatpush1.msra.mxu0 %v2934
    %4114 = vmatprep.subr.mxu0 0.0
    %4115 = vmatpush1.msra.mxu0 %v2933
    %4116 = vmatprep.subr.mxu0 0.0
    %4117 = vmatpush1.msra.mxu0 %v2932
    %4118 = vmatprep.subr.mxu0 0.0
    %4119 = vmatpush1.msra.mxu0 %v2931
    %4120 = vmatprep.subr.mxu0 0.0
    %4121 = vmatpush1.msra.mxu0 %v2930
    %4122 = vmatprep.subr.mxu0 0.0
    %4123 = vmatpush1.msra.mxu0 %v2929
    %4124 = vmatprep.subr.mxu0 0.0
    %4125 = vmatpush1.msra.mxu0 %v2928
    %4126 = vmatprep.subr.mxu0 0.0
    %4127 = vmatpush1.msra.mxu0 %v2927
    %4128 = vmatprep.subr.mxu0 0.0
    %4129 = vmatpush1.msra.mxu0 %v2926
    %4130 = vmatprep.subr.mxu0 0.0
    %4131 = vmatpush1.msra.mxu0 %v2925
    %4132 = vmatprep.subr.mxu0 0.0
    %4133 = vmatpush1.msra.mxu0 %v2924
    %4134 = vmatprep.subr.mxu0 0.0
    %4135 = vmatpush2.msra.mxu0 0.0
    %4136 = vmatprep.subr.mxu0 0.0
    %4137 = vmatpush2.msra.mxu0 0.0
    %4138 = vmatprep.subr.mxu0 0.0
    %4139 = vmatpush2.msra.mxu0 0.0
    %4140 = vmatprep.subr.mxu0 0.0
    %4141 = vmatpush2.msra.mxu0 0.0
    %4142 = vmatprep.subr.mxu0 0.0
    %4143 = vmatpush2.msra.mxu0 0.0
    %4144 = vmatprep.subr.mxu0 0.0
    %4145 = vmatpush2.msra.mxu0 0.0
    %4146 = vmatprep.subr.mxu0 0.0
    %4147 = vmatpush2.msra.mxu0 0.0
    %4148 = vmatprep.subr.mxu0 0.0
    %4149 = vmatpush2.msra.mxu0 0.0
    %4150 = vmatprep.subr.mxu0 0.0
    %4151 = vmatpush2.msra.mxu0 0.0
    %4152 = vmatprep.subr.mxu0 0.0
    %4153 = vmatpush2.msra.mxu0 0.0
    %4154 = vmatprep.subr.mxu0 0.0
    %4155 = vmatpush2.msra.mxu0 0.0
    %4156 = vmatprep.subr.mxu0 0.0
    %4157 = vmatpush2.msra.mxu0 0.0
    %4158 = vmatprep.subr.mxu0 0.0
    %4159 = vmatpush2.msra.mxu0 0.0
    %4160 = vmatprep.subr.mxu0 0.0
    %4161 = vmatpush2.msra.mxu0 0.0
    %4162 = vmatprep.subr.mxu0 0.0
    %4163 = vmatpush2.msra.mxu0 0.0
    %4164 = vmatprep.subr.mxu0 0.0
    %4165 = vmatpush2.msra.mxu0 0.0
    %4166 = vmatprep.mubr.f32.mxu0 0.0
    %4167 = vmatmul.mubr.f32.gmra.mxu0 %v4088
    %v4168 = vpop.f32.mrf.mxu0
    %v4169 = vadd.f32 %v4100, %v4168
    %v4170 = vpop.f32.mrf.mxu0
    %4171 = vmatprep.mubr.f32.mxu0 0.0
    %4172 = vmatmul.mubr.f32.gmra.mxu0 %v4089
    %v4173 = vpop.f32.mrf.mxu0
    %v4174 = vadd.f32 %v4100, %v4173
    %v4175 = vpop.f32.mrf.mxu0
    %4176 = vmatprep.mubr.f32.mxu0 0.0
    %4177 = vmatmul.mubr.f32.gmra.mxu0 %v4090
    %v4178 = vpop.f32.mrf.mxu0
    %v4179 = vadd.f32 %v4100, %v4178
    %v4180 = vpop.f32.mrf.mxu0
    %4181 = vmatprep.mubr.f32.mxu0 0.0
    %4182 = vmatmul.mubr.f32.gmra.mxu0 %v4091
    %v4183 = vpop.f32.mrf.mxu0
    %v4184 = vadd.f32 %v4100, %v4183
    %v4185 = vpop.f32.mrf.mxu0
    %4186 = vmatprep.mubr.f32.mxu0 0.0
    %4187 = vmatmul.mubr.f32.gmra.mxu0 %v4092
    %v4188 = vpop.f32.mrf.mxu0
    %v4189 = vadd.f32 %v4100, %v4188
    %v4190 = vpop.f32.mrf.mxu0
    %4191 = vmatprep.mubr.f32.mxu0 0.0
    %4192 = vmatmul.mubr.f32.gmra.mxu0 %v4093
    %v4193 = vpop.f32.mrf.mxu0
    %v4194 = vadd.f32 %v4100, %v4193
    %v4195 = vpop.f32.mrf.mxu0
    %4196 = vmatprep.mubr.f32.mxu0 0.0
    %4197 = vmatmul.mubr.f32.gmra.mxu0 %v4094
    %v4198 = vpop.f32.mrf.mxu0
    %v4199 = vadd.f32 %v4100, %v4198
    %v4200 = vpop.f32.mrf.mxu0
    %4201 = vmatprep.mubr.f32.mxu0 0.0
    %4202 = vmatmul.mubr.f32.gmra.mxu0 %v4095
    %v4203 = vpop.f32.mrf.mxu0
    %v4204 = vadd.f32 %v4100, %v4203
    %v4205 = vpop.f32.mrf.mxu0
    %4206 = vdwg.mxu0
    %v4207 = vmax.f32 %v4169, 0.0
    %v4208 = vmax.f32 %v4174, 0.0
    %v4209 = vmax.f32 %v4179, 0.0
    %v4210 = vmax.f32 %v4184, 0.0
    %v4211 = vmax.f32 %v4189, 0.0
    %v4212 = vmax.f32 %v4194, 0.0
    %v4213 = vmax.f32 %v4199, 0.0
    %v4214 = vmax.f32 %v4204, 0.0
    %4223 = vrot.lane.b32.xlu0 %v3370, 64
    %v4224 = vpop.permute.xlu0 %4223
    %4225 = vrot.lane.b32.xlu0 %v3371, 64
    %v4226 = vpop.permute.xlu0 %4225
    %4227 = vrot.lane.b32.xlu0 %v3372, 64
    %v4228 = vpop.permute.xlu0 %4227
    %4229 = vrot.lane.b32.xlu0 %v3373, 64
    %v4230 = vpop.permute.xlu0 %4229
    %4231 = vrot.lane.b32.xlu0 %v3374, 64
    %v4232 = vpop.permute.xlu0 %4231
    %4233 = vrot.lane.b32.xlu0 %v3375, 64
    %v4234 = vpop.permute.xlu0 %4233
    %4235 = vrot.lane.b32.xlu0 %v3376, 64
    %v4236 = vpop.permute.xlu0 %4235
    %4237 = vrot.lane.b32.xlu0 %v3377, 64
    %v4238 = vpop.permute.xlu0 %4237
    %4255 = vrot.lane.b32.xlu0 %v4207, 64
    %v4256 = vpop.permute.xlu0 %4255
    %4257 = vrot.lane.b32.xlu0 %v4208, 64
    %v4258 = vpop.permute.xlu0 %4257
    %4259 = vrot.lane.b32.xlu0 %v4209, 64
    %v4260 = vpop.permute.xlu0 %4259
    %4261 = vrot.lane.b32.xlu0 %v4210, 64
    %v4262 = vpop.permute.xlu0 %4261
    %4263 = vrot.lane.b32.xlu0 %v4211, 64
    %v4264 = vpop.permute.xlu0 %4263
    %4265 = vrot.lane.b32.xlu0 %v4212, 64
    %v4266 = vpop.permute.xlu0 %4265
    %4267 = vrot.lane.b32.xlu0 %v4213, 64
    %v4268 = vpop.permute.xlu0 %4267
    %4269 = vrot.lane.b32.xlu0 %v4214, 64
    %v4270 = vpop.permute.xlu0 %4269
    %v4279 = vsel %vm1162, %v3137, %v4224
    %v4280 = vsel %vm1162, %v3139, %v4226
    %v4281 = vsel %vm1162, %v3141, %v4228
    %v4282 = vsel %vm1162, %v3143, %v4230
    %v4283 = vsel %vm1162, %v3145, %v4232
    %v4284 = vsel %vm1162, %v3147, %v4234
    %v4285 = vsel %vm1162, %v3149, %v4236
    %v4286 = vsel %vm1162, %v3151, %v4238
    %v4287 = vsel %vm1162, %v3760, %v4256
    %v4288 = vsel %vm1162, %v3761, %v4258
    %v4289 = vsel %vm1162, %v3762, %v4260
    %v4290 = vsel %vm1162, %v3763, %v4262
    %v4291 = vsel %vm1162, %v3764, %v4264
    %v4292 = vsel %vm1162, %v3765, %v4266
    %v4293 = vsel %vm1162, %v3766, %v4268
    %v4294 = vsel %vm1162, %v3767, %v4270
    %v4311 = vrot.slane %v4279, 1
    %v4312 = vrot.slane %v4280, 1
    %v4313 = vsel %vm1087, %v4311, %v4312
    %v4314 = vrot.slane %v4287, 1
    %v4315 = vrot.slane %v4288, 1
    %v4316 = vsel %vm1087, %v4314, %v4315
    %v4317 = vrot.slane %v4281, 1
    %v4318 = vsel %vm1087, %v4312, %v4317
    %v4319 = vrot.slane %v4289, 1
    %v4320 = vsel %vm1087, %v4315, %v4319
    %v4321 = vrot.slane %v4282, 1
    %v4322 = vsel %vm1087, %v4317, %v4321
    %v4323 = vrot.slane %v4290, 1
    %v4324 = vsel %vm1087, %v4319, %v4323
    %v4325 = vrot.slane %v4283, 1
    %v4326 = vsel %vm1087, %v4321, %v4325
    %v4327 = vrot.slane %v4291, 1
    %v4328 = vsel %vm1087, %v4323, %v4327
    %v4329 = vrot.slane %v4284, 1
    %v4330 = vsel %vm1087, %v4325, %v4329
    %v4331 = vrot.slane %v4292, 1
    %v4332 = vsel %vm1087, %v4327, %v4331
    %v4333 = vrot.slane %v4285, 1
    %v4334 = vsel %vm1087, %v4329, %v4333
    %v4335 = vrot.slane %v4293, 1
    %v4336 = vsel %vm1087, %v4331, %v4335
    %v4337 = vrot.slane %v4286, 1
    %v4338 = vsel %vm1087, %v4333, %v4337
    %v4339 = vrot.slane %v4294, 1
    %v4340 = vsel %vm1087, %v4335, %v4339
    %v4357 = vsel %vm1087, %v4337, 0.0
    %v4358 = vsel %vm1087, %v4339, 0.0
    %v4359 = vmax.f32 %v4279, %v4313
    %v4360 = vmax.f32 %v4287, %v4316
    %v4361 = vmax.f32 %v4280, %v4318
    %v4362 = vmax.f32 %v4288, %v4320
    %v4363 = vmax.f32 %v4281, %v4322
    %v4364 = vmax.f32 %v4289, %v4324
    %v4365 = vmax.f32 %v4282, %v4326
    %v4366 = vmax.f32 %v4290, %v4328
    %v4367 = vmax.f32 %v4283, %v4330
    %v4368 = vmax.f32 %v4291, %v4332
    %v4369 = vmax.f32 %v4284, %v4334
    %v4370 = vmax.f32 %v4292, %v4336
    %v4371 = vmax.f32 %v4285, %v4338
    %v4372 = vmax.f32 %v4293, %v4340
    %v4373 = vmax.f32 %v4286, %v4357
    %v4374 = vmax.f32 %v4294, %v4358
    %v4375 = vrot.slane %v4279, 2
    %v4376 = vrot.slane %v4280, 2
    %v4377 = vsel %vm1442, %v4375, %v4376
    %v4378 = vrot.slane %v4287, 2
    %v4379 = vrot.slane %v4288, 2
    %v4380 = vsel %vm1442, %v4378, %v4379
    %v4381 = vrot.slane %v4281, 2
    %v4382 = vsel %vm1442, %v4376, %v4381
    %v4383 = vrot.slane %v4289, 2
    %v4384 = vsel %vm1442, %v4379, %v4383
    %v4385 = vrot.slane %v4282, 2
    %v4386 = vsel %vm1442, %v4381, %v4385
    %v4387 = vrot.slane %v4290, 2
    %v4388 = vsel %vm1442, %v4383, %v4387
    %v4389 = vrot.slane %v4283, 2
    %v4390 = vsel %vm1442, %v4385, %v4389
    %v4391 = vrot.slane %v4291, 2
    %v4392 = vsel %vm1442, %v4387, %v4391
    %v4393 = vrot.slane %v4284, 2
    %v4394 = vsel %vm1442, %v4389, %v4393
    %v4395 = vrot.slane %v4292, 2
    %v4396 = vsel %vm1442, %v4391, %v4395
    %v4397 = vrot.slane %v4285, 2
    %v4398 = vsel %vm1442, %v4393, %v4397
    %v4399 = vrot.slane %v4293, 2
    %v4400 = vsel %vm1442, %v4395, %v4399
    %v4401 = vrot.slane %v4286, 2
    %v4402 = vsel %vm1442, %v4397, %v4401
    %v4403 = vrot.slane %v4294, 2
    %v4404 = vsel %vm1442, %v4399, %v4403
    %v4421 = vsel %vm1442, %v4401, 0.0
    %v4422 = vsel %vm1442, %v4403, 0.0
    %v4423 = vmax.f32 %v4359, %v4377
    %v4424 = vmax.f32 %v4360, %v4380
    %v4425 = vmax.f32 %v4361, %v4382
    %v4426 = vmax.f32 %v4362, %v4384
    %v4427 = vmax.f32 %v4363, %v4386
    %v4428 = vmax.f32 %v4364, %v4388
    %v4429 = vmax.f32 %v4365, %v4390
    %v4430 = vmax.f32 %v4366, %v4392
    %v4431 = vmax.f32 %v4367, %v4394
    %v4432 = vmax.f32 %v4368, %v4396
    %v4433 = vmax.f32 %v4369, %v4398
    %v4434 = vmax.f32 %v4370, %v4400
    %v4435 = vmax.f32 %v4371, %v4402
    %v4436 = vmax.f32 %v4372, %v4404
    %v4437 = vmax.f32 %v4373, %v4421
    %v4438 = vmax.f32 %v4374, %v4422
    %v4439 = vld [vmem:[%s15] sm:$0xff]
    %v4440 = vld [vmem:[%s15 + $0x8] sm:$0xff]
    %v4441 = vld [vmem:[%s15 + $0x10] sm:$0xff]
    %v4442 = vld [vmem:[%s15 + $0x18] sm:$0xff]
    %v4444 = vsel %vm1162, %v4439, 0
    %v4447 = vsel %vm1162, %v4440, 0
    %v4450 = vsel %vm1162, %v4441, 0
    %v4453 = vsel %vm1162, %v4442, 0
    %4455 = vmatprep.subr.mxu0 0.0
    %4456 = vmatpush1.msra.mxu0 0.0
    %4457 = vmatprep.subr.mxu0 0.0
    %4458 = vmatpush1.msra.mxu0 0.0
    %4459 = vmatprep.subr.mxu0 0.0
    %4460 = vmatpush1.msra.mxu0 0.0
    %4461 = vmatprep.subr.mxu0 0.0
    %4462 = vmatpush1.msra.mxu0 0.0
    %4463 = vmatprep.subr.mxu0 0.0
    %4464 = vmatpush1.msra.mxu0 0.0
    %4465 = vmatprep.subr.mxu0 0.0
    %4466 = vmatpush1.msra.mxu0 0.0
    %4467 = vmatprep.subr.mxu0 0.0
    %4468 = vmatpush1.msra.mxu0 0.0
    %4469 = vmatprep.subr.mxu0 0.0
    %4470 = vmatpush1.msra.mxu0 0.0
    %4471 = vmatprep.subr.mxu0 %v4438
    %4472 = vmatpush1.msra.mxu0 %v4437
    %4473 = vmatprep.subr.mxu0 %v4436
    %4474 = vmatpush1.msra.mxu0 %v4435
    %4475 = vmatprep.subr.mxu0 %v4434
    %4476 = vmatpush1.msra.mxu0 %v4433
    %4477 = vmatprep.subr.mxu0 %v4432
    %4478 = vmatpush1.msra.mxu0 %v4431
    %4479 = vmatprep.subr.mxu0 %v4430
    %4480 = vmatpush1.msra.mxu0 %v4429
    %4481 = vmatprep.subr.mxu0 %v4428
    %4482 = vmatpush1.msra.mxu0 %v4427
    %4483 = vmatprep.subr.mxu0 %v4426
    %4484 = vmatpush1.msra.mxu0 %v4425
    %4485 = vmatprep.subr.mxu0 %v4424
    %4486 = vmatpush1.msra.mxu0 %v4423
    %4487 = vmatprep.subr.mxu0 0.0
    %4488 = vmatpush2.msra.mxu0 0.0
    %4489 = vmatprep.subr.mxu0 0.0
    %4490 = vmatpush2.msra.mxu0 0.0
    %4491 = vmatprep.subr.mxu0 0.0
    %4492 = vmatpush2.msra.mxu0 0.0
    %4493 = vmatprep.subr.mxu0 0.0
    %4494 = vmatpush2.msra.mxu0 0.0
    %4495 = vmatprep.subr.mxu0 0.0
    %4496 = vmatpush2.msra.mxu0 0.0
    %4497 = vmatprep.subr.mxu0 0.0
    %4498 = vmatpush2.msra.mxu0 0.0
    %4499 = vmatprep.subr.mxu0 0.0
    %4500 = vmatpush2.msra.mxu0 0.0
    %4501 = vmatprep.subr.mxu0 0.0
    %4502 = vmatpush2.msra.mxu0 0.0
    %4503 = vmatprep.subr.mxu0 0.0
    %4504 = vmatpush2.msra.mxu0 0.0
    %4505 = vmatprep.subr.mxu0 0.0
    %4506 = vmatpush2.msra.mxu0 0.0
    %4507 = vmatprep.subr.mxu0 0.0
    %4508 = vmatpush2.msra.mxu0 0.0
    %4509 = vmatprep.subr.mxu0 0.0
    %4510 = vmatpush2.msra.mxu0 0.0
    %4511 = vmatprep.subr.mxu0 0.0
    %4512 = vmatpush2.msra.mxu0 0.0
    %4513 = vmatprep.subr.mxu0 0.0
    %4514 = vmatpush2.msra.mxu0 0.0
    %4515 = vmatprep.subr.mxu0 0.0
    %4516 = vmatpush2.msra.mxu0 0.0
    %4517 = vmatprep.subr.mxu0 0.0
    %4518 = vmatpush2.msra.mxu0 0.0
    %4519 = vmatprep.mubr.f32.mxu0 0.0
    %4520 = vmatmul.mubr.f32.gmra.mxu0 %v4444
    %v4521 = vpop.f32.mrf.mxu0
    %v4522 = vadd.f32 0.0, %v4521
    %v4523 = vpop.f32.mrf.mxu0
    %v4524 = vadd.f32 0.0, %v4523
    %4525 = vmatprep.mubr.f32.mxu0 0.0
    %4526 = vmatmul.mubr.f32.gmra.mxu0 %v4447
    %v4527 = vpop.f32.mrf.mxu0
    %v4528 = vadd.f32 0.0, %v4527
    %v4529 = vpop.f32.mrf.mxu0
    %v4530 = vadd.f32 0.0, %v4529
    %4531 = vmatprep.mubr.f32.mxu0 0.0
    %4532 = vmatmul.mubr.f32.gmra.mxu0 %v4450
    %v4533 = vpop.f32.mrf.mxu0
    %v4534 = vadd.f32 0.0, %v4533
    %v4535 = vpop.f32.mrf.mxu0
    %v4536 = vadd.f32 0.0, %v4535
    %4537 = vmatprep.mubr.f32.mxu0 0.0
    %4538 = vmatmul.mubr.f32.gmra.mxu0 %v4453
    %v4539 = vpop.f32.mrf.mxu0
    %v4540 = vadd.f32 0.0, %v4539
    %v4541 = vpop.f32.mrf.mxu0
    %v4542 = vadd.f32 0.0, %v4541
    %4543 = vdwg.mxu0
    %v4544 = vld [vmem:[%s11] sm:$0xff]
    %v4545 = vld [vmem:[%s11 + $0x8] sm:$0xff]
    %v4546 = vld [vmem:[%s11 + $0x10] sm:$0xff]
    %v4547 = vld [vmem:[%s11 + $0x18] sm:$0xff]
    %v4548 = vld [vmem:[%s51] sm:$0xff]
    %v4549 = vld [vmem:[%s51 + $0x8] sm:$0xff]
    %v4550 = vld [vmem:[%s51 + $0x10] sm:$0xff]
    %v4551 = vld [vmem:[%s51 + $0x18] sm:$0xff]
    %v4552 = vld [vmem:[%s51 + $0x20] sm:$0xff]
    %v4553 = vld [vmem:[%s51 + $0x28] sm:$0xff]
    %v4554 = vld [vmem:[%s51 + $0x30] sm:$0xff]
    %v4555 = vld [vmem:[%s51 + $0x38] sm:$0xff]
    %v4556 = vld [vmem:[%s51 + $0x40] sm:$0xff]
    %v4557 = vld [vmem:[%s51 + $0x48] sm:$0xff]
    %v4558 = vld [vmem:[%s51 + $0x50] sm:$0xff]
    %v4559 = vld [vmem:[%s51 + $0x58] sm:$0xff]
    %v4560 = vld [vmem:[%s51 + $0x60] sm:$0xff]
    %v4561 = vld [vmem:[%s51 + $0x68] sm:$0xff]
    %v4562 = vld [vmem:[%s51 + $0x70] sm:$0xff]
    %v4563 = vld [vmem:[%s51 + $0x78] sm:$0xff]
    %v4564 = vld [vmem:[%s51 + $0x80] sm:$0xff]
    %v4565 = vld [vmem:[%s51 + $0x88] sm:$0xff]
    %v4566 = vld [vmem:[%s51 + $0x90] sm:$0xff]
    %v4567 = vld [vmem:[%s51 + $0x98] sm:$0xff]
    %v4568 = vld [vmem:[%s51 + $0xa0] sm:$0xff]
    %v4569 = vld [vmem:[%s51 + $0xa8] sm:$0xff]
    %v4570 = vld [vmem:[%s51 + $0xb0] sm:$0xff]
    %v4571 = vld [vmem:[%s51 + $0xb8] sm:$0xff]
    %v4572 = vld [vmem:[%s51 + $0xc0] sm:$0xff]
    %v4573 = vld [vmem:[%s51 + $0xc8] sm:$0xff]
    %v4574 = vld [vmem:[%s51 + $0xd0] sm:$0xff]
    %v4575 = vld [vmem:[%s51 + $0xd8] sm:$0xff]
    %v4576 = vld [vmem:[%s51 + $0xe0] sm:$0xff]
    %v4577 = vld [vmem:[%s51 + $0xe8] sm:$0xff]
    %v4578 = vld [vmem:[%s51 + $0xf0] sm:$0xff]
    %v4579 = vld [vmem:[%s51 + $0xf8] sm:$0xff]
    %v4580 = vld [vmem:[%s51 + $0x100] sm:$0xff]
    %v4581 = vld [vmem:[%s51 + $0x108] sm:$0xff]
    %v4582 = vld [vmem:[%s51 + $0x110] sm:$0xff]
    %v4583 = vld [vmem:[%s51 + $0x118] sm:$0xff]
    %v4584 = vld [vmem:[%s51 + $0x120] sm:$0xff]
    %v4585 = vld [vmem:[%s51 + $0x128] sm:$0xff]
    %v4586 = vld [vmem:[%s51 + $0x130] sm:$0xff]
    %v4587 = vld [vmem:[%s51 + $0x138] sm:$0xff]
    %v4588 = vld [vmem:[%s51 + $0x140] sm:$0xff]
    %v4589 = vld [vmem:[%s51 + $0x148] sm:$0xff]
    %v4590 = vld [vmem:[%s51 + $0x150] sm:$0xff]
    %v4591 = vld [vmem:[%s51 + $0x158] sm:$0xff]
    %v4592 = vld [vmem:[%s51 + $0x160] sm:$0xff]
    %v4593 = vld [vmem:[%s51 + $0x168] sm:$0xff]
    %v4594 = vld [vmem:[%s51 + $0x170] sm:$0xff]
    %v4595 = vld [vmem:[%s51 + $0x178] sm:$0xff]
    %v4596 = vld [vmem:[%s51 + $0x180] sm:$0xff]
    %v4597 = vld [vmem:[%s51 + $0x188] sm:$0xff]
    %v4598 = vld [vmem:[%s51 + $0x190] sm:$0xff]
    %v4599 = vld [vmem:[%s51 + $0x198] sm:$0xff]
    %v4600 = vld [vmem:[%s51 + $0x1a0] sm:$0xff]
    %v4601 = vld [vmem:[%s51 + $0x1a8] sm:$0xff]
    %v4602 = vld [vmem:[%s51 + $0x1b0] sm:$0xff]
    %v4603 = vld [vmem:[%s51 + $0x1b8] sm:$0xff]
    %v4604 = vld [vmem:[%s51 + $0x1c0] sm:$0xff]
    %v4605 = vld [vmem:[%s51 + $0x1c8] sm:$0xff]
    %v4606 = vld [vmem:[%s51 + $0x1d0] sm:$0xff]
    %v4607 = vld [vmem:[%s51 + $0x1d8] sm:$0xff]
    %v4608 = vld [vmem:[%s51 + $0x1e0] sm:$0xff]
    %v4609 = vld [vmem:[%s51 + $0x1e8] sm:$0xff]
    %v4610 = vld [vmem:[%s51 + $0x1f0] sm:$0xff]
    %v4611 = vld [vmem:[%s51 + $0x1f8] sm:$0xff]
    %v4612 = vld [vmem:[%s51 + $0x200] sm:$0xff]
    %v4613 = vld [vmem:[%s51 + $0x208] sm:$0xff]
    %v4614 = vld [vmem:[%s51 + $0x210] sm:$0xff]
    %v4615 = vld [vmem:[%s51 + $0x218] sm:$0xff]
    %v4616 = vld [vmem:[%s51 + $0x220] sm:$0xff]
    %v4617 = vld [vmem:[%s51 + $0x228] sm:$0xff]
    %v4618 = vld [vmem:[%s51 + $0x230] sm:$0xff]
    %v4619 = vld [vmem:[%s51 + $0x238] sm:$0xff]
    %v4620 = vld [vmem:[%s51 + $0x240] sm:$0xff]
    %v4621 = vld [vmem:[%s51 + $0x248] sm:$0xff]
    %v4622 = vld [vmem:[%s51 + $0x250] sm:$0xff]
    %v4623 = vld [vmem:[%s51 + $0x258] sm:$0xff]
    %v4624 = vld [vmem:[%s51 + $0x260] sm:$0xff]
    %v4625 = vld [vmem:[%s51 + $0x268] sm:$0xff]
    %v4626 = vld [vmem:[%s51 + $0x270] sm:$0xff]
    %v4627 = vld [vmem:[%s51 + $0x278] sm:$0xff]
    %v4628 = vld [vmem:[%s51 + $0x280] sm:$0xff]
    %v4629 = vld [vmem:[%s51 + $0x288] sm:$0xff]
    %v4630 = vld [vmem:[%s51 + $0x290] sm:$0xff]
    %v4631 = vld [vmem:[%s51 + $0x298] sm:$0xff]
    %v4632 = vld [vmem:[%s51 + $0x2a0] sm:$0xff]
    %v4633 = vld [vmem:[%s51 + $0x2a8] sm:$0xff]
    %v4634 = vld [vmem:[%s51 + $0x2b0] sm:$0xff]
    %v4635 = vld [vmem:[%s51 + $0x2b8] sm:$0xff]
    %v4636 = vld [vmem:[%s51 + $0x2c0] sm:$0xff]
    %v4637 = vld [vmem:[%s51 + $0x2c8] sm:$0xff]
    %v4638 = vld [vmem:[%s51 + $0x2d0] sm:$0xff]
    %v4639 = vld [vmem:[%s51 + $0x2d8] sm:$0xff]
    %v4640 = vld [vmem:[%s51 + $0x2e0] sm:$0xff]
    %v4641 = vld [vmem:[%s51 + $0x2e8] sm:$0xff]
    %v4642 = vld [vmem:[%s51 + $0x2f0] sm:$0xff]
    %v4643 = vld [vmem:[%s51 + $0x2f8] sm:$0xff]
    %v4644 = vld [vmem:[%s53] sm:$0x7]
    %v4645 = vld [vmem:[#allocation16] sm:$0xff]
    %v4646 = vld [vmem:[#allocation16 + $0x8] sm:$0xff]
    %v4647 = vld [vmem:[#allocation16 + $0x10] sm:$0xff]
    %v4648 = vld [vmem:[#allocation16 + $0x18] sm:$0xff]
    %v4649 = vld [vmem:[#allocation16 + $0x20] sm:$0xff]
    %v4650 = vld [vmem:[#allocation16 + $0x28] sm:$0xff]
    %v4651 = vld [vmem:[#allocation16 + $0x30] sm:$0xff]
    %v4652 = vld [vmem:[#allocation16 + $0x38] sm:$0xff]
    %v4653 = vld [vmem:[#allocation16 + $0x40] sm:$0xff]
    %v4654 = vld [vmem:[#allocation16 + $0x48] sm:$0xff]
    %v4655 = vld [vmem:[#allocation16 + $0x50] sm:$0xff]
    %v4656 = vld [vmem:[#allocation16 + $0x58] sm:$0xff]
    %v4657 = vld [vmem:[#allocation16 + $0x60] sm:$0xff]
    %v4658 = vld [vmem:[#allocation16 + $0x68] sm:$0xff]
    %v4659 = vld [vmem:[#allocation16 + $0x70] sm:$0xff]
    %v4660 = vld [vmem:[#allocation16 + $0x78] sm:$0xff]
    %v4661 = vld [vmem:[#allocation16 + $0x80] sm:$0xff]
    %v4662 = vld [vmem:[#allocation16 + $0x88] sm:$0xff]
    %v4663 = vld [vmem:[#allocation16 + $0x90] sm:$0xff]
    %v4664 = vld [vmem:[#allocation16 + $0x98] sm:$0xff]
    %v4665 = vld [vmem:[#allocation16 + $0xa0] sm:$0xff]
    %v4666 = vld [vmem:[#allocation16 + $0xa8] sm:$0xff]
    %v4667 = vld [vmem:[#allocation16 + $0xb0] sm:$0xff]
    %v4668 = vld [vmem:[#allocation16 + $0xb8] sm:$0xff]
    %v4669 = vld [vmem:[#allocation16 + $0xc0] sm:$0xff]
    %v4670 = vld [vmem:[#allocation16 + $0xc8] sm:$0xff]
    %v4671 = vld [vmem:[#allocation16 + $0xd0] sm:$0xff]
    %v4672 = vld [vmem:[#allocation16 + $0xd8] sm:$0xff]
    %v4673 = vld [vmem:[#allocation16 + $0xe0] sm:$0xff]
    %v4674 = vld [vmem:[#allocation16 + $0xe8] sm:$0xff]
    %v4675 = vld [vmem:[#allocation16 + $0xf0] sm:$0xff]
    %v4676 = vld [vmem:[#allocation16 + $0xf8] sm:$0xff]
    %v4677 = vld [vmem:[#allocation16 + $0x100] sm:$0xff]
    %v4678 = vld [vmem:[#allocation16 + $0x108] sm:$0xff]
    %v4679 = vld [vmem:[#allocation16 + $0x110] sm:$0xff]
    %v4680 = vld [vmem:[#allocation16 + $0x118] sm:$0xff]
    %v4681 = vld [vmem:[#allocation16 + $0x120] sm:$0xff]
    %v4682 = vld [vmem:[#allocation16 + $0x128] sm:$0xff]
    %v4683 = vld [vmem:[#allocation16 + $0x130] sm:$0xff]
    %v4684 = vld [vmem:[#allocation16 + $0x138] sm:$0xff]
    %v4685 = vld [vmem:[#allocation16 + $0x140] sm:$0xff]
    %v4686 = vld [vmem:[#allocation16 + $0x148] sm:$0xff]
    %v4687 = vld [vmem:[#allocation16 + $0x150] sm:$0xff]
    %v4688 = vld [vmem:[#allocation16 + $0x158] sm:$0xff]
    %v4689 = vld [vmem:[#allocation16 + $0x160] sm:$0xff]
    %v4690 = vld [vmem:[#allocation16 + $0x168] sm:$0xff]
    %v4691 = vld [vmem:[#allocation16 + $0x170] sm:$0xff]
    %v4692 = vld [vmem:[#allocation16 + $0x178] sm:$0xff]
    %v4693 = vld [vmem:[#allocation17] sm:$0x1]
    %v4694 = vld [vmem:[#allocation19] sm:$0xff]
    %v4695 = vld [vmem:[#allocation19 + $0x8] sm:$0xff]
    %v4696 = vld [vmem:[#allocation19 + $0x10] sm:$0xff]
    %v4697 = vld [vmem:[#allocation19 + $0x18] sm:$0xff]
    %v4698 = vld [vmem:[#allocation19 + $0x20] sm:$0xff]
    %v4699 = vld [vmem:[#allocation19 + $0x28] sm:$0xff]
    %v4700 = vld [vmem:[#allocation19 + $0x30] sm:$0xff]
    %v4701 = vld [vmem:[#allocation19 + $0x38] sm:$0xff]
    %v4702 = vld [vmem:[#allocation19 + $0x40] sm:$0xff]
    %v4703 = vld [vmem:[#allocation19 + $0x48] sm:$0xff]
    %v4704 = vld [vmem:[#allocation19 + $0x50] sm:$0xff]
    %v4705 = vld [vmem:[#allocation19 + $0x58] sm:$0xff]
    %v4706 = vld [vmem:[#allocation19 + $0x60] sm:$0xff]
    %v4707 = vld [vmem:[#allocation19 + $0x68] sm:$0xff]
    %v4708 = vld [vmem:[#allocation19 + $0x70] sm:$0xff]
    %v4709 = vld [vmem:[#allocation19 + $0x78] sm:$0xff]
    %v4710 = vld [vmem:[#allocation19 + $0x80] sm:$0xff]
    %v4711 = vld [vmem:[#allocation19 + $0x88] sm:$0xff]
    %v4712 = vld [vmem:[#allocation19 + $0x90] sm:$0xff]
    %v4713 = vld [vmem:[#allocation19 + $0x98] sm:$0xff]
    %v4714 = vld [vmem:[#allocation19 + $0xa0] sm:$0xff]
    %v4715 = vld [vmem:[#allocation19 + $0xa8] sm:$0xff]
    %v4716 = vld [vmem:[#allocation19 + $0xb0] sm:$0xff]
    %v4717 = vld [vmem:[#allocation19 + $0xb8] sm:$0xff]
    %v4718 = vld [vmem:[#allocation19 + $0xc0] sm:$0xff]
    %v4719 = vld [vmem:[#allocation19 + $0xc8] sm:$0xff]
    %v4720 = vld [vmem:[#allocation19 + $0xd0] sm:$0xff]
    %v4721 = vld [vmem:[#allocation19 + $0xd8] sm:$0xff]
    %v4722 = vld [vmem:[#allocation19 + $0xe0] sm:$0xff]
    %v4723 = vld [vmem:[#allocation19 + $0xe8] sm:$0xff]
    %v4724 = vld [vmem:[#allocation19 + $0xf0] sm:$0xff]
    %v4725 = vld [vmem:[#allocation19 + $0xf8] sm:$0xff]
    %v4726 = vld [vmem:[#allocation19 + $0x100] sm:$0xff]
    %v4727 = vld [vmem:[#allocation19 + $0x108] sm:$0xff]
    %v4728 = vld [vmem:[#allocation19 + $0x110] sm:$0xff]
    %v4729 = vld [vmem:[#allocation19 + $0x118] sm:$0xff]
    %v4730 = vld [vmem:[#allocation19 + $0x120] sm:$0xff]
    %v4731 = vld [vmem:[#allocation19 + $0x128] sm:$0xff]
    %v4732 = vld [vmem:[#allocation19 + $0x130] sm:$0xff]
    %v4733 = vld [vmem:[#allocation19 + $0x138] sm:$0xff]
    %v4734 = vld [vmem:[#allocation19 + $0x140] sm:$0xff]
    %v4735 = vld [vmem:[#allocation19 + $0x148] sm:$0xff]
    %v4736 = vld [vmem:[#allocation19 + $0x150] sm:$0xff]
    %v4737 = vld [vmem:[#allocation19 + $0x158] sm:$0xff]
    %v4738 = vld [vmem:[#allocation19 + $0x160] sm:$0xff]
    %v4739 = vld [vmem:[#allocation19 + $0x168] sm:$0xff]
    %v4740 = vld [vmem:[#allocation19 + $0x170] sm:$0xff]
    %v4741 = vld [vmem:[#allocation19 + $0x178] sm:$0xff]
    %v4742 = vld [vmem:[#allocation19 + $0x180] sm:$0xff]
    %v4743 = vld [vmem:[#allocation19 + $0x188] sm:$0xff]
    %v4744 = vld [vmem:[#allocation19 + $0x190] sm:$0xff]
    %v4745 = vld [vmem:[#allocation19 + $0x198] sm:$0xff]
    %v4746 = vld [vmem:[#allocation19 + $0x1a0] sm:$0xff]
    %v4747 = vld [vmem:[#allocation19 + $0x1a8] sm:$0xff]
    %v4748 = vld [vmem:[#allocation19 + $0x1b0] sm:$0xff]
    %v4749 = vld [vmem:[#allocation19 + $0x1b8] sm:$0xff]
    %v4750 = vld [vmem:[#allocation19 + $0x1c0] sm:$0xff]
    %v4751 = vld [vmem:[#allocation19 + $0x1c8] sm:$0xff]
    %v4752 = vld [vmem:[#allocation19 + $0x1d0] sm:$0xff]
    %v4753 = vld [vmem:[#allocation19 + $0x1d8] sm:$0xff]
    %v4754 = vld [vmem:[#allocation19 + $0x1e0] sm:$0xff]
    %v4755 = vld [vmem:[#allocation19 + $0x1e8] sm:$0xff]
    %v4756 = vld [vmem:[#allocation19 + $0x1f0] sm:$0xff]
    %v4757 = vld [vmem:[#allocation19 + $0x1f8] sm:$0xff]
    %v4758 = vld [vmem:[#allocation19 + $0x200] sm:$0xff]
    %v4759 = vld [vmem:[#allocation19 + $0x208] sm:$0xff]
    %v4760 = vld [vmem:[#allocation19 + $0x210] sm:$0xff]
    %v4761 = vld [vmem:[#allocation19 + $0x218] sm:$0xff]
    %v4762 = vld [vmem:[#allocation19 + $0x220] sm:$0xff]
    %v4763 = vld [vmem:[#allocation19 + $0x228] sm:$0xff]
    %v4764 = vld [vmem:[#allocation19 + $0x230] sm:$0xff]
    %v4765 = vld [vmem:[#allocation19 + $0x238] sm:$0xff]
    %v4766 = vld [vmem:[#allocation19 + $0x240] sm:$0xff]
    %v4767 = vld [vmem:[#allocation19 + $0x248] sm:$0xff]
    %v4768 = vld [vmem:[#allocation19 + $0x250] sm:$0xff]
    %v4769 = vld [vmem:[#allocation19 + $0x258] sm:$0xff]
    %v4770 = vld [vmem:[#allocation19 + $0x260] sm:$0xff]
    %v4771 = vld [vmem:[#allocation19 + $0x268] sm:$0xff]
    %v4772 = vld [vmem:[#allocation19 + $0x270] sm:$0xff]
    %v4773 = vld [vmem:[#allocation19 + $0x278] sm:$0xff]
    %v4774 = vld [vmem:[#allocation20] sm:$0x1]
    %v4775 = vld [vmem:[#allocation22] sm:$0xff]
    %v4776 = vld [vmem:[#allocation22 + $0x8] sm:$0xff]
    %v4777 = vld [vmem:[#allocation22 + $0x10] sm:$0xff]
    %v4778 = vld [vmem:[#allocation22 + $0x18] sm:$0xff]
    %v4779 = vld [vmem:[#allocation22 + $0x20] sm:$0xff]
    %v4780 = vld [vmem:[#allocation22 + $0x28] sm:$0xff]
    %v4781 = vld [vmem:[#allocation22 + $0x30] sm:$0xff]
    %v4782 = vld [vmem:[#allocation22 + $0x38] sm:$0xff]
    %v4783 = vld [vmem:[#allocation22 + $0x40] sm:$0xff]
    %v4784 = vld [vmem:[#allocation22 + $0x48] sm:$0xff]
    %v4785 = vld [vmem:[#allocation22 + $0x50] sm:$0xff]
    %v4786 = vld [vmem:[#allocation22 + $0x58] sm:$0xff]
    %v4787 = vld [vmem:[#allocation22 + $0x60] sm:$0xff]
    %v4788 = vld [vmem:[#allocation22 + $0x68] sm:$0xff]
    %v4789 = vld [vmem:[#allocation22 + $0x70] sm:$0xff]
    %v4790 = vld [vmem:[#allocation22 + $0x78] sm:$0xff]
    %v4791 = vld [vmem:[#allocation22 + $0x80] sm:$0xff]
    %v4792 = vld [vmem:[#allocation22 + $0x88] sm:$0xff]
    %v4793 = vld [vmem:[#allocation22 + $0x90] sm:$0xff]
    %v4794 = vld [vmem:[#allocation22 + $0x98] sm:$0xff]
    %v4795 = vld [vmem:[#allocation22 + $0xa0] sm:$0xff]
    %v4796 = vld [vmem:[#allocation22 + $0xa8] sm:$0xff]
    %v4797 = vld [vmem:[#allocation22 + $0xb0] sm:$0xff]
    %v4798 = vld [vmem:[#allocation22 + $0xb8] sm:$0xff]
    %v4799 = vld [vmem:[#allocation22 + $0xc0] sm:$0xff]
    %v4800 = vld [vmem:[#allocation22 + $0xc8] sm:$0xff]
    %v4801 = vld [vmem:[#allocation22 + $0xd0] sm:$0xff]
    %v4802 = vld [vmem:[#allocation22 + $0xd8] sm:$0xff]
    %v4803 = vld [vmem:[#allocation22 + $0xe0] sm:$0xff]
    %v4804 = vld [vmem:[#allocation22 + $0xe8] sm:$0xff]
    %v4805 = vld [vmem:[#allocation22 + $0xf0] sm:$0xff]
    %v4806 = vld [vmem:[#allocation22 + $0xf8] sm:$0xff]
    %v4807 = vld [vmem:[#allocation23] sm:$0x1]
    %v4809 = vlaneseq
    %v4810 = vshrl.u32 %v4809, 7
    %v4811 = vsub.s32 0, %v4810
    %v4812 = vrot.slane %v4644, %v4811
    %v4813 = vlaneseq
    %v4814 = vshrl.u32 %v4813, 7
    %v4815 = vsub.s32 1, %v4814
    %v4816 = vrot.slane %v4644, %v4815
    %v4817 = vlaneseq
    %v4818 = vshrl.u32 %v4817, 7
    %v4819 = vsub.s32 2, %v4818
    %v4820 = vrot.slane %v4644, %v4819
    %4824 = vmatprep.subr.mxu0 %v4594
    %4825 = vmatpush1.msra.mxu0 %v4593
    %4826 = vmatprep.subr.mxu0 %v4591
    %4827 = vmatpush1.msra.mxu0 %v4590
    %4828 = vmatprep.subr.mxu0 %v4588
    %4829 = vmatpush1.msra.mxu0 %v4587
    %4830 = vmatprep.subr.mxu0 %v4585
    %4831 = vmatpush1.msra.mxu0 %v4584
    %4832 = vmatprep.subr.mxu0 %v4582
    %4833 = vmatpush1.msra.mxu0 %v4581
    %4834 = vmatprep.subr.mxu0 %v4579
    %4835 = vmatpush1.msra.mxu0 %v4578
    %4836 = vmatprep.subr.mxu0 %v4576
    %4837 = vmatpush1.msra.mxu0 %v4575
    %4838 = vmatprep.subr.mxu0 %v4573
    %4839 = vmatpush1.msra.mxu0 %v4572
    %4840 = vmatprep.subr.mxu0 %v4570
    %4841 = vmatpush1.msra.mxu0 %v4569
    %4842 = vmatprep.subr.mxu0 %v4567
    %4843 = vmatpush1.msra.mxu0 %v4566
    %4844 = vmatprep.subr.mxu0 %v4564
    %4845 = vmatpush1.msra.mxu0 %v4563
    %4846 = vmatprep.subr.mxu0 %v4561
    %4847 = vmatpush1.msra.mxu0 %v4560
    %4848 = vmatprep.subr.mxu0 %v4558
    %4849 = vmatpush1.msra.mxu0 %v4557
    %4850 = vmatprep.subr.mxu0 %v4555
    %4851 = vmatpush1.msra.mxu0 %v4554
    %4852 = vmatprep.subr.mxu0 %v4552
    %4853 = vmatpush1.msra.mxu0 %v4551
    %4854 = vmatprep.subr.mxu0 %v4549
    %4855 = vmatpush1.msra.mxu0 %v4548
    %4856 = vmatprep.subr.mxu0 %v4642
    %4857 = vmatpush2.msra.mxu0 %v4641
    %4858 = vmatprep.subr.mxu0 %v4639
    %4859 = vmatpush2.msra.mxu0 %v4638
    %4860 = vmatprep.subr.mxu0 %v4636
    %4861 = vmatpush2.msra.mxu0 %v4635
    %4862 = vmatprep.subr.mxu0 %v4633
    %4863 = vmatpush2.msra.mxu0 %v4632
    %4864 = vmatprep.subr.mxu0 %v4630
    %4865 = vmatpush2.msra.mxu0 %v4629
    %4866 = vmatprep.subr.mxu0 %v4627
    %4867 = vmatpush2.msra.mxu0 %v4626
    %4868 = vmatprep.subr.mxu0 %v4624
    %4869 = vmatpush2.msra.mxu0 %v4623
    %4870 = vmatprep.subr.mxu0 %v4621
    %4871 = vmatpush2.msra.mxu0 %v4620
    %4872 = vmatprep.subr.mxu0 %v4618
    %4873 = vmatpush2.msra.mxu0 %v4617
    %4874 = vmatprep.subr.mxu0 %v4615
    %4875 = vmatpush2.msra.mxu0 %v4614
    %4876 = vmatprep.subr.mxu0 %v4612
    %4877 = vmatpush2.msra.mxu0 %v4611
    %4878 = vmatprep.subr.mxu0 %v4609
    %4879 = vmatpush2.msra.mxu0 %v4608
    %4880 = vmatprep.subr.mxu0 %v4606
    %4881 = vmatpush2.msra.mxu0 %v4605
    %4882 = vmatprep.subr.mxu0 %v4603
    %4883 = vmatpush2.msra.mxu0 %v4602
    %4884 = vmatprep.subr.mxu0 %v4600
    %4885 = vmatpush2.msra.mxu0 %v4599
    %4886 = vmatprep.subr.mxu0 %v4597
    %4887 = vmatpush2.msra.mxu0 %v4596
    %4888 = vmatprep.mubr.f32.mxu0 %v4524
    %4889 = vmatmul.mubr.f32.gmra.mxu0 %v4522
    %v4890 = vpop.f32.mrf.mxu0
    %v4891 = vadd.f32 %v4812, %v4890
    %v4892 = vpop.f32.mrf.mxu0
    %v4893 = vadd.f32 %v4816, %v4892
    %4894 = vmatprep.mubr.f32.mxu0 %v4530
    %4895 = vmatmul.mubr.f32.gmra.mxu0 %v4528
    %v4896 = vpop.f32.mrf.mxu0
    %v4897 = vadd.f32 %v4812, %v4896
    %v4898 = vpop.f32.mrf.mxu0
    %v4899 = vadd.f32 %v4816, %v4898
    %4900 = vmatprep.mubr.f32.mxu0 %v4536
    %4901 = vmatmul.mubr.f32.gmra.mxu0 %v4534
    %v4902 = vpop.f32.mrf.mxu0
    %v4903 = vadd.f32 %v4812, %v4902
    %v4904 = vpop.f32.mrf.mxu0
    %v4905 = vadd.f32 %v4816, %v4904
    %4906 = vmatprep.mubr.f32.mxu0 %v4542
    %4907 = vmatmul.mubr.f32.gmra.mxu0 %v4540
    %v4908 = vpop.f32.mrf.mxu0
    %v4909 = vadd.f32 %v4812, %v4908
    %v4910 = vpop.f32.mrf.mxu0
    %v4911 = vadd.f32 %v4816, %v4910
    %4912 = vdwg.mxu0
    %4913 = vmatprep.subr.mxu0 0.0
    %4914 = vmatpush1.msra.mxu0 %v4595
    %4915 = vmatprep.subr.mxu0 0.0
    %4916 = vmatpush1.msra.mxu0 %v4592
    %4917 = vmatprep.subr.mxu0 0.0
    %4918 = vmatpush1.msra.mxu0 %v4589
    %4919 = vmatprep.subr.mxu0 0.0
    %4920 = vmatpush1.msra.mxu0 %v4586
    %4921 = vmatprep.subr.mxu0 0.0
    %4922 = vmatpush1.msra.mxu0 %v4583
    %4923 = vmatprep.subr.mxu0 0.0
    %4924 = vmatpush1.msra.mxu0 %v4580
    %4925 = vmatprep.subr.mxu0 0.0
    %4926 = vmatpush1.msra.mxu0 %v4577
    %4927 = vmatprep.subr.mxu0 0.0
    %4928 = vmatpush1.msra.mxu0 %v4574
    %4929 = vmatprep.subr.mxu0 0.0
    %4930 = vmatpush1.msra.mxu0 %v4571
    %4931 = vmatprep.subr.mxu0 0.0
    %4932 = vmatpush1.msra.mxu0 %v4568
    %4933 = vmatprep.subr.mxu0 0.0
    %4934 = vmatpush1.msra.mxu0 %v4565
    %4935 = vmatprep.subr.mxu0 0.0
    %4936 = vmatpush1.msra.mxu0 %v4562
    %4937 = vmatprep.subr.mxu0 0.0
    %4938 = vmatpush1.msra.mxu0 %v4559
    %4939 = vmatprep.subr.mxu0 0.0
    %4940 = vmatpush1.msra.mxu0 %v4556
    %4941 = vmatprep.subr.mxu0 0.0
    %4942 = vmatpush1.msra.mxu0 %v4553
    %4943 = vmatprep.subr.mxu0 0.0
    %4944 = vmatpush1.msra.mxu0 %v4550
    %4945 = vmatprep.subr.mxu0 0.0
    %4946 = vmatpush2.msra.mxu0 %v4643
    %4947 = vmatprep.subr.mxu0 0.0
    %4948 = vmatpush2.msra.mxu0 %v4640
    %4949 = vmatprep.subr.mxu0 0.0
    %4950 = vmatpush2.msra.mxu0 %v4637
    %4951 = vmatprep.subr.mxu0 0.0
    %4952 = vmatpush2.msra.mxu0 %v4634
    %4953 = vmatprep.subr.mxu0 0.0
    %4954 = vmatpush2.msra.mxu0 %v4631
    %4955 = vmatprep.subr.mxu0 0.0
    %4956 = vmatpush2.msra.mxu0 %v4628
    %4957 = vmatprep.subr.mxu0 0.0
    %4958 = vmatpush2.msra.mxu0 %v4625
    %4959 = vmatprep.subr.mxu0 0.0
    %4960 = vmatpush2.msra.mxu0 %v4622
    %4961 = vmatprep.subr.mxu0 0.0
    %4962 = vmatpush2.msra.mxu0 %v4619
    %4963 = vmatprep.subr.mxu0 0.0
    %4964 = vmatpush2.msra.mxu0 %v4616
    %4965 = vmatprep.subr.mxu0 0.0
    %4966 = vmatpush2.msra.mxu0 %v4613
    %4967 = vmatprep.subr.mxu0 0.0
    %4968 = vmatpush2.msra.mxu0 %v4610
    %4969 = vmatprep.subr.mxu0 0.0
    %4970 = vmatpush2.msra.mxu0 %v4607
    %4971 = vmatprep.subr.mxu0 0.0
    %4972 = vmatpush2.msra.mxu0 %v4604
    %4973 = vmatprep.subr.mxu0 0.0
    %4974 = vmatpush2.msra.mxu0 %v4601
    %4975 = vmatprep.subr.mxu0 0.0
    %4976 = vmatpush2.msra.mxu0 %v4598
    %4977 = vmatprep.mubr.f32.mxu0 %v4524
    %4978 = vmatmul.mubr.f32.gmra.mxu0 %v4522
    %v4979 = vpop.f32.mrf.mxu0
    %v4980 = vadd.f32 %v4820, %v4979
    %v4981 = vpop.f32.mrf.mxu0
    %4982 = vmatprep.mubr.f32.mxu0 %v4530
    %4983 = vmatmul.mubr.f32.gmra.mxu0 %v4528
    %v4984 = vpop.f32.mrf.mxu0
    %v4985 = vadd.f32 %v4820, %v4984
    %v4986 = vpop.f32.mrf.mxu0
    %4987 = vmatprep.mubr.f32.mxu0 %v4536
    %4988 = vmatmul.mubr.f32.gmra.mxu0 %v4534
    %v4989 = vpop.f32.mrf.mxu0
    %v4990 = vadd.f32 %v4820, %v4989
    %v4991 = vpop.f32.mrf.mxu0
    %4992 = vmatprep.mubr.f32.mxu0 %v4542
    %4993 = vmatmul.mubr.f32.gmra.mxu0 %v4540
    %v4994 = vpop.f32.mrf.mxu0
    %v4995 = vadd.f32 %v4820, %v4994
    %v4996 = vpop.f32.mrf.mxu0
    %4997 = vdwg.mxu0
    %v4998 = vmax.f32 %v4891, 0.0
    %v4999 = vmax.f32 %v4893, 0.0
    %v5000 = vmax.f32 %v4980, 0.0
    %v5001 = vmax.f32 %v4897, 0.0
    %v5002 = vmax.f32 %v4899, 0.0
    %v5003 = vmax.f32 %v4985, 0.0
    %v5004 = vmax.f32 %v4903, 0.0
    %v5005 = vmax.f32 %v4905, 0.0
    %v5006 = vmax.f32 %v4990, 0.0
    %v5007 = vmax.f32 %v4909, 0.0
    %v5008 = vmax.f32 %v4911, 0.0
    %v5009 = vmax.f32 %v4995, 0.0
    %vm5010 = vcmp.lt.s32.totalorder %v4544, 3
    %vm5011 = vcmp.lt.s32.totalorder %v4545, 3
    %vm5012 = vcmp.lt.s32.totalorder %v4546, 3
    %vm5013 = vcmp.lt.s32.totalorder %v4547, 3
    %v5014 = vsel %vm5010, 1.0, 0.0
    %v5015 = vsel %vm5011, 1.0, 0.0
    %v5016 = vsel %vm5012, 1.0, 0.0
    %v5017 = vsel %vm5013, 1.0, 0.0
    %5019 = vset.pattern.permute.xlu0 0
    %5020 = vperm.xlu0 %5019, %v5014
    %v5021 = vpop.permute.xlu0 %5020
    %5024 = vset.pattern.permute.xlu0 0
    %5025 = vperm.xlu0 %5024, %v5015
    %v5026 = vpop.permute.xlu0 %5025
    %5029 = vset.pattern.permute.xlu0 0
    %5030 = vperm.xlu0 %5029, %v5016
    %v5031 = vpop.permute.xlu0 %5030
    %5034 = vset.pattern.permute.xlu0 0
    %5035 = vperm.xlu0 %5034, %v5017
    %v5036 = vpop.permute.xlu0 %5035
    %v5038 = vmul.f32 %v4998, %v5021
    %v5039 = vmul.f32 %v4999, %v5021
    %v5040 = vmul.f32 %v5000, %v5021
    %v5041 = vmul.f32 %v5001, %v5026
    %v5042 = vmul.f32 %v5002, %v5026
    %v5043 = vmul.f32 %v5003, %v5026
    %v5044 = vmul.f32 %v5004, %v5031
    %v5045 = vmul.f32 %v5005, %v5031
    %v5046 = vmul.f32 %v5006, %v5031
    %v5047 = vmul.f32 %v5007, %v5036
    %v5048 = vmul.f32 %v5008, %v5036
    %v5049 = vmul.f32 %v5009, %v5036
    %v5054 = vrot.slane %v5039, 7
    %v5055 = vrot.slane %v5042, 7
    %v5056 = vsel %vm1026, %v5054, %v5055
    %v5057 = vrot.slane %v5045, 7
    %v5058 = vsel %vm1026, %v5055, %v5057
    %v5059 = vrot.slane %v5048, 7
    %v5060 = vsel %vm1026, %v5057, %v5059
    %v5065 = vsel %vm1026, 0.0, %v5054
    %v5066 = vrot.slane %v5039, 1
    %v5067 = vrot.slane %v5042, 1
    %v5068 = vsel %vm1087, %v5066, %v5067
    %v5069 = vrot.slane %v5045, 1
    %v5070 = vsel %vm1087, %v5067, %v5069
    %v5071 = vrot.slane %v5048, 1
    %v5072 = vsel %vm1087, %v5069, %v5071
    %v5077 = vsel %vm1087, %v5071, 0.0
    %v5079 = vlaneseq
    %v5080 = vshrl.u32 %v5079, 7
    %v5081 = vsub.s32 0, %v5080
    %v5082 = vrot.slane %v4693, %v5081
    %5084 = vmatprep.subr.mxu0 0.0
    %5085 = vmatpush1.msra.mxu0 %v4660
    %5086 = vmatprep.subr.mxu0 0.0
    %5087 = vmatpush1.msra.mxu0 %v4659
    %5088 = vmatprep.subr.mxu0 0.0
    %5089 = vmatpush1.msra.mxu0 %v4658
    %5090 = vmatprep.subr.mxu0 0.0
    %5091 = vmatpush1.msra.mxu0 %v4657
    %5092 = vmatprep.subr.mxu0 0.0
    %5093 = vmatpush1.msra.mxu0 %v4656
    %5094 = vmatprep.subr.mxu0 0.0
    %5095 = vmatpush1.msra.mxu0 %v4655
    %5096 = vmatprep.subr.mxu0 0.0
    %5097 = vmatpush1.msra.mxu0 %v4654
    %5098 = vmatprep.subr.mxu0 0.0
    %5099 = vmatpush1.msra.mxu0 %v4653
    %5100 = vmatprep.subr.mxu0 0.0
    %5101 = vmatpush1.msra.mxu0 %v4652
    %5102 = vmatprep.subr.mxu0 0.0
    %5103 = vmatpush1.msra.mxu0 %v4651
    %5104 = vmatprep.subr.mxu0 0.0
    %5105 = vmatpush1.msra.mxu0 %v4650
    %5106 = vmatprep.subr.mxu0 0.0
    %5107 = vmatpush1.msra.mxu0 %v4649
    %5108 = vmatprep.subr.mxu0 0.0
    %5109 = vmatpush1.msra.mxu0 %v4648
    %5110 = vmatprep.subr.mxu0 0.0
    %5111 = vmatpush1.msra.mxu0 %v4647
    %5112 = vmatprep.subr.mxu0 0.0
    %5113 = vmatpush1.msra.mxu0 %v4646
    %5114 = vmatprep.subr.mxu0 0.0
    %5115 = vmatpush1.msra.mxu0 %v4645
    %5116 = vmatprep.subr.mxu0 0.0
    %5117 = vmatpush2.msra.mxu0 %v4676
    %5118 = vmatprep.subr.mxu0 0.0
    %5119 = vmatpush2.msra.mxu0 %v4675
    %5120 = vmatprep.subr.mxu0 0.0
    %5121 = vmatpush2.msra.mxu0 %v4674
    %5122 = vmatprep.subr.mxu0 0.0
    %5123 = vmatpush2.msra.mxu0 %v4673
    %5124 = vmatprep.subr.mxu0 0.0
    %5125 = vmatpush2.msra.mxu0 %v4672
    %5126 = vmatprep.subr.mxu0 0.0
    %5127 = vmatpush2.msra.mxu0 %v4671
    %5128 = vmatprep.subr.mxu0 0.0
    %5129 = vmatpush2.msra.mxu0 %v4670
    %5130 = vmatprep.subr.mxu0 0.0
    %5131 = vmatpush2.msra.mxu0 %v4669
    %5132 = vmatprep.subr.mxu0 0.0
    %5133 = vmatpush2.msra.mxu0 %v4668
    %5134 = vmatprep.subr.mxu0 0.0
    %5135 = vmatpush2.msra.mxu0 %v4667
    %5136 = vmatprep.subr.mxu0 0.0
    %5137 = vmatpush2.msra.mxu0 %v4666
    %5138 = vmatprep.subr.mxu0 0.0
    %5139 = vmatpush2.msra.mxu0 %v4665
    %5140 = vmatprep.subr.mxu0 0.0
    %5141 = vmatpush2.msra.mxu0 %v4664
    %5142 = vmatprep.subr.mxu0 0.0
    %5143 = vmatpush2.msra.mxu0 %v4663
    %5144 = vmatprep.subr.mxu0 0.0
    %5145 = vmatpush2.msra.mxu0 %v4662
    %5146 = vmatprep.subr.mxu0 0.0
    %5147 = vmatpush2.msra.mxu0 %v4661
    %5148 = vmatprep.mubr.f32.mxu0 %v5039
    %5149 = vmatmul.mubr.f32.gmra.mxu0 %v5065
    %v5150 = vpop.f32.mrf.mxu0
    %v5151 = vadd.f32 %v5082, %v5150
    %v5152 = vpop.f32.mrf.mxu0
    %5153 = vmatprep.mubr.f32.mxu0 %v5042
    %5154 = vmatmul.mubr.f32.gmra.mxu0 %v5056
    %v5155 = vpop.f32.mrf.mxu0
    %v5156 = vadd.f32 %v5082, %v5155
    %v5157 = vpop.f32.mrf.mxu0
    %5158 = vmatprep.mubr.f32.mxu0 %v5045
    %5159 = vmatmul.mubr.f32.gmra.mxu0 %v5058
    %v5160 = vpop.f32.mrf.mxu0
    %v5161 = vadd.f32 %v5082, %v5160
    %v5162 = vpop.f32.mrf.mxu0
    %5163 = vmatprep.mubr.f32.mxu0 %v5048
    %5164 = vmatmul.mubr.f32.gmra.mxu0 %v5060
    %v5165 = vpop.f32.mrf.mxu0
    %v5166 = vadd.f32 %v5082, %v5165
    %v5167 = vpop.f32.mrf.mxu0
    %5168 = vdwg.mxu0
    %5169 = vmatprep.subr.mxu0 0.0
    %5170 = vmatpush1.msra.mxu0 %v4692
    %5171 = vmatprep.subr.mxu0 0.0
    %5172 = vmatpush1.msra.mxu0 %v4691
    %5173 = vmatprep.subr.mxu0 0.0
    %5174 = vmatpush1.msra.mxu0 %v4690
    %5175 = vmatprep.subr.mxu0 0.0
    %5176 = vmatpush1.msra.mxu0 %v4689
    %5177 = vmatprep.subr.mxu0 0.0
    %5178 = vmatpush1.msra.mxu0 %v4688
    %5179 = vmatprep.subr.mxu0 0.0
    %5180 = vmatpush1.msra.mxu0 %v4687
    %5181 = vmatprep.subr.mxu0 0.0
    %5182 = vmatpush1.msra.mxu0 %v4686
    %5183 = vmatprep.subr.mxu0 0.0
    %5184 = vmatpush1.msra.mxu0 %v4685
    %5185 = vmatprep.subr.mxu0 0.0
    %5186 = vmatpush1.msra.mxu0 %v4684
    %5187 = vmatprep.subr.mxu0 0.0
    %5188 = vmatpush1.msra.mxu0 %v4683
    %5189 = vmatprep.subr.mxu0 0.0
    %5190 = vmatpush1.msra.mxu0 %v4682
    %5191 = vmatprep.subr.mxu0 0.0
    %5192 = vmatpush1.msra.mxu0 %v4681
    %5193 = vmatprep.subr.mxu0 0.0
    %5194 = vmatpush1.msra.mxu0 %v4680
    %5195 = vmatprep.subr.mxu0 0.0
    %5196 = vmatpush1.msra.mxu0 %v4679
    %5197 = vmatprep.subr.mxu0 0.0
    %5198 = vmatpush1.msra.mxu0 %v4678
    %5199 = vmatprep.subr.mxu0 0.0
    %5200 = vmatpush1.msra.mxu0 %v4677
    %5201 = vmatprep.subr.mxu0 0.0
    %5202 = vmatpush2.msra.mxu0 0.0
    %5203 = vmatprep.subr.mxu0 0.0
    %5204 = vmatpush2.msra.mxu0 0.0
    %5205 = vmatprep.subr.mxu0 0.0
    %5206 = vmatpush2.msra.mxu0 0.0
    %5207 = vmatprep.subr.mxu0 0.0
    %5208 = vmatpush2.msra.mxu0 0.0
    %5209 = vmatprep.subr.mxu0 0.0
    %5210 = vmatpush2.msra.mxu0 0.0
    %5211 = vmatprep.subr.mxu0 0.0
    %5212 = vmatpush2.msra.mxu0 0.0
    %5213 = vmatprep.subr.mxu0 0.0
    %5214 = vmatpush2.msra.mxu0 0.0
    %5215 = vmatprep.subr.mxu0 0.0
    %5216 = vmatpush2.msra.mxu0 0.0
    %5217 = vmatprep.subr.mxu0 0.0
    %5218 = vmatpush2.msra.mxu0 0.0
    %5219 = vmatprep.subr.mxu0 0.0
    %5220 = vmatpush2.msra.mxu0 0.0
    %5221 = vmatprep.subr.mxu0 0.0
    %5222 = vmatpush2.msra.mxu0 0.0
    %5223 = vmatprep.subr.mxu0 0.0
    %5224 = vmatpush2.msra.mxu0 0.0
    %5225 = vmatprep.subr.mxu0 0.0
    %5226 = vmatpush2.msra.mxu0 0.0
    %5227 = vmatprep.subr.mxu0 0.0
    %5228 = vmatpush2.msra.mxu0 0.0
    %5229 = vmatprep.subr.mxu0 0.0
    %5230 = vmatpush2.msra.mxu0 0.0
    %5231 = vmatprep.subr.mxu0 0.0
    %5232 = vmatpush2.msra.mxu0 0.0
    %5233 = vmatprep.mubr.f32.mxu0 0.0
    %5234 = vmatmul.mubr.f32.gmra.mxu0 %v5068
    %v5235 = vpop.f32.mrf.mxu0
    %v5236 = vadd.f32 %v5151, %v5235
    %v5237 = vpop.f32.mrf.mxu0
    %5238 = vmatprep.mubr.f32.mxu0 0.0
    %5239 = vmatmul.mubr.f32.gmra.mxu0 %v5070
    %v5240 = vpop.f32.mrf.mxu0
    %v5241 = vadd.f32 %v5156, %v5240
    %v5242 = vpop.f32.mrf.mxu0
    %5243 = vmatprep.mubr.f32.mxu0 0.0
    %5244 = vmatmul.mubr.f32.gmra.mxu0 %v5072
    %v5245 = vpop.f32.mrf.mxu0
    %v5246 = vadd.f32 %v5161, %v5245
    %v5247 = vpop.f32.mrf.mxu0
    %5248 = vmatprep.mubr.f32.mxu0 0.0
    %5249 = vmatmul.mubr.f32.gmra.mxu0 %v5077
    %v5250 = vpop.f32.mrf.mxu0
    %v5251 = vadd.f32 %v5166, %v5250
    %v5252 = vpop.f32.mrf.mxu0
    %5253 = vdwg.mxu0
    %v5254 = vmax.f32 %v5236, 0.0
    %v5255 = vmax.f32 %v5241, 0.0
    %v5256 = vmax.f32 %v5246, 0.0
    %v5257 = vmax.f32 %v5251, 0.0
    %v5262 = vrot.slane %v5040, 6
    %v5263 = vrot.slane %v5043, 6
    %v5264 = vsel %vm1355, %v5262, %v5263
    %v5265 = vrot.slane %v5046, 6
    %v5266 = vsel %vm1355, %v5263, %v5265
    %v5267 = vrot.slane %v5049, 6
    %v5268 = vsel %vm1355, %v5265, %v5267
    %v5273 = vsel %vm1355, 0.0, %v5262
    %v5274 = vrot.slane %v5040, 7
    %v5275 = vrot.slane %v5043, 7
    %v5276 = vsel %vm1026, %v5274, %v5275
    %v5277 = vrot.slane %v5046, 7
    %v5278 = vsel %vm1026, %v5275, %v5277
    %v5279 = vrot.slane %v5049, 7
    %v5280 = vsel %vm1026, %v5277, %v5279
    %v5285 = vsel %vm1026, 0.0, %v5274
    %v5286 = vrot.slane %v5040, 1
    %v5287 = vrot.slane %v5043, 1
    %v5288 = vsel %vm1087, %v5286, %v5287
    %v5289 = vrot.slane %v5046, 1
    %v5290 = vsel %vm1087, %v5287, %v5289
    %v5291 = vrot.slane %v5049, 1
    %v5292 = vsel %vm1087, %v5289, %v5291
    %v5297 = vsel %vm1087, %v5291, 0.0
    %v5298 = vrot.slane %v5040, 2
    %v5299 = vrot.slane %v5043, 2
    %v5300 = vsel %vm1442, %v5298, %v5299
    %v5301 = vrot.slane %v5046, 2
    %v5302 = vsel %vm1442, %v5299, %v5301
    %v5303 = vrot.slane %v5049, 2
    %v5304 = vsel %vm1442, %v5301, %v5303
    %v5309 = vsel %vm1442, %v5303, 0.0
    %v5311 = vlaneseq
    %v5312 = vshrl.u32 %v5311, 7
    %v5313 = vsub.s32 0, %v5312
    %v5314 = vrot.slane %v4774, %v5313
    %5316 = vmatprep.subr.mxu0 0.0
    %5317 = vmatpush1.msra.mxu0 %v4709
    %5318 = vmatprep.subr.mxu0 0.0
    %5319 = vmatpush1.msra.mxu0 %v4708
    %5320 = vmatprep.subr.mxu0 0.0
    %5321 = vmatpush1.msra.mxu0 %v4707
    %5322 = vmatprep.subr.mxu0 0.0
    %5323 = vmatpush1.msra.mxu0 %v4706
    %5324 = vmatprep.subr.mxu0 0.0
    %5325 = vmatpush1.msra.mxu0 %v4705
    %5326 = vmatprep.subr.mxu0 0.0
    %5327 = vmatpush1.msra.mxu0 %v4704
    %5328 = vmatprep.subr.mxu0 0.0
    %5329 = vmatpush1.msra.mxu0 %v4703
    %5330 = vmatprep.subr.mxu0 0.0
    %5331 = vmatpush1.msra.mxu0 %v4702
    %5332 = vmatprep.subr.mxu0 0.0
    %5333 = vmatpush1.msra.mxu0 %v4701
    %5334 = vmatprep.subr.mxu0 0.0
    %5335 = vmatpush1.msra.mxu0 %v4700
    %5336 = vmatprep.subr.mxu0 0.0
    %5337 = vmatpush1.msra.mxu0 %v4699
    %5338 = vmatprep.subr.mxu0 0.0
    %5339 = vmatpush1.msra.mxu0 %v4698
    %5340 = vmatprep.subr.mxu0 0.0
    %5341 = vmatpush1.msra.mxu0 %v4697
    %5342 = vmatprep.subr.mxu0 0.0
    %5343 = vmatpush1.msra.mxu0 %v4696
    %5344 = vmatprep.subr.mxu0 0.0
    %5345 = vmatpush1.msra.mxu0 %v4695
    %5346 = vmatprep.subr.mxu0 0.0
    %5347 = vmatpush1.msra.mxu0 %v4694
    %5348 = vmatprep.subr.mxu0 0.0
    %5349 = vmatpush2.msra.mxu0 %v4725
    %5350 = vmatprep.subr.mxu0 0.0
    %5351 = vmatpush2.msra.mxu0 %v4724
    %5352 = vmatprep.subr.mxu0 0.0
    %5353 = vmatpush2.msra.mxu0 %v4723
    %5354 = vmatprep.subr.mxu0 0.0
    %5355 = vmatpush2.msra.mxu0 %v4722
    %5356 = vmatprep.subr.mxu0 0.0
    %5357 = vmatpush2.msra.mxu0 %v4721
    %5358 = vmatprep.subr.mxu0 0.0
    %5359 = vmatpush2.msra.mxu0 %v4720
    %5360 = vmatprep.subr.mxu0 0.0
    %5361 = vmatpush2.msra.mxu0 %v4719
    %5362 = vmatprep.subr.mxu0 0.0
    %5363 = vmatpush2.msra.mxu0 %v4718
    %5364 = vmatprep.subr.mxu0 0.0
    %5365 = vmatpush2.msra.mxu0 %v4717
    %5366 = vmatprep.subr.mxu0 0.0
    %5367 = vmatpush2.msra.mxu0 %v4716
    %5368 = vmatprep.subr.mxu0 0.0
    %5369 = vmatpush2.msra.mxu0 %v4715
    %5370 = vmatprep.subr.mxu0 0.0
    %5371 = vmatpush2.msra.mxu0 %v4714
    %5372 = vmatprep.subr.mxu0 0.0
    %5373 = vmatpush2.msra.mxu0 %v4713
    %5374 = vmatprep.subr.mxu0 0.0
    %5375 = vmatpush2.msra.mxu0 %v4712
    %5376 = vmatprep.subr.mxu0 0.0
    %5377 = vmatpush2.msra.mxu0 %v4711
    %5378 = vmatprep.subr.mxu0 0.0
    %5379 = vmatpush2.msra.mxu0 %v4710
    %5380 = vmatprep.mubr.f32.mxu0 %v5285
    %5381 = vmatmul.mubr.f32.gmra.mxu0 %v5273
    %v5382 = vpop.f32.mrf.mxu0
    %v5383 = vadd.f32 %v5314, %v5382
    %v5384 = vpop.f32.mrf.mxu0
    %5385 = vmatprep.mubr.f32.mxu0 %v5276
    %5386 = vmatmul.mubr.f32.gmra.mxu0 %v5264
    %v5387 = vpop.f32.mrf.mxu0
    %v5388 = vadd.f32 %v5314, %v5387
    %v5389 = vpop.f32.mrf.mxu0
    %5390 = vmatprep.mubr.f32.mxu0 %v5278
    %5391 = vmatmul.mubr.f32.gmra.mxu0 %v5266
    %v5392 = vpop.f32.mrf.mxu0
    %v5393 = vadd.f32 %v5314, %v5392
    %v5394 = vpop.f32.mrf.mxu0
    %5395 = vmatprep.mubr.f32.mxu0 %v5280
    %5396 = vmatmul.mubr.f32.gmra.mxu0 %v5268
    %v5397 = vpop.f32.mrf.mxu0
    %v5398 = vadd.f32 %v5314, %v5397
    %v5399 = vpop.f32.mrf.mxu0
    %5400 = vdwg.mxu0
    %5401 = vmatprep.subr.mxu0 0.0
    %5402 = vmatpush1.msra.mxu0 %v4741
    %5403 = vmatprep.subr.mxu0 0.0
    %5404 = vmatpush1.msra.mxu0 %v4740
    %5405 = vmatprep.subr.mxu0 0.0
    %5406 = vmatpush1.msra.mxu0 %v4739
    %5407 = vmatprep.subr.mxu0 0.0
    %5408 = vmatpush1.msra.mxu0 %v4738
    %5409 = vmatprep.subr.mxu0 0.0
    %5410 = vmatpush1.msra.mxu0 %v4737
    %5411 = vmatprep.subr.mxu0 0.0
    %5412 = vmatpush1.msra.mxu0 %v4736
    %5413 = vmatprep.subr.mxu0 0.0
    %5414 = vmatpush1.msra.mxu0 %v4735
    %5415 = vmatprep.subr.mxu0 0.0
    %5416 = vmatpush1.msra.mxu0 %v4734
    %5417 = vmatprep.subr.mxu0 0.0
    %5418 = vmatpush1.msra.mxu0 %v4733
    %5419 = vmatprep.subr.mxu0 0.0
    %5420 = vmatpush1.msra.mxu0 %v4732
    %5421 = vmatprep.subr.mxu0 0.0
    %5422 = vmatpush1.msra.mxu0 %v4731
    %5423 = vmatprep.subr.mxu0 0.0
    %5424 = vmatpush1.msra.mxu0 %v4730
    %5425 = vmatprep.subr.mxu0 0.0
    %5426 = vmatpush1.msra.mxu0 %v4729
    %5427 = vmatprep.subr.mxu0 0.0
    %5428 = vmatpush1.msra.mxu0 %v4728
    %5429 = vmatprep.subr.mxu0 0.0
    %5430 = vmatpush1.msra.mxu0 %v4727
    %5431 = vmatprep.subr.mxu0 0.0
    %5432 = vmatpush1.msra.mxu0 %v4726
    %5433 = vmatprep.subr.mxu0 0.0
    %5434 = vmatpush2.msra.mxu0 %v4757
    %5435 = vmatprep.subr.mxu0 0.0
    %5436 = vmatpush2.msra.mxu0 %v4756
    %5437 = vmatprep.subr.mxu0 0.0
    %5438 = vmatpush2.msra.mxu0 %v4755
    %5439 = vmatprep.subr.mxu0 0.0
    %5440 = vmatpush2.msra.mxu0 %v4754
    %5441 = vmatprep.subr.mxu0 0.0
    %5442 = vmatpush2.msra.mxu0 %v4753
    %5443 = vmatprep.subr.mxu0 0.0
    %5444 = vmatpush2.msra.mxu0 %v4752
    %5445 = vmatprep.subr.mxu0 0.0
    %5446 = vmatpush2.msra.mxu0 %v4751
    %5447 = vmatprep.subr.mxu0 0.0
    %5448 = vmatpush2.msra.mxu0 %v4750
    %5449 = vmatprep.subr.mxu0 0.0
    %5450 = vmatpush2.msra.mxu0 %v4749
    %5451 = vmatprep.subr.mxu0 0.0
    %5452 = vmatpush2.msra.mxu0 %v4748
    %5453 = vmatprep.subr.mxu0 0.0
    %5454 = vmatpush2.msra.mxu0 %v4747
    %5455 = vmatprep.subr.mxu0 0.0
    %5456 = vmatpush2.msra.mxu0 %v4746
    %5457 = vmatprep.subr.mxu0 0.0
    %5458 = vmatpush2.msra.mxu0 %v4745
    %5459 = vmatprep.subr.mxu0 0.0
    %5460 = vmatpush2.msra.mxu0 %v4744
    %5461 = vmatprep.subr.mxu0 0.0
    %5462 = vmatpush2.msra.mxu0 %v4743
    %5463 = vmatprep.subr.mxu0 0.0
    %5464 = vmatpush2.msra.mxu0 %v4742
    %5465 = vmatprep.mubr.f32.mxu0 %v5288
    %5466 = vmatmul.mubr.f32.gmra.mxu0 %v5040
    %v5467 = vpop.f32.mrf.mxu0
    %v5468 = vadd.f32 %v5383, %v5467
    %v5469 = vpop.f32.mrf.mxu0
    %5470 = vmatprep.mubr.f32.mxu0 %v5290
    %5471 = vmatmul.mubr.f32.gmra.mxu0 %v5043
    %v5472 = vpop.f32.mrf.mxu0
    %v5473 = vadd.f32 %v5388, %v5472
    %v5474 = vpop.f32.mrf.mxu0
    %5475 = vmatprep.mubr.f32.mxu0 %v5292
    %5476 = vmatmul.mubr.f32.gmra.mxu0 %v5046
    %v5477 = vpop.f32.mrf.mxu0
    %v5478 = vadd.f32 %v5393, %v5477
    %v5479 = vpop.f32.mrf.mxu0
    %5480 = vmatprep.mubr.f32.mxu0 %v5297
    %5481 = vmatmul.mubr.f32.gmra.mxu0 %v5049
    %v5482 = vpop.f32.mrf.mxu0
    %v5483 = vadd.f32 %v5398, %v5482
    %v5484 = vpop.f32.mrf.mxu0
    %5485 = vdwg.mxu0
    %5486 = vmatprep.subr.mxu0 0.0
    %5487 = vmatpush1.msra.mxu0 %v4773
    %5488 = vmatprep.subr.mxu0 0.0
    %5489 = vmatpush1.msra.mxu0 %v4772
    %5490 = vmatprep.subr.mxu0 0.0
    %5491 = vmatpush1.msra.mxu0 %v4771
    %5492 = vmatprep.subr.mxu0 0.0
    %5493 = vmatpush1.msra.mxu0 %v4770
    %5494 = vmatprep.subr.mxu0 0.0
    %5495 = vmatpush1.msra.mxu0 %v4769
    %5496 = vmatprep.subr.mxu0 0.0
    %5497 = vmatpush1.msra.mxu0 %v4768
    %5498 = vmatprep.subr.mxu0 0.0
    %5499 = vmatpush1.msra.mxu0 %v4767
    %5500 = vmatprep.subr.mxu0 0.0
    %5501 = vmatpush1.msra.mxu0 %v4766
    %5502 = vmatprep.subr.mxu0 0.0
    %5503 = vmatpush1.msra.mxu0 %v4765
    %5504 = vmatprep.subr.mxu0 0.0
    %5505 = vmatpush1.msra.mxu0 %v4764
    %5506 = vmatprep.subr.mxu0 0.0
    %5507 = vmatpush1.msra.mxu0 %v4763
    %5508 = vmatprep.subr.mxu0 0.0
    %5509 = vmatpush1.msra.mxu0 %v4762
    %5510 = vmatprep.subr.mxu0 0.0
    %5511 = vmatpush1.msra.mxu0 %v4761
    %5512 = vmatprep.subr.mxu0 0.0
    %5513 = vmatpush1.msra.mxu0 %v4760
    %5514 = vmatprep.subr.mxu0 0.0
    %5515 = vmatpush1.msra.mxu0 %v4759
    %5516 = vmatprep.subr.mxu0 0.0
    %5517 = vmatpush1.msra.mxu0 %v4758
    %5518 = vmatprep.subr.mxu0 0.0
    %5519 = vmatpush2.msra.mxu0 0.0
    %5520 = vmatprep.subr.mxu0 0.0
    %5521 = vmatpush2.msra.mxu0 0.0
    %5522 = vmatprep.subr.mxu0 0.0
    %5523 = vmatpush2.msra.mxu0 0.0
    %5524 = vmatprep.subr.mxu0 0.0
    %5525 = vmatpush2.msra.mxu0 0.0
    %5526 = vmatprep.subr.mxu0 0.0
    %5527 = vmatpush2.msra.mxu0 0.0
    %5528 = vmatprep.subr.mxu0 0.0
    %5529 = vmatpush2.msra.mxu0 0.0
    %5530 = vmatprep.subr.mxu0 0.0
    %5531 = vmatpush2.msra.mxu0 0.0
    %5532 = vmatprep.subr.mxu0 0.0
    %5533 = vmatpush2.msra.mxu0 0.0
    %5534 = vmatprep.subr.mxu0 0.0
    %5535 = vmatpush2.msra.mxu0 0.0
    %5536 = vmatprep.subr.mxu0 0.0
    %5537 = vmatpush2.msra.mxu0 0.0
    %5538 = vmatprep.subr.mxu0 0.0
    %5539 = vmatpush2.msra.mxu0 0.0
    %5540 = vmatprep.subr.mxu0 0.0
    %5541 = vmatpush2.msra.mxu0 0.0
    %5542 = vmatprep.subr.mxu0 0.0
    %5543 = vmatpush2.msra.mxu0 0.0
    %5544 = vmatprep.subr.mxu0 0.0
    %5545 = vmatpush2.msra.mxu0 0.0
    %5546 = vmatprep.subr.mxu0 0.0
    %5547 = vmatpush2.msra.mxu0 0.0
    %5548 = vmatprep.subr.mxu0 0.0
    %5549 = vmatpush2.msra.mxu0 0.0
    %5550 = vmatprep.mubr.f32.mxu0 0.0
    %5551 = vmatmul.mubr.f32.gmra.mxu0 %v5300
    %v5552 = vpop.f32.mrf.mxu0
    %v5553 = vadd.f32 %v5468, %v5552
    %v5554 = vpop.f32.mrf.mxu0
    %5555 = vmatprep.mubr.f32.mxu0 0.0
    %5556 = vmatmul.mubr.f32.gmra.mxu0 %v5302
    %v5557 = vpop.f32.mrf.mxu0
    %v5558 = vadd.f32 %v5473, %v5557
    %v5559 = vpop.f32.mrf.mxu0
    %5560 = vmatprep.mubr.f32.mxu0 0.0
    %5561 = vmatmul.mubr.f32.gmra.mxu0 %v5304
    %v5562 = vpop.f32.mrf.mxu0
    %v5563 = vadd.f32 %v5478, %v5562
    %v5564 = vpop.f32.mrf.mxu0
    %5565 = vmatprep.mubr.f32.mxu0 0.0
    %5566 = vmatmul.mubr.f32.gmra.mxu0 %v5309
    %v5567 = vpop.f32.mrf.mxu0
    %v5568 = vadd.f32 %v5483, %v5567
    %v5569 = vpop.f32.mrf.mxu0
    %5570 = vdwg.mxu0
    %v5571 = vmax.f32 %v5553, 0.0
    %v5572 = vmax.f32 %v5558, 0.0
    %v5573 = vmax.f32 %v5563, 0.0
    %v5574 = vmax.f32 %v5568, 0.0
    %vm5575 = vcmp.eq.s32.totalorder %v4544, 0
    %vm5576 = vcmp.eq.s32.totalorder %v4545, 0
    %vm5577 = vcmp.eq.s32.totalorder %v4546, 0
    %vm5578 = vcmp.eq.s32.totalorder %v4547, 0
    %v5579 = vsel %vm5575, 1.0, 0.0
    %v5580 = vsel %vm5576, 1.0, 0.0
    %v5581 = vsel %vm5577, 1.0, 0.0
    %v5582 = vsel %vm5578, 1.0, 0.0
    %vm5583 = vcmp.eq.s32.totalorder %v4544, 2
    %vm5584 = vcmp.eq.s32.totalorder %v4545, 2
    %vm5585 = vcmp.eq.s32.totalorder %v4546, 2
    %vm5586 = vcmp.eq.s32.totalorder %v4547, 2
    %v5587 = vsel %vm5583, 1.0, 0.0
    %v5588 = vsel %vm5584, 1.0, 0.0
    %v5589 = vsel %vm5585, 1.0, 0.0
    %v5590 = vsel %vm5586, 1.0, 0.0
    %v5599 = vrot.slane %v4522, 7
    %v5600 = vrot.slane %v4524, 7
    %v5601 = vrot.slane %v4528, 7
    %v5602 = vsel %vm1026, %v5599, %v5601
    %v5603 = vrot.slane %v4530, 7
    %v5604 = vsel %vm1026, %v5600, %v5603
    %v5605 = vrot.slane %v4534, 7
    %v5606 = vsel %vm1026, %v5601, %v5605
    %v5607 = vrot.slane %v4536, 7
    %v5608 = vsel %vm1026, %v5603, %v5607
    %v5609 = vrot.slane %v4540, 7
    %v5610 = vsel %vm1026, %v5605, %v5609
    %v5611 = vrot.slane %v4542, 7
    %v5612 = vsel %vm1026, %v5607, %v5611
    %v5621 = vsel %vm1026, 0.0, %v5599
    %v5622 = vsel %vm1026, 0.0, %v5600
    %v5623 = vrot.slane %v4522, 1
    %v5624 = vrot.slane %v4528, 1
    %v5625 = vsel %vm1087, %v5623, %v5624
    %v5626 = vrot.slane %v4524, 1
    %v5627 = vrot.slane %v4530, 1
    %v5628 = vsel %vm1087, %v5626, %v5627
    %v5629 = vrot.slane %v4534, 1
    %v5630 = vsel %vm1087, %v5624, %v5629
    %v5631 = vrot.slane %v4536, 1
    %v5632 = vsel %vm1087, %v5627, %v5631
    %v5633 = vrot.slane %v4540, 1
    %v5634 = vsel %vm1087, %v5629, %v5633
    %v5635 = vrot.slane %v4542, 1
    %v5636 = vsel %vm1087, %v5631, %v5635
    %v5645 = vsel %vm1087, %v5633, 0.0
    %v5646 = vsel %vm1087, %v5635, 0.0
    %5648 = vset.pattern.permute.xlu0 0
    %5649 = vperm.xlu0 %5648, %v5579
    %v5650 = vpop.permute.xlu0 %5649
    %5653 = vset.pattern.permute.xlu0 0
    %5654 = vperm.xlu0 %5653, %v5580
    %v5655 = vpop.permute.xlu0 %5654
    %5658 = vset.pattern.permute.xlu0 0
    %5659 = vperm.xlu0 %5658, %v5581
    %v5660 = vpop.permute.xlu0 %5659
    %5663 = vset.pattern.permute.xlu0 0
    %5664 = vperm.xlu0 %5663, %v5582
    %v5665 = vpop.permute.xlu0 %5664
    %v5667 = vmul.f32 %v5650, %v4522
    %v5668 = vmul.f32 %v5650, %v4524
    %v5669 = vmul.f32 %v5655, %v4528
    %v5670 = vmul.f32 %v5655, %v4530
    %v5671 = vmul.f32 %v5660, %v4534
    %v5672 = vmul.f32 %v5660, %v4536
    %v5673 = vmul.f32 %v5665, %v4540
    %v5674 = vmul.f32 %v5665, %v4542
    %v5675 = vsub.f32 1.0, %v5579
    %v5676 = vsub.f32 1.0, %v5580
    %v5677 = vsub.f32 1.0, %v5581
    %v5678 = vsub.f32 1.0, %v5582
    %5680 = vset.pattern.permute.xlu0 0
    %5681 = vperm.xlu0 %5680, %v5675
    %v5682 = vpop.permute.xlu0 %5681
    %5685 = vset.pattern.permute.xlu0 0
    %5686 = vperm.xlu0 %5685, %v5676
    %v5687 = vpop.permute.xlu0 %5686
    %5690 = vset.pattern.permute.xlu0 0
    %5691 = vperm.xlu0 %5690, %v5677
    %v5692 = vpop.permute.xlu0 %5691
    %5695 = vset.pattern.permute.xlu0 0
    %5696 = vperm.xlu0 %5695, %v5678
    %v5697 = vpop.permute.xlu0 %5696
    %v5699 = vmul.f32 %v5682, %v5621
    %v5700 = vmul.f32 %v5682, %v5622
    %v5701 = vmul.f32 %v5687, %v5602
    %v5702 = vmul.f32 %v5687, %v5604
    %v5703 = vmul.f32 %v5692, %v5606
    %v5704 = vmul.f32 %v5692, %v5608
    %v5705 = vmul.f32 %v5697, %v5610
    %v5706 = vmul.f32 %v5697, %v5612
    %v5707 = vadd.f32 %v5667, %v5699
    %v5708 = vadd.f32 %v5668, %v5700
    %v5709 = vadd.f32 %v5669, %v5701
    %v5710 = vadd.f32 %v5670, %v5702
    %v5711 = vadd.f32 %v5671, %v5703
    %v5712 = vadd.f32 %v5672, %v5704
    %v5713 = vadd.f32 %v5673, %v5705
    %v5714 = vadd.f32 %v5674, %v5706
    %5716 = vset.pattern.permute.xlu0 0
    %5717 = vperm.xlu0 %5716, %v5587
    %v5718 = vpop.permute.xlu0 %5717
    %5721 = vset.pattern.permute.xlu0 0
    %5722 = vperm.xlu0 %5721, %v5588
    %v5723 = vpop.permute.xlu0 %5722
    %5726 = vset.pattern.permute.xlu0 0
    %5727 = vperm.xlu0 %5726, %v5589
    %v5728 = vpop.permute.xlu0 %5727
    %5731 = vset.pattern.permute.xlu0 0
    %5732 = vperm.xlu0 %5731, %v5590
    %v5733 = vpop.permute.xlu0 %5732
    %v5735 = vmul.f32 %v5718, %v4522
    %v5736 = vmul.f32 %v5718, %v4524
    %v5737 = vmul.f32 %v5723, %v4528
    %v5738 = vmul.f32 %v5723, %v4530
    %v5739 = vmul.f32 %v5728, %v4534
    %v5740 = vmul.f32 %v5728, %v4536
    %v5741 = vmul.f32 %v5733, %v4540
    %v5742 = vmul.f32 %v5733, %v4542
    %v5743 = vsub.f32 1.0, %v5587
    %v5744 = vsub.f32 1.0, %v5588
    %v5745 = vsub.f32 1.0, %v5589
    %v5746 = vsub.f32 1.0, %v5590
    %5748 = vset.pattern.permute.xlu0 0
    %5749 = vperm.xlu0 %5748, %v5743
    %v5750 = vpop.permute.xlu0 %5749
    %5753 = vset.pattern.permute.xlu0 0
    %5754 = vperm.xlu0 %5753, %v5744
    %v5755 = vpop.permute.xlu0 %5754
    %5758 = vset.pattern.permute.xlu0 0
    %5759 = vperm.xlu0 %5758, %v5745
    %v5760 = vpop.permute.xlu0 %5759
    %5763 = vset.pattern.permute.xlu0 0
    %5764 = vperm.xlu0 %5763, %v5746
    %v5765 = vpop.permute.xlu0 %5764
    %v5767 = vmul.f32 %v5750, %v5625
    %v5768 = vmul.f32 %v5750, %v5628
    %v5769 = vmul.f32 %v5755, %v5630
    %v5770 = vmul.f32 %v5755, %v5632
    %v5771 = vmul.f32 %v5760, %v5634
    %v5772 = vmul.f32 %v5760, %v5636
    %v5773 = vmul.f32 %v5765, %v5645
    %v5774 = vmul.f32 %v5765, %v5646
    %v5775 = vadd.f32 %v5735, %v5767
    %v5776 = vadd.f32 %v5736, %v5768
    %v5777 = vadd.f32 %v5737, %v5769
    %v5778 = vadd.f32 %v5738, %v5770
    %v5779 = vadd.f32 %v5739, %v5771
    %v5780 = vadd.f32 %v5740, %v5772
    %v5781 = vadd.f32 %v5741, %v5773
    %v5782 = vadd.f32 %v5742, %v5774
    %v5783 = vmax.f32 %v4522, %v5707
    %v5784 = vmax.f32 %v4524, %v5708
    %v5785 = vmax.f32 %v4528, %v5709
    %v5786 = vmax.f32 %v4530, %v5710
    %v5787 = vmax.f32 %v4534, %v5711
    %v5788 = vmax.f32 %v4536, %v5712
    %v5789 = vmax.f32 %v4540, %v5713
    %v5790 = vmax.f32 %v4542, %v5714
    %v5791 = vmax.f32 %v5783, %v5775
    %v5792 = vmax.f32 %v5784, %v5776
    %v5793 = vmax.f32 %v5785, %v5777
    %v5794 = vmax.f32 %v5786, %v5778
    %v5795 = vmax.f32 %v5787, %v5779
    %v5796 = vmax.f32 %v5788, %v5780
    %v5797 = vmax.f32 %v5789, %v5781
    %v5798 = vmax.f32 %v5790, %v5782
    %v5800 = vlaneseq
    %v5801 = vshrl.u32 %v5800, 7
    %v5802 = vsub.s32 0, %v5801
    %v5803 = vrot.slane %v4807, %v5802
    %5805 = vmatprep.subr.mxu0 0.0
    %5806 = vmatpush1.msra.mxu0 %v4790
    %5807 = vmatprep.subr.mxu0 0.0
    %5808 = vmatpush1.msra.mxu0 %v4789
    %5809 = vmatprep.subr.mxu0 0.0
    %5810 = vmatpush1.msra.mxu0 %v4788
    %5811 = vmatprep.subr.mxu0 0.0
    %5812 = vmatpush1.msra.mxu0 %v4787
    %5813 = vmatprep.subr.mxu0 0.0
    %5814 = vmatpush1.msra.mxu0 %v4786
    %5815 = vmatprep.subr.mxu0 0.0
    %5816 = vmatpush1.msra.mxu0 %v4785
    %5817 = vmatprep.subr.mxu0 0.0
    %5818 = vmatpush1.msra.mxu0 %v4784
    %5819 = vmatprep.subr.mxu0 0.0
    %5820 = vmatpush1.msra.mxu0 %v4783
    %5821 = vmatprep.subr.mxu0 0.0
    %5822 = vmatpush1.msra.mxu0 %v4782
    %5823 = vmatprep.subr.mxu0 0.0
    %5824 = vmatpush1.msra.mxu0 %v4781
    %5825 = vmatprep.subr.mxu0 0.0
    %5826 = vmatpush1.msra.mxu0 %v4780
    %5827 = vmatprep.subr.mxu0 0.0
    %5828 = vmatpush1.msra.mxu0 %v4779
    %5829 = vmatprep.subr.mxu0 0.0
    %5830 = vmatpush1.msra.mxu0 %v4778
    %5831 = vmatprep.subr.mxu0 0.0
    %5832 = vmatpush1.msra.mxu0 %v4777
    %5833 = vmatprep.subr.mxu0 0.0
    %5834 = vmatpush1.msra.mxu0 %v4776
    %5835 = vmatprep.subr.mxu0 0.0
    %5836 = vmatpush1.msra.mxu0 %v4775
    %5837 = vmatprep.subr.mxu0 0.0
    %5838 = vmatpush2.msra.mxu0 %v4806
    %5839 = vmatprep.subr.mxu0 0.0
    %5840 = vmatpush2.msra.mxu0 %v4805
    %5841 = vmatprep.subr.mxu0 0.0
    %5842 = vmatpush2.msra.mxu0 %v4804
    %5843 = vmatprep.subr.mxu0 0.0
    %5844 = vmatpush2.msra.mxu0 %v4803
    %5845 = vmatprep.subr.mxu0 0.0
    %5846 = vmatpush2.msra.mxu0 %v4802
    %5847 = vmatprep.subr.mxu0 0.0
    %5848 = vmatpush2.msra.mxu0 %v4801
    %5849 = vmatprep.subr.mxu0 0.0
    %5850 = vmatpush2.msra.mxu0 %v4800
    %5851 = vmatprep.subr.mxu0 0.0
    %5852 = vmatpush2.msra.mxu0 %v4799
    %5853 = vmatprep.subr.mxu0 0.0
    %5854 = vmatpush2.msra.mxu0 %v4798
    %5855 = vmatprep.subr.mxu0 0.0
    %5856 = vmatpush2.msra.mxu0 %v4797
    %5857 = vmatprep.subr.mxu0 0.0
    %5858 = vmatpush2.msra.mxu0 %v4796
    %5859 = vmatprep.subr.mxu0 0.0
    %5860 = vmatpush2.msra.mxu0 %v4795
    %5861 = vmatprep.subr.mxu0 0.0
    %5862 = vmatpush2.msra.mxu0 %v4794
    %5863 = vmatprep.subr.mxu0 0.0
    %5864 = vmatpush2.msra.mxu0 %v4793
    %5865 = vmatprep.subr.mxu0 0.0
    %5866 = vmatpush2.msra.mxu0 %v4792
    %5867 = vmatprep.subr.mxu0 0.0
    %5868 = vmatpush2.msra.mxu0 %v4791
    %5869 = vmatprep.mubr.f32.mxu0 %v5792
    %5870 = vmatmul.mubr.f32.gmra.mxu0 %v5791
    %v5871 = vpop.f32.mrf.mxu0
    %v5872 = vadd.f32 %v5803, %v5871
    %v5873 = vpop.f32.mrf.mxu0
    %5874 = vmatprep.mubr.f32.mxu0 %v5794
    %5875 = vmatmul.mubr.f32.gmra.mxu0 %v5793
    %v5876 = vpop.f32.mrf.mxu0
    %v5877 = vadd.f32 %v5803, %v5876
    %v5878 = vpop.f32.mrf.mxu0
    %5879 = vmatprep.mubr.f32.mxu0 %v5796
    %5880 = vmatmul.mubr.f32.gmra.mxu0 %v5795
    %v5881 = vpop.f32.mrf.mxu0
    %v5882 = vadd.f32 %v5803, %v5881
    %v5883 = vpop.f32.mrf.mxu0
    %5884 = vmatprep.mubr.f32.mxu0 %v5798
    %5885 = vmatmul.mubr.f32.gmra.mxu0 %v5797
    %v5886 = vpop.f32.mrf.mxu0
    %v5887 = vadd.f32 %v5803, %v5886
    %v5888 = vpop.f32.mrf.mxu0
    %5889 = vdwg.mxu0
    %v5890 = vmax.f32 %v5872, 0.0
    %v5891 = vmax.f32 %v5877, 0.0
    %v5892 = vmax.f32 %v5882, 0.0
    %v5893 = vmax.f32 %v5887, 0.0
    %v5910 = vrot.slane %v5038, 1
    %v5911 = vrot.slane %v5041, 1
    %v5912 = vsel %vm1087, %v5910, %v5911
    %v5913 = vrot.slane %v5254, 1
    %v5914 = vrot.slane %v5255, 1
    %v5915 = vsel %vm1087, %v5913, %v5914
    %v5916 = vrot.slane %v5571, 1
    %v5917 = vrot.slane %v5572, 1
    %v5918 = vsel %vm1087, %v5916, %v5917
    %v5919 = vrot.slane %v5890, 1
    %v5920 = vrot.slane %v5891, 1
    %v5921 = vsel %vm1087, %v5919, %v5920
    %v5922 = vrot.slane %v5044, 1
    %v5923 = vsel %vm1087, %v5911, %v5922
    %v5924 = vrot.slane %v5256, 1
    %v5925 = vsel %vm1087, %v5914, %v5924
    %v5926 = vrot.slane %v5573, 1
    %v5927 = vsel %vm1087, %v5917, %v5926
    %v5928 = vrot.slane %v5892, 1
    %v5929 = vsel %vm1087, %v5920, %v5928
    %v5930 = vrot.slane %v5047, 1
    %v5931 = vsel %vm1087, %v5922, %v5930
    %v5932 = vrot.slane %v5257, 1
    %v5933 = vsel %vm1087, %v5924, %v5932
    %v5934 = vrot.slane %v5574, 1
    %v5935 = vsel %vm1087, %v5926, %v5934
    %v5936 = vrot.slane %v5893, 1
    %v5937 = vsel %vm1087, %v5928, %v5936
    %v5954 = vsel %vm1087, %v5930, 0.0
    %v5955 = vsel %vm1087, %v5932, 0.0
    %v5956 = vsel %vm1087, %v5934, 0.0
    %v5957 = vsel %vm1087, %v5936, 0.0
    %v5958 = vmax.f32 %v5038, %v5912
    %v5959 = vmax.f32 %v5254, %v5915
    %v5960 = vmax.f32 %v5571, %v5918
    %v5961 = vmax.f32 %v5890, %v5921
    %v5962 = vmax.f32 %v5041, %v5923
    %v5963 = vmax.f32 %v5255, %v5925
    %v5964 = vmax.f32 %v5572, %v5927
    %v5965 = vmax.f32 %v5891, %v5929
    %v5966 = vmax.f32 %v5044, %v5931
    %v5967 = vmax.f32 %v5256, %v5933
    %v5968 = vmax.f32 %v5573, %v5935
    %v5969 = vmax.f32 %v5892, %v5937
    %v5970 = vmax.f32 %v5047, %v5954
    %v5971 = vmax.f32 %v5257, %v5955
    %v5972 = vmax.f32 %v5574, %v5956
    %v5973 = vmax.f32 %v5893, %v5957
    %v5974 = vrot.slane %v5038, 2
    %v5975 = vrot.slane %v5041, 2
    %v5976 = vsel %vm1442, %v5974, %v5975
    %v5977 = vrot.slane %v5254, 2
    %v5978 = vrot.slane %v5255, 2
    %v5979 = vsel %vm1442, %v5977, %v5978
    %v5980 = vrot.slane %v5571, 2
    %v5981 = vrot.slane %v5572, 2
    %v5982 = vsel %vm1442, %v5980, %v5981
    %v5983 = vrot.slane %v5890, 2
    %v5984 = vrot.slane %v5891, 2
    %v5985 = vsel %vm1442, %v5983, %v5984
    %v5986 = vrot.slane %v5044, 2
    %v5987 = vsel %vm1442, %v5975, %v5986
    %v5988 = vrot.slane %v5256, 2
    %v5989 = vsel %vm1442, %v5978, %v5988
    %v5990 = vrot.slane %v5573, 2
    %v5991 = vsel %vm1442, %v5981, %v5990
    %v5992 = vrot.slane %v5892, 2
    %v5993 = vsel %vm1442, %v5984, %v5992
    %v5994 = vrot.slane %v5047, 2
    %v5995 = vsel %vm1442, %v5986, %v5994
    %v5996 = vrot.slane %v5257, 2
    %v5997 = vsel %vm1442, %v5988, %v5996
    %v5998 = vrot.slane %v5574, 2
    %v5999 = vsel %vm1442, %v5990, %v5998
    %v6000 = vrot.slane %v5893, 2
    %v6001 = vsel %vm1442, %v5992, %v6000
    %v6018 = vsel %vm1442, %v5994, 0.0
    %v6019 = vsel %vm1442, %v5996, 0.0
    %v6020 = vsel %vm1442, %v5998, 0.0
    %v6021 = vsel %vm1442, %v6000, 0.0
    %v6022 = vmax.f32 %v5958, %v5976
    %v6023 = vmax.f32 %v5959, %v5979
    %v6024 = vmax.f32 %v5960, %v5982
    %v6025 = vmax.f32 %v5961, %v5985
    %v6026 = vmax.f32 %v5962, %v5987
    %v6027 = vmax.f32 %v5963, %v5989
    %v6028 = vmax.f32 %v5964, %v5991
    %v6029 = vmax.f32 %v5965, %v5993
    %v6030 = vmax.f32 %v5966, %v5995
    %v6031 = vmax.f32 %v5967, %v5997
    %v6032 = vmax.f32 %v5968, %v5999
    %v6033 = vmax.f32 %v5969, %v6001
    %v6034 = vmax.f32 %v5970, %v6018
    %v6035 = vmax.f32 %v5971, %v6019
    %v6036 = vmax.f32 %v5972, %v6020
    %v6037 = vmax.f32 %v5973, %v6021
    %v6038 = vld [vmem:[%s17] sm:$0xf]
    %v6040 = vsel %vm521, %v6038, 0
    %6042 = vmatprep.subr.mxu0 0.0
    %6043 = vmatpush1.msra.mxu0 0.0
    %6044 = vmatprep.subr.mxu0 0.0
    %6045 = vmatpush1.msra.mxu0 0.0
    %6046 = vmatprep.subr.mxu0 0.0
    %6047 = vmatpush1.msra.mxu0 0.0
    %6048 = vmatprep.subr.mxu0 0.0
    %6049 = vmatpush1.msra.mxu0 0.0
    %6050 = vmatprep.subr.mxu0 0.0
    %6051 = vmatpush1.msra.mxu0 0.0
    %6052 = vmatprep.subr.mxu0 0.0
    %6053 = vmatpush1.msra.mxu0 0.0
    %6054 = vmatprep.subr.mxu0 0.0
    %6055 = vmatpush1.msra.mxu0 0.0
    %6056 = vmatprep.subr.mxu0 0.0
    %6057 = vmatpush1.msra.mxu0 0.0
    %6058 = vmatprep.subr.mxu0 0.0
    %6059 = vmatpush1.msra.mxu0 0.0
    %6060 = vmatprep.subr.mxu0 0.0
    %6061 = vmatpush1.msra.mxu0 0.0
    %6062 = vmatprep.subr.mxu0 0.0
    %6063 = vmatpush1.msra.mxu0 0.0
    %6064 = vmatprep.subr.mxu0 0.0
    %6065 = vmatpush1.msra.mxu0 0.0
    %6066 = vmatprep.subr.mxu0 %v6035
    %6067 = vmatpush1.msra.mxu0 %v6034
    %6068 = vmatprep.subr.mxu0 %v6031
    %6069 = vmatpush1.msra.mxu0 %v6030
    %6070 = vmatprep.subr.mxu0 %v6027
    %6071 = vmatpush1.msra.mxu0 %v6026
    %6072 = vmatprep.subr.mxu0 %v6023
    %6073 = vmatpush1.msra.mxu0 %v6022
    %6074 = vmatprep.subr.mxu0 0.0
    %6075 = vmatpush2.msra.mxu0 0.0
    %6076 = vmatprep.subr.mxu0 0.0
    %6077 = vmatpush2.msra.mxu0 0.0
    %6078 = vmatprep.subr.mxu0 0.0
    %6079 = vmatpush2.msra.mxu0 0.0
    %6080 = vmatprep.subr.mxu0 0.0
    %6081 = vmatpush2.msra.mxu0 0.0
    %6082 = vmatprep.subr.mxu0 0.0
    %6083 = vmatpush2.msra.mxu0 0.0
    %6084 = vmatprep.subr.mxu0 0.0
    %6085 = vmatpush2.msra.mxu0 0.0
    %6086 = vmatprep.subr.mxu0 0.0
    %6087 = vmatpush2.msra.mxu0 0.0
    %6088 = vmatprep.subr.mxu0 0.0
    %6089 = vmatpush2.msra.mxu0 0.0
    %6090 = vmatprep.subr.mxu0 0.0
    %6091 = vmatpush2.msra.mxu0 0.0
    %6092 = vmatprep.subr.mxu0 0.0
    %6093 = vmatpush2.msra.mxu0 0.0
    %6094 = vmatprep.subr.mxu0 0.0
    %6095 = vmatpush2.msra.mxu0 0.0
    %6096 = vmatprep.subr.mxu0 0.0
    %6097 = vmatpush2.msra.mxu0 0.0
    %6098 = vmatprep.subr.mxu0 0.0
    %6099 = vmatpush2.msra.mxu0 0.0
    %6100 = vmatprep.subr.mxu0 0.0
    %6101 = vmatpush2.msra.mxu0 0.0
    %6102 = vmatprep.subr.mxu0 0.0
    %6103 = vmatpush2.msra.mxu0 0.0
    %6104 = vmatprep.subr.mxu0 0.0
    %6105 = vmatpush2.msra.mxu0 0.0
    %6106 = vmatprep.mubr.f32.mxu0 0.0
    %6107 = vmatmul.mubr.f32.gmra.mxu0 %v6040
    %v6108 = vpop.f32.mrf.mxu0
    %v6109 = vadd.f32 0.0, %v6108
    %v6110 = vpop.f32.mrf.mxu0
    %v6111 = vadd.f32 0.0, %v6110
    %6112 = vdwg.mxu0
    %6113 = vmatprep.subr.mxu0 0.0
    %6114 = vmatpush1.msra.mxu0 0.0
    %6115 = vmatprep.subr.mxu0 0.0
    %6116 = vmatpush1.msra.mxu0 0.0
    %6117 = vmatprep.subr.mxu0 0.0
    %6118 = vmatpush1.msra.mxu0 0.0
    %6119 = vmatprep.subr.mxu0 0.0
    %6120 = vmatpush1.msra.mxu0 0.0
    %6121 = vmatprep.subr.mxu0 0.0
    %6122 = vmatpush1.msra.mxu0 0.0
    %6123 = vmatprep.subr.mxu0 0.0
    %6124 = vmatpush1.msra.mxu0 0.0
    %6125 = vmatprep.subr.mxu0 0.0
    %6126 = vmatpush1.msra.mxu0 0.0
    %6127 = vmatprep.subr.mxu0 0.0
    %6128 = vmatpush1.msra.mxu0 0.0
    %6129 = vmatprep.subr.mxu0 0.0
    %6130 = vmatpush1.msra.mxu0 0.0
    %6131 = vmatprep.subr.mxu0 0.0
    %6132 = vmatpush1.msra.mxu0 0.0
    %6133 = vmatprep.subr.mxu0 0.0
    %6134 = vmatpush1.msra.mxu0 0.0
    %6135 = vmatprep.subr.mxu0 0.0
    %6136 = vmatpush1.msra.mxu0 0.0
    %6137 = vmatprep.subr.mxu0 %v6037
    %6138 = vmatpush1.msra.mxu0 %v6036
    %6139 = vmatprep.subr.mxu0 %v6033
    %6140 = vmatpush1.msra.mxu0 %v6032
    %6141 = vmatprep.subr.mxu0 %v6029
    %6142 = vmatpush1.msra.mxu0 %v6028
    %6143 = vmatprep.subr.mxu0 %v6025
    %6144 = vmatpush1.msra.mxu0 %v6024
    %6145 = vmatprep.subr.mxu0 0.0
    %6146 = vmatpush2.msra.mxu0 0.0
    %6147 = vmatprep.subr.mxu0 0.0
    %6148 = vmatpush2.msra.mxu0 0.0
    %6149 = vmatprep.subr.mxu0 0.0
    %6150 = vmatpush2.msra.mxu0 0.0
    %6151 = vmatprep.subr.mxu0 0.0
    %6152 = vmatpush2.msra.mxu0 0.0
    %6153 = vmatprep.subr.mxu0 0.0
    %6154 = vmatpush2.msra.mxu0 0.0
    %6155 = vmatprep.subr.mxu0 0.0
    %6156 = vmatpush2.msra.mxu0 0.0
    %6157 = vmatprep.subr.mxu0 0.0
    %6158 = vmatpush2.msra.mxu0 0.0
    %6159 = vmatprep.subr.mxu0 0.0
    %6160 = vmatpush2.msra.mxu0 0.0
    %6161 = vmatprep.subr.mxu0 0.0
    %6162 = vmatpush2.msra.mxu0 0.0
    %6163 = vmatprep.subr.mxu0 0.0
    %6164 = vmatpush2.msra.mxu0 0.0
    %6165 = vmatprep.subr.mxu0 0.0
    %6166 = vmatpush2.msra.mxu0 0.0
    %6167 = vmatprep.subr.mxu0 0.0
    %6168 = vmatpush2.msra.mxu0 0.0
    %6169 = vmatprep.subr.mxu0 0.0
    %6170 = vmatpush2.msra.mxu0 0.0
    %6171 = vmatprep.subr.mxu0 0.0
    %6172 = vmatpush2.msra.mxu0 0.0
    %6173 = vmatprep.subr.mxu0 0.0
    %6174 = vmatpush2.msra.mxu0 0.0
    %6175 = vmatprep.subr.mxu0 0.0
    %6176 = vmatpush2.msra.mxu0 0.0
    %6177 = vmatprep.mubr.f32.mxu0 0.0
    %6178 = vmatmul.mubr.f32.gmra.mxu0 %v6040
    %v6179 = vpop.f32.mrf.mxu0
    %v6180 = vadd.f32 0.0, %v6179
    %v6181 = vpop.f32.mrf.mxu0
    %v6182 = vadd.f32 0.0, %v6181
    %6183 = vdwg.mxu0
    %v6184 = vld [vmem:[%s67] sm:$0xff]
    %v6185 = vld [vmem:[%s67 + $0x8] sm:$0xff]
    %v6186 = vld [vmem:[%s67 + $0x10] sm:$0xff]
    %v6187 = vld [vmem:[%s67 + $0x18] sm:$0xff]
    %v6188 = vld [vmem:[%s67 + $0x20] sm:$0xff]
    %v6189 = vld [vmem:[%s67 + $0x28] sm:$0xff]
    %v6190 = vld [vmem:[%s67 + $0x30] sm:$0xff]
    %v6191 = vld [vmem:[%s67 + $0x38] sm:$0xff]
    %v6192 = vld [vmem:[%s67 + $0x40] sm:$0xff]
    %v6193 = vld [vmem:[%s67 + $0x48] sm:$0xff]
    %v6194 = vld [vmem:[%s67 + $0x50] sm:$0xff]
    %v6195 = vld [vmem:[%s67 + $0x58] sm:$0xff]
    %v6196 = vld [vmem:[%s67 + $0x60] sm:$0xff]
    %v6197 = vld [vmem:[%s67 + $0x68] sm:$0xff]
    %v6198 = vld [vmem:[%s67 + $0x70] sm:$0xff]
    %v6199 = vld [vmem:[%s67 + $0x78] sm:$0xff]
    %v6200 = vld [vmem:[%s67 + $0x80] sm:$0xff]
    %v6201 = vld [vmem:[%s67 + $0x88] sm:$0xff]
    %v6202 = vld [vmem:[%s67 + $0x90] sm:$0xff]
    %v6203 = vld [vmem:[%s67 + $0x98] sm:$0xff]
    %v6204 = vld [vmem:[%s67 + $0xa0] sm:$0xff]
    %v6205 = vld [vmem:[%s67 + $0xa8] sm:$0xff]
    %v6206 = vld [vmem:[%s67 + $0xb0] sm:$0xff]
    %v6207 = vld [vmem:[%s67 + $0xb8] sm:$0xff]
    %v6208 = vld [vmem:[%s67 + $0xc0] sm:$0xff]
    %v6209 = vld [vmem:[%s67 + $0xc8] sm:$0xff]
    %v6210 = vld [vmem:[%s67 + $0xd0] sm:$0xff]
    %v6211 = vld [vmem:[%s67 + $0xd8] sm:$0xff]
    %v6212 = vld [vmem:[%s67 + $0xe0] sm:$0xff]
    %v6213 = vld [vmem:[%s67 + $0xe8] sm:$0xff]
    %v6214 = vld [vmem:[%s67 + $0xf0] sm:$0xff]
    %v6215 = vld [vmem:[%s67 + $0xf8] sm:$0xff]
    %v6216 = vld [vmem:[%s67 + $0x100] sm:$0xff]
    %v6217 = vld [vmem:[%s67 + $0x108] sm:$0xff]
    %v6218 = vld [vmem:[%s67 + $0x110] sm:$0xff]
    %v6219 = vld [vmem:[%s67 + $0x118] sm:$0xff]
    %v6220 = vld [vmem:[%s67 + $0x120] sm:$0xff]
    %v6221 = vld [vmem:[%s67 + $0x128] sm:$0xff]
    %v6222 = vld [vmem:[%s67 + $0x130] sm:$0xff]
    %v6223 = vld [vmem:[%s67 + $0x138] sm:$0xff]
    %v6224 = vld [vmem:[%s67 + $0x140] sm:$0xff]
    %v6225 = vld [vmem:[%s67 + $0x148] sm:$0xff]
    %v6226 = vld [vmem:[%s67 + $0x150] sm:$0xff]
    %v6227 = vld [vmem:[%s67 + $0x158] sm:$0xff]
    %v6228 = vld [vmem:[%s67 + $0x160] sm:$0xff]
    %v6229 = vld [vmem:[%s67 + $0x168] sm:$0xff]
    %v6230 = vld [vmem:[%s67 + $0x170] sm:$0xff]
    %v6231 = vld [vmem:[%s67 + $0x178] sm:$0xff]
    %v6232 = vld [vmem:[%s67 + $0x180] sm:$0xff]
    %v6233 = vld [vmem:[%s67 + $0x188] sm:$0xff]
    %v6234 = vld [vmem:[%s67 + $0x190] sm:$0xff]
    %v6235 = vld [vmem:[%s67 + $0x198] sm:$0xff]
    %v6236 = vld [vmem:[%s67 + $0x1a0] sm:$0xff]
    %v6237 = vld [vmem:[%s67 + $0x1a8] sm:$0xff]
    %v6238 = vld [vmem:[%s67 + $0x1b0] sm:$0xff]
    %v6239 = vld [vmem:[%s67 + $0x1b8] sm:$0xff]
    %v6240 = vld [vmem:[%s67 + $0x1c0] sm:$0xff]
    %v6241 = vld [vmem:[%s67 + $0x1c8] sm:$0xff]
    %v6242 = vld [vmem:[%s67 + $0x1d0] sm:$0xff]
    %v6243 = vld [vmem:[%s67 + $0x1d8] sm:$0xff]
    %v6244 = vld [vmem:[%s67 + $0x1e0] sm:$0xff]
    %v6245 = vld [vmem:[%s67 + $0x1e8] sm:$0xff]
    %v6246 = vld [vmem:[%s67 + $0x1f0] sm:$0xff]
    %v6247 = vld [vmem:[%s67 + $0x1f8] sm:$0xff]
    %v6248 = vld [vmem:[%s67 + $0x200] sm:$0xff]
    %v6249 = vld [vmem:[%s67 + $0x208] sm:$0xff]
    %v6250 = vld [vmem:[%s67 + $0x210] sm:$0xff]
    %v6251 = vld [vmem:[%s67 + $0x218] sm:$0xff]
    %v6252 = vld [vmem:[%s67 + $0x220] sm:$0xff]
    %v6253 = vld [vmem:[%s67 + $0x228] sm:$0xff]
    %v6254 = vld [vmem:[%s67 + $0x230] sm:$0xff]
    %v6255 = vld [vmem:[%s67 + $0x238] sm:$0xff]
    %v6256 = vld [vmem:[%s67 + $0x240] sm:$0xff]
    %v6257 = vld [vmem:[%s67 + $0x248] sm:$0xff]
    %v6258 = vld [vmem:[%s67 + $0x250] sm:$0xff]
    %v6259 = vld [vmem:[%s67 + $0x258] sm:$0xff]
    %v6260 = vld [vmem:[%s67 + $0x260] sm:$0xff]
    %v6261 = vld [vmem:[%s67 + $0x268] sm:$0xff]
    %v6262 = vld [vmem:[%s67 + $0x270] sm:$0xff]
    %v6263 = vld [vmem:[%s67 + $0x278] sm:$0xff]
    %v6264 = vld [vmem:[%s67 + $0x280] sm:$0xff]
    %v6265 = vld [vmem:[%s67 + $0x288] sm:$0xff]
    %v6266 = vld [vmem:[%s67 + $0x290] sm:$0xff]
    %v6267 = vld [vmem:[%s67 + $0x298] sm:$0xff]
    %v6268 = vld [vmem:[%s67 + $0x2a0] sm:$0xff]
    %v6269 = vld [vmem:[%s67 + $0x2a8] sm:$0xff]
    %v6270 = vld [vmem:[%s67 + $0x2b0] sm:$0xff]
    %v6271 = vld [vmem:[%s67 + $0x2b8] sm:$0xff]
    %v6272 = vld [vmem:[%s67 + $0x2c0] sm:$0xff]
    %v6273 = vld [vmem:[%s67 + $0x2c8] sm:$0xff]
    %v6274 = vld [vmem:[%s67 + $0x2d0] sm:$0xff]
    %v6275 = vld [vmem:[%s67 + $0x2d8] sm:$0xff]
    %v6276 = vld [vmem:[%s67 + $0x2e0] sm:$0xff]
    %v6277 = vld [vmem:[%s67 + $0x2e8] sm:$0xff]
    %v6278 = vld [vmem:[%s67 + $0x2f0] sm:$0xff]
    %v6279 = vld [vmem:[%s67 + $0x2f8] sm:$0xff]
    %v6280 = vld [vmem:[%s67 + $0x300] sm:$0xff]
    %v6281 = vld [vmem:[%s67 + $0x308] sm:$0xff]
    %v6282 = vld [vmem:[%s67 + $0x310] sm:$0xff]
    %v6283 = vld [vmem:[%s67 + $0x318] sm:$0xff]
    %v6284 = vld [vmem:[%s67 + $0x320] sm:$0xff]
    %v6285 = vld [vmem:[%s67 + $0x328] sm:$0xff]
    %v6286 = vld [vmem:[%s67 + $0x330] sm:$0xff]
    %v6287 = vld [vmem:[%s67 + $0x338] sm:$0xff]
    %v6288 = vld [vmem:[%s67 + $0x340] sm:$0xff]
    %v6289 = vld [vmem:[%s67 + $0x348] sm:$0xff]
    %v6290 = vld [vmem:[%s67 + $0x350] sm:$0xff]
    %v6291 = vld [vmem:[%s67 + $0x358] sm:$0xff]
    %v6292 = vld [vmem:[%s67 + $0x360] sm:$0xff]
    %v6293 = vld [vmem:[%s67 + $0x368] sm:$0xff]
    %v6294 = vld [vmem:[%s67 + $0x370] sm:$0xff]
    %v6295 = vld [vmem:[%s67 + $0x378] sm:$0xff]
    %v6296 = vld [vmem:[%s67 + $0x380] sm:$0xff]
    %v6297 = vld [vmem:[%s67 + $0x388] sm:$0xff]
    %v6298 = vld [vmem:[%s67 + $0x390] sm:$0xff]
    %v6299 = vld [vmem:[%s67 + $0x398] sm:$0xff]
    %v6300 = vld [vmem:[%s67 + $0x3a0] sm:$0xff]
    %v6301 = vld [vmem:[%s67 + $0x3a8] sm:$0xff]
    %v6302 = vld [vmem:[%s67 + $0x3b0] sm:$0xff]
    %v6303 = vld [vmem:[%s67 + $0x3b8] sm:$0xff]
    %v6304 = vld [vmem:[%s67 + $0x3c0] sm:$0xff]
    %v6305 = vld [vmem:[%s67 + $0x3c8] sm:$0xff]
    %v6306 = vld [vmem:[%s67 + $0x3d0] sm:$0xff]
    %v6307 = vld [vmem:[%s67 + $0x3d8] sm:$0xff]
    %v6308 = vld [vmem:[%s67 + $0x3e0] sm:$0xff]
    %v6309 = vld [vmem:[%s67 + $0x3e8] sm:$0xff]
    %v6310 = vld [vmem:[%s67 + $0x3f0] sm:$0xff]
    %v6311 = vld [vmem:[%s67 + $0x3f8] sm:$0xff]
    %v6312 = vld [vmem:[#allocation25] sm:$0x3]
    %v6314 = vlaneseq
    %v6315 = vshrl.u32 %v6314, 7
    %v6316 = vsub.s32 0, %v6315
    %v6317 = vrot.slane %v6312, %v6316
    %v6318 = vlaneseq
    %v6319 = vshrl.u32 %v6318, 7
    %v6320 = vsub.s32 1, %v6319
    %v6321 = vrot.slane %v6312, %v6320
    %6324 = vmatprep.subr.mxu0 %v6215
    %6325 = vmatpush1.msra.mxu0 %v6214
    %6326 = vmatprep.subr.mxu0 %v6213
    %6327 = vmatpush1.msra.mxu0 %v6212
    %6328 = vmatprep.subr.mxu0 %v6211
    %6329 = vmatpush1.msra.mxu0 %v6210
    %6330 = vmatprep.subr.mxu0 %v6209
    %6331 = vmatpush1.msra.mxu0 %v6208
    %6332 = vmatprep.subr.mxu0 %v6207
    %6333 = vmatpush1.msra.mxu0 %v6206
    %6334 = vmatprep.subr.mxu0 %v6205
    %6335 = vmatpush1.msra.mxu0 %v6204
    %6336 = vmatprep.subr.mxu0 %v6203
    %6337 = vmatpush1.msra.mxu0 %v6202
    %6338 = vmatprep.subr.mxu0 %v6201
    %6339 = vmatpush1.msra.mxu0 %v6200
    %6340 = vmatprep.subr.mxu0 %v6199
    %6341 = vmatpush1.msra.mxu0 %v6198
    %6342 = vmatprep.subr.mxu0 %v6197
    %6343 = vmatpush1.msra.mxu0 %v6196
    %6344 = vmatprep.subr.mxu0 %v6195
    %6345 = vmatpush1.msra.mxu0 %v6194
    %6346 = vmatprep.subr.mxu0 %v6193
    %6347 = vmatpush1.msra.mxu0 %v6192
    %6348 = vmatprep.subr.mxu0 %v6191
    %6349 = vmatpush1.msra.mxu0 %v6190
    %6350 = vmatprep.subr.mxu0 %v6189
    %6351 = vmatpush1.msra.mxu0 %v6188
    %6352 = vmatprep.subr.mxu0 %v6187
    %6353 = vmatpush1.msra.mxu0 %v6186
    %6354 = vmatprep.subr.mxu0 %v6185
    %6355 = vmatpush1.msra.mxu0 %v6184
    %6356 = vmatprep.subr.mxu0 %v6247
    %6357 = vmatpush2.msra.mxu0 %v6246
    %6358 = vmatprep.subr.mxu0 %v6245
    %6359 = vmatpush2.msra.mxu0 %v6244
    %6360 = vmatprep.subr.mxu0 %v6243
    %6361 = vmatpush2.msra.mxu0 %v6242
    %6362 = vmatprep.subr.mxu0 %v6241
    %6363 = vmatpush2.msra.mxu0 %v6240
    %6364 = vmatprep.subr.mxu0 %v6239
    %6365 = vmatpush2.msra.mxu0 %v6238
    %6366 = vmatprep.subr.mxu0 %v6237
    %6367 = vmatpush2.msra.mxu0 %v6236
    %6368 = vmatprep.subr.mxu0 %v6235
    %6369 = vmatpush2.msra.mxu0 %v6234
    %6370 = vmatprep.subr.mxu0 %v6233
    %6371 = vmatpush2.msra.mxu0 %v6232
    %6372 = vmatprep.subr.mxu0 %v6231
    %6373 = vmatpush2.msra.mxu0 %v6230
    %6374 = vmatprep.subr.mxu0 %v6229
    %6375 = vmatpush2.msra.mxu0 %v6228
    %6376 = vmatprep.subr.mxu0 %v6227
    %6377 = vmatpush2.msra.mxu0 %v6226
    %6378 = vmatprep.subr.mxu0 %v6225
    %6379 = vmatpush2.msra.mxu0 %v6224
    %6380 = vmatprep.subr.mxu0 %v6223
    %6381 = vmatpush2.msra.mxu0 %v6222
    %6382 = vmatprep.subr.mxu0 %v6221
    %6383 = vmatpush2.msra.mxu0 %v6220
    %6384 = vmatprep.subr.mxu0 %v6219
    %6385 = vmatpush2.msra.mxu0 %v6218
    %6386 = vmatprep.subr.mxu0 %v6217
    %6387 = vmatpush2.msra.mxu0 %v6216
    %6388 = vmatprep.mubr.f32.mxu0 %v6111
    %6389 = vmatmul.mubr.f32.gmra.mxu0 %v6109
    %v6390 = vpop.f32.mrf.mxu0
    %v6391 = vadd.f32 %v6317, %v6390
    %v6392 = vpop.f32.mrf.mxu0
    %v6393 = vadd.f32 %v6321, %v6392
    %6394 = vdwg.mxu0
    %6395 = vmatprep.subr.mxu0 %v6279
    %6396 = vmatpush1.msra.mxu0 %v6278
    %6397 = vmatprep.subr.mxu0 %v6277
    %6398 = vmatpush1.msra.mxu0 %v6276
    %6399 = vmatprep.subr.mxu0 %v6275
    %6400 = vmatpush1.msra.mxu0 %v6274
    %6401 = vmatprep.subr.mxu0 %v6273
    %6402 = vmatpush1.msra.mxu0 %v6272
    %6403 = vmatprep.subr.mxu0 %v6271
    %6404 = vmatpush1.msra.mxu0 %v6270
    %6405 = vmatprep.subr.mxu0 %v6269
    %6406 = vmatpush1.msra.mxu0 %v6268
    %6407 = vmatprep.subr.mxu0 %v6267
    %6408 = vmatpush1.msra.mxu0 %v6266
    %6409 = vmatprep.subr.mxu0 %v6265
    %6410 = vmatpush1.msra.mxu0 %v6264
    %6411 = vmatprep.subr.mxu0 %v6263
    %6412 = vmatpush1.msra.mxu0 %v6262
    %6413 = vmatprep.subr.mxu0 %v6261
    %6414 = vmatpush1.msra.mxu0 %v6260
    %6415 = vmatprep.subr.mxu0 %v6259
    %6416 = vmatpush1.msra.mxu0 %v6258
    %6417 = vmatprep.subr.mxu0 %v6257
    %6418 = vmatpush1.msra.mxu0 %v6256
    %6419 = vmatprep.subr.mxu0 %v6255
    %6420 = vmatpush1.msra.mxu0 %v6254
    %6421 = vmatprep.subr.mxu0 %v6253
    %6422 = vmatpush1.msra.mxu0 %v6252
    %6423 = vmatprep.subr.mxu0 %v6251
    %6424 = vmatpush1.msra.mxu0 %v6250
    %6425 = vmatprep.subr.mxu0 %v6249
    %6426 = vmatpush1.msra.mxu0 %v6248
    %6427 = vmatprep.subr.mxu0 %v6311
    %6428 = vmatpush2.msra.mxu0 %v6310
    %6429 = vmatprep.subr.mxu0 %v6309
    %6430 = vmatpush2.msra.mxu0 %v6308
    %6431 = vmatprep.subr.mxu0 %v6307
    %6432 = vmatpush2.msra.mxu0 %v6306
    %6433 = vmatprep.subr.mxu0 %v6305
    %6434 = vmatpush2.msra.mxu0 %v6304
    %6435 = vmatprep.subr.mxu0 %v6303
    %6436 = vmatpush2.msra.mxu0 %v6302
    %6437 = vmatprep.subr.mxu0 %v6301
    %6438 = vmatpush2.msra.mxu0 %v6300
    %6439 = vmatprep.subr.mxu0 %v6299
    %6440 = vmatpush2.msra.mxu0 %v6298
    %6441 = vmatprep.subr.mxu0 %v6297
    %6442 = vmatpush2.msra.mxu0 %v6296
    %6443 = vmatprep.subr.mxu0 %v6295
    %6444 = vmatpush2.msra.mxu0 %v6294
    %6445 = vmatprep.subr.mxu0 %v6293
    %6446 = vmatpush2.msra.mxu0 %v6292
    %6447 = vmatprep.subr.mxu0 %v6291
    %6448 = vmatpush2.msra.mxu0 %v6290
    %6449 = vmatprep.subr.mxu0 %v6289
    %6450 = vmatpush2.msra.mxu0 %v6288
    %6451 = vmatprep.subr.mxu0 %v6287
    %6452 = vmatpush2.msra.mxu0 %v6286
    %6453 = vmatprep.subr.mxu0 %v6285
    %6454 = vmatpush2.msra.mxu0 %v6284
    %6455 = vmatprep.subr.mxu0 %v6283
    %6456 = vmatpush2.msra.mxu0 %v6282
    %6457 = vmatprep.subr.mxu0 %v6281
    %6458 = vmatpush2.msra.mxu0 %v6280
    %6459 = vmatprep.mubr.f32.mxu0 %v6182
    %6460 = vmatmul.mubr.f32.gmra.mxu0 %v6180
    %v6461 = vpop.f32.mrf.mxu0
    %v6462 = vadd.f32 %v6391, %v6461
    %v6463 = vpop.f32.mrf.mxu0
    %v6464 = vadd.f32 %v6393, %v6463
    %6465 = vdwg.mxu0
    %v6466 = vmax.f32 %v6462, 0.0
    %v6467 = vmax.f32 %v6464, 0.0
    %v6468 = vld [vmem:[%s3] sm:$0xf]
    %v6469 = vld [vmem:[#allocation26] sm:$0xff]
    %v6470 = vld [vmem:[#allocation26 + $0x8] sm:$0xff]
    %v6471 = vld [vmem:[#allocation26 + $0x10] sm:$0xff]
    %v6472 = vld [vmem:[#allocation26 + $0x18] sm:$0xff]
    %v6473 = vld [vmem:[#allocation26 + $0x20] sm:$0xff]
    %v6474 = vld [vmem:[#allocation26 + $0x28] sm:$0xff]
    %v6475 = vld [vmem:[#allocation26 + $0x30] sm:$0xff]
    %v6476 = vld [vmem:[#allocation26 + $0x38] sm:$0xff]
    %v6477 = vld [vmem:[#allocation26 + $0x40] sm:$0xff]
    %v6478 = vld [vmem:[#allocation26 + $0x48] sm:$0xff]
    %v6479 = vld [vmem:[#allocation26 + $0x50] sm:$0xff]
    %v6480 = vld [vmem:[#allocation26 + $0x58] sm:$0xff]
    %v6481 = vld [vmem:[#allocation26 + $0x60] sm:$0xff]
    %v6482 = vld [vmem:[#allocation26 + $0x68] sm:$0xff]
    %v6483 = vld [vmem:[#allocation26 + $0x70] sm:$0xff]
    %v6484 = vld [vmem:[#allocation26 + $0x78] sm:$0xff]
    %v6485 = vld [vmem:[%s73] sm:$0xf]
    %v6487 = vlaneseq
    %v6488 = vshrl.u32 %v6487, 7
    %v6489 = vsub.s32 0, %v6488
    %v6490 = vrot.slane %v6485, %v6489
    %v6491 = vlaneseq
    %v6492 = vshrl.u32 %v6491, 7
    %v6493 = vsub.s32 1, %v6492
    %v6494 = vrot.slane %v6485, %v6493
    %v6495 = vlaneseq
    %v6496 = vshrl.u32 %v6495, 7
    %v6497 = vsub.s32 2, %v6496
    %v6498 = vrot.slane %v6485, %v6497
    %v6499 = vlaneseq
    %v6500 = vshrl.u32 %v6499, 7
    %v6501 = vsub.s32 3, %v6500
    %v6502 = vrot.slane %v6485, %v6501
    %v6508 = vsel %vm521, %v6468, 0
    %6510 = vmatprep.subr.mxu0 0.0
    %6511 = vmatpush1.msra.mxu0 0.0
    %6512 = vmatprep.subr.mxu0 0.0
    %6513 = vmatpush1.msra.mxu0 0.0
    %6514 = vmatprep.subr.mxu0 0.0
    %6515 = vmatpush1.msra.mxu0 0.0
    %6516 = vmatprep.subr.mxu0 0.0
    %6517 = vmatpush1.msra.mxu0 0.0
    %6518 = vmatprep.subr.mxu0 0.0
    %6519 = vmatpush1.msra.mxu0 0.0
    %6520 = vmatprep.subr.mxu0 0.0
    %6521 = vmatpush1.msra.mxu0 0.0
    %6522 = vmatprep.subr.mxu0 0.0
    %6523 = vmatpush1.msra.mxu0 0.0
    %6524 = vmatprep.subr.mxu0 0.0
    %6525 = vmatpush1.msra.mxu0 0.0
    %6526 = vmatprep.subr.mxu0 0.0
    %6527 = vmatpush1.msra.mxu0 0.0
    %6528 = vmatprep.subr.mxu0 0.0
    %6529 = vmatpush1.msra.mxu0 0.0
    %6530 = vmatprep.subr.mxu0 0.0
    %6531 = vmatpush1.msra.mxu0 0.0
    %6532 = vmatprep.subr.mxu0 0.0
    %6533 = vmatpush1.msra.mxu0 0.0
    %6534 = vmatprep.subr.mxu0 %v6482
    %6535 = vmatpush1.msra.mxu0 %v6481
    %6536 = vmatprep.subr.mxu0 %v6478
    %6537 = vmatpush1.msra.mxu0 %v6477
    %6538 = vmatprep.subr.mxu0 %v6474
    %6539 = vmatpush1.msra.mxu0 %v6473
    %6540 = vmatprep.subr.mxu0 %v6470
    %6541 = vmatpush1.msra.mxu0 %v6469
    %6542 = vmatprep.subr.mxu0 0.0
    %6543 = vmatpush2.msra.mxu0 0.0
    %6544 = vmatprep.subr.mxu0 0.0
    %6545 = vmatpush2.msra.mxu0 0.0
    %6546 = vmatprep.subr.mxu0 0.0
    %6547 = vmatpush2.msra.mxu0 0.0
    %6548 = vmatprep.subr.mxu0 0.0
    %6549 = vmatpush2.msra.mxu0 0.0
    %6550 = vmatprep.subr.mxu0 0.0
    %6551 = vmatpush2.msra.mxu0 0.0
    %6552 = vmatprep.subr.mxu0 0.0
    %6553 = vmatpush2.msra.mxu0 0.0
    %6554 = vmatprep.subr.mxu0 0.0
    %6555 = vmatpush2.msra.mxu0 0.0
    %6556 = vmatprep.subr.mxu0 0.0
    %6557 = vmatpush2.msra.mxu0 0.0
    %6558 = vmatprep.subr.mxu0 0.0
    %6559 = vmatpush2.msra.mxu0 0.0
    %6560 = vmatprep.subr.mxu0 0.0
    %6561 = vmatpush2.msra.mxu0 0.0
    %6562 = vmatprep.subr.mxu0 0.0
    %6563 = vmatpush2.msra.mxu0 0.0
    %6564 = vmatprep.subr.mxu0 0.0
    %6565 = vmatpush2.msra.mxu0 0.0
    %6566 = vmatprep.subr.mxu0 0.0
    %6567 = vmatpush2.msra.mxu0 0.0
    %6568 = vmatprep.subr.mxu0 0.0
    %6569 = vmatpush2.msra.mxu0 0.0
    %6570 = vmatprep.subr.mxu0 0.0
    %6571 = vmatpush2.msra.mxu0 0.0
    %6572 = vmatprep.subr.mxu0 0.0
    %6573 = vmatpush2.msra.mxu0 0.0
    %6574 = vmatprep.mubr.f32.mxu0 0.0
    %6575 = vmatmul.mubr.f32.gmra.mxu0 %v6508
    %v6576 = vpop.f32.mrf.mxu0
    %v6577 = vadd.f32 %v6490, %v6576
    %v6578 = vpop.f32.mrf.mxu0
    %v6579 = vadd.f32 %v6494, %v6578
    %6580 = vdwg.mxu0
    %6581 = vmatprep.subr.mxu0 0.0
    %6582 = vmatpush1.msra.mxu0 0.0
    %6583 = vmatprep.subr.mxu0 0.0
    %6584 = vmatpush1.msra.mxu0 0.0
    %6585 = vmatprep.subr.mxu0 0.0
    %6586 = vmatpush1.msra.mxu0 0.0
    %6587 = vmatprep.subr.mxu0 0.0
    %6588 = vmatpush1.msra.mxu0 0.0
    %6589 = vmatprep.subr.mxu0 0.0
    %6590 = vmatpush1.msra.mxu0 0.0
    %6591 = vmatprep.subr.mxu0 0.0
    %6592 = vmatpush1.msra.mxu0 0.0
    %6593 = vmatprep.subr.mxu0 0.0
    %6594 = vmatpush1.msra.mxu0 0.0
    %6595 = vmatprep.subr.mxu0 0.0
    %6596 = vmatpush1.msra.mxu0 0.0
    %6597 = vmatprep.subr.mxu0 0.0
    %6598 = vmatpush1.msra.mxu0 0.0
    %6599 = vmatprep.subr.mxu0 0.0
    %6600 = vmatpush1.msra.mxu0 0.0
    %6601 = vmatprep.subr.mxu0 0.0
    %6602 = vmatpush1.msra.mxu0 0.0
    %6603 = vmatprep.subr.mxu0 0.0
    %6604 = vmatpush1.msra.mxu0 0.0
    %6605 = vmatprep.subr.mxu0 %v6484
    %6606 = vmatpush1.msra.mxu0 %v6483
    %6607 = vmatprep.subr.mxu0 %v6480
    %6608 = vmatpush1.msra.mxu0 %v6479
    %6609 = vmatprep.subr.mxu0 %v6476
    %6610 = vmatpush1.msra.mxu0 %v6475
    %6611 = vmatprep.subr.mxu0 %v6472
    %6612 = vmatpush1.msra.mxu0 %v6471
    %6613 = vmatprep.subr.mxu0 0.0
    %6614 = vmatpush2.msra.mxu0 0.0
    %6615 = vmatprep.subr.mxu0 0.0
    %6616 = vmatpush2.msra.mxu0 0.0
    %6617 = vmatprep.subr.mxu0 0.0
    %6618 = vmatpush2.msra.mxu0 0.0
    %6619 = vmatprep.subr.mxu0 0.0
    %6620 = vmatpush2.msra.mxu0 0.0
    %6621 = vmatprep.subr.mxu0 0.0
    %6622 = vmatpush2.msra.mxu0 0.0
    %6623 = vmatprep.subr.mxu0 0.0
    %6624 = vmatpush2.msra.mxu0 0.0
    %6625 = vmatprep.subr.mxu0 0.0
    %6626 = vmatpush2.msra.mxu0 0.0
    %6627 = vmatprep.subr.mxu0 0.0
    %6628 = vmatpush2.msra.mxu0 0.0
    %6629 = vmatprep.subr.mxu0 0.0
    %6630 = vmatpush2.msra.mxu0 0.0
    %6631 = vmatprep.subr.mxu0 0.0
    %6632 = vmatpush2.msra.mxu0 0.0
    %6633 = vmatprep.subr.mxu0 0.0
    %6634 = vmatpush2.msra.mxu0 0.0
    %6635 = vmatprep.subr.mxu0 0.0
    %6636 = vmatpush2.msra.mxu0 0.0
    %6637 = vmatprep.subr.mxu0 0.0
    %6638 = vmatpush2.msra.mxu0 0.0
    %6639 = vmatprep.subr.mxu0 0.0
    %6640 = vmatpush2.msra.mxu0 0.0
    %6641 = vmatprep.subr.mxu0 0.0
    %6642 = vmatpush2.msra.mxu0 0.0
    %6643 = vmatprep.subr.mxu0 0.0
    %6644 = vmatpush2.msra.mxu0 0.0
    %6645 = vmatprep.mubr.f32.mxu0 0.0
    %6646 = vmatmul.mubr.f32.gmra.mxu0 %v6508
    %v6647 = vpop.f32.mrf.mxu0
    %v6648 = vadd.f32 %v6498, %v6647
    %v6649 = vpop.f32.mrf.mxu0
    %v6650 = vadd.f32 %v6502, %v6649
    %6651 = vdwg.mxu0
    %vm6652 = vcmp.gt.f32.partialorder %v6577, 0.0
    %vm6653 = vcmp.gt.f32.partialorder %v6579, 0.0
    %vm6654 = vcmp.gt.f32.partialorder %v6648, 0.0
    %vm6655 = vcmp.gt.f32.partialorder %v6650, 0.0
    %v6656 = vmul.f32 %v6577, 0.01
    %v6657 = vmul.f32 %v6579, 0.01
    %v6658 = vmul.f32 %v6648, 0.01
    %v6659 = vmul.f32 %v6650, 0.01
    %v6660 = vsel %vm6652, %v6577, %v6656
    %v6661 = vsel %vm6653, %v6579, %v6657
    %v6662 = vsel %vm6654, %v6648, %v6658
    %v6663 = vsel %vm6655, %v6650, %v6659
    %v6664 = vld [vmem:[#allocation28] sm:$0xff]
    %v6665 = vld [vmem:[#allocation28 + $0x8] sm:$0xff]
    %v6666 = vld [vmem:[#allocation28 + $0x10] sm:$0xff]
    %v6667 = vld [vmem:[#allocation28 + $0x18] sm:$0xff]
    %v6668 = vld [vmem:[#allocation28 + $0x20] sm:$0xff]
    %v6669 = vld [vmem:[#allocation28 + $0x28] sm:$0xff]
    %v6670 = vld [vmem:[#allocation28 + $0x30] sm:$0xff]
    %v6671 = vld [vmem:[#allocation28 + $0x38] sm:$0xff]
    %v6672 = vld [vmem:[#allocation28 + $0x40] sm:$0xff]
    %v6673 = vld [vmem:[#allocation28 + $0x48] sm:$0xff]
    %v6674 = vld [vmem:[#allocation28 + $0x50] sm:$0xff]
    %v6675 = vld [vmem:[#allocation28 + $0x58] sm:$0xff]
    %v6676 = vld [vmem:[#allocation28 + $0x60] sm:$0xff]
    %v6677 = vld [vmem:[#allocation28 + $0x68] sm:$0xff]
    %v6678 = vld [vmem:[#allocation28 + $0x70] sm:$0xff]
    %v6679 = vld [vmem:[#allocation28 + $0x78] sm:$0xff]
    %v6680 = vld [vmem:[#allocation28 + $0x80] sm:$0xff]
    %v6681 = vld [vmem:[#allocation28 + $0x88] sm:$0xff]
    %v6682 = vld [vmem:[#allocation28 + $0x90] sm:$0xff]
    %v6683 = vld [vmem:[#allocation28 + $0x98] sm:$0xff]
    %v6684 = vld [vmem:[#allocation28 + $0xa0] sm:$0xff]
    %v6685 = vld [vmem:[#allocation28 + $0xa8] sm:$0xff]
    %v6686 = vld [vmem:[#allocation28 + $0xb0] sm:$0xff]
    %v6687 = vld [vmem:[#allocation28 + $0xb8] sm:$0xff]
    %v6688 = vld [vmem:[#allocation28 + $0xc0] sm:$0xff]
    %v6689 = vld [vmem:[#allocation28 + $0xc8] sm:$0xff]
    %v6690 = vld [vmem:[#allocation28 + $0xd0] sm:$0xff]
    %v6691 = vld [vmem:[#allocation28 + $0xd8] sm:$0xff]
    %v6692 = vld [vmem:[#allocation28 + $0xe0] sm:$0xff]
    %v6693 = vld [vmem:[#allocation28 + $0xe8] sm:$0xff]
    %v6694 = vld [vmem:[#allocation28 + $0xf0] sm:$0xff]
    %v6695 = vld [vmem:[#allocation28 + $0xf8] sm:$0xff]
    %v6696 = vld [vmem:[#allocation28 + $0x100] sm:$0xff]
    %v6697 = vld [vmem:[#allocation28 + $0x108] sm:$0xff]
    %v6698 = vld [vmem:[#allocation28 + $0x110] sm:$0xff]
    %v6699 = vld [vmem:[#allocation28 + $0x118] sm:$0xff]
    %v6700 = vld [vmem:[#allocation28 + $0x120] sm:$0xff]
    %v6701 = vld [vmem:[#allocation28 + $0x128] sm:$0xff]
    %v6702 = vld [vmem:[#allocation28 + $0x130] sm:$0xff]
    %v6703 = vld [vmem:[#allocation28 + $0x138] sm:$0xff]
    %v6704 = vld [vmem:[#allocation28 + $0x140] sm:$0xff]
    %v6705 = vld [vmem:[#allocation28 + $0x148] sm:$0xff]
    %v6706 = vld [vmem:[#allocation28 + $0x150] sm:$0xff]
    %v6707 = vld [vmem:[#allocation28 + $0x158] sm:$0xff]
    %v6708 = vld [vmem:[#allocation28 + $0x160] sm:$0xff]
    %v6709 = vld [vmem:[#allocation28 + $0x168] sm:$0xff]
    %v6710 = vld [vmem:[#allocation28 + $0x170] sm:$0xff]
    %v6711 = vld [vmem:[#allocation28 + $0x178] sm:$0xff]
    %v6712 = vld [vmem:[#allocation28 + $0x180] sm:$0xff]
    %v6713 = vld [vmem:[#allocation28 + $0x188] sm:$0xff]
    %v6714 = vld [vmem:[#allocation28 + $0x190] sm:$0xff]
    %v6715 = vld [vmem:[#allocation28 + $0x198] sm:$0xff]
    %v6716 = vld [vmem:[#allocation28 + $0x1a0] sm:$0xff]
    %v6717 = vld [vmem:[#allocation28 + $0x1a8] sm:$0xff]
    %v6718 = vld [vmem:[#allocation28 + $0x1b0] sm:$0xff]
    %v6719 = vld [vmem:[#allocation28 + $0x1b8] sm:$0xff]
    %v6720 = vld [vmem:[#allocation28 + $0x1c0] sm:$0xff]
    %v6721 = vld [vmem:[#allocation28 + $0x1c8] sm:$0xff]
    %v6722 = vld [vmem:[#allocation28 + $0x1d0] sm:$0xff]
    %v6723 = vld [vmem:[#allocation28 + $0x1d8] sm:$0xff]
    %v6724 = vld [vmem:[#allocation28 + $0x1e0] sm:$0xff]
    %v6725 = vld [vmem:[#allocation28 + $0x1e8] sm:$0xff]
    %v6726 = vld [vmem:[#allocation28 + $0x1f0] sm:$0xff]
    %v6727 = vld [vmem:[#allocation28 + $0x1f8] sm:$0xff]
    %v6728 = vld [vmem:[#allocation28 + $0x200] sm:$0xff]
    %v6729 = vld [vmem:[#allocation28 + $0x208] sm:$0xff]
    %v6730 = vld [vmem:[#allocation28 + $0x210] sm:$0xff]
    %v6731 = vld [vmem:[#allocation28 + $0x218] sm:$0xff]
    %v6732 = vld [vmem:[#allocation28 + $0x220] sm:$0xff]
    %v6733 = vld [vmem:[#allocation28 + $0x228] sm:$0xff]
    %v6734 = vld [vmem:[#allocation28 + $0x230] sm:$0xff]
    %v6735 = vld [vmem:[#allocation28 + $0x238] sm:$0xff]
    %v6736 = vld [vmem:[#allocation28 + $0x240] sm:$0xff]
    %v6737 = vld [vmem:[#allocation28 + $0x248] sm:$0xff]
    %v6738 = vld [vmem:[#allocation28 + $0x250] sm:$0xff]
    %v6739 = vld [vmem:[#allocation28 + $0x258] sm:$0xff]
    %v6740 = vld [vmem:[#allocation28 + $0x260] sm:$0xff]
    %v6741 = vld [vmem:[#allocation28 + $0x268] sm:$0xff]
    %v6742 = vld [vmem:[#allocation28 + $0x270] sm:$0xff]
    %v6743 = vld [vmem:[#allocation28 + $0x278] sm:$0xff]
    %v6744 = vld [vmem:[#allocation28 + $0x280] sm:$0xff]
    %v6745 = vld [vmem:[#allocation28 + $0x288] sm:$0xff]
    %v6746 = vld [vmem:[#allocation28 + $0x290] sm:$0xff]
    %v6747 = vld [vmem:[#allocation28 + $0x298] sm:$0xff]
    %v6748 = vld [vmem:[#allocation28 + $0x2a0] sm:$0xff]
    %v6749 = vld [vmem:[#allocation28 + $0x2a8] sm:$0xff]
    %v6750 = vld [vmem:[#allocation28 + $0x2b0] sm:$0xff]
    %v6751 = vld [vmem:[#allocation28 + $0x2b8] sm:$0xff]
    %v6752 = vld [vmem:[#allocation28 + $0x2c0] sm:$0xff]
    %v6753 = vld [vmem:[#allocation28 + $0x2c8] sm:$0xff]
    %v6754 = vld [vmem:[#allocation28 + $0x2d0] sm:$0xff]
    %v6755 = vld [vmem:[#allocation28 + $0x2d8] sm:$0xff]
    %v6756 = vld [vmem:[#allocation28 + $0x2e0] sm:$0xff]
    %v6757 = vld [vmem:[#allocation28 + $0x2e8] sm:$0xff]
    %v6758 = vld [vmem:[#allocation28 + $0x2f0] sm:$0xff]
    %v6759 = vld [vmem:[#allocation28 + $0x2f8] sm:$0xff]
    %v6760 = vld [vmem:[#allocation28 + $0x300] sm:$0xff]
    %v6761 = vld [vmem:[#allocation28 + $0x308] sm:$0xff]
    %v6762 = vld [vmem:[#allocation28 + $0x310] sm:$0xff]
    %v6763 = vld [vmem:[#allocation28 + $0x318] sm:$0xff]
    %v6764 = vld [vmem:[#allocation28 + $0x320] sm:$0xff]
    %v6765 = vld [vmem:[#allocation28 + $0x328] sm:$0xff]
    %v6766 = vld [vmem:[#allocation28 + $0x330] sm:$0xff]
    %v6767 = vld [vmem:[#allocation28 + $0x338] sm:$0xff]
    %v6768 = vld [vmem:[#allocation28 + $0x340] sm:$0xff]
    %v6769 = vld [vmem:[#allocation28 + $0x348] sm:$0xff]
    %v6770 = vld [vmem:[#allocation28 + $0x350] sm:$0xff]
    %v6771 = vld [vmem:[#allocation28 + $0x358] sm:$0xff]
    %v6772 = vld [vmem:[#allocation28 + $0x360] sm:$0xff]
    %v6773 = vld [vmem:[#allocation28 + $0x368] sm:$0xff]
    %v6774 = vld [vmem:[#allocation28 + $0x370] sm:$0xff]
    %v6775 = vld [vmem:[#allocation28 + $0x378] sm:$0xff]
    %v6776 = vld [vmem:[#allocation28 + $0x380] sm:$0xff]
    %v6777 = vld [vmem:[#allocation28 + $0x388] sm:$0xff]
    %v6778 = vld [vmem:[#allocation28 + $0x390] sm:$0xff]
    %v6779 = vld [vmem:[#allocation28 + $0x398] sm:$0xff]
    %v6780 = vld [vmem:[#allocation28 + $0x3a0] sm:$0xff]
    %v6781 = vld [vmem:[#allocation28 + $0x3a8] sm:$0xff]
    %v6782 = vld [vmem:[#allocation28 + $0x3b0] sm:$0xff]
    %v6783 = vld [vmem:[#allocation28 + $0x3b8] sm:$0xff]
    %v6784 = vld [vmem:[#allocation28 + $0x3c0] sm:$0xff]
    %v6785 = vld [vmem:[#allocation28 + $0x3c8] sm:$0xff]
    %v6786 = vld [vmem:[#allocation28 + $0x3d0] sm:$0xff]
    %v6787 = vld [vmem:[#allocation28 + $0x3d8] sm:$0xff]
    %v6788 = vld [vmem:[#allocation28 + $0x3e0] sm:$0xff]
    %v6789 = vld [vmem:[#allocation28 + $0x3e8] sm:$0xff]
    %v6790 = vld [vmem:[#allocation28 + $0x3f0] sm:$0xff]
    %v6791 = vld [vmem:[#allocation28 + $0x3f8] sm:$0xff]
    %v6792 = vld [vmem:[%s77] sm:$0x3]
    %v6794 = vlaneseq
    %v6795 = vshrl.u32 %v6794, 7
    %v6796 = vsub.s32 0, %v6795
    %v6797 = vrot.slane %v6792, %v6796
    %v6798 = vlaneseq
    %v6799 = vshrl.u32 %v6798, 7
    %v6800 = vsub.s32 1, %v6799
    %v6801 = vrot.slane %v6792, %v6800
    %6804 = vmatprep.subr.mxu0 %v6695
    %6805 = vmatpush1.msra.mxu0 %v6694
    %6806 = vmatprep.subr.mxu0 %v6693
    %6807 = vmatpush1.msra.mxu0 %v6692
    %6808 = vmatprep.subr.mxu0 %v6691
    %6809 = vmatpush1.msra.mxu0 %v6690
    %6810 = vmatprep.subr.mxu0 %v6689
    %6811 = vmatpush1.msra.mxu0 %v6688
    %6812 = vmatprep.subr.mxu0 %v6687
    %6813 = vmatpush1.msra.mxu0 %v6686
    %6814 = vmatprep.subr.mxu0 %v6685
    %6815 = vmatpush1.msra.mxu0 %v6684
    %6816 = vmatprep.subr.mxu0 %v6683
    %6817 = vmatpush1.msra.mxu0 %v6682
    %6818 = vmatprep.subr.mxu0 %v6681
    %6819 = vmatpush1.msra.mxu0 %v6680
    %6820 = vmatprep.subr.mxu0 %v6679
    %6821 = vmatpush1.msra.mxu0 %v6678
    %6822 = vmatprep.subr.mxu0 %v6677
    %6823 = vmatpush1.msra.mxu0 %v6676
    %6824 = vmatprep.subr.mxu0 %v6675
    %6825 = vmatpush1.msra.mxu0 %v6674
    %6826 = vmatprep.subr.mxu0 %v6673
    %6827 = vmatpush1.msra.mxu0 %v6672
    %6828 = vmatprep.subr.mxu0 %v6671
    %6829 = vmatpush1.msra.mxu0 %v6670
    %6830 = vmatprep.subr.mxu0 %v6669
    %6831 = vmatpush1.msra.mxu0 %v6668
    %6832 = vmatprep.subr.mxu0 %v6667
    %6833 = vmatpush1.msra.mxu0 %v6666
    %6834 = vmatprep.subr.mxu0 %v6665
    %6835 = vmatpush1.msra.mxu0 %v6664
    %6836 = vmatprep.subr.mxu0 %v6727
    %6837 = vmatpush2.msra.mxu0 %v6726
    %6838 = vmatprep.subr.mxu0 %v6725
    %6839 = vmatpush2.msra.mxu0 %v6724
    %6840 = vmatprep.subr.mxu0 %v6723
    %6841 = vmatpush2.msra.mxu0 %v6722
    %6842 = vmatprep.subr.mxu0 %v6721
    %6843 = vmatpush2.msra.mxu0 %v6720
    %6844 = vmatprep.subr.mxu0 %v6719
    %6845 = vmatpush2.msra.mxu0 %v6718
    %6846 = vmatprep.subr.mxu0 %v6717
    %6847 = vmatpush2.msra.mxu0 %v6716
    %6848 = vmatprep.subr.mxu0 %v6715
    %6849 = vmatpush2.msra.mxu0 %v6714
    %6850 = vmatprep.subr.mxu0 %v6713
    %6851 = vmatpush2.msra.mxu0 %v6712
    %6852 = vmatprep.subr.mxu0 %v6711
    %6853 = vmatpush2.msra.mxu0 %v6710
    %6854 = vmatprep.subr.mxu0 %v6709
    %6855 = vmatpush2.msra.mxu0 %v6708
    %6856 = vmatprep.subr.mxu0 %v6707
    %6857 = vmatpush2.msra.mxu0 %v6706
    %6858 = vmatprep.subr.mxu0 %v6705
    %6859 = vmatpush2.msra.mxu0 %v6704
    %6860 = vmatprep.subr.mxu0 %v6703
    %6861 = vmatpush2.msra.mxu0 %v6702
    %6862 = vmatprep.subr.mxu0 %v6701
    %6863 = vmatpush2.msra.mxu0 %v6700
    %6864 = vmatprep.subr.mxu0 %v6699
    %6865 = vmatpush2.msra.mxu0 %v6698
    %6866 = vmatprep.subr.mxu0 %v6697
    %6867 = vmatpush2.msra.mxu0 %v6696
    %6868 = vmatprep.mubr.f32.mxu0 %v6661
    %6869 = vmatmul.mubr.f32.gmra.mxu0 %v6660
    %v6870 = vpop.f32.mrf.mxu0
    %v6871 = vadd.f32 %v6797, %v6870
    %v6872 = vpop.f32.mrf.mxu0
    %v6873 = vadd.f32 %v6801, %v6872
    %6874 = vdwg.mxu0
    %6875 = vmatprep.subr.mxu0 %v6759
    %6876 = vmatpush1.msra.mxu0 %v6758
    %6877 = vmatprep.subr.mxu0 %v6757
    %6878 = vmatpush1.msra.mxu0 %v6756
    %6879 = vmatprep.subr.mxu0 %v6755
    %6880 = vmatpush1.msra.mxu0 %v6754
    %6881 = vmatprep.subr.mxu0 %v6753
    %6882 = vmatpush1.msra.mxu0 %v6752
    %6883 = vmatprep.subr.mxu0 %v6751
    %6884 = vmatpush1.msra.mxu0 %v6750
    %6885 = vmatprep.subr.mxu0 %v6749
    %6886 = vmatpush1.msra.mxu0 %v6748
    %6887 = vmatprep.subr.mxu0 %v6747
    %6888 = vmatpush1.msra.mxu0 %v6746
    %6889 = vmatprep.subr.mxu0 %v6745
    %6890 = vmatpush1.msra.mxu0 %v6744
    %6891 = vmatprep.subr.mxu0 %v6743
    %6892 = vmatpush1.msra.mxu0 %v6742
    %6893 = vmatprep.subr.mxu0 %v6741
    %6894 = vmatpush1.msra.mxu0 %v6740
    %6895 = vmatprep.subr.mxu0 %v6739
    %6896 = vmatpush1.msra.mxu0 %v6738
    %6897 = vmatprep.subr.mxu0 %v6737
    %6898 = vmatpush1.msra.mxu0 %v6736
    %6899 = vmatprep.subr.mxu0 %v6735
    %6900 = vmatpush1.msra.mxu0 %v6734
    %6901 = vmatprep.subr.mxu0 %v6733
    %6902 = vmatpush1.msra.mxu0 %v6732
    %6903 = vmatprep.subr.mxu0 %v6731
    %6904 = vmatpush1.msra.mxu0 %v6730
    %6905 = vmatprep.subr.mxu0 %v6729
    %6906 = vmatpush1.msra.mxu0 %v6728
    %6907 = vmatprep.subr.mxu0 %v6791
    %6908 = vmatpush2.msra.mxu0 %v6790
    %6909 = vmatprep.subr.mxu0 %v6789
    %6910 = vmatpush2.msra.mxu0 %v6788
    %6911 = vmatprep.subr.mxu0 %v6787
    %6912 = vmatpush2.msra.mxu0 %v6786
    %6913 = vmatprep.subr.mxu0 %v6785
    %6914 = vmatpush2.msra.mxu0 %v6784
    %6915 = vmatprep.subr.mxu0 %v6783
    %6916 = vmatpush2.msra.mxu0 %v6782
    %6917 = vmatprep.subr.mxu0 %v6781
    %6918 = vmatpush2.msra.mxu0 %v6780
    %6919 = vmatprep.subr.mxu0 %v6779
    %6920 = vmatpush2.msra.mxu0 %v6778
    %6921 = vmatprep.subr.mxu0 %v6777
    %6922 = vmatpush2.msra.mxu0 %v6776
    %6923 = vmatprep.subr.mxu0 %v6775
    %6924 = vmatpush2.msra.mxu0 %v6774
    %6925 = vmatprep.subr.mxu0 %v6773
    %6926 = vmatpush2.msra.mxu0 %v6772
    %6927 = vmatprep.subr.mxu0 %v6771
    %6928 = vmatpush2.msra.mxu0 %v6770
    %6929 = vmatprep.subr.mxu0 %v6769
    %6930 = vmatpush2.msra.mxu0 %v6768
    %6931 = vmatprep.subr.mxu0 %v6767
    %6932 = vmatpush2.msra.mxu0 %v6766
    %6933 = vmatprep.subr.mxu0 %v6765
    %6934 = vmatpush2.msra.mxu0 %v6764
    %6935 = vmatprep.subr.mxu0 %v6763
    %6936 = vmatpush2.msra.mxu0 %v6762
    %6937 = vmatprep.subr.mxu0 %v6761
    %6938 = vmatpush2.msra.mxu0 %v6760
    %6939 = vmatprep.mubr.f32.mxu0 %v6663
    %6940 = vmatmul.mubr.f32.gmra.mxu0 %v6662
    %v6941 = vpop.f32.mrf.mxu0
    %v6942 = vadd.f32 %v6871, %v6941
    %v6943 = vpop.f32.mrf.mxu0
    %v6944 = vadd.f32 %v6873, %v6943
    %6945 = vdwg.mxu0
    %vm6946 = vcmp.gt.f32.partialorder %v6942, 0.0
    %vm6947 = vcmp.gt.f32.partialorder %v6944, 0.0
    %v6948 = vmul.f32 %v6942, 0.01
    %v6949 = vmul.f32 %v6944, 0.01
    %v6950 = vsel %vm6946, %v6942, %v6948
    %v6951 = vsel %vm6947, %v6944, %v6949
    %v6952 = vld [vmem:[#allocation29] sm:$0xff]
    %v6953 = vld [vmem:[#allocation29 + $0x8] sm:$0xff]
    %v6954 = vld [vmem:[#allocation29 + $0x10] sm:$0xff]
    %v6955 = vld [vmem:[#allocation29 + $0x18] sm:$0xff]
    %v6956 = vld [vmem:[#allocation29 + $0x20] sm:$0xff]
    %v6957 = vld [vmem:[#allocation29 + $0x28] sm:$0xff]
    %v6958 = vld [vmem:[#allocation29 + $0x30] sm:$0xff]
    %v6959 = vld [vmem:[#allocation29 + $0x38] sm:$0xff]
    %v6960 = vld [vmem:[#allocation29 + $0x40] sm:$0xff]
    %v6961 = vld [vmem:[#allocation29 + $0x48] sm:$0xff]
    %v6962 = vld [vmem:[#allocation29 + $0x50] sm:$0xff]
    %v6963 = vld [vmem:[#allocation29 + $0x58] sm:$0xff]
    %v6964 = vld [vmem:[#allocation29 + $0x60] sm:$0xff]
    %v6965 = vld [vmem:[#allocation29 + $0x68] sm:$0xff]
    %v6966 = vld [vmem:[#allocation29 + $0x70] sm:$0xff]
    %v6967 = vld [vmem:[#allocation29 + $0x78] sm:$0xff]
    %v6968 = vld [vmem:[#allocation29 + $0x80] sm:$0xff]
    %v6969 = vld [vmem:[#allocation29 + $0x88] sm:$0xff]
    %v6970 = vld [vmem:[#allocation29 + $0x90] sm:$0xff]
    %v6971 = vld [vmem:[#allocation29 + $0x98] sm:$0xff]
    %v6972 = vld [vmem:[#allocation29 + $0xa0] sm:$0xff]
    %v6973 = vld [vmem:[#allocation29 + $0xa8] sm:$0xff]
    %v6974 = vld [vmem:[#allocation29 + $0xb0] sm:$0xff]
    %v6975 = vld [vmem:[#allocation29 + $0xb8] sm:$0xff]
    %v6976 = vld [vmem:[#allocation29 + $0xc0] sm:$0xff]
    %v6977 = vld [vmem:[#allocation29 + $0xc8] sm:$0xff]
    %v6978 = vld [vmem:[#allocation29 + $0xd0] sm:$0xff]
    %v6979 = vld [vmem:[#allocation29 + $0xd8] sm:$0xff]
    %v6980 = vld [vmem:[#allocation29 + $0xe0] sm:$0xff]
    %v6981 = vld [vmem:[#allocation29 + $0xe8] sm:$0xff]
    %v6982 = vld [vmem:[#allocation29 + $0xf0] sm:$0xff]
    %v6983 = vld [vmem:[#allocation29 + $0xf8] sm:$0xff]
    %v6984 = vld [vmem:[#allocation29 + $0x100] sm:$0xff]
    %v6985 = vld [vmem:[#allocation29 + $0x108] sm:$0xff]
    %v6986 = vld [vmem:[#allocation29 + $0x110] sm:$0xff]
    %v6987 = vld [vmem:[#allocation29 + $0x118] sm:$0xff]
    %v6988 = vld [vmem:[#allocation29 + $0x120] sm:$0xff]
    %v6989 = vld [vmem:[#allocation29 + $0x128] sm:$0xff]
    %v6990 = vld [vmem:[#allocation29 + $0x130] sm:$0xff]
    %v6991 = vld [vmem:[#allocation29 + $0x138] sm:$0xff]
    %v6992 = vld [vmem:[#allocation29 + $0x140] sm:$0xff]
    %v6993 = vld [vmem:[#allocation29 + $0x148] sm:$0xff]
    %v6994 = vld [vmem:[#allocation29 + $0x150] sm:$0xff]
    %v6995 = vld [vmem:[#allocation29 + $0x158] sm:$0xff]
    %v6996 = vld [vmem:[#allocation29 + $0x160] sm:$0xff]
    %v6997 = vld [vmem:[#allocation29 + $0x168] sm:$0xff]
    %v6998 = vld [vmem:[#allocation29 + $0x170] sm:$0xff]
    %v6999 = vld [vmem:[#allocation29 + $0x178] sm:$0xff]
    %v7000 = vld [vmem:[#allocation29 + $0x180] sm:$0xff]
    %v7001 = vld [vmem:[#allocation29 + $0x188] sm:$0xff]
    %v7002 = vld [vmem:[#allocation29 + $0x190] sm:$0xff]
    %v7003 = vld [vmem:[#allocation29 + $0x198] sm:$0xff]
    %v7004 = vld [vmem:[#allocation29 + $0x1a0] sm:$0xff]
    %v7005 = vld [vmem:[#allocation29 + $0x1a8] sm:$0xff]
    %v7006 = vld [vmem:[#allocation29 + $0x1b0] sm:$0xff]
    %v7007 = vld [vmem:[#allocation29 + $0x1b8] sm:$0xff]
    %v7008 = vld [vmem:[#allocation29 + $0x1c0] sm:$0xff]
    %v7009 = vld [vmem:[#allocation29 + $0x1c8] sm:$0xff]
    %v7010 = vld [vmem:[#allocation29 + $0x1d0] sm:$0xff]
    %v7011 = vld [vmem:[#allocation29 + $0x1d8] sm:$0xff]
    %v7012 = vld [vmem:[#allocation29 + $0x1e0] sm:$0xff]
    %v7013 = vld [vmem:[#allocation29 + $0x1e8] sm:$0xff]
    %v7014 = vld [vmem:[#allocation29 + $0x1f0] sm:$0xff]
    %v7015 = vld [vmem:[#allocation29 + $0x1f8] sm:$0xff]
    %v7016 = vld [vmem:[#allocation29 + $0x200] sm:$0xff]
    %v7017 = vld [vmem:[#allocation29 + $0x208] sm:$0xff]
    %v7018 = vld [vmem:[#allocation29 + $0x210] sm:$0xff]
    %v7019 = vld [vmem:[#allocation29 + $0x218] sm:$0xff]
    %v7020 = vld [vmem:[#allocation29 + $0x220] sm:$0xff]
    %v7021 = vld [vmem:[#allocation29 + $0x228] sm:$0xff]
    %v7022 = vld [vmem:[#allocation29 + $0x230] sm:$0xff]
    %v7023 = vld [vmem:[#allocation29 + $0x238] sm:$0xff]
    %v7024 = vld [vmem:[#allocation29 + $0x240] sm:$0xff]
    %v7025 = vld [vmem:[#allocation29 + $0x248] sm:$0xff]
    %v7026 = vld [vmem:[#allocation29 + $0x250] sm:$0xff]
    %v7027 = vld [vmem:[#allocation29 + $0x258] sm:$0xff]
    %v7028 = vld [vmem:[#allocation29 + $0x260] sm:$0xff]
    %v7029 = vld [vmem:[#allocation29 + $0x268] sm:$0xff]
    %v7030 = vld [vmem:[#allocation29 + $0x270] sm:$0xff]
    %v7031 = vld [vmem:[#allocation29 + $0x278] sm:$0xff]
    %v7032 = vld [vmem:[#allocation29 + $0x280] sm:$0xff]
    %v7033 = vld [vmem:[#allocation29 + $0x288] sm:$0xff]
    %v7034 = vld [vmem:[#allocation29 + $0x290] sm:$0xff]
    %v7035 = vld [vmem:[#allocation29 + $0x298] sm:$0xff]
    %v7036 = vld [vmem:[#allocation29 + $0x2a0] sm:$0xff]
    %v7037 = vld [vmem:[#allocation29 + $0x2a8] sm:$0xff]
    %v7038 = vld [vmem:[#allocation29 + $0x2b0] sm:$0xff]
    %v7039 = vld [vmem:[#allocation29 + $0x2b8] sm:$0xff]
    %v7040 = vld [vmem:[#allocation29 + $0x2c0] sm:$0xff]
    %v7041 = vld [vmem:[#allocation29 + $0x2c8] sm:$0xff]
    %v7042 = vld [vmem:[#allocation29 + $0x2d0] sm:$0xff]
    %v7043 = vld [vmem:[#allocation29 + $0x2d8] sm:$0xff]
    %v7044 = vld [vmem:[#allocation29 + $0x2e0] sm:$0xff]
    %v7045 = vld [vmem:[#allocation29 + $0x2e8] sm:$0xff]
    %v7046 = vld [vmem:[#allocation29 + $0x2f0] sm:$0xff]
    %v7047 = vld [vmem:[#allocation29 + $0x2f8] sm:$0xff]
    %v7048 = vld [vmem:[#allocation29 + $0x300] sm:$0xff]
    %v7049 = vld [vmem:[#allocation29 + $0x308] sm:$0xff]
    %v7050 = vld [vmem:[#allocation29 + $0x310] sm:$0xff]
    %v7051 = vld [vmem:[#allocation29 + $0x318] sm:$0xff]
    %v7052 = vld [vmem:[#allocation29 + $0x320] sm:$0xff]
    %v7053 = vld [vmem:[#allocation29 + $0x328] sm:$0xff]
    %v7054 = vld [vmem:[#allocation29 + $0x330] sm:$0xff]
    %v7055 = vld [vmem:[#allocation29 + $0x338] sm:$0xff]
    %v7056 = vld [vmem:[#allocation29 + $0x340] sm:$0xff]
    %v7057 = vld [vmem:[#allocation29 + $0x348] sm:$0xff]
    %v7058 = vld [vmem:[#allocation29 + $0x350] sm:$0xff]
    %v7059 = vld [vmem:[#allocation29 + $0x358] sm:$0xff]
    %v7060 = vld [vmem:[#allocation29 + $0x360] sm:$0xff]
    %v7061 = vld [vmem:[#allocation29 + $0x368] sm:$0xff]
    %v7062 = vld [vmem:[#allocation29 + $0x370] sm:$0xff]
    %v7063 = vld [vmem:[#allocation29 + $0x378] sm:$0xff]
    %v7064 = vld [vmem:[#allocation29 + $0x380] sm:$0xff]
    %v7065 = vld [vmem:[#allocation29 + $0x388] sm:$0xff]
    %v7066 = vld [vmem:[#allocation29 + $0x390] sm:$0xff]
    %v7067 = vld [vmem:[#allocation29 + $0x398] sm:$0xff]
    %v7068 = vld [vmem:[#allocation29 + $0x3a0] sm:$0xff]
    %v7069 = vld [vmem:[#allocation29 + $0x3a8] sm:$0xff]
    %v7070 = vld [vmem:[#allocation29 + $0x3b0] sm:$0xff]
    %v7071 = vld [vmem:[#allocation29 + $0x3b8] sm:$0xff]
    %v7072 = vld [vmem:[#allocation29 + $0x3c0] sm:$0xff]
    %v7073 = vld [vmem:[#allocation29 + $0x3c8] sm:$0xff]
    %v7074 = vld [vmem:[#allocation29 + $0x3d0] sm:$0xff]
    %v7075 = vld [vmem:[#allocation29 + $0x3d8] sm:$0xff]
    %v7076 = vld [vmem:[#allocation29 + $0x3e0] sm:$0xff]
    %v7077 = vld [vmem:[#allocation29 + $0x3e8] sm:$0xff]
    %v7078 = vld [vmem:[#allocation29 + $0x3f0] sm:$0xff]
    %v7079 = vld [vmem:[#allocation29 + $0x3f8] sm:$0xff]
    %v7080 = vld [vmem:[#allocation31] sm:$0xff]
    %v7081 = vld [vmem:[#allocation31 + $0x8] sm:$0xff]
    %v7082 = vld [vmem:[#allocation31 + $0x10] sm:$0xff]
    %v7083 = vld [vmem:[#allocation31 + $0x18] sm:$0xff]
    %v7084 = vld [vmem:[#allocation31 + $0x20] sm:$0xff]
    %v7085 = vld [vmem:[#allocation31 + $0x28] sm:$0xff]
    %v7086 = vld [vmem:[#allocation31 + $0x30] sm:$0xff]
    %v7087 = vld [vmem:[#allocation31 + $0x38] sm:$0xff]
    %v7088 = vld [vmem:[#allocation31 + $0x40] sm:$0xff]
    %v7089 = vld [vmem:[#allocation31 + $0x48] sm:$0xff]
    %v7090 = vld [vmem:[#allocation31 + $0x50] sm:$0xff]
    %v7091 = vld [vmem:[#allocation31 + $0x58] sm:$0xff]
    %v7092 = vld [vmem:[#allocation31 + $0x60] sm:$0xff]
    %v7093 = vld [vmem:[#allocation31 + $0x68] sm:$0xff]
    %v7094 = vld [vmem:[#allocation31 + $0x70] sm:$0xff]
    %v7095 = vld [vmem:[#allocation31 + $0x78] sm:$0xff]
    %v7096 = vld [vmem:[#allocation31 + $0x80] sm:$0xff]
    %v7097 = vld [vmem:[#allocation31 + $0x88] sm:$0xff]
    %v7098 = vld [vmem:[#allocation31 + $0x90] sm:$0xff]
    %v7099 = vld [vmem:[#allocation31 + $0x98] sm:$0xff]
    %v7100 = vld [vmem:[#allocation31 + $0xa0] sm:$0xff]
    %v7101 = vld [vmem:[#allocation31 + $0xa8] sm:$0xff]
    %v7102 = vld [vmem:[#allocation31 + $0xb0] sm:$0xff]
    %v7103 = vld [vmem:[#allocation31 + $0xb8] sm:$0xff]
    %v7104 = vld [vmem:[#allocation31 + $0xc0] sm:$0xff]
    %v7105 = vld [vmem:[#allocation31 + $0xc8] sm:$0xff]
    %v7106 = vld [vmem:[#allocation31 + $0xd0] sm:$0xff]
    %v7107 = vld [vmem:[#allocation31 + $0xd8] sm:$0xff]
    %v7108 = vld [vmem:[#allocation31 + $0xe0] sm:$0xff]
    %v7109 = vld [vmem:[#allocation31 + $0xe8] sm:$0xff]
    %v7110 = vld [vmem:[#allocation31 + $0xf0] sm:$0xff]
    %v7111 = vld [vmem:[#allocation31 + $0xf8] sm:$0xff]
    %v7112 = vld [vmem:[#allocation31 + $0x100] sm:$0xff]
    %v7113 = vld [vmem:[#allocation31 + $0x108] sm:$0xff]
    %v7114 = vld [vmem:[#allocation31 + $0x110] sm:$0xff]
    %v7115 = vld [vmem:[#allocation31 + $0x118] sm:$0xff]
    %v7116 = vld [vmem:[#allocation31 + $0x120] sm:$0xff]
    %v7117 = vld [vmem:[#allocation31 + $0x128] sm:$0xff]
    %v7118 = vld [vmem:[#allocation31 + $0x130] sm:$0xff]
    %v7119 = vld [vmem:[#allocation31 + $0x138] sm:$0xff]
    %v7120 = vld [vmem:[#allocation31 + $0x140] sm:$0xff]
    %v7121 = vld [vmem:[#allocation31 + $0x148] sm:$0xff]
    %v7122 = vld [vmem:[#allocation31 + $0x150] sm:$0xff]
    %v7123 = vld [vmem:[#allocation31 + $0x158] sm:$0xff]
    %v7124 = vld [vmem:[#allocation31 + $0x160] sm:$0xff]
    %v7125 = vld [vmem:[#allocation31 + $0x168] sm:$0xff]
    %v7126 = vld [vmem:[#allocation31 + $0x170] sm:$0xff]
    %v7127 = vld [vmem:[#allocation31 + $0x178] sm:$0xff]
    %v7128 = vld [vmem:[#allocation31 + $0x180] sm:$0xff]
    %v7129 = vld [vmem:[#allocation31 + $0x188] sm:$0xff]
    %v7130 = vld [vmem:[#allocation31 + $0x190] sm:$0xff]
    %v7131 = vld [vmem:[#allocation31 + $0x198] sm:$0xff]
    %v7132 = vld [vmem:[#allocation31 + $0x1a0] sm:$0xff]
    %v7133 = vld [vmem:[#allocation31 + $0x1a8] sm:$0xff]
    %v7134 = vld [vmem:[#allocation31 + $0x1b0] sm:$0xff]
    %v7135 = vld [vmem:[#allocation31 + $0x1b8] sm:$0xff]
    %v7136 = vld [vmem:[#allocation31 + $0x1c0] sm:$0xff]
    %v7137 = vld [vmem:[#allocation31 + $0x1c8] sm:$0xff]
    %v7138 = vld [vmem:[#allocation31 + $0x1d0] sm:$0xff]
    %v7139 = vld [vmem:[#allocation31 + $0x1d8] sm:$0xff]
    %v7140 = vld [vmem:[#allocation31 + $0x1e0] sm:$0xff]
    %v7141 = vld [vmem:[#allocation31 + $0x1e8] sm:$0xff]
    %v7142 = vld [vmem:[#allocation31 + $0x1f0] sm:$0xff]
    %v7143 = vld [vmem:[#allocation31 + $0x1f8] sm:$0xff]
    %v7144 = vld [vmem:[#allocation31 + $0x200] sm:$0xff]
    %v7145 = vld [vmem:[#allocation31 + $0x208] sm:$0xff]
    %v7146 = vld [vmem:[#allocation31 + $0x210] sm:$0xff]
    %v7147 = vld [vmem:[#allocation31 + $0x218] sm:$0xff]
    %v7148 = vld [vmem:[#allocation31 + $0x220] sm:$0xff]
    %v7149 = vld [vmem:[#allocation31 + $0x228] sm:$0xff]
    %v7150 = vld [vmem:[#allocation31 + $0x230] sm:$0xff]
    %v7151 = vld [vmem:[#allocation31 + $0x238] sm:$0xff]
    %v7152 = vld [vmem:[#allocation31 + $0x240] sm:$0xff]
    %v7153 = vld [vmem:[#allocation31 + $0x248] sm:$0xff]
    %v7154 = vld [vmem:[#allocation31 + $0x250] sm:$0xff]
    %v7155 = vld [vmem:[#allocation31 + $0x258] sm:$0xff]
    %v7156 = vld [vmem:[#allocation31 + $0x260] sm:$0xff]
    %v7157 = vld [vmem:[#allocation31 + $0x268] sm:$0xff]
    %v7158 = vld [vmem:[#allocation31 + $0x270] sm:$0xff]
    %v7159 = vld [vmem:[#allocation31 + $0x278] sm:$0xff]
    %v7160 = vld [vmem:[#allocation31 + $0x280] sm:$0xff]
    %v7161 = vld [vmem:[#allocation31 + $0x288] sm:$0xff]
    %v7162 = vld [vmem:[#allocation31 + $0x290] sm:$0xff]
    %v7163 = vld [vmem:[#allocation31 + $0x298] sm:$0xff]
    %v7164 = vld [vmem:[#allocation31 + $0x2a0] sm:$0xff]
    %v7165 = vld [vmem:[#allocation31 + $0x2a8] sm:$0xff]
    %v7166 = vld [vmem:[#allocation31 + $0x2b0] sm:$0xff]
    %v7167 = vld [vmem:[#allocation31 + $0x2b8] sm:$0xff]
    %v7168 = vld [vmem:[#allocation31 + $0x2c0] sm:$0xff]
    %v7169 = vld [vmem:[#allocation31 + $0x2c8] sm:$0xff]
    %v7170 = vld [vmem:[#allocation31 + $0x2d0] sm:$0xff]
    %v7171 = vld [vmem:[#allocation31 + $0x2d8] sm:$0xff]
    %v7172 = vld [vmem:[#allocation31 + $0x2e0] sm:$0xff]
    %v7173 = vld [vmem:[#allocation31 + $0x2e8] sm:$0xff]
    %v7174 = vld [vmem:[#allocation31 + $0x2f0] sm:$0xff]
    %v7175 = vld [vmem:[#allocation31 + $0x2f8] sm:$0xff]
    %v7176 = vld [vmem:[#allocation31 + $0x300] sm:$0xff]
    %v7177 = vld [vmem:[#allocation31 + $0x308] sm:$0xff]
    %v7178 = vld [vmem:[#allocation31 + $0x310] sm:$0xff]
    %v7179 = vld [vmem:[#allocation31 + $0x318] sm:$0xff]
    %v7180 = vld [vmem:[#allocation31 + $0x320] sm:$0xff]
    %v7181 = vld [vmem:[#allocation31 + $0x328] sm:$0xff]
    %v7182 = vld [vmem:[#allocation31 + $0x330] sm:$0xff]
    %v7183 = vld [vmem:[#allocation31 + $0x338] sm:$0xff]
    %v7184 = vld [vmem:[#allocation31 + $0x340] sm:$0xff]
    %v7185 = vld [vmem:[#allocation31 + $0x348] sm:$0xff]
    %v7186 = vld [vmem:[#allocation31 + $0x350] sm:$0xff]
    %v7187 = vld [vmem:[#allocation31 + $0x358] sm:$0xff]
    %v7188 = vld [vmem:[#allocation31 + $0x360] sm:$0xff]
    %v7189 = vld [vmem:[#allocation31 + $0x368] sm:$0xff]
    %v7190 = vld [vmem:[#allocation31 + $0x370] sm:$0xff]
    %v7191 = vld [vmem:[#allocation31 + $0x378] sm:$0xff]
    %v7192 = vld [vmem:[#allocation31 + $0x380] sm:$0xff]
    %v7193 = vld [vmem:[#allocation31 + $0x388] sm:$0xff]
    %v7194 = vld [vmem:[#allocation31 + $0x390] sm:$0xff]
    %v7195 = vld [vmem:[#allocation31 + $0x398] sm:$0xff]
    %v7196 = vld [vmem:[#allocation31 + $0x3a0] sm:$0xff]
    %v7197 = vld [vmem:[#allocation31 + $0x3a8] sm:$0xff]
    %v7198 = vld [vmem:[#allocation31 + $0x3b0] sm:$0xff]
    %v7199 = vld [vmem:[#allocation31 + $0x3b8] sm:$0xff]
    %v7200 = vld [vmem:[#allocation31 + $0x3c0] sm:$0xff]
    %v7201 = vld [vmem:[#allocation31 + $0x3c8] sm:$0xff]
    %v7202 = vld [vmem:[#allocation31 + $0x3d0] sm:$0xff]
    %v7203 = vld [vmem:[#allocation31 + $0x3d8] sm:$0xff]
    %v7204 = vld [vmem:[#allocation31 + $0x3e0] sm:$0xff]
    %v7205 = vld [vmem:[#allocation31 + $0x3e8] sm:$0xff]
    %v7206 = vld [vmem:[#allocation31 + $0x3f0] sm:$0xff]
    %v7207 = vld [vmem:[#allocation31 + $0x3f8] sm:$0xff]
    %7208 = vmatprep.subr.mxu0 %v7141
    %7209 = vmatpush1.msra.mxu0 %v7140
    %7210 = vmatprep.subr.mxu0 %v7137
    %7211 = vmatpush1.msra.mxu0 %v7136
    %7212 = vmatprep.subr.mxu0 %v7133
    %7213 = vmatpush1.msra.mxu0 %v7132
    %7214 = vmatprep.subr.mxu0 %v7129
    %7215 = vmatpush1.msra.mxu0 %v7128
    %7216 = vmatprep.subr.mxu0 %v7125
    %7217 = vmatpush1.msra.mxu0 %v7124
    %7218 = vmatprep.subr.mxu0 %v7121
    %7219 = vmatpush1.msra.mxu0 %v7120
    %7220 = vmatprep.subr.mxu0 %v7117
    %7221 = vmatpush1.msra.mxu0 %v7116
    %7222 = vmatprep.subr.mxu0 %v7113
    %7223 = vmatpush1.msra.mxu0 %v7112
    %7224 = vmatprep.subr.mxu0 %v7109
    %7225 = vmatpush1.msra.mxu0 %v7108
    %7226 = vmatprep.subr.mxu0 %v7105
    %7227 = vmatpush1.msra.mxu0 %v7104
    %7228 = vmatprep.subr.mxu0 %v7101
    %7229 = vmatpush1.msra.mxu0 %v7100
    %7230 = vmatprep.subr.mxu0 %v7097
    %7231 = vmatpush1.msra.mxu0 %v7096
    %7232 = vmatprep.subr.mxu0 %v7093
    %7233 = vmatpush1.msra.mxu0 %v7092
    %7234 = vmatprep.subr.mxu0 %v7089
    %7235 = vmatpush1.msra.mxu0 %v7088
    %7236 = vmatprep.subr.mxu0 %v7085
    %7237 = vmatpush1.msra.mxu0 %v7084
    %7238 = vmatprep.subr.mxu0 %v7081
    %7239 = vmatpush1.msra.mxu0 %v7080
    %7240 = vmatprep.subr.mxu0 %v7205
    %7241 = vmatpush2.msra.mxu0 %v7204
    %7242 = vmatprep.subr.mxu0 %v7201
    %7243 = vmatpush2.msra.mxu0 %v7200
    %7244 = vmatprep.subr.mxu0 %v7197
    %7245 = vmatpush2.msra.mxu0 %v7196
    %7246 = vmatprep.subr.mxu0 %v7193
    %7247 = vmatpush2.msra.mxu0 %v7192
    %7248 = vmatprep.subr.mxu0 %v7189
    %7249 = vmatpush2.msra.mxu0 %v7188
    %7250 = vmatprep.subr.mxu0 %v7185
    %7251 = vmatpush2.msra.mxu0 %v7184
    %7252 = vmatprep.subr.mxu0 %v7181
    %7253 = vmatpush2.msra.mxu0 %v7180
    %7254 = vmatprep.subr.mxu0 %v7177
    %7255 = vmatpush2.msra.mxu0 %v7176
    %7256 = vmatprep.subr.mxu0 %v7173
    %7257 = vmatpush2.msra.mxu0 %v7172
    %7258 = vmatprep.subr.mxu0 %v7169
    %7259 = vmatpush2.msra.mxu0 %v7168
    %7260 = vmatprep.subr.mxu0 %v7165
    %7261 = vmatpush2.msra.mxu0 %v7164
    %7262 = vmatprep.subr.mxu0 %v7161
    %7263 = vmatpush2.msra.mxu0 %v7160
    %7264 = vmatprep.subr.mxu0 %v7157
    %7265 = vmatpush2.msra.mxu0 %v7156
    %7266 = vmatprep.subr.mxu0 %v7153
    %7267 = vmatpush2.msra.mxu0 %v7152
    %7268 = vmatprep.subr.mxu0 %v7149
    %7269 = vmatpush2.msra.mxu0 %v7148
    %7270 = vmatprep.subr.mxu0 %v7145
    %7271 = vmatpush2.msra.mxu0 %v7144
    %7272 = vmatprep.mubr.f32.mxu0 %v6951
    %7273 = vmatmul.mubr.f32.gmra.mxu0 %v6950
    %v7274 = vpop.f32.mrf.mxu0
    %v7275 = vadd.f32 0.0, %v7274
    %v7276 = vpop.f32.mrf.mxu0
    %v7277 = vadd.f32 0.0, %v7276
    %7278 = vdwg.mxu0
    %7279 = vmatprep.subr.mxu0 %v7143
    %7280 = vmatpush1.msra.mxu0 %v7142
    %7281 = vmatprep.subr.mxu0 %v7139
    %7282 = vmatpush1.msra.mxu0 %v7138
    %7283 = vmatprep.subr.mxu0 %v7135
    %7284 = vmatpush1.msra.mxu0 %v7134
    %7285 = vmatprep.subr.mxu0 %v7131
    %7286 = vmatpush1.msra.mxu0 %v7130
    %7287 = vmatprep.subr.mxu0 %v7127
    %7288 = vmatpush1.msra.mxu0 %v7126
    %7289 = vmatprep.subr.mxu0 %v7123
    %7290 = vmatpush1.msra.mxu0 %v7122
    %7291 = vmatprep.subr.mxu0 %v7119
    %7292 = vmatpush1.msra.mxu0 %v7118
    %7293 = vmatprep.subr.mxu0 %v7115
    %7294 = vmatpush1.msra.mxu0 %v7114
    %7295 = vmatprep.subr.mxu0 %v7111
    %7296 = vmatpush1.msra.mxu0 %v7110
    %7297 = vmatprep.subr.mxu0 %v7107
    %7298 = vmatpush1.msra.mxu0 %v7106
    %7299 = vmatprep.subr.mxu0 %v7103
    %7300 = vmatpush1.msra.mxu0 %v7102
    %7301 = vmatprep.subr.mxu0 %v7099
    %7302 = vmatpush1.msra.mxu0 %v7098
    %7303 = vmatprep.subr.mxu0 %v7095
    %7304 = vmatpush1.msra.mxu0 %v7094
    %7305 = vmatprep.subr.mxu0 %v7091
    %7306 = vmatpush1.msra.mxu0 %v7090
    %7307 = vmatprep.subr.mxu0 %v7087
    %7308 = vmatpush1.msra.mxu0 %v7086
    %7309 = vmatprep.subr.mxu0 %v7083
    %7310 = vmatpush1.msra.mxu0 %v7082
    %7311 = vmatprep.subr.mxu0 %v7207
    %7312 = vmatpush2.msra.mxu0 %v7206
    %7313 = vmatprep.subr.mxu0 %v7203
    %7314 = vmatpush2.msra.mxu0 %v7202
    %7315 = vmatprep.subr.mxu0 %v7199
    %7316 = vmatpush2.msra.mxu0 %v7198
    %7317 = vmatprep.subr.mxu0 %v7195
    %7318 = vmatpush2.msra.mxu0 %v7194
    %7319 = vmatprep.subr.mxu0 %v7191
    %7320 = vmatpush2.msra.mxu0 %v7190
    %7321 = vmatprep.subr.mxu0 %v7187
    %7322 = vmatpush2.msra.mxu0 %v7186
    %7323 = vmatprep.subr.mxu0 %v7183
    %7324 = vmatpush2.msra.mxu0 %v7182
    %7325 = vmatprep.subr.mxu0 %v7179
    %7326 = vmatpush2.msra.mxu0 %v7178
    %7327 = vmatprep.subr.mxu0 %v7175
    %7328 = vmatpush2.msra.mxu0 %v7174
    %7329 = vmatprep.subr.mxu0 %v7171
    %7330 = vmatpush2.msra.mxu0 %v7170
    %7331 = vmatprep.subr.mxu0 %v7167
    %7332 = vmatpush2.msra.mxu0 %v7166
    %7333 = vmatprep.subr.mxu0 %v7163
    %7334 = vmatpush2.msra.mxu0 %v7162
    %7335 = vmatprep.subr.mxu0 %v7159
    %7336 = vmatpush2.msra.mxu0 %v7158
    %7337 = vmatprep.subr.mxu0 %v7155
    %7338 = vmatpush2.msra.mxu0 %v7154
    %7339 = vmatprep.subr.mxu0 %v7151
    %7340 = vmatpush2.msra.mxu0 %v7150
    %7341 = vmatprep.subr.mxu0 %v7147
    %7342 = vmatpush2.msra.mxu0 %v7146
    %7343 = vmatprep.mubr.f32.mxu0 %v6951
    %7344 = vmatmul.mubr.f32.gmra.mxu0 %v6950
    %v7345 = vpop.f32.mrf.mxu0
    %v7346 = vadd.f32 0.0, %v7345
    %v7347 = vpop.f32.mrf.mxu0
    %v7348 = vadd.f32 0.0, %v7347
    %7349 = vdwg.mxu0
    %7350 = vmatprep.subr.mxu0 %v7013
    %7351 = vmatpush1.msra.mxu0 %v7012
    %7352 = vmatprep.subr.mxu0 %v7009
    %7353 = vmatpush1.msra.mxu0 %v7008
    %7354 = vmatprep.subr.mxu0 %v7005
    %7355 = vmatpush1.msra.mxu0 %v7004
    %7356 = vmatprep.subr.mxu0 %v7001
    %7357 = vmatpush1.msra.mxu0 %v7000
    %7358 = vmatprep.subr.mxu0 %v6997
    %7359 = vmatpush1.msra.mxu0 %v6996
    %7360 = vmatprep.subr.mxu0 %v6993
    %7361 = vmatpush1.msra.mxu0 %v6992
    %7362 = vmatprep.subr.mxu0 %v6989
    %7363 = vmatpush1.msra.mxu0 %v6988
    %7364 = vmatprep.subr.mxu0 %v6985
    %7365 = vmatpush1.msra.mxu0 %v6984
    %7366 = vmatprep.subr.mxu0 %v6981
    %7367 = vmatpush1.msra.mxu0 %v6980
    %7368 = vmatprep.subr.mxu0 %v6977
    %7369 = vmatpush1.msra.mxu0 %v6976
    %7370 = vmatprep.subr.mxu0 %v6973
    %7371 = vmatpush1.msra.mxu0 %v6972
    %7372 = vmatprep.subr.mxu0 %v6969
    %7373 = vmatpush1.msra.mxu0 %v6968
    %7374 = vmatprep.subr.mxu0 %v6965
    %7375 = vmatpush1.msra.mxu0 %v6964
    %7376 = vmatprep.subr.mxu0 %v6961
    %7377 = vmatpush1.msra.mxu0 %v6960
    %7378 = vmatprep.subr.mxu0 %v6957
    %7379 = vmatpush1.msra.mxu0 %v6956
    %7380 = vmatprep.subr.mxu0 %v6953
    %7381 = vmatpush1.msra.mxu0 %v6952
    %7382 = vmatprep.subr.mxu0 %v7077
    %7383 = vmatpush2.msra.mxu0 %v7076
    %7384 = vmatprep.subr.mxu0 %v7073
    %7385 = vmatpush2.msra.mxu0 %v7072
    %7386 = vmatprep.subr.mxu0 %v7069
    %7387 = vmatpush2.msra.mxu0 %v7068
    %7388 = vmatprep.subr.mxu0 %v7065
    %7389 = vmatpush2.msra.mxu0 %v7064
    %7390 = vmatprep.subr.mxu0 %v7061
    %7391 = vmatpush2.msra.mxu0 %v7060
    %7392 = vmatprep.subr.mxu0 %v7057
    %7393 = vmatpush2.msra.mxu0 %v7056
    %7394 = vmatprep.subr.mxu0 %v7053
    %7395 = vmatpush2.msra.mxu0 %v7052
    %7396 = vmatprep.subr.mxu0 %v7049
    %7397 = vmatpush2.msra.mxu0 %v7048
    %7398 = vmatprep.subr.mxu0 %v7045
    %7399 = vmatpush2.msra.mxu0 %v7044
    %7400 = vmatprep.subr.mxu0 %v7041
    %7401 = vmatpush2.msra.mxu0 %v7040
    %7402 = vmatprep.subr.mxu0 %v7037
    %7403 = vmatpush2.msra.mxu0 %v7036
    %7404 = vmatprep.subr.mxu0 %v7033
    %7405 = vmatpush2.msra.mxu0 %v7032
    %7406 = vmatprep.subr.mxu0 %v7029
    %7407 = vmatpush2.msra.mxu0 %v7028
    %7408 = vmatprep.subr.mxu0 %v7025
    %7409 = vmatpush2.msra.mxu0 %v7024
    %7410 = vmatprep.subr.mxu0 %v7021
    %7411 = vmatpush2.msra.mxu0 %v7020
    %7412 = vmatprep.subr.mxu0 %v7017
    %7413 = vmatpush2.msra.mxu0 %v7016
    %7414 = vmatprep.mubr.f32.mxu0 %v6467
    %7415 = vmatmul.mubr.f32.gmra.mxu0 %v6466
    %v7416 = vpop.f32.mrf.mxu0
    %v7417 = vadd.f32 %v7275, %v7416
    %v7418 = vpop.f32.mrf.mxu0
    %v7419 = vadd.f32 %v7277, %v7418
    %7420 = vdwg.mxu0
    %7421 = vmatprep.subr.mxu0 %v7015
    %7422 = vmatpush1.msra.mxu0 %v7014
    %7423 = vmatprep.subr.mxu0 %v7011
    %7424 = vmatpush1.msra.mxu0 %v7010
    %7425 = vmatprep.subr.mxu0 %v7007
    %7426 = vmatpush1.msra.mxu0 %v7006
    %7427 = vmatprep.subr.mxu0 %v7003
    %7428 = vmatpush1.msra.mxu0 %v7002
    %7429 = vmatprep.subr.mxu0 %v6999
    %7430 = vmatpush1.msra.mxu0 %v6998
    %7431 = vmatprep.subr.mxu0 %v6995
    %7432 = vmatpush1.msra.mxu0 %v6994
    %7433 = vmatprep.subr.mxu0 %v6991
    %7434 = vmatpush1.msra.mxu0 %v6990
    %7435 = vmatprep.subr.mxu0 %v6987
    %7436 = vmatpush1.msra.mxu0 %v6986
    %7437 = vmatprep.subr.mxu0 %v6983
    %7438 = vmatpush1.msra.mxu0 %v6982
    %7439 = vmatprep.subr.mxu0 %v6979
    %7440 = vmatpush1.msra.mxu0 %v6978
    %7441 = vmatprep.subr.mxu0 %v6975
    %7442 = vmatpush1.msra.mxu0 %v6974
    %7443 = vmatprep.subr.mxu0 %v6971
    %7444 = vmatpush1.msra.mxu0 %v6970
    %7445 = vmatprep.subr.mxu0 %v6967
    %7446 = vmatpush1.msra.mxu0 %v6966
    %7447 = vmatprep.subr.mxu0 %v6963
    %7448 = vmatpush1.msra.mxu0 %v6962
    %7449 = vmatprep.subr.mxu0 %v6959
    %7450 = vmatpush1.msra.mxu0 %v6958
    %7451 = vmatprep.subr.mxu0 %v6955
    %7452 = vmatpush1.msra.mxu0 %v6954
    %7453 = vmatprep.subr.mxu0 %v7079
    %7454 = vmatpush2.msra.mxu0 %v7078
    %7455 = vmatprep.subr.mxu0 %v7075
    %7456 = vmatpush2.msra.mxu0 %v7074
    %7457 = vmatprep.subr.mxu0 %v7071
    %7458 = vmatpush2.msra.mxu0 %v7070
    %7459 = vmatprep.subr.mxu0 %v7067
    %7460 = vmatpush2.msra.mxu0 %v7066
    %7461 = vmatprep.subr.mxu0 %v7063
    %7462 = vmatpush2.msra.mxu0 %v7062
    %7463 = vmatprep.subr.mxu0 %v7059
    %7464 = vmatpush2.msra.mxu0 %v7058
    %7465 = vmatprep.subr.mxu0 %v7055
    %7466 = vmatpush2.msra.mxu0 %v7054
    %7467 = vmatprep.subr.mxu0 %v7051
    %7468 = vmatpush2.msra.mxu0 %v7050
    %7469 = vmatprep.subr.mxu0 %v7047
    %7470 = vmatpush2.msra.mxu0 %v7046
    %7471 = vmatprep.subr.mxu0 %v7043
    %7472 = vmatpush2.msra.mxu0 %v7042
    %7473 = vmatprep.subr.mxu0 %v7039
    %7474 = vmatpush2.msra.mxu0 %v7038
    %7475 = vmatprep.subr.mxu0 %v7035
    %7476 = vmatpush2.msra.mxu0 %v7034
    %7477 = vmatprep.subr.mxu0 %v7031
    %7478 = vmatpush2.msra.mxu0 %v7030
    %7479 = vmatprep.subr.mxu0 %v7027
    %7480 = vmatpush2.msra.mxu0 %v7026
    %7481 = vmatprep.subr.mxu0 %v7023
    %7482 = vmatpush2.msra.mxu0 %v7022
    %7483 = vmatprep.subr.mxu0 %v7019
    %7484 = vmatpush2.msra.mxu0 %v7018
    %7485 = vmatprep.mubr.f32.mxu0 %v6467
    %7486 = vmatmul.mubr.f32.gmra.mxu0 %v6466
    %v7487 = vpop.f32.mrf.mxu0
    %v7488 = vadd.f32 %v7346, %v7487
    %v7489 = vpop.f32.mrf.mxu0
    %v7490 = vadd.f32 %v7348, %v7489
    %7491 = vdwg.mxu0
    %v7492 = vld [vmem:[%s83] sm:$0xf]
    %v7494 = vlaneseq
    %v7495 = vshrl.u32 %v7494, 7
    %v7496 = vsub.s32 0, %v7495
    %v7497 = vrot.slane %v7492, %v7496
    %v7498 = vlaneseq
    %v7499 = vshrl.u32 %v7498, 7
    %v7500 = vsub.s32 1, %v7499
    %v7501 = vrot.slane %v7492, %v7500
    %v7502 = vlaneseq
    %v7503 = vshrl.u32 %v7502, 7
    %v7504 = vsub.s32 2, %v7503
    %v7505 = vrot.slane %v7492, %v7504
    %v7506 = vlaneseq
    %v7507 = vshrl.u32 %v7506, 7
    %v7508 = vsub.s32 3, %v7507
    %v7509 = vrot.slane %v7492, %v7508
    %v7514 = vadd.f32 %v7417, %v7497
    %v7515 = vadd.f32 %v7419, %v7501
    %v7516 = vadd.f32 %v7488, %v7505
    %v7517 = vadd.f32 %v7490, %v7509
    %vm7518 = vcmp.gt.f32.partialorder %v7514, 0.0
    %vm7519 = vcmp.gt.f32.partialorder %v7515, 0.0
    %vm7520 = vcmp.gt.f32.partialorder %v7516, 0.0
    %vm7521 = vcmp.gt.f32.partialorder %v7517, 0.0
    %v7522 = vmul.f32 %v7514, 0.01
    %v7523 = vmul.f32 %v7515, 0.01
    %v7524 = vmul.f32 %v7516, 0.01
    %v7525 = vmul.f32 %v7517, 0.01
    %v7526 = vsel %vm7518, %v7514, %v7522
    %v7527 = vsel %vm7519, %v7515, %v7523
    %v7528 = vsel %vm7520, %v7516, %v7524
    %v7529 = vsel %vm7521, %v7517, %v7525
    %v7530 = vld [vmem:[#allocation32] sm:$0xff]
    %v7531 = vld [vmem:[#allocation32 + $0x8] sm:$0xff]
    %v7532 = vld [vmem:[#allocation32 + $0x10] sm:$0xff]
    %v7533 = vld [vmem:[#allocation32 + $0x18] sm:$0xff]
    %v7534 = vld [vmem:[#allocation32 + $0x20] sm:$0xff]
    %v7535 = vld [vmem:[#allocation32 + $0x28] sm:$0xff]
    %v7536 = vld [vmem:[#allocation32 + $0x30] sm:$0xff]
    %v7537 = vld [vmem:[#allocation32 + $0x38] sm:$0xff]
    %v7538 = vld [vmem:[#allocation32 + $0x40] sm:$0xff]
    %v7539 = vld [vmem:[#allocation32 + $0x48] sm:$0xff]
    %v7540 = vld [vmem:[#allocation32 + $0x50] sm:$0xff]
    %v7541 = vld [vmem:[#allocation32 + $0x58] sm:$0xff]
    %v7542 = vld [vmem:[#allocation32 + $0x60] sm:$0xff]
    %v7543 = vld [vmem:[#allocation32 + $0x68] sm:$0xff]
    %v7544 = vld [vmem:[#allocation32 + $0x70] sm:$0xff]
    %v7545 = vld [vmem:[#allocation32 + $0x78] sm:$0xff]
    %v7546 = vld [vmem:[#allocation32 + $0x80] sm:$0xff]
    %v7547 = vld [vmem:[#allocation32 + $0x88] sm:$0xff]
    %v7548 = vld [vmem:[#allocation32 + $0x90] sm:$0xff]
    %v7549 = vld [vmem:[#allocation32 + $0x98] sm:$0xff]
    %v7550 = vld [vmem:[#allocation32 + $0xa0] sm:$0xff]
    %v7551 = vld [vmem:[#allocation32 + $0xa8] sm:$0xff]
    %v7552 = vld [vmem:[#allocation32 + $0xb0] sm:$0xff]
    %v7553 = vld [vmem:[#allocation32 + $0xb8] sm:$0xff]
    %v7554 = vld [vmem:[#allocation32 + $0xc0] sm:$0xff]
    %v7555 = vld [vmem:[#allocation32 + $0xc8] sm:$0xff]
    %v7556 = vld [vmem:[#allocation32 + $0xd0] sm:$0xff]
    %v7557 = vld [vmem:[#allocation32 + $0xd8] sm:$0xff]
    %v7558 = vld [vmem:[#allocation32 + $0xe0] sm:$0xff]
    %v7559 = vld [vmem:[#allocation32 + $0xe8] sm:$0xff]
    %v7560 = vld [vmem:[#allocation32 + $0xf0] sm:$0xff]
    %v7561 = vld [vmem:[#allocation32 + $0xf8] sm:$0xff]
    %v7562 = vld [vmem:[#allocation32 + $0x100] sm:$0xff]
    %v7563 = vld [vmem:[#allocation32 + $0x108] sm:$0xff]
    %v7564 = vld [vmem:[#allocation32 + $0x110] sm:$0xff]
    %v7565 = vld [vmem:[#allocation32 + $0x118] sm:$0xff]
    %v7566 = vld [vmem:[#allocation32 + $0x120] sm:$0xff]
    %v7567 = vld [vmem:[#allocation32 + $0x128] sm:$0xff]
    %v7568 = vld [vmem:[#allocation32 + $0x130] sm:$0xff]
    %v7569 = vld [vmem:[#allocation32 + $0x138] sm:$0xff]
    %v7570 = vld [vmem:[#allocation32 + $0x140] sm:$0xff]
    %v7571 = vld [vmem:[#allocation32 + $0x148] sm:$0xff]
    %v7572 = vld [vmem:[#allocation32 + $0x150] sm:$0xff]
    %v7573 = vld [vmem:[#allocation32 + $0x158] sm:$0xff]
    %v7574 = vld [vmem:[#allocation32 + $0x160] sm:$0xff]
    %v7575 = vld [vmem:[#allocation32 + $0x168] sm:$0xff]
    %v7576 = vld [vmem:[#allocation32 + $0x170] sm:$0xff]
    %v7577 = vld [vmem:[#allocation32 + $0x178] sm:$0xff]
    %v7578 = vld [vmem:[#allocation32 + $0x180] sm:$0xff]
    %v7579 = vld [vmem:[#allocation32 + $0x188] sm:$0xff]
    %v7580 = vld [vmem:[#allocation32 + $0x190] sm:$0xff]
    %v7581 = vld [vmem:[#allocation32 + $0x198] sm:$0xff]
    %v7582 = vld [vmem:[#allocation32 + $0x1a0] sm:$0xff]
    %v7583 = vld [vmem:[#allocation32 + $0x1a8] sm:$0xff]
    %v7584 = vld [vmem:[#allocation32 + $0x1b0] sm:$0xff]
    %v7585 = vld [vmem:[#allocation32 + $0x1b8] sm:$0xff]
    %v7586 = vld [vmem:[#allocation32 + $0x1c0] sm:$0xff]
    %v7587 = vld [vmem:[#allocation32 + $0x1c8] sm:$0xff]
    %v7588 = vld [vmem:[#allocation32 + $0x1d0] sm:$0xff]
    %v7589 = vld [vmem:[#allocation32 + $0x1d8] sm:$0xff]
    %v7590 = vld [vmem:[#allocation32 + $0x1e0] sm:$0xff]
    %v7591 = vld [vmem:[#allocation32 + $0x1e8] sm:$0xff]
    %v7592 = vld [vmem:[#allocation32 + $0x1f0] sm:$0xff]
    %v7593 = vld [vmem:[#allocation32 + $0x1f8] sm:$0xff]
    %v7594 = vld [vmem:[#allocation32 + $0x200] sm:$0xff]
    %v7595 = vld [vmem:[#allocation32 + $0x208] sm:$0xff]
    %v7596 = vld [vmem:[#allocation32 + $0x210] sm:$0xff]
    %v7597 = vld [vmem:[#allocation32 + $0x218] sm:$0xff]
    %v7598 = vld [vmem:[#allocation32 + $0x220] sm:$0xff]
    %v7599 = vld [vmem:[#allocation32 + $0x228] sm:$0xff]
    %v7600 = vld [vmem:[#allocation32 + $0x230] sm:$0xff]
    %v7601 = vld [vmem:[#allocation32 + $0x238] sm:$0xff]
    %v7602 = vld [vmem:[#allocation32 + $0x240] sm:$0xff]
    %v7603 = vld [vmem:[#allocation32 + $0x248] sm:$0xff]
    %v7604 = vld [vmem:[#allocation32 + $0x250] sm:$0xff]
    %v7605 = vld [vmem:[#allocation32 + $0x258] sm:$0xff]
    %v7606 = vld [vmem:[#allocation32 + $0x260] sm:$0xff]
    %v7607 = vld [vmem:[#allocation32 + $0x268] sm:$0xff]
    %v7608 = vld [vmem:[#allocation32 + $0x270] sm:$0xff]
    %v7609 = vld [vmem:[#allocation32 + $0x278] sm:$0xff]
    %v7610 = vld [vmem:[#allocation32 + $0x280] sm:$0xff]
    %v7611 = vld [vmem:[#allocation32 + $0x288] sm:$0xff]
    %v7612 = vld [vmem:[#allocation32 + $0x290] sm:$0xff]
    %v7613 = vld [vmem:[#allocation32 + $0x298] sm:$0xff]
    %v7614 = vld [vmem:[#allocation32 + $0x2a0] sm:$0xff]
    %v7615 = vld [vmem:[#allocation32 + $0x2a8] sm:$0xff]
    %v7616 = vld [vmem:[#allocation32 + $0x2b0] sm:$0xff]
    %v7617 = vld [vmem:[#allocation32 + $0x2b8] sm:$0xff]
    %v7618 = vld [vmem:[#allocation32 + $0x2c0] sm:$0xff]
    %v7619 = vld [vmem:[#allocation32 + $0x2c8] sm:$0xff]
    %v7620 = vld [vmem:[#allocation32 + $0x2d0] sm:$0xff]
    %v7621 = vld [vmem:[#allocation32 + $0x2d8] sm:$0xff]
    %v7622 = vld [vmem:[#allocation32 + $0x2e0] sm:$0xff]
    %v7623 = vld [vmem:[#allocation32 + $0x2e8] sm:$0xff]
    %v7624 = vld [vmem:[#allocation32 + $0x2f0] sm:$0xff]
    %v7625 = vld [vmem:[#allocation32 + $0x2f8] sm:$0xff]
    %v7626 = vld [vmem:[#allocation32 + $0x300] sm:$0xff]
    %v7627 = vld [vmem:[#allocation32 + $0x308] sm:$0xff]
    %v7628 = vld [vmem:[#allocation32 + $0x310] sm:$0xff]
    %v7629 = vld [vmem:[#allocation32 + $0x318] sm:$0xff]
    %v7630 = vld [vmem:[#allocation32 + $0x320] sm:$0xff]
    %v7631 = vld [vmem:[#allocation32 + $0x328] sm:$0xff]
    %v7632 = vld [vmem:[#allocation32 + $0x330] sm:$0xff]
    %v7633 = vld [vmem:[#allocation32 + $0x338] sm:$0xff]
    %v7634 = vld [vmem:[#allocation32 + $0x340] sm:$0xff]
    %v7635 = vld [vmem:[#allocation32 + $0x348] sm:$0xff]
    %v7636 = vld [vmem:[#allocation32 + $0x350] sm:$0xff]
    %v7637 = vld [vmem:[#allocation32 + $0x358] sm:$0xff]
    %v7638 = vld [vmem:[#allocation32 + $0x360] sm:$0xff]
    %v7639 = vld [vmem:[#allocation32 + $0x368] sm:$0xff]
    %v7640 = vld [vmem:[#allocation32 + $0x370] sm:$0xff]
    %v7641 = vld [vmem:[#allocation32 + $0x378] sm:$0xff]
    %v7642 = vld [vmem:[#allocation32 + $0x380] sm:$0xff]
    %v7643 = vld [vmem:[#allocation32 + $0x388] sm:$0xff]
    %v7644 = vld [vmem:[#allocation32 + $0x390] sm:$0xff]
    %v7645 = vld [vmem:[#allocation32 + $0x398] sm:$0xff]
    %v7646 = vld [vmem:[#allocation32 + $0x3a0] sm:$0xff]
    %v7647 = vld [vmem:[#allocation32 + $0x3a8] sm:$0xff]
    %v7648 = vld [vmem:[#allocation32 + $0x3b0] sm:$0xff]
    %v7649 = vld [vmem:[#allocation32 + $0x3b8] sm:$0xff]
    %v7650 = vld [vmem:[#allocation32 + $0x3c0] sm:$0xff]
    %v7651 = vld [vmem:[#allocation32 + $0x3c8] sm:$0xff]
    %v7652 = vld [vmem:[#allocation32 + $0x3d0] sm:$0xff]
    %v7653 = vld [vmem:[#allocation32 + $0x3d8] sm:$0xff]
    %v7654 = vld [vmem:[#allocation32 + $0x3e0] sm:$0xff]
    %v7655 = vld [vmem:[#allocation32 + $0x3e8] sm:$0xff]
    %v7656 = vld [vmem:[#allocation32 + $0x3f0] sm:$0xff]
    %v7657 = vld [vmem:[#allocation32 + $0x3f8] sm:$0xff]
    %v7658 = vld [vmem:[%s87] sm:$0x3]
    %v7660 = vlaneseq
    %v7661 = vshrl.u32 %v7660, 7
    %v7662 = vsub.s32 0, %v7661
    %v7663 = vrot.slane %v7658, %v7662
    %v7664 = vlaneseq
    %v7665 = vshrl.u32 %v7664, 7
    %v7666 = vsub.s32 1, %v7665
    %v7667 = vrot.slane %v7658, %v7666
    %7670 = vmatprep.subr.mxu0 %v7561
    %7671 = vmatpush1.msra.mxu0 %v7560
    %7672 = vmatprep.subr.mxu0 %v7559
    %7673 = vmatpush1.msra.mxu0 %v7558
    %7674 = vmatprep.subr.mxu0 %v7557
    %7675 = vmatpush1.msra.mxu0 %v7556
    %7676 = vmatprep.subr.mxu0 %v7555
    %7677 = vmatpush1.msra.mxu0 %v7554
    %7678 = vmatprep.subr.mxu0 %v7553
    %7679 = vmatpush1.msra.mxu0 %v7552
    %7680 = vmatprep.subr.mxu0 %v7551
    %7681 = vmatpush1.msra.mxu0 %v7550
    %7682 = vmatprep.subr.mxu0 %v7549
    %7683 = vmatpush1.msra.mxu0 %v7548
    %7684 = vmatprep.subr.mxu0 %v7547
    %7685 = vmatpush1.msra.mxu0 %v7546
    %7686 = vmatprep.subr.mxu0 %v7545
    %7687 = vmatpush1.msra.mxu0 %v7544
    %7688 = vmatprep.subr.mxu0 %v7543
    %7689 = vmatpush1.msra.mxu0 %v7542
    %7690 = vmatprep.subr.mxu0 %v7541
    %7691 = vmatpush1.msra.mxu0 %v7540
    %7692 = vmatprep.subr.mxu0 %v7539
    %7693 = vmatpush1.msra.mxu0 %v7538
    %7694 = vmatprep.subr.mxu0 %v7537
    %7695 = vmatpush1.msra.mxu0 %v7536
    %7696 = vmatprep.subr.mxu0 %v7535
    %7697 = vmatpush1.msra.mxu0 %v7534
    %7698 = vmatprep.subr.mxu0 %v7533
    %7699 = vmatpush1.msra.mxu0 %v7532
    %7700 = vmatprep.subr.mxu0 %v7531
    %7701 = vmatpush1.msra.mxu0 %v7530
    %7702 = vmatprep.subr.mxu0 %v7593
    %7703 = vmatpush2.msra.mxu0 %v7592
    %7704 = vmatprep.subr.mxu0 %v7591
    %7705 = vmatpush2.msra.mxu0 %v7590
    %7706 = vmatprep.subr.mxu0 %v7589
    %7707 = vmatpush2.msra.mxu0 %v7588
    %7708 = vmatprep.subr.mxu0 %v7587
    %7709 = vmatpush2.msra.mxu0 %v7586
    %7710 = vmatprep.subr.mxu0 %v7585
    %7711 = vmatpush2.msra.mxu0 %v7584
    %7712 = vmatprep.subr.mxu0 %v7583
    %7713 = vmatpush2.msra.mxu0 %v7582
    %7714 = vmatprep.subr.mxu0 %v7581
    %7715 = vmatpush2.msra.mxu0 %v7580
    %7716 = vmatprep.subr.mxu0 %v7579
    %7717 = vmatpush2.msra.mxu0 %v7578
    %7718 = vmatprep.subr.mxu0 %v7577
    %7719 = vmatpush2.msra.mxu0 %v7576
    %7720 = vmatprep.subr.mxu0 %v7575
    %7721 = vmatpush2.msra.mxu0 %v7574
    %7722 = vmatprep.subr.mxu0 %v7573
    %7723 = vmatpush2.msra.mxu0 %v7572
    %7724 = vmatprep.subr.mxu0 %v7571
    %7725 = vmatpush2.msra.mxu0 %v7570
    %7726 = vmatprep.subr.mxu0 %v7569
    %7727 = vmatpush2.msra.mxu0 %v7568
    %7728 = vmatprep.subr.mxu0 %v7567
    %7729 = vmatpush2.msra.mxu0 %v7566
    %7730 = vmatprep.subr.mxu0 %v7565
    %7731 = vmatpush2.msra.mxu0 %v7564
    %7732 = vmatprep.subr.mxu0 %v7563
    %7733 = vmatpush2.msra.mxu0 %v7562
    %7734 = vmatprep.mubr.f32.mxu0 %v7527
    %7735 = vmatmul.mubr.f32.gmra.mxu0 %v7526
    %v7736 = vpop.f32.mrf.mxu0
    %v7737 = vadd.f32 %v7663, %v7736
    %v7738 = vpop.f32.mrf.mxu0
    %v7739 = vadd.f32 %v7667, %v7738
    %7740 = vdwg.mxu0
    %7741 = vmatprep.subr.mxu0 %v7625
    %7742 = vmatpush1.msra.mxu0 %v7624
    %7743 = vmatprep.subr.mxu0 %v7623
    %7744 = vmatpush1.msra.mxu0 %v7622
    %7745 = vmatprep.subr.mxu0 %v7621
    %7746 = vmatpush1.msra.mxu0 %v7620
    %7747 = vmatprep.subr.mxu0 %v7619
    %7748 = vmatpush1.msra.mxu0 %v7618
    %7749 = vmatprep.subr.mxu0 %v7617
    %7750 = vmatpush1.msra.mxu0 %v7616
    %7751 = vmatprep.subr.mxu0 %v7615
    %7752 = vmatpush1.msra.mxu0 %v7614
    %7753 = vmatprep.subr.mxu0 %v7613
    %7754 = vmatpush1.msra.mxu0 %v7612
    %7755 = vmatprep.subr.mxu0 %v7611
    %7756 = vmatpush1.msra.mxu0 %v7610
    %7757 = vmatprep.subr.mxu0 %v7609
    %7758 = vmatpush1.msra.mxu0 %v7608
    %7759 = vmatprep.subr.mxu0 %v7607
    %7760 = vmatpush1.msra.mxu0 %v7606
    %7761 = vmatprep.subr.mxu0 %v7605
    %7762 = vmatpush1.msra.mxu0 %v7604
    %7763 = vmatprep.subr.mxu0 %v7603
    %7764 = vmatpush1.msra.mxu0 %v7602
    %7765 = vmatprep.subr.mxu0 %v7601
    %7766 = vmatpush1.msra.mxu0 %v7600
    %7767 = vmatprep.subr.mxu0 %v7599
    %7768 = vmatpush1.msra.mxu0 %v7598
    %7769 = vmatprep.subr.mxu0 %v7597
    %7770 = vmatpush1.msra.mxu0 %v7596
    %7771 = vmatprep.subr.mxu0 %v7595
    %7772 = vmatpush1.msra.mxu0 %v7594
    %7773 = vmatprep.subr.mxu0 %v7657
    %7774 = vmatpush2.msra.mxu0 %v7656
    %7775 = vmatprep.subr.mxu0 %v7655
    %7776 = vmatpush2.msra.mxu0 %v7654
    %7777 = vmatprep.subr.mxu0 %v7653
    %7778 = vmatpush2.msra.mxu0 %v7652
    %7779 = vmatprep.subr.mxu0 %v7651
    %7780 = vmatpush2.msra.mxu0 %v7650
    %7781 = vmatprep.subr.mxu0 %v7649
    %7782 = vmatpush2.msra.mxu0 %v7648
    %7783 = vmatprep.subr.mxu0 %v7647
    %7784 = vmatpush2.msra.mxu0 %v7646
    %7785 = vmatprep.subr.mxu0 %v7645
    %7786 = vmatpush2.msra.mxu0 %v7644
    %7787 = vmatprep.subr.mxu0 %v7643
    %7788 = vmatpush2.msra.mxu0 %v7642
    %7789 = vmatprep.subr.mxu0 %v7641
    %7790 = vmatpush2.msra.mxu0 %v7640
    %7791 = vmatprep.subr.mxu0 %v7639
    %7792 = vmatpush2.msra.mxu0 %v7638
    %7793 = vmatprep.subr.mxu0 %v7637
    %7794 = vmatpush2.msra.mxu0 %v7636
    %7795 = vmatprep.subr.mxu0 %v7635
    %7796 = vmatpush2.msra.mxu0 %v7634
    %7797 = vmatprep.subr.mxu0 %v7633
    %7798 = vmatpush2.msra.mxu0 %v7632
    %7799 = vmatprep.subr.mxu0 %v7631
    %7800 = vmatpush2.msra.mxu0 %v7630
    %7801 = vmatprep.subr.mxu0 %v7629
    %7802 = vmatpush2.msra.mxu0 %v7628
    %7803 = vmatprep.subr.mxu0 %v7627
    %7804 = vmatpush2.msra.mxu0 %v7626
    %7805 = vmatprep.mubr.f32.mxu0 %v7529
    %7806 = vmatmul.mubr.f32.gmra.mxu0 %v7528
    %v7807 = vpop.f32.mrf.mxu0
    %v7808 = vadd.f32 %v7737, %v7807
    %v7809 = vpop.f32.mrf.mxu0
    %v7810 = vadd.f32 %v7739, %v7809
    %7811 = vdwg.mxu0
    %vm7812 = vcmp.gt.f32.partialorder %v7808, 0.0
    %vm7813 = vcmp.gt.f32.partialorder %v7810, 0.0
    %v7814 = vmul.f32 %v7808, 0.01
    %v7815 = vmul.f32 %v7810, 0.01
    %v7816 = vsel %vm7812, %v7808, %v7814
    %v7817 = vsel %vm7813, %v7810, %v7815
    %v7818 = vld [vmem:[%s89] sm:$0x3]
    %v7820 = vlaneseq
    %v7821 = vshrl.u32 %v7820, 7
    %v7822 = vsub.s32 0, %v7821
    %v7823 = vrot.slane %v7818, %v7822
    %v7824 = vlaneseq
    %v7825 = vshrl.u32 %v7824, 7
    %v7826 = vsub.s32 1, %v7825
    %v7827 = vrot.slane %v7818, %v7826
    %v7830 = vmul.f32 %v7816, %v7823
    %v7831 = vmul.f32 %v7817, %v7827
    %vm7832 = vcmask 1043456
    %v7833 = vsel %vm7832, %v7830, 0.0
    %v7834 = vsel %vm7832, %v7831, 0.0
    %v7835 = vadd.f32 %v7833, %v7834
    %7836 = vadd.xlane.f32.xlu0 %v7835
    %v7837 = vpop.xlane.xlu0 %7836
    %v7838 = vld [vmem:[#allocation2] sm:$0x1]
    %v7840 = vlaneseq
    %v7841 = vshrl.u32 %v7840, 7
    %v7842 = vsub.s32 0, %v7841
    %v7843 = vrot.slane %v7838, %v7842
    %v7845 = vadd.f32 %v7837, %v7843
    %v7846 = vsub.f32 0.0, %v7845
    %v7847 = vmul.f32 %v7846, 1.442695
    %v7848 = vpow.pop %v7847
    %v7849 = vadd.f32 %v7848, 1.0
    %v7850 = vrcp.pop %v7849
    %vm7851 = vcmask 3072
    %7852 = vst.msk [vmem:[%s93] sm:$0xf] %vm7851, %v7850
    // Predicated region
    $region266: #{final_model_forward.1} parent=1 // pred_check
      _
    $region267: #{final_model_forward.1} parent=1 // pred_check_branch
      %7854 = sbr.rel (0) target = $region269
    $region268: #{final_model_forward.1} parent=1 // pred_region
      _
    $region269: #{final_model_forward.1} parent=1 // pred_fallthru
      _
    // Predicated region
    $region270: #{final_model_forward.1} parent=1 // pred_check
      _
    $region271: #{final_model_forward.1} parent=1 // pred_check_branch
      %7856 = sbr.rel (0) target = $region273
    $region272: #{final_model_forward.1} parent=1 // pred_region
      _
    $region273: #{final_model_forward.1} parent=1 // pred_fallthru
      _
    %7857 = vsyncpa [#allocation4], 1
    %7858 = vsyncpa [#allocation6], 1
    %7859 = vsyncpa [#allocation9], 1
    %7860 = vsyncpa [#allocation12], 1
    %7861 = vsyncpa [#allocation15], 1
    %7862 = vsyncpa [#allocation18], 1
    %7863 = vsyncpa [#allocation21], 1
    %7864 = vsyncpa [#allocation24], 1
    %7865 = vsyncpa [#allocation27], 1
    %7866 = vsyncpa [#allocation30], 1
    %7867 = vsyncpa [#allocation33], 1

</llo_original>
